<compile_context>
chip_gen: v7x
topology: tpu7x:2x2x1
jax: 0.10.0
libtpu: 0.0.40
codegen_flags: <defaults>
</compile_context>

<pallas_src>
import functools

import jax
import jax.numpy as jnp
from jax.experimental import pallas as pl
from jax.experimental.pallas import tpu as pltpu

LANE = 128
SUB = 8
BLK_E = 128     # edges processed per grid step in the embedding kernel


def _rup(v, m):
    return (v + m - 1) // m * m


def _pad2(a, rows, cols):
    a = jnp.asarray(a, jnp.float32)
    return jnp.pad(a, ((0, rows - a.shape[0]), (0, cols - a.shape[1])))


# ----------------------------------------------------------------------------
# Kernel 1: NNConvEmbed (aggr='max') over one block of edges.
#   message  m_e = ReLU( x_i @ Wi + x_j @ Wj + ea_e @ We + b )   (x_i = x[dst])
#   out[n]   = max over incoming edges (0 if no incoming edge)
# out_ref stays resident across the edge-block grid axis (same block index)
# and acts as the running-max accumulator.
# ----------------------------------------------------------------------------
def embed_kernel(x_ref, ea_ref, src_sub_ref, dst_sub_ref, dst_lane_ref,
                 wi_ref, wj_ref, we_ref, b_ref,
                 out_ref, xw_ref):
    n_pad = x_ref.shape[0]
    blk_e = ea_ref.shape[0]

    @pl.when(pl.program_id(0) == 0)
    def _init():
        x = x_ref[...]
        # Node-granularity projections, computed once and stacked so a single
        # combined one-hot gather matmul reads both halves.
        xw_ref[0:n_pad, :] = jnp.dot(x, wi_ref[...],
                                     preferred_element_type=jnp.float32)
        xw_ref[n_pad:, :] = jnp.dot(x, wj_ref[...],
                                    preferred_element_type=jnp.float32)
        out_ref[...] = jnp.zeros_like(out_ref)

    src = src_sub_ref[...]          # (blk_e, 1) int32, padded entries = -2*N_pad
    dst = dst_sub_ref[...]          # (blk_e, 1) int32, padded entries = -1

    # Combined one-hot gather: lanes [0, n_pad) pick x_i@Wi (row = dst),
    # lanes [n_pad, 2*n_pad) pick x_j@Wj (row = src).  One MXU matmul gives
    # x_i@Wi + x_j@Wj directly.  Padded edges match nothing (sentinels < 0).
    iota2 = jax.lax.broadcasted_iota(jnp.int32, (blk_e, 2 * n_pad), 1)
    gath = jnp.logical_or(iota2 == dst, iota2 == src + n_pad).astype(jnp.float32)
    xij = jnp.dot(gath, xw_ref[...], preferred_element_type=jnp.float32)

    msg = xij + jnp.dot(ea_ref[...], we_ref[...],
                        preferred_element_type=jnp.float32) + b_ref[...]
    msg = jnp.maximum(msg, 0.0)     # ReLU -> msg >= 0

    # Running max-scatter into the resident output block.
    # NOTE: correctness relies on msg >= 0 (post-ReLU) and on PyG 'max'
    # aggregation filling 0 for nodes with no incoming edge. Padded edges have
    # dst == -1 and therefore never match any node.
    iota_ne = jax.lax.broadcasted_iota(jnp.int32, (n_pad, blk_e), 0)
    hit_ne = (iota_ne == dst_lane_ref[...]).astype(jnp.float32)   # (n_pad, blk_e)
    contrib = hit_ne[:, :, None] * msg[None, :, :]                # (n_pad, blk_e, C_pad)
    out_ref[...] = jnp.maximum(out_ref[...], jnp.max(contrib, axis=1))


# ----------------------------------------------------------------------------
# Kernel 2: fused tail.
#   2x [ ChebConv(K=2,'sym'): y = x@W0 + (L_hat@x)@W1 + b ; LayerNorm ; ReLU ]
#   then Linear(H,1) + gate by (1 - data.x[:,2]), written lane-dense.
# For the demo sizes everything is resident in VMEM; for large N this would be
# split into per-layer row-tiled calls (node axis 'parallel') instead.
# ----------------------------------------------------------------------------
def cheb_stack_kernel(h_ref, l_ref, gate_ref,
                      w00_ref, w01_ref, b0_ref,
                      w10_ref, w11_ref, b1_ref,
                      wl_ref, bl_ref, out_ref, *, real_h):
    lap = l_ref[...]                       # L_hat read once for both layers
    inv_h = 1.0 / float(real_h)

    def cheb_ln_relu(xx, w0, w1, b):
        tx1 = jnp.dot(lap, xx, preferred_element_type=jnp.float32)
        y = (jnp.dot(xx, w0, preferred_element_type=jnp.float32)
             + jnp.dot(tx1, w1, preferred_element_type=jnp.float32)
             + b)
        # LayerNorm(eps=1e-5, gamma=1, beta=0) over the first `real_h` lanes.
        # Padded lanes of y are exactly 0 (zero-padded weights/bias), so the
        # lane sum equals the sum over real channels; centered padded lanes are
        # masked before the variance.
        mean = jnp.sum(y, axis=-1, keepdims=True) * inv_h
        lane = jax.lax.broadcasted_iota(jnp.int32, y.shape, 1)
        cent = jnp.where(lane < real_h, y - mean, 0.0)
        var = jnp.sum(cent * cent, axis=-1, keepdims=True) * inv_h
        yn = cent * jax.lax.rsqrt(var + 1e-5)
        return jnp.maximum(yn, 0.0)        # ReLU (dropout_rate=0 -> identity)

    h1 = cheb_ln_relu(h_ref[...], w00_ref[...], w01_ref[...], b0_ref[...])
    h2 = cheb_ln_relu(h1, w10_ref[...], w11_ref[...], b1_ref[...])

    # Final Linear(H,1) lands in lane 0 of a 128-wide padded slab; gate broadcasts.
    y = jnp.dot(h2, wl_ref[...], preferred_element_type=jnp.float32) + bl_ref[...]
    out_ref[...] = y * gate_ref[...]


# ----------------------------------------------------------------------------
# Wrapper glue: dense rescaled Laplacian for ChebConv('sym', lambda_max=2):
#   L_hat[i, j] = -deg^-1/2[i] * deg^-1/2[j] * A[i, j],  zero diagonal,
# self-loops removed first (as in ChebConv.__norm__), degree computed over
# edge_index[0] (as in get_laplacian).
# TODO(synk): for large graphs compute Tx1 = L_hat @ x sparsely inside the
# kernel (per-edge scaled gather/scatter) instead of materializing dense N^2.
# ----------------------------------------------------------------------------
def cheb_laplacian_dense(edge_index, num_nodes, n_pad):
    src, dst = edge_index[0], edge_index[1]
    keep = (src != dst).astype(jnp.float32)          # remove_self_loops
    deg = jnp.zeros(num_nodes, jnp.float32).at[src].add(keep)
    dis = jnp.where(deg > 0, jax.lax.rsqrt(jnp.maximum(deg, 1e-12)), 0.0)
    w = dis[src] * dis[dst] * keep
    return jnp.zeros((n_pad, n_pad), jnp.float32).at[dst, src].add(-w)


def gnn_chebconv_forward(x, edge_index, edge_attr, params):
    x = jnp.asarray(x, jnp.float32)
    edge_attr = jnp.asarray(edge_attr, jnp.float32)
    edge_index = jnp.asarray(edge_index, jnp.int32)

    N, Fx = x.shape
    E = edge_index.shape[1]
    Fea = edge_attr.shape[1]
    C = params["emb_wi"].shape[1]
    H = params["conv0_w0"].shape[1]

    N_pad = _rup(N, SUB)
    E_pad = _rup(E, BLK_E)
    Fx_pad = _rup(Fx, LANE)
    Fea_pad = _rup(Fea, LANE)
    C_pad = _rup(C, LANE)
    H_pad = _rup(H, LANE)
    n_eb = E_pad // BLK_E

    # ---- zero-pad inputs / params (math stays exact; see LN masking) ----
    x_p = _pad2(x, N_pad, Fx_pad)
    ea_p = _pad2(edge_attr, E_pad, Fea_pad)

    src = edge_index[0]
    dst = edge_index[1]
    # padded-edge sentinels: dst=-1 never matches; src sentinel keeps
    # (src + N_pad) negative so the combined gather one-hot never matches.
    src_p = jnp.full((E_pad,), -2 * N_pad, jnp.int32).at[:E].set(src)
    dst_p = jnp.full((E_pad,), -1, jnp.int32).at[:E].set(dst)
    src_sub = src_p.reshape(E_pad, 1)       # edges on sublanes (for gather one-hot)
    dst_sub = dst_p.reshape(E_pad, 1)
    dst_lane = dst_p.reshape(1, E_pad)      # edges on lanes (for scatter one-hot)

    wi_p = _pad2(params["emb_wi"], Fx_pad, C_pad)
    wj_p = _pad2(params["emb_wj"], Fx_pad, C_pad)
    we_p = _pad2(params["emb_we"], Fea_pad, C_pad)
    eb_p = _pad2(params["emb_b"], 1, C_pad)

    w00 = _pad2(params["conv0_w0"], C_pad, H_pad)
    w01 = _pad2(params["conv0_w1"], C_pad, H_pad)
    b0 = _pad2(params["conv0_b"], 1, H_pad)
    w10 = _pad2(params["conv1_w0"], H_pad, H_pad)
    w11 = _pad2(params["conv1_w1"], H_pad, H_pad)
    b1 = _pad2(params["conv1_b"], 1, H_pad)
    wl = _pad2(params["lin_w"], H_pad, LANE)
    bl = _pad2(params["lin_b"], 1, LANE)

    # ---- Kernel 1: NNConvEmbed (aggr='max'), gridded over edge blocks ----
    embed_cost = pl.CostEstimate(
        flops=int(4 * N_pad * Fx_pad * C_pad
                  + n_eb * (4 * BLK_E * N_pad * C_pad
                            + 2 * BLK_E * Fea_pad * C_pad
                            + 2 * N_pad * BLK_E * C_pad)),
        transcendentals=0,
        bytes_accessed=int(4 * (x_p.size + ea_p.size + wi_p.size + wj_p.size
                                + we_p.size + eb_p.size + N_pad * C_pad)
                           + 4 * 3 * E_pad))
    h = pl.pallas_call(
        embed_kernel,
        out_shape=jax.ShapeDtypeStruct((N_pad, C_pad), jnp.float32),
        grid_spec=pltpu.PrefetchScalarGridSpec(
            num_scalar_prefetch=0,
            grid=(n_eb,),
            in_specs=[
                pl.BlockSpec((N_pad, Fx_pad), lambda e: (0, 0)),    # x (resident)
                pl.BlockSpec((BLK_E, Fea_pad), lambda e: (e, 0)),   # edge_attr block
                pl.BlockSpec((BLK_E, 1), lambda e: (e, 0)),         # src idx (sublane)
                pl.BlockSpec((BLK_E, 1), lambda e: (e, 0)),         # dst idx (sublane)
                pl.BlockSpec((1, BLK_E), lambda e: (0, e)),         # dst idx (lane)
                pl.BlockSpec((Fx_pad, C_pad), lambda e: (0, 0)),    # Wi
                pl.BlockSpec((Fx_pad, C_pad), lambda e: (0, 0)),    # Wj
                pl.BlockSpec((Fea_pad, C_pad), lambda e: (0, 0)),   # We
                pl.BlockSpec((1, C_pad), lambda e: (0, 0)),         # bias
            ],
            out_specs=pl.BlockSpec((N_pad, C_pad), lambda e: (0, 0)),
            scratch_shapes=[pltpu.VMEM((2 * N_pad, C_pad), jnp.float32)],  # [x@Wi ; x@Wj]
        ),
        compiler_params=pltpu.CompilerParams(
            dimension_semantics=("arbitrary",),
            vmem_limit_bytes=64 * 1024 * 1024),
        cost_estimate=embed_cost,
    )(x_p, ea_p, src_sub, dst_sub, dst_lane, wi_p, wj_p, we_p, eb_p)

    # ---- dense rescaled Laplacian (wrapper glue, built once per graph) ----
    L_p = cheb_laplacian_dense(edge_index, N, N_pad)

    # gate = 1 - data.x[:, 2]
    gate_p = jnp.zeros((N_pad, 1), jnp.float32).at[:N, 0].set(1.0 - x[:, 2])

    # ---- Kernel 2: fused [ChebConv + LN + ReLU] x2 + Linear + gate ----
    cheb_cost = pl.CostEstimate(
        flops=int(2 * (2 * N_pad * N_pad * H_pad + 4 * N_pad * H_pad * H_pad)
                  + 2 * N_pad * H_pad * LANE),
        transcendentals=int(2 * N_pad),
        bytes_accessed=int(4 * (N_pad * C_pad + N_pad * N_pad + N_pad
                                + w00.size + w01.size + b0.size
                                + w10.size + w11.size + b1.size
                                + wl.size + bl.size + N_pad * LANE)))
    vmem_spec = pl.BlockSpec(memory_space=pltpu.MemorySpace.VMEM)
    out_pad = pl.pallas_call(
        functools.partial(cheb_stack_kernel, real_h=H),
        out_shape=jax.ShapeDtypeStruct((N_pad, LANE), jnp.float32),
        in_specs=[vmem_spec] * 11,
        out_specs=vmem_spec,
        compiler_params=pltpu.CompilerParams(vmem_limit_bytes=64 * 1024 * 1024),
        cost_estimate=cheb_cost,
    )(h, L_p, gate_p, w00, w01, b0, w10, w11, b1, wl, bl)

    # lane-dense padded slab -> (N, 1) result
    return out_pad[:N, :1]


def init_params(key, node_features, edge_features, edge_channels, hid_channels):
    ks = jax.random.split(key, 10)
    Fx, Fea, C, H = node_features, edge_features, edge_channels, hid_channels
    w_emb = 0.1 * jax.random.normal(ks[0], (2 * Fx + Fea, C), jnp.float32)
    return {
        "emb_wi": w_emb[:Fx],            # acts on x_i (target)
        "emb_wj": w_emb[Fx:2 * Fx],      # acts on x_j (source)
        "emb_we": w_emb[2 * Fx:],        # acts on edge_attr
        "emb_b": 0.1 * jax.random.normal(ks[1], (1, C), jnp.float32),
        "conv0_w0": 0.1 * jax.random.normal(ks[2], (C, H), jnp.float32),
        "conv0_w1": 0.1 * jax.random.normal(ks[3], (C, H), jnp.float32),
        "conv0_b": 0.1 * jax.random.normal(ks[4], (1, H), jnp.float32),
        "conv1_w0": 0.1 * jax.random.normal(ks[5], (H, H), jnp.float32),
        "conv1_w1": 0.1 * jax.random.normal(ks[6], (H, H), jnp.float32),
        "conv1_b": 0.1 * jax.random.normal(ks[7], (1, H), jnp.float32),
        "lin_w": 0.1 * jax.random.normal(ks[8], (H, 1), jnp.float32),
        "lin_b": 0.1 * jax.random.normal(ks[9], (1, 1), jnp.float32),
    }


if __name__ == "__main__":
    # small synthetic graph: 64 nodes, bidirectional ring (128 directed edges)
    N, Fx, Fea, C, H = 64, 4, 4, 32, 32
    key = jax.random.PRNGKey(0)
    kx, ke, kp = jax.random.split(key, 3)

    x = jax.random.normal(kx, (N, Fx), jnp.float32)                # data.x
    idx = jnp.arange(N)
    src = jnp.concatenate([idx, (idx + 1) % N])
    dst = jnp.concatenate([(idx + 1) % N, idx])
    edge_index = jnp.stack([src, dst]).astype(jnp.int32)           # data.edge_index (2, E)
    edge_attr = jax.random.normal(ke, (edge_index.shape[1], Fea), jnp.float32)  # data.edge_attr

    params = init_params(kp, Fx, Fea, C, H)

    out = gnn_chebconv_forward(x, edge_index, edge_attr, params)
    jax.block_until_ready(out)
    assert out.shape == (N, 1), out.shape
    print("KERNEL_OK")
</pallas_src>

<mosaic_0001>
module attributes {stable_mosaic.version = 11 : i64} {
  func.func @embed_kernel(%arg0: i32, %arg1: memref<64x128xf32, #tpu.memory_space<vmem>>, %arg2: memref<128x128xf32, #tpu.memory_space<vmem>>, %arg3: memref<128x1xi32, #tpu.memory_space<vmem>>, %arg4: memref<128x1xi32, #tpu.memory_space<vmem>>, %arg5: memref<1x128xi32, #tpu.memory_space<vmem>>, %arg6: memref<128x128xf32, #tpu.memory_space<vmem>>, %arg7: memref<128x128xf32, #tpu.memory_space<vmem>>, %arg8: memref<128x128xf32, #tpu.memory_space<vmem>>, %arg9: memref<1x128xf32, #tpu.memory_space<vmem>>, %arg10: memref<64x128xf32, #tpu.memory_space<vmem>>, %arg11: memref<128x128xf32, #tpu.memory_space<vmem>>) attributes {dimension_semantics = [#tpu.dimension_semantics<arbitrary>], iteration_bounds = array<i64: 1>, scalar_prefetch = 0 : i64, scratch_operands = 1 : i64, tpu.core_type = #tpu.core_type<tc>, window_params = [{pipeline_mode = #tpu.pipeline_mode<synchronous>, transform_indices = @transform_0, window_bounds = array<i64: 64, 128>}, {transform_indices = @transform_1, window_bounds = array<i64: 128, 128>}, {transform_indices = @transform_2, window_bounds = array<i64: 128, 1>}, {transform_indices = @transform_3, window_bounds = array<i64: 128, 1>}, {transform_indices = @transform_4, window_bounds = array<i64: 1, 128>}, {pipeline_mode = #tpu.pipeline_mode<synchronous>, transform_indices = @transform_5, window_bounds = array<i64: 128, 128>}, {pipeline_mode = #tpu.pipeline_mode<synchronous>, transform_indices = @transform_6, window_bounds = array<i64: 128, 128>}, {pipeline_mode = #tpu.pipeline_mode<synchronous>, transform_indices = @transform_7, window_bounds = array<i64: 128, 128>}, {pipeline_mode = #tpu.pipeline_mode<synchronous>, transform_indices = @transform_8, window_bounds = array<i64: 1, 128>}, {pipeline_mode = #tpu.pipeline_mode<synchronous>, transform_indices = @transform_9, window_bounds = array<i64: 64, 128>}]} {
    %c0_i32 = arith.constant 0 : i32
    %0 = arith.cmpi eq, %arg0, %c0_i32 : i32
    %1 = arith.extui %0 : i1 to i32
    %c0_i32_0 = arith.constant 0 : i32
    %2 = arith.cmpi ne, %1, %c0_i32_0 : i32
    scf.if %2 {
      %c0_21 = arith.constant 0 : index
      %c0_22 = arith.constant 0 : index
      %41 = vector.load %arg1[%c0_21, %c0_22] : memref<64x128xf32, #tpu.memory_space<vmem>>, vector<64x128xf32>
      %c0_23 = arith.constant 0 : index
      %c0_24 = arith.constant 0 : index
      %42 = vector.load %arg6[%c0_23, %c0_24] : memref<128x128xf32, #tpu.memory_space<vmem>>, vector<128x128xf32>
      %cst_25 = arith.constant dense<0.000000e+00> : vector<64x128xf32>
      %43 = tpu.matmul %41, %42, %cst_25 {dimension_numbers = #tpu.dot_dimension_numbers<[1], [0], [0], [1], [0, 0, 1, 1], [], []>} : vector<64x128xf32>, vector<128x128xf32>, vector<64x128xf32> -> vector<64x128xf32>
      %c0_26 = arith.constant 0 : index
      %c0_27 = arith.constant 0 : index
      %44 = vector.load %arg11[%c0_26, %c0_27] : memref<128x128xf32, #tpu.memory_space<vmem>>, vector<64x128xf32>
      tpu.vector_store %arg11[%c0_26, %c0_27], %43 {strides = array<i32>} : memref<128x128xf32, #tpu.memory_space<vmem>>, vector<64x128xf32>,
      %c0_28 = arith.constant 0 : index
      %c0_29 = arith.constant 0 : index
      %45 = vector.load %arg7[%c0_28, %c0_29] : memref<128x128xf32, #tpu.memory_space<vmem>>, vector<128x128xf32>
      %cst_30 = arith.constant dense<0.000000e+00> : vector<64x128xf32>
      %46 = tpu.matmul %41, %45, %cst_30 {dimension_numbers = #tpu.dot_dimension_numbers<[1], [0], [0], [1], [0, 0, 1, 1], [], []>} : vector<64x128xf32>, vector<128x128xf32>, vector<64x128xf32> -> vector<64x128xf32>
      %c64 = arith.constant 64 : index
      %c0_31 = arith.constant 0 : index
      %47 = vector.load %arg11[%c64, %c0_31] : memref<128x128xf32, #tpu.memory_space<vmem>>, vector<64x128xf32>
      tpu.vector_store %arg11[%c64, %c0_31], %46 {strides = array<i32>} : memref<128x128xf32, #tpu.memory_space<vmem>>, vector<64x128xf32>,
      %cst_32 = arith.constant 0.000000e+00 : f32
      %48 = vector.broadcast %cst_32 : f32 to vector<64x128xf32>
      %c0_33 = arith.constant 0 : index
      %c0_34 = arith.constant 0 : index
      %49 = vector.load %arg10[%c0_33, %c0_34] : memref<64x128xf32, #tpu.memory_space<vmem>>, vector<64x128xf32>
      tpu.vector_store %arg10[%c0_33, %c0_34], %48 {strides = array<i32>} : memref<64x128xf32, #tpu.memory_space<vmem>>, vector<64x128xf32>,
    } else {
    }
    %c0 = arith.constant 0 : index
    %c0_1 = arith.constant 0 : index
    %3 = vector.load %arg3[%c0, %c0_1] : memref<128x1xi32, #tpu.memory_space<vmem>>, vector<128x1xi32>
    %c0_2 = arith.constant 0 : index
    %c0_3 = arith.constant 0 : index
    %4 = vector.load %arg4[%c0_2, %c0_3] : memref<128x1xi32, #tpu.memory_space<vmem>>, vector<128x1xi32>
    %5 = tpu.iota {dimensions = array<i32: 1>} : vector<128x128xi32>
    %6 = vector.broadcast %4 : vector<128x1xi32> to vector<128x128xi32>
    %7 = arith.cmpi eq, %5, %6 : vector<128x128xi32>
    %c64_i32 = arith.constant 64 : i32
    %8 = vector.broadcast %c64_i32 : i32 to vector<128x1xi32>
    %9 = arith.addi %3, %8 : vector<128x1xi32>
    %10 = vector.broadcast %9 : vector<128x1xi32> to vector<128x128xi32>
    %11 = arith.cmpi eq, %5, %10 : vector<128x128xi32>
    %12 = arith.ori %7, %11 : vector<128x128xi1>
    %13 = arith.extui %12 : vector<128x128xi1> to vector<128x128xi32>
    %14 = arith.sitofp %13 : vector<128x128xi32> to vector<128x128xf32>
    %c0_4 = arith.constant 0 : index
    %c0_5 = arith.constant 0 : index
    %15 = vector.load %arg11[%c0_4, %c0_5] : memref<128x128xf32, #tpu.memory_space<vmem>>, vector<128x128xf32>
    %cst = arith.constant dense<0.000000e+00> : vector<128x128xf32>
    %16 = tpu.matmul %14, %15, %cst {dimension_numbers = #tpu.dot_dimension_numbers<[1], [0], [0], [1], [0, 0, 1, 1], [], []>} : vector<128x128xf32>, vector<128x128xf32>, vector<128x128xf32> -> vector<128x128xf32>
    %c0_6 = arith.constant 0 : index
    %c0_7 = arith.constant 0 : index
    %17 = vector.load %arg2[%c0_6, %c0_7] : memref<128x128xf32, #tpu.memory_space<vmem>>, vector<128x128xf32>
    %c0_8 = arith.constant 0 : index
    %c0_9 = arith.constant 0 : index
    %18 = vector.load %arg8[%c0_8, %c0_9] : memref<128x128xf32, #tpu.memory_space<vmem>>, vector<128x128xf32>
    %cst_10 = arith.constant dense<0.000000e+00> : vector<128x128xf32>
    %19 = tpu.matmul %17, %18, %cst_10 {dimension_numbers = #tpu.dot_dimension_numbers<[1], [0], [0], [1], [0, 0, 1, 1], [], []>} : vector<128x128xf32>, vector<128x128xf32>, vector<128x128xf32> -> vector<128x128xf32>
    %20 = arith.addf %16, %19 : vector<128x128xf32>
    %c0_11 = arith.constant 0 : index
    %c0_12 = arith.constant 0 : index
    %21 = vector.load %arg9[%c0_11, %c0_12] : memref<1x128xf32, #tpu.memory_space<vmem>>, vector<1x128xf32>
    %22 = vector.broadcast %21 : vector<1x128xf32> to vector<128x128xf32>
    %23 = arith.addf %20, %22 : vector<128x128xf32>
    %cst_13 = arith.constant 0.000000e+00 : f32
    %24 = vector.broadcast %cst_13 : f32 to vector<128x128xf32>
    %25 = arith.maximumf %23, %24 : vector<128x128xf32>
    %26 = tpu.iota {dimensions = array<i32: 0>} : vector<64x128xi32>
    %c0_14 = arith.constant 0 : index
    %c0_15 = arith.constant 0 : index
    %27 = vector.load %arg5[%c0_14, %c0_15] : memref<1x128xi32, #tpu.memory_space<vmem>>, vector<1x128xi32>
    %28 = vector.broadcast %27 : vector<1x128xi32> to vector<64x128xi32>
    %29 = arith.cmpi eq, %26, %28 : vector<64x128xi32>
    %30 = arith.extui %29 : vector<64x128xi1> to vector<64x128xi32>
    %31 = arith.sitofp %30 : vector<64x128xi32> to vector<64x128xf32>
    %32 = vector.shape_cast %31 : vector<64x128xf32> to vector<64x128x1xf32>
    %33 = vector.shape_cast %25 : vector<128x128xf32> to vector<1x128x128xf32>
    %34 = vector.broadcast %32 : vector<64x128x1xf32> to vector<64x128x128xf32>
    %35 = vector.broadcast %33 : vector<1x128x128xf32> to vector<64x128x128xf32>
    %36 = arith.mulf %34, %35 : vector<64x128x128xf32>
    %c0_16 = arith.constant 0 : index
    %c0_17 = arith.constant 0 : index
    %37 = vector.load %arg10[%c0_16, %c0_17] : memref<64x128xf32, #tpu.memory_space<vmem>>, vector<64x128xf32>
    %cst_18 = arith.constant dense<0xFF800000> : vector<64x128xf32>
    %38 = vector.multi_reduction <maximumf>, %36, %cst_18 [1] : vector<64x128x128xf32> to vector<64x128xf32>
    %39 = arith.maximumf %37, %38 : vector<64x128xf32>
    %c0_19 = arith.constant 0 : index
    %c0_20 = arith.constant 0 : index
    %40 = vector.load %arg10[%c0_19, %c0_20] : memref<64x128xf32, #tpu.memory_space<vmem>>, vector<64x128xf32>
    tpu.vector_store %arg10[%c0_19, %c0_20], %39 {strides = array<i32>} : memref<64x128xf32, #tpu.memory_space<vmem>>, vector<64x128xf32>,
    return
  }
  func.func @transform_0(%arg0: i32) -> (i32, i32) {
    %c0_i32 = arith.constant 0 : i32
    %c0_i32_0 = arith.constant 0 : i32
    %c0_i32_1 = arith.constant 0 : i32
    return %c0_i32, %c0_i32_0 : i32, i32
  }
  func.func @transform_1(%arg0: i32) -> (i32, i32) {
    %c0_i32 = arith.constant 0 : i32
    %c0_i32_0 = arith.constant 0 : i32
    return %arg0, %c0_i32 : i32, i32
  }
  func.func @transform_2(%arg0: i32) -> (i32, i32) {
    %c0_i32 = arith.constant 0 : i32
    %c0_i32_0 = arith.constant 0 : i32
    return %arg0, %c0_i32 : i32, i32
  }
  func.func @transform_3(%arg0: i32) -> (i32, i32) {
    %c0_i32 = arith.constant 0 : i32
    %c0_i32_0 = arith.constant 0 : i32
    return %arg0, %c0_i32 : i32, i32
  }
  func.func @transform_4(%arg0: i32) -> (i32, i32) {
    %c0_i32 = arith.constant 0 : i32
    %c0_i32_0 = arith.constant 0 : i32
    return %c0_i32, %arg0 : i32, i32
  }
  func.func @transform_5(%arg0: i32) -> (i32, i32) {
    %c0_i32 = arith.constant 0 : i32
    %c0_i32_0 = arith.constant 0 : i32
    %c0_i32_1 = arith.constant 0 : i32
    return %c0_i32, %c0_i32_0 : i32, i32
  }
  func.func @transform_6(%arg0: i32) -> (i32, i32) {
    %c0_i32 = arith.constant 0 : i32
    %c0_i32_0 = arith.constant 0 : i32
    %c0_i32_1 = arith.constant 0 : i32
    return %c0_i32, %c0_i32_0 : i32, i32
  }
  func.func @transform_7(%arg0: i32) -> (i32, i32) {
    %c0_i32 = arith.constant 0 : i32
    %c0_i32_0 = arith.constant 0 : i32
    %c0_i32_1 = arith.constant 0 : i32
    return %c0_i32, %c0_i32_0 : i32, i32
  }
  func.func @transform_8(%arg0: i32) -> (i32, i32) {
    %c0_i32 = arith.constant 0 : i32
    %c0_i32_0 = arith.constant 0 : i32
    %c0_i32_1 = arith.constant 0 : i32
    return %c0_i32, %c0_i32_0 : i32, i32
  }
  func.func @transform_9(%arg0: i32) -> (i32, i32) {
    %c0_i32 = arith.constant 0 : i32
    %c0_i32_0 = arith.constant 0 : i32
    %c0_i32_1 = arith.constant 0 : i32
    return %c0_i32, %c0_i32_0 : i32, i32
  }
}

</mosaic_0001>

<llo_original>
// kernel: tpu_custom_call.1
$region0: #{tpu_custom_call.1}
  #allocation0 [shape = 'u32[]', space=smem, size = 0x4, offset = 0x4, fixed_abs, tag = 'smem constant byte address 0x4 - core index']
  #allocation1 [shape = 'u32[144,128]{1,0:T(1,128)}', space=vmem, size = 0x12000, scoped, tag = 'internal scratch']
  #allocation2 [shape = 'f32[128,128]{1,0:T(8,128)}', space=vmem, size = 0x10000, scoped, tag = 'scratch operand']
  %s0 = inlined_call_operand.hbm [shape: f32[64,128], index: 0, kind: input, shape index: {}]
  %s1 = inlined_call_operand.hbm [shape: f32[128,128], index: 1, kind: input, shape index: {}]
  %s2 = inlined_call_operand.hbm [shape: s32[128,1], index: 2, kind: input, shape index: {}]
  %s3 = inlined_call_operand.hbm [shape: s32[128,1], index: 3, kind: input, shape index: {}]
  %s4 = inlined_call_operand.hbm [shape: s32[1,128], index: 4, kind: input, shape index: {}]
  %s5 = inlined_call_operand.hbm [shape: f32[128,128], index: 5, kind: input, shape index: {}]
  %s6 = inlined_call_operand.hbm [shape: f32[128,128], index: 6, kind: input, shape index: {}]
  %s7 = inlined_call_operand.hbm [shape: f32[128,128], index: 7, kind: input, shape index: {}]
  %s8 = inlined_call_operand.hbm [shape: f32[1,128], index: 8, kind: input, shape index: {}]
  %s9 = inlined_call_operand.hbm [shape: f32[64,128], index: 9, kind: output, shape index: {}]
  %s10 = sld [smem:[#allocation0]]
  $region86: #{tpu_custom_call.1} parent=0
    _
  %s12 = ssub.s32 1, %s10
  %s13 = scalar_select 0, %s12, %s10
  $region1: #{tpu_custom_call.1} parent=0
    #allocation3 [shape = 'u8[32768]{0}', space=vmem, size = 0x8000, scoped, tag = 'input window, operand 0, single buffered']
    #allocation4 [shape = 's32[1]{0}', space=sflag, size = 0x4, scoped, tag = 'scoped memory for tpu_custom_call.1']
    #allocation5 [shape = 's32[1]{0}', space=sflag, size = 0x4, scoped, tag = 'scoped memory for tpu_custom_call.1']
    #allocation6 [shape = 'u8[65536]{0}', space=vmem, size = 0x10000, scoped, tag = 'input window, operand 1, single buffered']
    #allocation7 [shape = 's32[1]{0}', space=sflag, size = 0x4, scoped, tag = 'scoped memory for tpu_custom_call.1']
    #allocation8 [shape = 'u8[65536]{0}', space=vmem, size = 0x10000, scoped, tag = 'input window, operand 2, single buffered']
    #allocation9 [shape = 'u8[65536]{0}', space=vmem, size = 0x10000, scoped, tag = 'input window, operand 3, single buffered']
    #allocation10 [shape = 's32[1]{0}', space=sflag, size = 0x4, scoped, tag = 'scoped memory for tpu_custom_call.1']
    #allocation11 [shape = 'u8[512]{0}', space=vmem, size = 0x400, scoped, tag = 'input window, operand 4, single buffered']
    #allocation12 [shape = 'u8[65536]{0}', space=vmem, size = 0x10000, scoped, tag = 'input window, operand 5, single buffered']
    #allocation13 [shape = 's32[1]{0}', space=sflag, size = 0x4, scoped, tag = 'scoped memory for tpu_custom_call.1']
    #allocation14 [shape = 'u8[65536]{0}', space=vmem, size = 0x10000, scoped, tag = 'input window, operand 6, single buffered']
    #allocation15 [shape = 'u8[65536]{0}', space=vmem, size = 0x10000, scoped, tag = 'input window, operand 7, single buffered']
    #allocation16 [shape = 's32[1]{0}', space=sflag, size = 0x4, scoped, tag = 'scoped memory for tpu_custom_call.1']
    #allocation17 [shape = 'u8[512]{0}', space=vmem, size = 0x400, scoped, tag = 'input window, operand 8, single buffered']
    #allocation18 [shape = 'u8[32768]{0}', space=vmem, size = 0x8000, scoped, tag = 'output window, operand 0, single buffered']
    %14 = vsyncpa [#allocation4], 0
    %15 = vsyncpa [#allocation7], 0
    %16 = vsyncpa [#allocation10], 0
    %17 = vsyncpa [#allocation13], 0
    %18 = vsyncpa [#allocation16], 0
    %19 = vsyncpa [#allocation5], 0
    // Predicated region
    $region2: #{tpu_custom_call.1} parent=1 // pred_check
      _
    $region3: #{tpu_custom_call.1} parent=1 // pred_check_branch
      %21 = sbr.rel (0) target = $region5
    $region4: #{tpu_custom_call.1} parent=1 // pred_region
      %s23 = ssub.s32 1024, 1024
      %24 = vsyncadd [#allocation4], %s23
      %s25 = sshll.u32 [#allocation3], 4
      %s26 = int_to_ptr.vmem [resolvable:$true] %s25
      %31 = dma.hbm_to_vmem [thread:$0]  %s0, 1024, %s26, [#allocation4], 128, 128, 8
    $region5: #{tpu_custom_call.1} parent=1 // pred_fallthru
      _
    // Predicated region
    $region6: #{tpu_custom_call.1} parent=1 // pred_check
      _
    $region7: #{tpu_custom_call.1} parent=1 // pred_check_branch
      %33 = sbr.rel (0) target = $region9
    $region8: #{tpu_custom_call.1} parent=1 // pred_region
      %s35 = ssub.s32 2048, 2048
      %36 = vsyncadd [#allocation7], %s35
      %s37 = sshll.u32 [#allocation6], 4
      %s38 = int_to_ptr.vmem [resolvable:$true] %s37
      %43 = dma.hbm_to_vmem [thread:$0]  %s1, 2048, %s38, [#allocation7], 128, 128, 8
    $region9: #{tpu_custom_call.1} parent=1 // pred_fallthru
      _
    // Predicated region
    $region10: #{tpu_custom_call.1} parent=1 // pred_check
      _
    $region11: #{tpu_custom_call.1} parent=1 // pred_check_branch
      %45 = sbr.rel (0) target = $region13
    $region12: #{tpu_custom_call.1} parent=1 // pred_region
      %s47 = ssub.s32 2048, 2048
      %48 = vsyncadd [#allocation7], %s47
      %s49 = sshll.u32 [#allocation8], 4
      %s50 = int_to_ptr.vmem [resolvable:$true] %s49
      %55 = dma.hbm_to_vmem [thread:$0]  %s2, 2048, %s50, [#allocation7], 128, 128, 8
    $region13: #{tpu_custom_call.1} parent=1 // pred_fallthru
      _
    // Predicated region
    $region14: #{tpu_custom_call.1} parent=1 // pred_check
      _
    $region15: #{tpu_custom_call.1} parent=1 // pred_check_branch
      %57 = sbr.rel (0) target = $region17
    $region16: #{tpu_custom_call.1} parent=1 // pred_region
      %s59 = ssub.s32 2048, 2048
      %60 = vsyncadd [#allocation10], %s59
      %s61 = sshll.u32 [#allocation9], 4
      %s62 = int_to_ptr.vmem [resolvable:$true] %s61
      %67 = dma.hbm_to_vmem [thread:$0]  %s3, 2048, %s62, [#allocation10], 128, 128, 8
    $region17: #{tpu_custom_call.1} parent=1 // pred_fallthru
      _
    // Predicated region
    $region18: #{tpu_custom_call.1} parent=1 // pred_check
      _
    $region19: #{tpu_custom_call.1} parent=1 // pred_check_branch
      %69 = sbr.rel (0) target = $region21
    $region20: #{tpu_custom_call.1} parent=1 // pred_region
      %s71 = ssub.s32 16, 16
      %72 = vsyncadd [#allocation10], %s71
      %s74 = sshll.u32 [#allocation11], 4
      %s75 = int_to_ptr.vmem [resolvable:$true] %s74
      %77 = dma.hbm_to_vmem [thread:$0]  %s4, 16, %s75, [#allocation10]
    $region21: #{tpu_custom_call.1} parent=1 // pred_fallthru
      _
    // Predicated region
    $region22: #{tpu_custom_call.1} parent=1 // pred_check
      _
    $region23: #{tpu_custom_call.1} parent=1 // pred_check_branch
      %79 = sbr.rel (0) target = $region25
    $region24: #{tpu_custom_call.1} parent=1 // pred_region
      %s81 = ssub.s32 2048, 2048
      %82 = vsyncadd [#allocation13], %s81
      %s83 = sshll.u32 [#allocation12], 4
      %s84 = int_to_ptr.vmem [resolvable:$true] %s83
      %89 = dma.hbm_to_vmem [thread:$0]  %s5, 2048, %s84, [#allocation13], 128, 128, 8
    $region25: #{tpu_custom_call.1} parent=1 // pred_fallthru
      _
    // Predicated region
    $region26: #{tpu_custom_call.1} parent=1 // pred_check
      _
    $region27: #{tpu_custom_call.1} parent=1 // pred_check_branch
      %91 = sbr.rel (0) target = $region29
    $region28: #{tpu_custom_call.1} parent=1 // pred_region
      %s93 = ssub.s32 2048, 2048
      %94 = vsyncadd [#allocation13], %s93
      %s95 = sshll.u32 [#allocation14], 4
      %s96 = int_to_ptr.vmem [resolvable:$true] %s95
      %101 = dma.hbm_to_vmem [thread:$0]  %s6, 2048, %s96, [#allocation13], 128, 128, 8
    $region29: #{tpu_custom_call.1} parent=1 // pred_fallthru
      _
    // Predicated region
    $region30: #{tpu_custom_call.1} parent=1 // pred_check
      _
    $region31: #{tpu_custom_call.1} parent=1 // pred_check_branch
      %103 = sbr.rel (0) target = $region33
    $region32: #{tpu_custom_call.1} parent=1 // pred_region
      %s105 = ssub.s32 2048, 2048
      %106 = vsyncadd [#allocation16], %s105
      %s107 = sshll.u32 [#allocation15], 4
      %s108 = int_to_ptr.vmem [resolvable:$true] %s107
      %113 = dma.hbm_to_vmem [thread:$0]  %s7, 2048, %s108, [#allocation16], 128, 128, 8
    $region33: #{tpu_custom_call.1} parent=1 // pred_fallthru
      _
    // Predicated region
    $region34: #{tpu_custom_call.1} parent=1 // pred_check
      _
    $region35: #{tpu_custom_call.1} parent=1 // pred_check_branch
      %115 = sbr.rel (0) target = $region37
    $region36: #{tpu_custom_call.1} parent=1 // pred_region
      %s117 = ssub.s32 16, 16
      %118 = vsyncadd [#allocation16], %s117
      %s120 = sshll.u32 [#allocation17], 4
      %s121 = int_to_ptr.vmem [resolvable:$true] %s120
      %123 = dma.hbm_to_vmem [thread:$0]  %s8, 16, %s121, [#allocation16]
    $region37: #{tpu_custom_call.1} parent=1 // pred_fallthru
      _
    // Predicated region
    $region38: #{tpu_custom_call.1} parent=1 // pred_check
      _
    $region39: #{tpu_custom_call.1} parent=1 // pred_check_branch
      %125 = sbr.rel (0) target = $region41
    $region40: #{tpu_custom_call.1} parent=1 // pred_region
      %126 = dma.done [#allocation4], 1024
    $region41: #{tpu_custom_call.1} parent=1 // pred_fallthru
      _
    // Predicated region
    $region42: #{tpu_custom_call.1} parent=1 // pred_check
      _
    $region43: #{tpu_custom_call.1} parent=1 // pred_check_branch
      %128 = sbr.rel (0) target = $region45
    $region44: #{tpu_custom_call.1} parent=1 // pred_region
      %129 = dma.done [#allocation7], 2048
    $region45: #{tpu_custom_call.1} parent=1 // pred_fallthru
      _
    // Predicated region
    $region46: #{tpu_custom_call.1} parent=1 // pred_check
      _
    $region47: #{tpu_custom_call.1} parent=1 // pred_check_branch
      %131 = sbr.rel (0) target = $region49
    $region48: #{tpu_custom_call.1} parent=1 // pred_region
      %132 = dma.done [#allocation7], 2048
    $region49: #{tpu_custom_call.1} parent=1 // pred_fallthru
      _
    // Predicated region
    $region50: #{tpu_custom_call.1} parent=1 // pred_check
      _
    $region51: #{tpu_custom_call.1} parent=1 // pred_check_branch
      %134 = sbr.rel (0) target = $region53
    $region52: #{tpu_custom_call.1} parent=1 // pred_region
      %135 = dma.done [#allocation10], 2048
    $region53: #{tpu_custom_call.1} parent=1 // pred_fallthru
      _
    // Predicated region
    $region54: #{tpu_custom_call.1} parent=1 // pred_check
      _
    $region55: #{tpu_custom_call.1} parent=1 // pred_check_branch
      %137 = sbr.rel (0) target = $region57
    $region56: #{tpu_custom_call.1} parent=1 // pred_region
      %138 = dma.done [#allocation10], 16
    $region57: #{tpu_custom_call.1} parent=1 // pred_fallthru
      _
    // Predicated region
    $region58: #{tpu_custom_call.1} parent=1 // pred_check
      _
    $region59: #{tpu_custom_call.1} parent=1 // pred_check_branch
      %140 = sbr.rel (0) target = $region61
    $region60: #{tpu_custom_call.1} parent=1 // pred_region
      %141 = dma.done [#allocation13], 2048
    $region61: #{tpu_custom_call.1} parent=1 // pred_fallthru
      _
    // Predicated region
    $region62: #{tpu_custom_call.1} parent=1 // pred_check
      _
    $region63: #{tpu_custom_call.1} parent=1 // pred_check_branch
      %143 = sbr.rel (0) target = $region65
    $region64: #{tpu_custom_call.1} parent=1 // pred_region
      %144 = dma.done [#allocation13], 2048
    $region65: #{tpu_custom_call.1} parent=1 // pred_fallthru
      _
    // Predicated region
    $region66: #{tpu_custom_call.1} parent=1 // pred_check
      _
    $region67: #{tpu_custom_call.1} parent=1 // pred_check_branch
      %146 = sbr.rel (0) target = $region69
    $region68: #{tpu_custom_call.1} parent=1 // pred_region
      %147 = dma.done [#allocation16], 2048
    $region69: #{tpu_custom_call.1} parent=1 // pred_fallthru
      _
    // Predicated region
    $region70: #{tpu_custom_call.1} parent=1 // pred_check
      _
    $region71: #{tpu_custom_call.1} parent=1 // pred_check_branch
      %149 = sbr.rel (0) target = $region73
    $region72: #{tpu_custom_call.1} parent=1 // pred_region
      %150 = dma.done [#allocation16], 16
    $region73: #{tpu_custom_call.1} parent=1 // pred_fallthru
      _
    %p151 = scmp.eq.s32.totalorder 0, 0
    // Predicated region
    $region74: #{tpu_custom_call.1} parent=1 // pred_check
      %p152 = pneg %p151
    $region75: #{tpu_custom_call.1} parent=1 // pred_check_branch
      %154 = sbr.rel (%p152) target = $region77
    $region76: #{tpu_custom_call.1} parent=1 // pred_region
      %v155 = vld [vmem:[#allocation3] sm:$0xff]
      %v156 = vld [vmem:[#allocation3 + $0x8] sm:$0xff]
      %v157 = vld [vmem:[#allocation3 + $0x10] sm:$0xff]
      %v158 = vld [vmem:[#allocation3 + $0x18] sm:$0xff]
      %v159 = vld [vmem:[#allocation3 + $0x20] sm:$0xff]
      %v160 = vld [vmem:[#allocation3 + $0x28] sm:$0xff]
      %v161 = vld [vmem:[#allocation3 + $0x30] sm:$0xff]
      %v162 = vld [vmem:[#allocation3 + $0x38] sm:$0xff]
      %v163 = vld [vmem:[#allocation12] sm:$0xff]
      %v164 = vld [vmem:[#allocation12 + $0x8] sm:$0xff]
      %v165 = vld [vmem:[#allocation12 + $0x10] sm:$0xff]
      %v166 = vld [vmem:[#allocation12 + $0x18] sm:$0xff]
      %v167 = vld [vmem:[#allocation12 + $0x20] sm:$0xff]
      %v168 = vld [vmem:[#allocation12 + $0x28] sm:$0xff]
      %v169 = vld [vmem:[#allocation12 + $0x30] sm:$0xff]
      %v170 = vld [vmem:[#allocation12 + $0x38] sm:$0xff]
      %v171 = vld [vmem:[#allocation12 + $0x40] sm:$0xff]
      %v172 = vld [vmem:[#allocation12 + $0x48] sm:$0xff]
      %v173 = vld [vmem:[#allocation12 + $0x50] sm:$0xff]
      %v174 = vld [vmem:[#allocation12 + $0x58] sm:$0xff]
      %v175 = vld [vmem:[#allocation12 + $0x60] sm:$0xff]
      %v176 = vld [vmem:[#allocation12 + $0x68] sm:$0xff]
      %v177 = vld [vmem:[#allocation12 + $0x70] sm:$0xff]
      %v178 = vld [vmem:[#allocation12 + $0x78] sm:$0xff]
      %179 = vmatprep.subr.mxu0 0.0
      %180 = vmatpush1.msra.mxu0 %v163
      %181 = vmatprep.subr.mxu0 0.0
      %182 = vmatpush1.msra.mxu0 %v164
      %183 = vmatprep.subr.mxu0 0.0
      %184 = vmatpush1.msra.mxu0 %v165
      %185 = vmatprep.subr.mxu0 0.0
      %186 = vmatpush1.msra.mxu0 %v166
      %187 = vmatprep.subr.mxu0 0.0
      %188 = vmatpush1.msra.mxu0 %v167
      %189 = vmatprep.subr.mxu0 0.0
      %190 = vmatpush1.msra.mxu0 %v168
      %191 = vmatprep.subr.mxu0 0.0
      %192 = vmatpush1.msra.mxu0 %v169
      %193 = vmatprep.subr.mxu0 0.0
      %194 = vmatpush1.msra.mxu0 %v170
      %195 = vmatprep.subr.mxu0 0.0
      %196 = vmatpush1.msra.mxu0 %v171
      %197 = vmatprep.subr.mxu0 0.0
      %198 = vmatpush1.msra.mxu0 %v172
      %199 = vmatprep.subr.mxu0 0.0
      %200 = vmatpush1.msra.mxu0 %v173
      %201 = vmatprep.subr.mxu0 0.0
      %202 = vmatpush1.msra.mxu0 %v174
      %203 = vmatprep.subr.mxu0 0.0
      %204 = vmatpush1.msra.mxu0 %v175
      %205 = vmatprep.subr.mxu0 0.0
      %206 = vmatpush1.msra.mxu0 %v176
      %207 = vmatprep.subr.mxu0 0.0
      %208 = vmatpush1.msra.mxu0 %v177
      %209 = vmatprep.subr.mxu0 0.0
      %210 = vmatpush1.msra.mxu0 %v178
      %211 = vmatprep.subr.mxu0 0.0
      %212 = vmatpush1.msra.mxu0 0.0
      %213 = vmatprep.subr.mxu0 0.0
      %214 = vmatpush1.msra.mxu0 0.0
      %215 = vmatprep.subr.mxu0 0.0
      %216 = vmatpush1.msra.mxu0 0.0
      %217 = vmatprep.subr.mxu0 0.0
      %218 = vmatpush1.msra.mxu0 0.0
      %219 = vmatprep.subr.mxu0 0.0
      %220 = vmatpush1.msra.mxu0 0.0
      %221 = vmatprep.subr.mxu0 0.0
      %222 = vmatpush1.msra.mxu0 0.0
      %223 = vmatprep.subr.mxu0 0.0
      %224 = vmatpush1.msra.mxu0 0.0
      %225 = vmatprep.subr.mxu0 0.0
      %226 = vmatpush1.msra.mxu0 0.0
      %227 = vmatprep.subr.mxu0 0.0
      %228 = vmatpush1.msra.mxu0 0.0
      %229 = vmatprep.subr.mxu0 0.0
      %230 = vmatpush1.msra.mxu0 0.0
      %231 = vmatprep.subr.mxu0 0.0
      %232 = vmatpush1.msra.mxu0 0.0
      %233 = vmatprep.subr.mxu0 0.0
      %234 = vmatpush1.msra.mxu0 0.0
      %235 = vmatprep.subr.mxu0 0.0
      %236 = vmatpush1.msra.mxu0 0.0
      %237 = vmatprep.subr.mxu0 0.0
      %238 = vmatpush1.msra.mxu0 0.0
      %239 = vmatprep.subr.mxu0 0.0
      %240 = vmatpush1.msra.mxu0 0.0
      %241 = vmatprep.subr.mxu0 0.0
      %242 = vmatpush1.msra.mxu0 0.0
      %243 = vmatprep.mubr.f32.mxu0 0.0
      %244 = vmatmul.mubr.f32.gmra.mrb[0].mxu0 %v155
      %v245 = vpop.f32.mrb[0].mxu0
      %v246 = vadd.f32 0.0, %v245
      %v247 = vpop.f32.mrb[0].mxu0
      %248 = vmatprep.mubr.f32.mxu0 0.0
      %249 = vmatmul.mubr.f32.gmra.mrb[0].mxu0 %v156
      %v250 = vpop.f32.mrb[0].mxu0
      %v251 = vadd.f32 0.0, %v250
      %v252 = vpop.f32.mrb[0].mxu0
      %253 = vmatprep.mubr.f32.mxu0 0.0
      %254 = vmatmul.mubr.f32.gmra.mrb[0].mxu0 %v157
      %v255 = vpop.f32.mrb[0].mxu0
      %v256 = vadd.f32 0.0, %v255
      %v257 = vpop.f32.mrb[0].mxu0
      %258 = vmatprep.mubr.f32.mxu0 0.0
      %259 = vmatmul.mubr.f32.gmra.mrb[0].mxu0 %v158
      %v260 = vpop.f32.mrb[0].mxu0
      %v261 = vadd.f32 0.0, %v260
      %v262 = vpop.f32.mrb[0].mxu0
      %263 = vmatprep.mubr.f32.mxu0 0.0
      %264 = vmatmul.mubr.f32.gmra.mrb[0].mxu0 %v159
      %v265 = vpop.f32.mrb[0].mxu0
      %v266 = vadd.f32 0.0, %v265
      %v267 = vpop.f32.mrb[0].mxu0
      %268 = vmatprep.mubr.f32.mxu0 0.0
      %269 = vmatmul.mubr.f32.gmra.mrb[0].mxu0 %v160
      %v270 = vpop.f32.mrb[0].mxu0
      %v271 = vadd.f32 0.0, %v270
      %v272 = vpop.f32.mrb[0].mxu0
      %273 = vmatprep.mubr.f32.mxu0 0.0
      %274 = vmatmul.mubr.f32.gmra.mrb[0].mxu0 %v161
      %v275 = vpop.f32.mrb[0].mxu0
      %v276 = vadd.f32 0.0, %v275
      %v277 = vpop.f32.mrb[0].mxu0
      %278 = vmatprep.mubr.f32.mxu0 0.0
      %279 = vmatmul.mubr.f32.gmra.mrb[0].mxu0 %v162
      %v280 = vpop.f32.mrb[0].mxu0
      %v281 = vadd.f32 0.0, %v280
      %v282 = vpop.f32.mrb[0].mxu0
      %283 = vdwg.mxu0
      %284 = vst [vmem:[#allocation2] sm:$0xff] %v246
      %285 = vst [vmem:[#allocation2 + $0x8] sm:$0xff] %v251
      %286 = vst [vmem:[#allocation2 + $0x10] sm:$0xff] %v256
      %287 = vst [vmem:[#allocation2 + $0x18] sm:$0xff] %v261
      %288 = vst [vmem:[#allocation2 + $0x20] sm:$0xff] %v266
      %289 = vst [vmem:[#allocation2 + $0x28] sm:$0xff] %v271
      %290 = vst [vmem:[#allocation2 + $0x30] sm:$0xff] %v276
      %291 = vst [vmem:[#allocation2 + $0x38] sm:$0xff] %v281
      %v292 = vld [vmem:[#allocation14] sm:$0xff]
      %v293 = vld [vmem:[#allocation14 + $0x8] sm:$0xff]
      %v294 = vld [vmem:[#allocation14 + $0x10] sm:$0xff]
      %v295 = vld [vmem:[#allocation14 + $0x18] sm:$0xff]
      %v296 = vld [vmem:[#allocation14 + $0x20] sm:$0xff]
      %v297 = vld [vmem:[#allocation14 + $0x28] sm:$0xff]
      %v298 = vld [vmem:[#allocation14 + $0x30] sm:$0xff]
      %v299 = vld [vmem:[#allocation14 + $0x38] sm:$0xff]
      %v300 = vld [vmem:[#allocation14 + $0x40] sm:$0xff]
      %v301 = vld [vmem:[#allocation14 + $0x48] sm:$0xff]
      %v302 = vld [vmem:[#allocation14 + $0x50] sm:$0xff]
      %v303 = vld [vmem:[#allocation14 + $0x58] sm:$0xff]
      %v304 = vld [vmem:[#allocation14 + $0x60] sm:$0xff]
      %v305 = vld [vmem:[#allocation14 + $0x68] sm:$0xff]
      %v306 = vld [vmem:[#allocation14 + $0x70] sm:$0xff]
      %v307 = vld [vmem:[#allocation14 + $0x78] sm:$0xff]
      %308 = vmatprep.subr.mxu0 0.0
      %309 = vmatpush1.msra.mxu0 %v292
      %310 = vmatprep.subr.mxu0 0.0
      %311 = vmatpush1.msra.mxu0 %v293
      %312 = vmatprep.subr.mxu0 0.0
      %313 = vmatpush1.msra.mxu0 %v294
      %314 = vmatprep.subr.mxu0 0.0
      %315 = vmatpush1.msra.mxu0 %v295
      %316 = vmatprep.subr.mxu0 0.0
      %317 = vmatpush1.msra.mxu0 %v296
      %318 = vmatprep.subr.mxu0 0.0
      %319 = vmatpush1.msra.mxu0 %v297
      %320 = vmatprep.subr.mxu0 0.0
      %321 = vmatpush1.msra.mxu0 %v298
      %322 = vmatprep.subr.mxu0 0.0
      %323 = vmatpush1.msra.mxu0 %v299
      %324 = vmatprep.subr.mxu0 0.0
      %325 = vmatpush1.msra.mxu0 %v300
      %326 = vmatprep.subr.mxu0 0.0
      %327 = vmatpush1.msra.mxu0 %v301
      %328 = vmatprep.subr.mxu0 0.0
      %329 = vmatpush1.msra.mxu0 %v302
      %330 = vmatprep.subr.mxu0 0.0
      %331 = vmatpush1.msra.mxu0 %v303
      %332 = vmatprep.subr.mxu0 0.0
      %333 = vmatpush1.msra.mxu0 %v304
      %334 = vmatprep.subr.mxu0 0.0
      %335 = vmatpush1.msra.mxu0 %v305
      %336 = vmatprep.subr.mxu0 0.0
      %337 = vmatpush1.msra.mxu0 %v306
      %338 = vmatprep.subr.mxu0 0.0
      %339 = vmatpush1.msra.mxu0 %v307
      %340 = vmatprep.subr.mxu0 0.0
      %341 = vmatpush1.msra.mxu0 0.0
      %342 = vmatprep.subr.mxu0 0.0
      %343 = vmatpush1.msra.mxu0 0.0
      %344 = vmatprep.subr.mxu0 0.0
      %345 = vmatpush1.msra.mxu0 0.0
      %346 = vmatprep.subr.mxu0 0.0
      %347 = vmatpush1.msra.mxu0 0.0
      %348 = vmatprep.subr.mxu0 0.0
      %349 = vmatpush1.msra.mxu0 0.0
      %350 = vmatprep.subr.mxu0 0.0
      %351 = vmatpush1.msra.mxu0 0.0
      %352 = vmatprep.subr.mxu0 0.0
      %353 = vmatpush1.msra.mxu0 0.0
      %354 = vmatprep.subr.mxu0 0.0
      %355 = vmatpush1.msra.mxu0 0.0
      %356 = vmatprep.subr.mxu0 0.0
      %357 = vmatpush1.msra.mxu0 0.0
      %358 = vmatprep.subr.mxu0 0.0
      %359 = vmatpush1.msra.mxu0 0.0
      %360 = vmatprep.subr.mxu0 0.0
      %361 = vmatpush1.msra.mxu0 0.0
      %362 = vmatprep.subr.mxu0 0.0
      %363 = vmatpush1.msra.mxu0 0.0
      %364 = vmatprep.subr.mxu0 0.0
      %365 = vmatpush1.msra.mxu0 0.0
      %366 = vmatprep.subr.mxu0 0.0
      %367 = vmatpush1.msra.mxu0 0.0
      %368 = vmatprep.subr.mxu0 0.0
      %369 = vmatpush1.msra.mxu0 0.0
      %370 = vmatprep.subr.mxu0 0.0
      %371 = vmatpush1.msra.mxu0 0.0
      %372 = vmatprep.mubr.f32.mxu0 0.0
      %373 = vmatmul.mubr.f32.gmra.mrb[0].mxu0 %v155
      %v374 = vpop.f32.mrb[0].mxu0
      %v375 = vadd.f32 0.0, %v374
      %v376 = vpop.f32.mrb[0].mxu0
      %377 = vmatprep.mubr.f32.mxu0 0.0
      %378 = vmatmul.mubr.f32.gmra.mrb[0].mxu0 %v156
      %v379 = vpop.f32.mrb[0].mxu0
      %v380 = vadd.f32 0.0, %v379
      %v381 = vpop.f32.mrb[0].mxu0
      %382 = vmatprep.mubr.f32.mxu0 0.0
      %383 = vmatmul.mubr.f32.gmra.mrb[0].mxu0 %v157
      %v384 = vpop.f32.mrb[0].mxu0
      %v385 = vadd.f32 0.0, %v384
      %v386 = vpop.f32.mrb[0].mxu0
      %387 = vmatprep.mubr.f32.mxu0 0.0
      %388 = vmatmul.mubr.f32.gmra.mrb[0].mxu0 %v158
      %v389 = vpop.f32.mrb[0].mxu0
      %v390 = vadd.f32 0.0, %v389
      %v391 = vpop.f32.mrb[0].mxu0
      %392 = vmatprep.mubr.f32.mxu0 0.0
      %393 = vmatmul.mubr.f32.gmra.mrb[0].mxu0 %v159
      %v394 = vpop.f32.mrb[0].mxu0
      %v395 = vadd.f32 0.0, %v394
      %v396 = vpop.f32.mrb[0].mxu0
      %397 = vmatprep.mubr.f32.mxu0 0.0
      %398 = vmatmul.mubr.f32.gmra.mrb[0].mxu0 %v160
      %v399 = vpop.f32.mrb[0].mxu0
      %v400 = vadd.f32 0.0, %v399
      %v401 = vpop.f32.mrb[0].mxu0
      %402 = vmatprep.mubr.f32.mxu0 0.0
      %403 = vmatmul.mubr.f32.gmra.mrb[0].mxu0 %v161
      %v404 = vpop.f32.mrb[0].mxu0
      %v405 = vadd.f32 0.0, %v404
      %v406 = vpop.f32.mrb[0].mxu0
      %407 = vmatprep.mubr.f32.mxu0 0.0
      %408 = vmatmul.mubr.f32.gmra.mrb[0].mxu0 %v162
      %v409 = vpop.f32.mrb[0].mxu0
      %v410 = vadd.f32 0.0, %v409
      %v411 = vpop.f32.mrb[0].mxu0
      %412 = vdwg.mxu0
      %413 = vst [vmem:[#allocation2 + $0x40] sm:$0xff] %v375
      %414 = vst [vmem:[#allocation2 + $0x48] sm:$0xff] %v380
      %415 = vst [vmem:[#allocation2 + $0x50] sm:$0xff] %v385
      %416 = vst [vmem:[#allocation2 + $0x58] sm:$0xff] %v390
      %417 = vst [vmem:[#allocation2 + $0x60] sm:$0xff] %v395
      %418 = vst [vmem:[#allocation2 + $0x68] sm:$0xff] %v400
      %419 = vst [vmem:[#allocation2 + $0x70] sm:$0xff] %v405
      %420 = vst [vmem:[#allocation2 + $0x78] sm:$0xff] %v410
      %421 = vst [vmem:[#allocation18] sm:$0xff] 0.0
      %422 = vst [vmem:[#allocation18 + $0x8] sm:$0xff] 0.0
      %423 = vst [vmem:[#allocation18 + $0x10] sm:$0xff] 0.0
      %424 = vst [vmem:[#allocation18 + $0x18] sm:$0xff] 0.0
      %425 = vst [vmem:[#allocation18 + $0x20] sm:$0xff] 0.0
      %426 = vst [vmem:[#allocation18 + $0x28] sm:$0xff] 0.0
      %427 = vst [vmem:[#allocation18 + $0x30] sm:$0xff] 0.0
      %428 = vst [vmem:[#allocation18 + $0x38] sm:$0xff] 0.0
    $region77: #{tpu_custom_call.1} parent=1 // pred_fallthru
      _
    %v429 = vld [vmem:[#allocation8] sm:$0xff]
    %v430 = vld [vmem:[#allocation8 + $0x8] sm:$0xff]
    %v431 = vld [vmem:[#allocation8 + $0x10] sm:$0xff]
    %v432 = vld [vmem:[#allocation8 + $0x18] sm:$0xff]
    %v433 = vld [vmem:[#allocation8 + $0x20] sm:$0xff]
    %v434 = vld [vmem:[#allocation8 + $0x28] sm:$0xff]
    %v435 = vld [vmem:[#allocation8 + $0x30] sm:$0xff]
    %v436 = vld [vmem:[#allocation8 + $0x38] sm:$0xff]
    %v437 = vld [vmem:[#allocation8 + $0x40] sm:$0xff]
    %v438 = vld [vmem:[#allocation8 + $0x48] sm:$0xff]
    %v439 = vld [vmem:[#allocation8 + $0x50] sm:$0xff]
    %v440 = vld [vmem:[#allocation8 + $0x58] sm:$0xff]
    %v441 = vld [vmem:[#allocation8 + $0x60] sm:$0xff]
    %v442 = vld [vmem:[#allocation8 + $0x68] sm:$0xff]
    %v443 = vld [vmem:[#allocation8 + $0x70] sm:$0xff]
    %v444 = vld [vmem:[#allocation8 + $0x78] sm:$0xff]
    %v445 = vld [vmem:[#allocation9] sm:$0xff]
    %v446 = vld [vmem:[#allocation9 + $0x8] sm:$0xff]
    %v447 = vld [vmem:[#allocation9 + $0x10] sm:$0xff]
    %v448 = vld [vmem:[#allocation9 + $0x18] sm:$0xff]
    %v449 = vld [vmem:[#allocation9 + $0x20] sm:$0xff]
    %v450 = vld [vmem:[#allocation9 + $0x28] sm:$0xff]
    %v451 = vld [vmem:[#allocation9 + $0x30] sm:$0xff]
    %v452 = vld [vmem:[#allocation9 + $0x38] sm:$0xff]
    %v453 = vld [vmem:[#allocation9 + $0x40] sm:$0xff]
    %v454 = vld [vmem:[#allocation9 + $0x48] sm:$0xff]
    %v455 = vld [vmem:[#allocation9 + $0x50] sm:$0xff]
    %v456 = vld [vmem:[#allocation9 + $0x58] sm:$0xff]
    %v457 = vld [vmem:[#allocation9 + $0x60] sm:$0xff]
    %v458 = vld [vmem:[#allocation9 + $0x68] sm:$0xff]
    %v459 = vld [vmem:[#allocation9 + $0x70] sm:$0xff]
    %v460 = vld [vmem:[#allocation9 + $0x78] sm:$0xff]
    %v461 = vlaneseq
    %v462 = vand.u32 %v461, 127
    %463 = vset.pattern.permute.xlu0 0
    %464 = vperm.xlu0 %463, %v445
    %v465 = vpop.permute.xlu0 %464
    %466 = vset.pattern.permute.xlu0 0
    %467 = vperm.xlu0 %466, %v446
    %v468 = vpop.permute.xlu0 %467
    %469 = vset.pattern.permute.xlu0 0
    %470 = vperm.xlu0 %469, %v447
    %v471 = vpop.permute.xlu0 %470
    %472 = vset.pattern.permute.xlu0 0
    %473 = vperm.xlu0 %472, %v448
    %v474 = vpop.permute.xlu0 %473
    %475 = vset.pattern.permute.xlu0 0
    %476 = vperm.xlu0 %475, %v449
    %v477 = vpop.permute.xlu0 %476
    %478 = vset.pattern.permute.xlu0 0
    %479 = vperm.xlu0 %478, %v450
    %v480 = vpop.permute.xlu0 %479
    %481 = vset.pattern.permute.xlu0 0
    %482 = vperm.xlu0 %481, %v451
    %v483 = vpop.permute.xlu0 %482
    %484 = vset.pattern.permute.xlu0 0
    %485 = vperm.xlu0 %484, %v452
    %v486 = vpop.permute.xlu0 %485
    %487 = vset.pattern.permute.xlu0 0
    %488 = vperm.xlu0 %487, %v453
    %v489 = vpop.permute.xlu0 %488
    %490 = vset.pattern.permute.xlu0 0
    %491 = vperm.xlu0 %490, %v454
    %v492 = vpop.permute.xlu0 %491
    %493 = vset.pattern.permute.xlu0 0
    %494 = vperm.xlu0 %493, %v455
    %v495 = vpop.permute.xlu0 %494
    %496 = vset.pattern.permute.xlu0 0
    %497 = vperm.xlu0 %496, %v456
    %v498 = vpop.permute.xlu0 %497
    %499 = vset.pattern.permute.xlu0 0
    %500 = vperm.xlu0 %499, %v457
    %v501 = vpop.permute.xlu0 %500
    %502 = vset.pattern.permute.xlu0 0
    %503 = vperm.xlu0 %502, %v458
    %v504 = vpop.permute.xlu0 %503
    %505 = vset.pattern.permute.xlu0 0
    %506 = vperm.xlu0 %505, %v459
    %v507 = vpop.permute.xlu0 %506
    %508 = vset.pattern.permute.xlu0 0
    %509 = vperm.xlu0 %508, %v460
    %v510 = vpop.permute.xlu0 %509
    %vm511 = vcmp.eq.s32.totalorder %v462, %v465
    %vm512 = vcmp.eq.s32.totalorder %v462, %v468
    %vm513 = vcmp.eq.s32.totalorder %v462, %v471
    %vm514 = vcmp.eq.s32.totalorder %v462, %v474
    %vm515 = vcmp.eq.s32.totalorder %v462, %v477
    %vm516 = vcmp.eq.s32.totalorder %v462, %v480
    %vm517 = vcmp.eq.s32.totalorder %v462, %v483
    %vm518 = vcmp.eq.s32.totalorder %v462, %v486
    %vm519 = vcmp.eq.s32.totalorder %v462, %v489
    %vm520 = vcmp.eq.s32.totalorder %v462, %v492
    %vm521 = vcmp.eq.s32.totalorder %v462, %v495
    %vm522 = vcmp.eq.s32.totalorder %v462, %v498
    %vm523 = vcmp.eq.s32.totalorder %v462, %v501
    %vm524 = vcmp.eq.s32.totalorder %v462, %v504
    %vm525 = vcmp.eq.s32.totalorder %v462, %v507
    %vm526 = vcmp.eq.s32.totalorder %v462, %v510
    %v527 = vadd.s32 %v429, 64
    %v528 = vadd.s32 %v430, 64
    %v529 = vadd.s32 %v431, 64
    %v530 = vadd.s32 %v432, 64
    %v531 = vadd.s32 %v433, 64
    %v532 = vadd.s32 %v434, 64
    %v533 = vadd.s32 %v435, 64
    %v534 = vadd.s32 %v436, 64
    %v535 = vadd.s32 %v437, 64
    %v536 = vadd.s32 %v438, 64
    %v537 = vadd.s32 %v439, 64
    %v538 = vadd.s32 %v440, 64
    %v539 = vadd.s32 %v441, 64
    %v540 = vadd.s32 %v442, 64
    %v541 = vadd.s32 %v443, 64
    %v542 = vadd.s32 %v444, 64
    %543 = vset.pattern.permute.xlu0 0
    %544 = vperm.xlu0 %543, %v527
    %v545 = vpop.permute.xlu0 %544
    %546 = vset.pattern.permute.xlu0 0
    %547 = vperm.xlu0 %546, %v528
    %v548 = vpop.permute.xlu0 %547
    %549 = vset.pattern.permute.xlu0 0
    %550 = vperm.xlu0 %549, %v529
    %v551 = vpop.permute.xlu0 %550
    %552 = vset.pattern.permute.xlu0 0
    %553 = vperm.xlu0 %552, %v530
    %v554 = vpop.permute.xlu0 %553
    %555 = vset.pattern.permute.xlu0 0
    %556 = vperm.xlu0 %555, %v531
    %v557 = vpop.permute.xlu0 %556
    %558 = vset.pattern.permute.xlu0 0
    %559 = vperm.xlu0 %558, %v532
    %v560 = vpop.permute.xlu0 %559
    %561 = vset.pattern.permute.xlu0 0
    %562 = vperm.xlu0 %561, %v533
    %v563 = vpop.permute.xlu0 %562
    %564 = vset.pattern.permute.xlu0 0
    %565 = vperm.xlu0 %564, %v534
    %v566 = vpop.permute.xlu0 %565
    %567 = vset.pattern.permute.xlu0 0
    %568 = vperm.xlu0 %567, %v535
    %v569 = vpop.permute.xlu0 %568
    %570 = vset.pattern.permute.xlu0 0
    %571 = vperm.xlu0 %570, %v536
    %v572 = vpop.permute.xlu0 %571
    %573 = vset.pattern.permute.xlu0 0
    %574 = vperm.xlu0 %573, %v537
    %v575 = vpop.permute.xlu0 %574
    %576 = vset.pattern.permute.xlu0 0
    %577 = vperm.xlu0 %576, %v538
    %v578 = vpop.permute.xlu0 %577
    %579 = vset.pattern.permute.xlu0 0
    %580 = vperm.xlu0 %579, %v539
    %v581 = vpop.permute.xlu0 %580
    %582 = vset.pattern.permute.xlu0 0
    %583 = vperm.xlu0 %582, %v540
    %v584 = vpop.permute.xlu0 %583
    %585 = vset.pattern.permute.xlu0 0
    %586 = vperm.xlu0 %585, %v541
    %v587 = vpop.permute.xlu0 %586
    %588 = vset.pattern.permute.xlu0 0
    %589 = vperm.xlu0 %588, %v542
    %v590 = vpop.permute.xlu0 %589
    %vm591 = vcmp.eq.s32.totalorder %v462, %v545
    %vm592 = vcmp.eq.s32.totalorder %v462, %v548
    %vm593 = vcmp.eq.s32.totalorder %v462, %v551
    %vm594 = vcmp.eq.s32.totalorder %v462, %v554
    %vm595 = vcmp.eq.s32.totalorder %v462, %v557
    %vm596 = vcmp.eq.s32.totalorder %v462, %v560
    %vm597 = vcmp.eq.s32.totalorder %v462, %v563
    %vm598 = vcmp.eq.s32.totalorder %v462, %v566
    %vm599 = vcmp.eq.s32.totalorder %v462, %v569
    %vm600 = vcmp.eq.s32.totalorder %v462, %v572
    %vm601 = vcmp.eq.s32.totalorder %v462, %v575
    %vm602 = vcmp.eq.s32.totalorder %v462, %v578
    %vm603 = vcmp.eq.s32.totalorder %v462, %v581
    %vm604 = vcmp.eq.s32.totalorder %v462, %v584
    %vm605 = vcmp.eq.s32.totalorder %v462, %v587
    %vm606 = vcmp.eq.s32.totalorder %v462, %v590
    %vm607 = vmor %vm511, %vm591
    %vm608 = vmor %vm512, %vm592
    %vm609 = vmor %vm513, %vm593
    %vm610 = vmor %vm514, %vm594
    %vm611 = vmor %vm515, %vm595
    %vm612 = vmor %vm516, %vm596
    %vm613 = vmor %vm517, %vm597
    %vm614 = vmor %vm518, %vm598
    %vm615 = vmor %vm519, %vm599
    %vm616 = vmor %vm520, %vm600
    %vm617 = vmor %vm521, %vm601
    %vm618 = vmor %vm522, %vm602
    %vm619 = vmor %vm523, %vm603
    %vm620 = vmor %vm524, %vm604
    %vm621 = vmor %vm525, %vm605
    %vm622 = vmor %vm526, %vm606
    %v623 = vsel %vm607, 1, 0
    %v624 = vsel %vm608, 1, 0
    %v625 = vsel %vm609, 1, 0
    %v626 = vsel %vm610, 1, 0
    %v627 = vsel %vm611, 1, 0
    %v628 = vsel %vm612, 1, 0
    %v629 = vsel %vm613, 1, 0
    %v630 = vsel %vm614, 1, 0
    %v631 = vsel %vm615, 1, 0
    %v632 = vsel %vm616, 1, 0
    %v633 = vsel %vm617, 1, 0
    %v634 = vsel %vm618, 1, 0
    %v635 = vsel %vm619, 1, 0
    %v636 = vsel %vm620, 1, 0
    %v637 = vsel %vm621, 1, 0
    %v638 = vsel %vm622, 1, 0
    %v639 = vcvt.s32.f32 %v623
    %v640 = vcvt.s32.f32 %v624
    %v641 = vcvt.s32.f32 %v625
    %v642 = vcvt.s32.f32 %v626
    %v643 = vcvt.s32.f32 %v627
    %v644 = vcvt.s32.f32 %v628
    %v645 = vcvt.s32.f32 %v629
    %v646 = vcvt.s32.f32 %v630
    %v647 = vcvt.s32.f32 %v631
    %v648 = vcvt.s32.f32 %v632
    %v649 = vcvt.s32.f32 %v633
    %v650 = vcvt.s32.f32 %v634
    %v651 = vcvt.s32.f32 %v635
    %v652 = vcvt.s32.f32 %v636
    %v653 = vcvt.s32.f32 %v637
    %v654 = vcvt.s32.f32 %v638
    %v655 = vld [vmem:[#allocation2] sm:$0xff]
    %v656 = vld [vmem:[#allocation2 + $0x8] sm:$0xff]
    %v657 = vld [vmem:[#allocation2 + $0x10] sm:$0xff]
    %v658 = vld [vmem:[#allocation2 + $0x18] sm:$0xff]
    %v659 = vld [vmem:[#allocation2 + $0x20] sm:$0xff]
    %v660 = vld [vmem:[#allocation2 + $0x28] sm:$0xff]
    %v661 = vld [vmem:[#allocation2 + $0x30] sm:$0xff]
    %v662 = vld [vmem:[#allocation2 + $0x38] sm:$0xff]
    %v663 = vld [vmem:[#allocation2 + $0x40] sm:$0xff]
    %v664 = vld [vmem:[#allocation2 + $0x48] sm:$0xff]
    %v665 = vld [vmem:[#allocation2 + $0x50] sm:$0xff]
    %v666 = vld [vmem:[#allocation2 + $0x58] sm:$0xff]
    %v667 = vld [vmem:[#allocation2 + $0x60] sm:$0xff]
    %v668 = vld [vmem:[#allocation2 + $0x68] sm:$0xff]
    %v669 = vld [vmem:[#allocation2 + $0x70] sm:$0xff]
    %v670 = vld [vmem:[#allocation2 + $0x78] sm:$0xff]
    %v671 = vld [vmem:[#allocation6] sm:$0xff]
    %v672 = vld [vmem:[#allocation6 + $0x8] sm:$0xff]
    %v673 = vld [vmem:[#allocation6 + $0x10] sm:$0xff]
    %v674 = vld [vmem:[#allocation6 + $0x18] sm:$0xff]
    %v675 = vld [vmem:[#allocation6 + $0x20] sm:$0xff]
    %v676 = vld [vmem:[#allocation6 + $0x28] sm:$0xff]
    %v677 = vld [vmem:[#allocation6 + $0x30] sm:$0xff]
    %v678 = vld [vmem:[#allocation6 + $0x38] sm:$0xff]
    %v679 = vld [vmem:[#allocation6 + $0x40] sm:$0xff]
    %v680 = vld [vmem:[#allocation6 + $0x48] sm:$0xff]
    %v681 = vld [vmem:[#allocation6 + $0x50] sm:$0xff]
    %v682 = vld [vmem:[#allocation6 + $0x58] sm:$0xff]
    %v683 = vld [vmem:[#allocation6 + $0x60] sm:$0xff]
    %v684 = vld [vmem:[#allocation6 + $0x68] sm:$0xff]
    %v685 = vld [vmem:[#allocation6 + $0x70] sm:$0xff]
    %v686 = vld [vmem:[#allocation6 + $0x78] sm:$0xff]
    %v687 = vld [vmem:[#allocation15] sm:$0xff]
    %v688 = vld [vmem:[#allocation15 + $0x8] sm:$0xff]
    %v689 = vld [vmem:[#allocation15 + $0x10] sm:$0xff]
    %v690 = vld [vmem:[#allocation15 + $0x18] sm:$0xff]
    %v691 = vld [vmem:[#allocation15 + $0x20] sm:$0xff]
    %v692 = vld [vmem:[#allocation15 + $0x28] sm:$0xff]
    %v693 = vld [vmem:[#allocation15 + $0x30] sm:$0xff]
    %v694 = vld [vmem:[#allocation15 + $0x38] sm:$0xff]
    %v695 = vld [vmem:[#allocation15 + $0x40] sm:$0xff]
    %v696 = vld [vmem:[#allocation15 + $0x48] sm:$0xff]
    %v697 = vld [vmem:[#allocation15 + $0x50] sm:$0xff]
    %v698 = vld [vmem:[#allocation15 + $0x58] sm:$0xff]
    %v699 = vld [vmem:[#allocation15 + $0x60] sm:$0xff]
    %v700 = vld [vmem:[#allocation15 + $0x68] sm:$0xff]
    %v701 = vld [vmem:[#allocation15 + $0x70] sm:$0xff]
    %v702 = vld [vmem:[#allocation15 + $0x78] sm:$0xff]
    %703 = vmatprep.subr.mxu0 0.0
    %704 = vmatpush1.msra.mxu0 %v687
    %705 = vmatprep.subr.mxu0 0.0
    %706 = vmatpush1.msra.mxu0 %v688
    %707 = vmatprep.subr.mxu0 0.0
    %708 = vmatpush1.msra.mxu0 %v689
    %709 = vmatprep.subr.mxu0 0.0
    %710 = vmatpush1.msra.mxu0 %v690
    %711 = vmatprep.subr.mxu0 0.0
    %712 = vmatpush1.msra.mxu0 %v691
    %713 = vmatprep.subr.mxu0 0.0
    %714 = vmatpush1.msra.mxu0 %v692
    %715 = vmatprep.subr.mxu0 0.0
    %716 = vmatpush1.msra.mxu0 %v693
    %717 = vmatprep.subr.mxu0 0.0
    %718 = vmatpush1.msra.mxu0 %v694
    %719 = vmatprep.subr.mxu0 0.0
    %720 = vmatpush1.msra.mxu0 %v695
    %721 = vmatprep.subr.mxu0 0.0
    %722 = vmatpush1.msra.mxu0 %v696
    %723 = vmatprep.subr.mxu0 0.0
    %724 = vmatpush1.msra.mxu0 %v697
    %725 = vmatprep.subr.mxu0 0.0
    %726 = vmatpush1.msra.mxu0 %v698
    %727 = vmatprep.subr.mxu0 0.0
    %728 = vmatpush1.msra.mxu0 %v699
    %729 = vmatprep.subr.mxu0 0.0
    %730 = vmatpush1.msra.mxu0 %v700
    %731 = vmatprep.subr.mxu0 0.0
    %732 = vmatpush1.msra.mxu0 %v701
    %733 = vmatprep.subr.mxu0 0.0
    %734 = vmatpush1.msra.mxu0 %v702
    %735 = vmatprep.subr.mxu0 0.0
    %736 = vmatpush1.msra.mxu0 0.0
    %737 = vmatprep.subr.mxu0 0.0
    %738 = vmatpush1.msra.mxu0 0.0
    %739 = vmatprep.subr.mxu0 0.0
    %740 = vmatpush1.msra.mxu0 0.0
    %741 = vmatprep.subr.mxu0 0.0
    %742 = vmatpush1.msra.mxu0 0.0
    %743 = vmatprep.subr.mxu0 0.0
    %744 = vmatpush1.msra.mxu0 0.0
    %745 = vmatprep.subr.mxu0 0.0
    %746 = vmatpush1.msra.mxu0 0.0
    %747 = vmatprep.subr.mxu0 0.0
    %748 = vmatpush1.msra.mxu0 0.0
    %749 = vmatprep.subr.mxu0 0.0
    %750 = vmatpush1.msra.mxu0 0.0
    %751 = vmatprep.subr.mxu0 0.0
    %752 = vmatpush1.msra.mxu0 0.0
    %753 = vmatprep.subr.mxu0 0.0
    %754 = vmatpush1.msra.mxu0 0.0
    %755 = vmatprep.subr.mxu0 0.0
    %756 = vmatpush1.msra.mxu0 0.0
    %757 = vmatprep.subr.mxu0 0.0
    %758 = vmatpush1.msra.mxu0 0.0
    %759 = vmatprep.subr.mxu0 0.0
    %760 = vmatpush1.msra.mxu0 0.0
    %761 = vmatprep.subr.mxu0 0.0
    %762 = vmatpush1.msra.mxu0 0.0
    %763 = vmatprep.subr.mxu0 0.0
    %764 = vmatpush1.msra.mxu0 0.0
    %765 = vmatprep.subr.mxu0 0.0
    %766 = vmatpush1.msra.mxu0 0.0
    %767 = vmatprep.mubr.f32.mxu0 0.0
    %768 = vmatmul.mubr.f32.gmra.mrb[0].mxu0 %v671
    %v769 = vpop.f32.mrb[0].mxu0
    %v770 = vadd.f32 0.0, %v769
    %v771 = vpop.f32.mrb[0].mxu0
    %772 = vmatprep.mubr.f32.mxu0 0.0
    %773 = vmatmul.mubr.f32.gmra.mrb[0].mxu0 %v672
    %v774 = vpop.f32.mrb[0].mxu0
    %v775 = vadd.f32 0.0, %v774
    %v776 = vpop.f32.mrb[0].mxu0
    %777 = vmatprep.mubr.f32.mxu0 0.0
    %778 = vmatmul.mubr.f32.gmra.mrb[0].mxu0 %v673
    %v779 = vpop.f32.mrb[0].mxu0
    %v780 = vadd.f32 0.0, %v779
    %v781 = vpop.f32.mrb[0].mxu0
    %782 = vmatprep.mubr.f32.mxu0 0.0
    %783 = vmatmul.mubr.f32.gmra.mrb[0].mxu0 %v674
    %v784 = vpop.f32.mrb[0].mxu0
    %v785 = vadd.f32 0.0, %v784
    %v786 = vpop.f32.mrb[0].mxu0
    %787 = vmatprep.mubr.f32.mxu0 0.0
    %788 = vmatmul.mubr.f32.gmra.mrb[0].mxu0 %v675
    %v789 = vpop.f32.mrb[0].mxu0
    %v790 = vadd.f32 0.0, %v789
    %v791 = vpop.f32.mrb[0].mxu0
    %792 = vmatprep.mubr.f32.mxu0 0.0
    %793 = vmatmul.mubr.f32.gmra.mrb[0].mxu0 %v676
    %v794 = vpop.f32.mrb[0].mxu0
    %v795 = vadd.f32 0.0, %v794
    %v796 = vpop.f32.mrb[0].mxu0
    %797 = vmatprep.mubr.f32.mxu0 0.0
    %798 = vmatmul.mubr.f32.gmra.mrb[0].mxu0 %v677
    %v799 = vpop.f32.mrb[0].mxu0
    %v800 = vadd.f32 0.0, %v799
    %v801 = vpop.f32.mrb[0].mxu0
    %802 = vmatprep.mubr.f32.mxu0 0.0
    %803 = vmatmul.mubr.f32.gmra.mrb[0].mxu0 %v678
    %v804 = vpop.f32.mrb[0].mxu0
    %v805 = vadd.f32 0.0, %v804
    %v806 = vpop.f32.mrb[0].mxu0
    %807 = vmatprep.mubr.f32.mxu0 0.0
    %808 = vmatmul.mubr.f32.gmra.mrb[0].mxu0 %v679
    %v809 = vpop.f32.mrb[0].mxu0
    %v810 = vadd.f32 0.0, %v809
    %v811 = vpop.f32.mrb[0].mxu0
    %812 = vmatprep.mubr.f32.mxu0 0.0
    %813 = vmatmul.mubr.f32.gmra.mrb[0].mxu0 %v680
    %v814 = vpop.f32.mrb[0].mxu0
    %v815 = vadd.f32 0.0, %v814
    %v816 = vpop.f32.mrb[0].mxu0
    %817 = vmatprep.mubr.f32.mxu0 0.0
    %818 = vmatmul.mubr.f32.gmra.mrb[0].mxu0 %v681
    %v819 = vpop.f32.mrb[0].mxu0
    %v820 = vadd.f32 0.0, %v819
    %v821 = vpop.f32.mrb[0].mxu0
    %822 = vmatprep.mubr.f32.mxu0 0.0
    %823 = vmatmul.mubr.f32.gmra.mrb[0].mxu0 %v682
    %v824 = vpop.f32.mrb[0].mxu0
    %v825 = vadd.f32 0.0, %v824
    %v826 = vpop.f32.mrb[0].mxu0
    %827 = vmatprep.mubr.f32.mxu0 0.0
    %828 = vmatmul.mubr.f32.gmra.mrb[0].mxu0 %v683
    %v829 = vpop.f32.mrb[0].mxu0
    %v830 = vadd.f32 0.0, %v829
    %v831 = vpop.f32.mrb[0].mxu0
    %832 = vmatprep.mubr.f32.mxu0 0.0
    %833 = vmatmul.mubr.f32.gmra.mrb[0].mxu0 %v684
    %v834 = vpop.f32.mrb[0].mxu0
    %v835 = vadd.f32 0.0, %v834
    %v836 = vpop.f32.mrb[0].mxu0
    %837 = vmatprep.mubr.f32.mxu0 0.0
    %838 = vmatmul.mubr.f32.gmra.mrb[0].mxu0 %v685
    %v839 = vpop.f32.mrb[0].mxu0
    %v840 = vadd.f32 0.0, %v839
    %v841 = vpop.f32.mrb[0].mxu0
    %842 = vmatprep.mubr.f32.mxu0 0.0
    %843 = vmatmul.mubr.f32.gmra.mrb[0].mxu0 %v686
    %v844 = vpop.f32.mrb[0].mxu0
    %v845 = vadd.f32 0.0, %v844
    %v846 = vpop.f32.mrb[0].mxu0
    %847 = vdwg.mxu0
    %848 = vmatprep.subr.mxu0 0.0
    %849 = vmatpush1.msra.mxu0 %v655
    %850 = vmatprep.subr.mxu0 0.0
    %851 = vmatpush1.msra.mxu0 %v656
    %852 = vmatprep.subr.mxu0 0.0
    %853 = vmatpush1.msra.mxu0 %v657
    %854 = vmatprep.subr.mxu0 0.0
    %855 = vmatpush1.msra.mxu0 %v658
    %856 = vmatprep.subr.mxu0 0.0
    %857 = vmatpush1.msra.mxu0 %v659
    %858 = vmatprep.subr.mxu0 0.0
    %859 = vmatpush1.msra.mxu0 %v660
    %860 = vmatprep.subr.mxu0 0.0
    %861 = vmatpush1.msra.mxu0 %v661
    %862 = vmatprep.subr.mxu0 0.0
    %863 = vmatpush1.msra.mxu0 %v662
    %864 = vmatprep.subr.mxu0 0.0
    %865 = vmatpush1.msra.mxu0 %v663
    %866 = vmatprep.subr.mxu0 0.0
    %867 = vmatpush1.msra.mxu0 %v664
    %868 = vmatprep.subr.mxu0 0.0
    %869 = vmatpush1.msra.mxu0 %v665
    %870 = vmatprep.subr.mxu0 0.0
    %871 = vmatpush1.msra.mxu0 %v666
    %872 = vmatprep.subr.mxu0 0.0
    %873 = vmatpush1.msra.mxu0 %v667
    %874 = vmatprep.subr.mxu0 0.0
    %875 = vmatpush1.msra.mxu0 %v668
    %876 = vmatprep.subr.mxu0 0.0
    %877 = vmatpush1.msra.mxu0 %v669
    %878 = vmatprep.subr.mxu0 0.0
    %879 = vmatpush1.msra.mxu0 %v670
    %880 = vmatprep.subr.mxu0 0.0
    %881 = vmatpush1.msra.mxu0 0.0
    %882 = vmatprep.subr.mxu0 0.0
    %883 = vmatpush1.msra.mxu0 0.0
    %884 = vmatprep.subr.mxu0 0.0
    %885 = vmatpush1.msra.mxu0 0.0
    %886 = vmatprep.subr.mxu0 0.0
    %887 = vmatpush1.msra.mxu0 0.0
    %888 = vmatprep.subr.mxu0 0.0
    %889 = vmatpush1.msra.mxu0 0.0
    %890 = vmatprep.subr.mxu0 0.0
    %891 = vmatpush1.msra.mxu0 0.0
    %892 = vmatprep.subr.mxu0 0.0
    %893 = vmatpush1.msra.mxu0 0.0
    %894 = vmatprep.subr.mxu0 0.0
    %895 = vmatpush1.msra.mxu0 0.0
    %896 = vmatprep.subr.mxu0 0.0
    %897 = vmatpush1.msra.mxu0 0.0
    %898 = vmatprep.subr.mxu0 0.0
    %899 = vmatpush1.msra.mxu0 0.0
    %900 = vmatprep.subr.mxu0 0.0
    %901 = vmatpush1.msra.mxu0 0.0
    %902 = vmatprep.subr.mxu0 0.0
    %903 = vmatpush1.msra.mxu0 0.0
    %904 = vmatprep.subr.mxu0 0.0
    %905 = vmatpush1.msra.mxu0 0.0
    %906 = vmatprep.subr.mxu0 0.0
    %907 = vmatpush1.msra.mxu0 0.0
    %908 = vmatprep.subr.mxu0 0.0
    %909 = vmatpush1.msra.mxu0 0.0
    %910 = vmatprep.subr.mxu0 0.0
    %911 = vmatpush1.msra.mxu0 0.0
    %912 = vmatprep.mubr.f32.mxu0 0.0
    %913 = vmatmul.mubr.f32.gmra.mrb[0].mxu0 %v639
    %v914 = vpop.f32.mrb[0].mxu0
    %v915 = vadd.f32 %v770, %v914
    %v916 = vpop.f32.mrb[0].mxu0
    %917 = vmatprep.mubr.f32.mxu0 0.0
    %918 = vmatmul.mubr.f32.gmra.mrb[0].mxu0 %v640
    %v919 = vpop.f32.mrb[0].mxu0
    %v920 = vadd.f32 %v775, %v919
    %v921 = vpop.f32.mrb[0].mxu0
    %922 = vmatprep.mubr.f32.mxu0 0.0
    %923 = vmatmul.mubr.f32.gmra.mrb[0].mxu0 %v641
    %v924 = vpop.f32.mrb[0].mxu0
    %v925 = vadd.f32 %v780, %v924
    %v926 = vpop.f32.mrb[0].mxu0
    %927 = vmatprep.mubr.f32.mxu0 0.0
    %928 = vmatmul.mubr.f32.gmra.mrb[0].mxu0 %v642
    %v929 = vpop.f32.mrb[0].mxu0
    %v930 = vadd.f32 %v785, %v929
    %v931 = vpop.f32.mrb[0].mxu0
    %932 = vmatprep.mubr.f32.mxu0 0.0
    %933 = vmatmul.mubr.f32.gmra.mrb[0].mxu0 %v643
    %v934 = vpop.f32.mrb[0].mxu0
    %v935 = vadd.f32 %v790, %v934
    %v936 = vpop.f32.mrb[0].mxu0
    %937 = vmatprep.mubr.f32.mxu0 0.0
    %938 = vmatmul.mubr.f32.gmra.mrb[0].mxu0 %v644
    %v939 = vpop.f32.mrb[0].mxu0
    %v940 = vadd.f32 %v795, %v939
    %v941 = vpop.f32.mrb[0].mxu0
    %942 = vmatprep.mubr.f32.mxu0 0.0
    %943 = vmatmul.mubr.f32.gmra.mrb[0].mxu0 %v645
    %v944 = vpop.f32.mrb[0].mxu0
    %v945 = vadd.f32 %v800, %v944
    %v946 = vpop.f32.mrb[0].mxu0
    %947 = vmatprep.mubr.f32.mxu0 0.0
    %948 = vmatmul.mubr.f32.gmra.mrb[0].mxu0 %v646
    %v949 = vpop.f32.mrb[0].mxu0
    %v950 = vadd.f32 %v805, %v949
    %v951 = vpop.f32.mrb[0].mxu0
    %952 = vmatprep.mubr.f32.mxu0 0.0
    %953 = vmatmul.mubr.f32.gmra.mrb[0].mxu0 %v647
    %v954 = vpop.f32.mrb[0].mxu0
    %v955 = vadd.f32 %v810, %v954
    %v956 = vpop.f32.mrb[0].mxu0
    %957 = vmatprep.mubr.f32.mxu0 0.0
    %958 = vmatmul.mubr.f32.gmra.mrb[0].mxu0 %v648
    %v959 = vpop.f32.mrb[0].mxu0
    %v960 = vadd.f32 %v815, %v959
    %v961 = vpop.f32.mrb[0].mxu0
    %962 = vmatprep.mubr.f32.mxu0 0.0
    %963 = vmatmul.mubr.f32.gmra.mrb[0].mxu0 %v649
    %v964 = vpop.f32.mrb[0].mxu0
    %v965 = vadd.f32 %v820, %v964
    %v966 = vpop.f32.mrb[0].mxu0
    %967 = vmatprep.mubr.f32.mxu0 0.0
    %968 = vmatmul.mubr.f32.gmra.mrb[0].mxu0 %v650
    %v969 = vpop.f32.mrb[0].mxu0
    %v970 = vadd.f32 %v825, %v969
    %v971 = vpop.f32.mrb[0].mxu0
    %972 = vmatprep.mubr.f32.mxu0 0.0
    %973 = vmatmul.mubr.f32.gmra.mrb[0].mxu0 %v651
    %v974 = vpop.f32.mrb[0].mxu0
    %v975 = vadd.f32 %v830, %v974
    %v976 = vpop.f32.mrb[0].mxu0
    %977 = vmatprep.mubr.f32.mxu0 0.0
    %978 = vmatmul.mubr.f32.gmra.mrb[0].mxu0 %v652
    %v979 = vpop.f32.mrb[0].mxu0
    %v980 = vadd.f32 %v835, %v979
    %v981 = vpop.f32.mrb[0].mxu0
    %982 = vmatprep.mubr.f32.mxu0 0.0
    %983 = vmatmul.mubr.f32.gmra.mrb[0].mxu0 %v653
    %v984 = vpop.f32.mrb[0].mxu0
    %v985 = vadd.f32 %v840, %v984
    %v986 = vpop.f32.mrb[0].mxu0
    %987 = vmatprep.mubr.f32.mxu0 0.0
    %988 = vmatmul.mubr.f32.gmra.mrb[0].mxu0 %v654
    %v989 = vpop.f32.mrb[0].mxu0
    %v990 = vadd.f32 %v845, %v989
    %v991 = vpop.f32.mrb[0].mxu0
    %992 = vdwg.mxu0
    %v993 = vld [vmem:[#allocation17] sm:$0x1]
    %v995 = vlaneseq
    %v996 = vshrl.u32 %v995, 7
    %v997 = vsub.s32 0, %v996
    %v998 = vrot.slane %v993, %v997
    %v1000 = vadd.f32 %v915, %v998
    %v1001 = vadd.f32 %v920, %v998
    %v1002 = vadd.f32 %v925, %v998
    %v1003 = vadd.f32 %v930, %v998
    %v1004 = vadd.f32 %v935, %v998
    %v1005 = vadd.f32 %v940, %v998
    %v1006 = vadd.f32 %v945, %v998
    %v1007 = vadd.f32 %v950, %v998
    %v1008 = vadd.f32 %v955, %v998
    %v1009 = vadd.f32 %v960, %v998
    %v1010 = vadd.f32 %v965, %v998
    %v1011 = vadd.f32 %v970, %v998
    %v1012 = vadd.f32 %v975, %v998
    %v1013 = vadd.f32 %v980, %v998
    %v1014 = vadd.f32 %v985, %v998
    %v1015 = vadd.f32 %v990, %v998
    %v1016 = vmax.f32 %v1000, 0.0
    %v1017 = vmax.f32 %v1001, 0.0
    %v1018 = vmax.f32 %v1002, 0.0
    %v1019 = vmax.f32 %v1003, 0.0
    %v1020 = vmax.f32 %v1004, 0.0
    %v1021 = vmax.f32 %v1005, 0.0
    %v1022 = vmax.f32 %v1006, 0.0
    %v1023 = vmax.f32 %v1007, 0.0
    %v1024 = vmax.f32 %v1008, 0.0
    %v1025 = vmax.f32 %v1009, 0.0
    %v1026 = vmax.f32 %v1010, 0.0
    %v1027 = vmax.f32 %v1011, 0.0
    %v1028 = vmax.f32 %v1012, 0.0
    %v1029 = vmax.f32 %v1013, 0.0
    %v1030 = vmax.f32 %v1014, 0.0
    %v1031 = vmax.f32 %v1015, 0.0
    %v1032 = vlaneseq
    %v1033 = vshrl.u32 %v1032, 7
    %v1034 = vadd.s32 %v1033, 8
    %v1035 = vadd.s32 %v1033, 16
    %v1036 = vadd.s32 %v1033, 24
    %v1037 = vadd.s32 %v1033, 32
    %v1038 = vadd.s32 %v1033, 40
    %v1039 = vadd.s32 %v1033, 48
    %v1040 = vadd.s32 %v1033, 56
    %v1041 = vld [vmem:[#allocation11] sm:$0x1]
    %v1042 = vlaneseq
    %v1043 = vshrl.u32 %v1042, 7
    %v1044 = vsub.s32 0, %v1043
    %v1045 = vrot.slane %v1041, %v1044
    %vm1046 = vcmp.eq.s32.totalorder %v1033, %v1045
    %vm1047 = vcmp.eq.s32.totalorder %v1034, %v1045
    %vm1048 = vcmp.eq.s32.totalorder %v1035, %v1045
    %vm1049 = vcmp.eq.s32.totalorder %v1036, %v1045
    %vm1050 = vcmp.eq.s32.totalorder %v1037, %v1045
    %vm1051 = vcmp.eq.s32.totalorder %v1038, %v1045
    %vm1052 = vcmp.eq.s32.totalorder %v1039, %v1045
    %vm1053 = vcmp.eq.s32.totalorder %v1040, %v1045
    %v1054 = vsel %vm1046, 1, 0
    %v1055 = vsel %vm1047, 1, 0
    %v1056 = vsel %vm1048, 1, 0
    %v1057 = vsel %vm1049, 1, 0
    %v1058 = vsel %vm1050, 1, 0
    %v1059 = vsel %vm1051, 1, 0
    %v1060 = vsel %vm1052, 1, 0
    %v1061 = vsel %vm1053, 1, 0
    %v1062 = vcvt.s32.f32 %v1054
    %v1063 = vcvt.s32.f32 %v1055
    %v1064 = vcvt.s32.f32 %v1056
    %v1065 = vcvt.s32.f32 %v1057
    %v1066 = vcvt.s32.f32 %v1058
    %v1067 = vcvt.s32.f32 %v1059
    %v1068 = vcvt.s32.f32 %v1060
    %v1069 = vcvt.s32.f32 %v1061
    %v1070 = vlaneseq
    %v1071 = vshrl.u32 %v1070, 7
    %v1072 = vsub.s32 0, %v1071
    %v1073 = vrot.slane %v1062, %v1072
    %1075 = vbcast.lane.b32.xlu0 %v1073, 256
    %v1076 = vpop.permute.xlu0 %1075
    %s1078 = sor.u32 256, 8
    %1079 = vbcast.lane.b32.xlu0 %v1073, %s1078
    %v1080 = vpop.permute.xlu0 %1079
    %s1082 = sor.u32 256, 16
    %1083 = vbcast.lane.b32.xlu0 %v1073, %s1082
    %v1084 = vpop.permute.xlu0 %1083
    %s1086 = sor.u32 256, 24
    %1087 = vbcast.lane.b32.xlu0 %v1073, %s1086
    %v1088 = vpop.permute.xlu0 %1087
    %s1090 = sor.u32 256, 32
    %1091 = vbcast.lane.b32.xlu0 %v1073, %s1090
    %v1092 = vpop.permute.xlu0 %1091
    %s1094 = sor.u32 256, 40
    %1095 = vbcast.lane.b32.xlu0 %v1073, %s1094
    %v1096 = vpop.permute.xlu0 %1095
    %s1098 = sor.u32 256, 48
    %1099 = vbcast.lane.b32.xlu0 %v1073, %s1098
    %v1100 = vpop.permute.xlu0 %1099
    %s1102 = sor.u32 256, 56
    %1103 = vbcast.lane.b32.xlu0 %v1073, %s1102
    %v1104 = vpop.permute.xlu0 %1103
    %s1106 = sor.u32 256, 64
    %1107 = vbcast.lane.b32.xlu0 %v1073, %s1106
    %v1108 = vpop.permute.xlu0 %1107
    %s1110 = sor.u32 256, 72
    %1111 = vbcast.lane.b32.xlu0 %v1073, %s1110
    %v1112 = vpop.permute.xlu0 %1111
    %s1114 = sor.u32 256, 80
    %1115 = vbcast.lane.b32.xlu0 %v1073, %s1114
    %v1116 = vpop.permute.xlu0 %1115
    %s1118 = sor.u32 256, 88
    %1119 = vbcast.lane.b32.xlu0 %v1073, %s1118
    %v1120 = vpop.permute.xlu0 %1119
    %s1122 = sor.u32 256, 96
    %1123 = vbcast.lane.b32.xlu0 %v1073, %s1122
    %v1124 = vpop.permute.xlu0 %1123
    %s1126 = sor.u32 256, 104
    %1127 = vbcast.lane.b32.xlu0 %v1073, %s1126
    %v1128 = vpop.permute.xlu0 %1127
    %s1130 = sor.u32 256, 112
    %1131 = vbcast.lane.b32.xlu0 %v1073, %s1130
    %v1132 = vpop.permute.xlu0 %1131
    %s1134 = sor.u32 256, 120
    %1135 = vbcast.lane.b32.xlu0 %v1073, %s1134
    %v1136 = vpop.permute.xlu0 %1135
    %v1137 = vlaneseq
    %v1138 = vshrl.u32 %v1137, 7
    %v1139 = vsub.s32 1, %v1138
    %v1140 = vrot.slane %v1062, %v1139
    %1142 = vbcast.lane.b32.xlu0 %v1140, 256
    %v1143 = vpop.permute.xlu0 %1142
    %s1145 = sor.u32 256, 8
    %1146 = vbcast.lane.b32.xlu0 %v1140, %s1145
    %v1147 = vpop.permute.xlu0 %1146
    %s1149 = sor.u32 256, 16
    %1150 = vbcast.lane.b32.xlu0 %v1140, %s1149
    %v1151 = vpop.permute.xlu0 %1150
    %s1153 = sor.u32 256, 24
    %1154 = vbcast.lane.b32.xlu0 %v1140, %s1153
    %v1155 = vpop.permute.xlu0 %1154
    %s1157 = sor.u32 256, 32
    %1158 = vbcast.lane.b32.xlu0 %v1140, %s1157
    %v1159 = vpop.permute.xlu0 %1158
    %s1161 = sor.u32 256, 40
    %1162 = vbcast.lane.b32.xlu0 %v1140, %s1161
    %v1163 = vpop.permute.xlu0 %1162
    %s1165 = sor.u32 256, 48
    %1166 = vbcast.lane.b32.xlu0 %v1140, %s1165
    %v1167 = vpop.permute.xlu0 %1166
    %s1169 = sor.u32 256, 56
    %1170 = vbcast.lane.b32.xlu0 %v1140, %s1169
    %v1171 = vpop.permute.xlu0 %1170
    %s1173 = sor.u32 256, 64
    %1174 = vbcast.lane.b32.xlu0 %v1140, %s1173
    %v1175 = vpop.permute.xlu0 %1174
    %s1177 = sor.u32 256, 72
    %1178 = vbcast.lane.b32.xlu0 %v1140, %s1177
    %v1179 = vpop.permute.xlu0 %1178
    %s1181 = sor.u32 256, 80
    %1182 = vbcast.lane.b32.xlu0 %v1140, %s1181
    %v1183 = vpop.permute.xlu0 %1182
    %s1185 = sor.u32 256, 88
    %1186 = vbcast.lane.b32.xlu0 %v1140, %s1185
    %v1187 = vpop.permute.xlu0 %1186
    %s1189 = sor.u32 256, 96
    %1190 = vbcast.lane.b32.xlu0 %v1140, %s1189
    %v1191 = vpop.permute.xlu0 %1190
    %s1193 = sor.u32 256, 104
    %1194 = vbcast.lane.b32.xlu0 %v1140, %s1193
    %v1195 = vpop.permute.xlu0 %1194
    %s1197 = sor.u32 256, 112
    %1198 = vbcast.lane.b32.xlu0 %v1140, %s1197
    %v1199 = vpop.permute.xlu0 %1198
    %s1201 = sor.u32 256, 120
    %1202 = vbcast.lane.b32.xlu0 %v1140, %s1201
    %v1203 = vpop.permute.xlu0 %1202
    %v1204 = vlaneseq
    %v1205 = vshrl.u32 %v1204, 7
    %v1206 = vsub.s32 2, %v1205
    %v1207 = vrot.slane %v1062, %v1206
    %1209 = vbcast.lane.b32.xlu0 %v1207, 256
    %v1210 = vpop.permute.xlu0 %1209
    %s1212 = sor.u32 256, 8
    %1213 = vbcast.lane.b32.xlu0 %v1207, %s1212
    %v1214 = vpop.permute.xlu0 %1213
    %s1216 = sor.u32 256, 16
    %1217 = vbcast.lane.b32.xlu0 %v1207, %s1216
    %v1218 = vpop.permute.xlu0 %1217
    %s1220 = sor.u32 256, 24
    %1221 = vbcast.lane.b32.xlu0 %v1207, %s1220
    %v1222 = vpop.permute.xlu0 %1221
    %s1224 = sor.u32 256, 32
    %1225 = vbcast.lane.b32.xlu0 %v1207, %s1224
    %v1226 = vpop.permute.xlu0 %1225
    %s1228 = sor.u32 256, 40
    %1229 = vbcast.lane.b32.xlu0 %v1207, %s1228
    %v1230 = vpop.permute.xlu0 %1229
    %s1232 = sor.u32 256, 48
    %1233 = vbcast.lane.b32.xlu0 %v1207, %s1232
    %v1234 = vpop.permute.xlu0 %1233
    %s1236 = sor.u32 256, 56
    %1237 = vbcast.lane.b32.xlu0 %v1207, %s1236
    %v1238 = vpop.permute.xlu0 %1237
    %s1240 = sor.u32 256, 64
    %1241 = vbcast.lane.b32.xlu0 %v1207, %s1240
    %v1242 = vpop.permute.xlu0 %1241
    %s1244 = sor.u32 256, 72
    %1245 = vbcast.lane.b32.xlu0 %v1207, %s1244
    %v1246 = vpop.permute.xlu0 %1245
    %s1248 = sor.u32 256, 80
    %1249 = vbcast.lane.b32.xlu0 %v1207, %s1248
    %v1250 = vpop.permute.xlu0 %1249
    %s1252 = sor.u32 256, 88
    %1253 = vbcast.lane.b32.xlu0 %v1207, %s1252
    %v1254 = vpop.permute.xlu0 %1253
    %s1256 = sor.u32 256, 96
    %1257 = vbcast.lane.b32.xlu0 %v1207, %s1256
    %v1258 = vpop.permute.xlu0 %1257
    %s1260 = sor.u32 256, 104
    %1261 = vbcast.lane.b32.xlu0 %v1207, %s1260
    %v1262 = vpop.permute.xlu0 %1261
    %s1264 = sor.u32 256, 112
    %1265 = vbcast.lane.b32.xlu0 %v1207, %s1264
    %v1266 = vpop.permute.xlu0 %1265
    %s1268 = sor.u32 256, 120
    %1269 = vbcast.lane.b32.xlu0 %v1207, %s1268
    %v1270 = vpop.permute.xlu0 %1269
    %v1271 = vlaneseq
    %v1272 = vshrl.u32 %v1271, 7
    %v1273 = vsub.s32 3, %v1272
    %v1274 = vrot.slane %v1062, %v1273
    %1276 = vbcast.lane.b32.xlu0 %v1274, 256
    %v1277 = vpop.permute.xlu0 %1276
    %s1279 = sor.u32 256, 8
    %1280 = vbcast.lane.b32.xlu0 %v1274, %s1279
    %v1281 = vpop.permute.xlu0 %1280
    %s1283 = sor.u32 256, 16
    %1284 = vbcast.lane.b32.xlu0 %v1274, %s1283
    %v1285 = vpop.permute.xlu0 %1284
    %s1287 = sor.u32 256, 24
    %1288 = vbcast.lane.b32.xlu0 %v1274, %s1287
    %v1289 = vpop.permute.xlu0 %1288
    %s1291 = sor.u32 256, 32
    %1292 = vbcast.lane.b32.xlu0 %v1274, %s1291
    %v1293 = vpop.permute.xlu0 %1292
    %s1295 = sor.u32 256, 40
    %1296 = vbcast.lane.b32.xlu0 %v1274, %s1295
    %v1297 = vpop.permute.xlu0 %1296
    %s1299 = sor.u32 256, 48
    %1300 = vbcast.lane.b32.xlu0 %v1274, %s1299
    %v1301 = vpop.permute.xlu0 %1300
    %s1303 = sor.u32 256, 56
    %1304 = vbcast.lane.b32.xlu0 %v1274, %s1303
    %v1305 = vpop.permute.xlu0 %1304
    %s1307 = sor.u32 256, 64
    %1308 = vbcast.lane.b32.xlu0 %v1274, %s1307
    %v1309 = vpop.permute.xlu0 %1308
    %s1311 = sor.u32 256, 72
    %1312 = vbcast.lane.b32.xlu0 %v1274, %s1311
    %v1313 = vpop.permute.xlu0 %1312
    %s1315 = sor.u32 256, 80
    %1316 = vbcast.lane.b32.xlu0 %v1274, %s1315
    %v1317 = vpop.permute.xlu0 %1316
    %s1319 = sor.u32 256, 88
    %1320 = vbcast.lane.b32.xlu0 %v1274, %s1319
    %v1321 = vpop.permute.xlu0 %1320
    %s1323 = sor.u32 256, 96
    %1324 = vbcast.lane.b32.xlu0 %v1274, %s1323
    %v1325 = vpop.permute.xlu0 %1324
    %s1327 = sor.u32 256, 104
    %1328 = vbcast.lane.b32.xlu0 %v1274, %s1327
    %v1329 = vpop.permute.xlu0 %1328
    %s1331 = sor.u32 256, 112
    %1332 = vbcast.lane.b32.xlu0 %v1274, %s1331
    %v1333 = vpop.permute.xlu0 %1332
    %s1335 = sor.u32 256, 120
    %1336 = vbcast.lane.b32.xlu0 %v1274, %s1335
    %v1337 = vpop.permute.xlu0 %1336
    %v1338 = vlaneseq
    %v1339 = vshrl.u32 %v1338, 7
    %v1340 = vsub.s32 4, %v1339
    %v1341 = vrot.slane %v1062, %v1340
    %1343 = vbcast.lane.b32.xlu0 %v1341, 256
    %v1344 = vpop.permute.xlu0 %1343
    %s1346 = sor.u32 256, 8
    %1347 = vbcast.lane.b32.xlu0 %v1341, %s1346
    %v1348 = vpop.permute.xlu0 %1347
    %s1350 = sor.u32 256, 16
    %1351 = vbcast.lane.b32.xlu0 %v1341, %s1350
    %v1352 = vpop.permute.xlu0 %1351
    %s1354 = sor.u32 256, 24
    %1355 = vbcast.lane.b32.xlu0 %v1341, %s1354
    %v1356 = vpop.permute.xlu0 %1355
    %s1358 = sor.u32 256, 32
    %1359 = vbcast.lane.b32.xlu0 %v1341, %s1358
    %v1360 = vpop.permute.xlu0 %1359
    %s1362 = sor.u32 256, 40
    %1363 = vbcast.lane.b32.xlu0 %v1341, %s1362
    %v1364 = vpop.permute.xlu0 %1363
    %s1366 = sor.u32 256, 48
    %1367 = vbcast.lane.b32.xlu0 %v1341, %s1366
    %v1368 = vpop.permute.xlu0 %1367
    %s1370 = sor.u32 256, 56
    %1371 = vbcast.lane.b32.xlu0 %v1341, %s1370
    %v1372 = vpop.permute.xlu0 %1371
    %s1374 = sor.u32 256, 64
    %1375 = vbcast.lane.b32.xlu0 %v1341, %s1374
    %v1376 = vpop.permute.xlu0 %1375
    %s1378 = sor.u32 256, 72
    %1379 = vbcast.lane.b32.xlu0 %v1341, %s1378
    %v1380 = vpop.permute.xlu0 %1379
    %s1382 = sor.u32 256, 80
    %1383 = vbcast.lane.b32.xlu0 %v1341, %s1382
    %v1384 = vpop.permute.xlu0 %1383
    %s1386 = sor.u32 256, 88
    %1387 = vbcast.lane.b32.xlu0 %v1341, %s1386
    %v1388 = vpop.permute.xlu0 %1387
    %s1390 = sor.u32 256, 96
    %1391 = vbcast.lane.b32.xlu0 %v1341, %s1390
    %v1392 = vpop.permute.xlu0 %1391
    %s1394 = sor.u32 256, 104
    %1395 = vbcast.lane.b32.xlu0 %v1341, %s1394
    %v1396 = vpop.permute.xlu0 %1395
    %s1398 = sor.u32 256, 112
    %1399 = vbcast.lane.b32.xlu0 %v1341, %s1398
    %v1400 = vpop.permute.xlu0 %1399
    %s1402 = sor.u32 256, 120
    %1403 = vbcast.lane.b32.xlu0 %v1341, %s1402
    %v1404 = vpop.permute.xlu0 %1403
    %v1405 = vlaneseq
    %v1406 = vshrl.u32 %v1405, 7
    %v1407 = vsub.s32 5, %v1406
    %v1408 = vrot.slane %v1062, %v1407
    %1410 = vbcast.lane.b32.xlu0 %v1408, 256
    %v1411 = vpop.permute.xlu0 %1410
    %s1413 = sor.u32 256, 8
    %1414 = vbcast.lane.b32.xlu0 %v1408, %s1413
    %v1415 = vpop.permute.xlu0 %1414
    %s1417 = sor.u32 256, 16
    %1418 = vbcast.lane.b32.xlu0 %v1408, %s1417
    %v1419 = vpop.permute.xlu0 %1418
    %s1421 = sor.u32 256, 24
    %1422 = vbcast.lane.b32.xlu0 %v1408, %s1421
    %v1423 = vpop.permute.xlu0 %1422
    %s1425 = sor.u32 256, 32
    %1426 = vbcast.lane.b32.xlu0 %v1408, %s1425
    %v1427 = vpop.permute.xlu0 %1426
    %s1429 = sor.u32 256, 40
    %1430 = vbcast.lane.b32.xlu0 %v1408, %s1429
    %v1431 = vpop.permute.xlu0 %1430
    %s1433 = sor.u32 256, 48
    %1434 = vbcast.lane.b32.xlu0 %v1408, %s1433
    %v1435 = vpop.permute.xlu0 %1434
    %s1437 = sor.u32 256, 56
    %1438 = vbcast.lane.b32.xlu0 %v1408, %s1437
    %v1439 = vpop.permute.xlu0 %1438
    %s1441 = sor.u32 256, 64
    %1442 = vbcast.lane.b32.xlu0 %v1408, %s1441
    %v1443 = vpop.permute.xlu0 %1442
    %s1445 = sor.u32 256, 72
    %1446 = vbcast.lane.b32.xlu0 %v1408, %s1445
    %v1447 = vpop.permute.xlu0 %1446
    %s1449 = sor.u32 256, 80
    %1450 = vbcast.lane.b32.xlu0 %v1408, %s1449
    %v1451 = vpop.permute.xlu0 %1450
    %s1453 = sor.u32 256, 88
    %1454 = vbcast.lane.b32.xlu0 %v1408, %s1453
    %v1455 = vpop.permute.xlu0 %1454
    %s1457 = sor.u32 256, 96
    %1458 = vbcast.lane.b32.xlu0 %v1408, %s1457
    %v1459 = vpop.permute.xlu0 %1458
    %s1461 = sor.u32 256, 104
    %1462 = vbcast.lane.b32.xlu0 %v1408, %s1461
    %v1463 = vpop.permute.xlu0 %1462
    %s1465 = sor.u32 256, 112
    %1466 = vbcast.lane.b32.xlu0 %v1408, %s1465
    %v1467 = vpop.permute.xlu0 %1466
    %s1469 = sor.u32 256, 120
    %1470 = vbcast.lane.b32.xlu0 %v1408, %s1469
    %v1471 = vpop.permute.xlu0 %1470
    %v1472 = vlaneseq
    %v1473 = vshrl.u32 %v1472, 7
    %v1474 = vsub.s32 6, %v1473
    %v1475 = vrot.slane %v1062, %v1474
    %1477 = vbcast.lane.b32.xlu0 %v1475, 256
    %v1478 = vpop.permute.xlu0 %1477
    %s1480 = sor.u32 256, 8
    %1481 = vbcast.lane.b32.xlu0 %v1475, %s1480
    %v1482 = vpop.permute.xlu0 %1481
    %s1484 = sor.u32 256, 16
    %1485 = vbcast.lane.b32.xlu0 %v1475, %s1484
    %v1486 = vpop.permute.xlu0 %1485
    %s1488 = sor.u32 256, 24
    %1489 = vbcast.lane.b32.xlu0 %v1475, %s1488
    %v1490 = vpop.permute.xlu0 %1489
    %s1492 = sor.u32 256, 32
    %1493 = vbcast.lane.b32.xlu0 %v1475, %s1492
    %v1494 = vpop.permute.xlu0 %1493
    %s1496 = sor.u32 256, 40
    %1497 = vbcast.lane.b32.xlu0 %v1475, %s1496
    %v1498 = vpop.permute.xlu0 %1497
    %s1500 = sor.u32 256, 48
    %1501 = vbcast.lane.b32.xlu0 %v1475, %s1500
    %v1502 = vpop.permute.xlu0 %1501
    %s1504 = sor.u32 256, 56
    %1505 = vbcast.lane.b32.xlu0 %v1475, %s1504
    %v1506 = vpop.permute.xlu0 %1505
    %s1508 = sor.u32 256, 64
    %1509 = vbcast.lane.b32.xlu0 %v1475, %s1508
    %v1510 = vpop.permute.xlu0 %1509
    %s1512 = sor.u32 256, 72
    %1513 = vbcast.lane.b32.xlu0 %v1475, %s1512
    %v1514 = vpop.permute.xlu0 %1513
    %s1516 = sor.u32 256, 80
    %1517 = vbcast.lane.b32.xlu0 %v1475, %s1516
    %v1518 = vpop.permute.xlu0 %1517
    %s1520 = sor.u32 256, 88
    %1521 = vbcast.lane.b32.xlu0 %v1475, %s1520
    %v1522 = vpop.permute.xlu0 %1521
    %s1524 = sor.u32 256, 96
    %1525 = vbcast.lane.b32.xlu0 %v1475, %s1524
    %v1526 = vpop.permute.xlu0 %1525
    %s1528 = sor.u32 256, 104
    %1529 = vbcast.lane.b32.xlu0 %v1475, %s1528
    %v1530 = vpop.permute.xlu0 %1529
    %s1532 = sor.u32 256, 112
    %1533 = vbcast.lane.b32.xlu0 %v1475, %s1532
    %v1534 = vpop.permute.xlu0 %1533
    %s1536 = sor.u32 256, 120
    %1537 = vbcast.lane.b32.xlu0 %v1475, %s1536
    %v1538 = vpop.permute.xlu0 %1537
    %v1539 = vlaneseq
    %v1540 = vshrl.u32 %v1539, 7
    %v1541 = vsub.s32 7, %v1540
    %v1542 = vrot.slane %v1062, %v1541
    %1544 = vbcast.lane.b32.xlu0 %v1542, 256
    %v1545 = vpop.permute.xlu0 %1544
    %s1547 = sor.u32 256, 8
    %1548 = vbcast.lane.b32.xlu0 %v1542, %s1547
    %v1549 = vpop.permute.xlu0 %1548
    %s1551 = sor.u32 256, 16
    %1552 = vbcast.lane.b32.xlu0 %v1542, %s1551
    %v1553 = vpop.permute.xlu0 %1552
    %s1555 = sor.u32 256, 24
    %1556 = vbcast.lane.b32.xlu0 %v1542, %s1555
    %v1557 = vpop.permute.xlu0 %1556
    %s1559 = sor.u32 256, 32
    %1560 = vbcast.lane.b32.xlu0 %v1542, %s1559
    %v1561 = vpop.permute.xlu0 %1560
    %s1563 = sor.u32 256, 40
    %1564 = vbcast.lane.b32.xlu0 %v1542, %s1563
    %v1565 = vpop.permute.xlu0 %1564
    %s1567 = sor.u32 256, 48
    %1568 = vbcast.lane.b32.xlu0 %v1542, %s1567
    %v1569 = vpop.permute.xlu0 %1568
    %s1571 = sor.u32 256, 56
    %1572 = vbcast.lane.b32.xlu0 %v1542, %s1571
    %v1573 = vpop.permute.xlu0 %1572
    %s1575 = sor.u32 256, 64
    %1576 = vbcast.lane.b32.xlu0 %v1542, %s1575
    %v1577 = vpop.permute.xlu0 %1576
    %s1579 = sor.u32 256, 72
    %1580 = vbcast.lane.b32.xlu0 %v1542, %s1579
    %v1581 = vpop.permute.xlu0 %1580
    %s1583 = sor.u32 256, 80
    %1584 = vbcast.lane.b32.xlu0 %v1542, %s1583
    %v1585 = vpop.permute.xlu0 %1584
    %s1587 = sor.u32 256, 88
    %1588 = vbcast.lane.b32.xlu0 %v1542, %s1587
    %v1589 = vpop.permute.xlu0 %1588
    %s1591 = sor.u32 256, 96
    %1592 = vbcast.lane.b32.xlu0 %v1542, %s1591
    %v1593 = vpop.permute.xlu0 %1592
    %s1595 = sor.u32 256, 104
    %1596 = vbcast.lane.b32.xlu0 %v1542, %s1595
    %v1597 = vpop.permute.xlu0 %1596
    %s1599 = sor.u32 256, 112
    %1600 = vbcast.lane.b32.xlu0 %v1542, %s1599
    %v1601 = vpop.permute.xlu0 %1600
    %s1603 = sor.u32 256, 120
    %1604 = vbcast.lane.b32.xlu0 %v1542, %s1603
    %v1605 = vpop.permute.xlu0 %1604
    %v1606 = vlaneseq
    %v1607 = vshrl.u32 %v1606, 7
    %v1608 = vsub.s32 0, %v1607
    %v1609 = vrot.slane %v1063, %v1608
    %1611 = vbcast.lane.b32.xlu0 %v1609, 256
    %v1612 = vpop.permute.xlu0 %1611
    %s1614 = sor.u32 256, 8
    %1615 = vbcast.lane.b32.xlu0 %v1609, %s1614
    %v1616 = vpop.permute.xlu0 %1615
    %s1618 = sor.u32 256, 16
    %1619 = vbcast.lane.b32.xlu0 %v1609, %s1618
    %v1620 = vpop.permute.xlu0 %1619
    %s1622 = sor.u32 256, 24
    %1623 = vbcast.lane.b32.xlu0 %v1609, %s1622
    %v1624 = vpop.permute.xlu0 %1623
    %s1626 = sor.u32 256, 32
    %1627 = vbcast.lane.b32.xlu0 %v1609, %s1626
    %v1628 = vpop.permute.xlu0 %1627
    %s1630 = sor.u32 256, 40
    %1631 = vbcast.lane.b32.xlu0 %v1609, %s1630
    %v1632 = vpop.permute.xlu0 %1631
    %s1634 = sor.u32 256, 48
    %1635 = vbcast.lane.b32.xlu0 %v1609, %s1634
    %v1636 = vpop.permute.xlu0 %1635
    %s1638 = sor.u32 256, 56
    %1639 = vbcast.lane.b32.xlu0 %v1609, %s1638
    %v1640 = vpop.permute.xlu0 %1639
    %s1642 = sor.u32 256, 64
    %1643 = vbcast.lane.b32.xlu0 %v1609, %s1642
    %v1644 = vpop.permute.xlu0 %1643
    %s1646 = sor.u32 256, 72
    %1647 = vbcast.lane.b32.xlu0 %v1609, %s1646
    %v1648 = vpop.permute.xlu0 %1647
    %s1650 = sor.u32 256, 80
    %1651 = vbcast.lane.b32.xlu0 %v1609, %s1650
    %v1652 = vpop.permute.xlu0 %1651
    %s1654 = sor.u32 256, 88
    %1655 = vbcast.lane.b32.xlu0 %v1609, %s1654
    %v1656 = vpop.permute.xlu0 %1655
    %s1658 = sor.u32 256, 96
    %1659 = vbcast.lane.b32.xlu0 %v1609, %s1658
    %v1660 = vpop.permute.xlu0 %1659
    %s1662 = sor.u32 256, 104
    %1663 = vbcast.lane.b32.xlu0 %v1609, %s1662
    %v1664 = vpop.permute.xlu0 %1663
    %s1666 = sor.u32 256, 112
    %1667 = vbcast.lane.b32.xlu0 %v1609, %s1666
    %v1668 = vpop.permute.xlu0 %1667
    %s1670 = sor.u32 256, 120
    %1671 = vbcast.lane.b32.xlu0 %v1609, %s1670
    %v1672 = vpop.permute.xlu0 %1671
    %v1673 = vlaneseq
    %v1674 = vshrl.u32 %v1673, 7
    %v1675 = vsub.s32 1, %v1674
    %v1676 = vrot.slane %v1063, %v1675
    %1678 = vbcast.lane.b32.xlu0 %v1676, 256
    %v1679 = vpop.permute.xlu0 %1678
    %s1681 = sor.u32 256, 8
    %1682 = vbcast.lane.b32.xlu0 %v1676, %s1681
    %v1683 = vpop.permute.xlu0 %1682
    %s1685 = sor.u32 256, 16
    %1686 = vbcast.lane.b32.xlu0 %v1676, %s1685
    %v1687 = vpop.permute.xlu0 %1686
    %s1689 = sor.u32 256, 24
    %1690 = vbcast.lane.b32.xlu0 %v1676, %s1689
    %v1691 = vpop.permute.xlu0 %1690
    %s1693 = sor.u32 256, 32
    %1694 = vbcast.lane.b32.xlu0 %v1676, %s1693
    %v1695 = vpop.permute.xlu0 %1694
    %s1697 = sor.u32 256, 40
    %1698 = vbcast.lane.b32.xlu0 %v1676, %s1697
    %v1699 = vpop.permute.xlu0 %1698
    %s1701 = sor.u32 256, 48
    %1702 = vbcast.lane.b32.xlu0 %v1676, %s1701
    %v1703 = vpop.permute.xlu0 %1702
    %s1705 = sor.u32 256, 56
    %1706 = vbcast.lane.b32.xlu0 %v1676, %s1705
    %v1707 = vpop.permute.xlu0 %1706
    %s1709 = sor.u32 256, 64
    %1710 = vbcast.lane.b32.xlu0 %v1676, %s1709
    %v1711 = vpop.permute.xlu0 %1710
    %s1713 = sor.u32 256, 72
    %1714 = vbcast.lane.b32.xlu0 %v1676, %s1713
    %v1715 = vpop.permute.xlu0 %1714
    %s1717 = sor.u32 256, 80
    %1718 = vbcast.lane.b32.xlu0 %v1676, %s1717
    %v1719 = vpop.permute.xlu0 %1718
    %s1721 = sor.u32 256, 88
    %1722 = vbcast.lane.b32.xlu0 %v1676, %s1721
    %v1723 = vpop.permute.xlu0 %1722
    %s1725 = sor.u32 256, 96
    %1726 = vbcast.lane.b32.xlu0 %v1676, %s1725
    %v1727 = vpop.permute.xlu0 %1726
    %s1729 = sor.u32 256, 104
    %1730 = vbcast.lane.b32.xlu0 %v1676, %s1729
    %v1731 = vpop.permute.xlu0 %1730
    %s1733 = sor.u32 256, 112
    %1734 = vbcast.lane.b32.xlu0 %v1676, %s1733
    %v1735 = vpop.permute.xlu0 %1734
    %s1737 = sor.u32 256, 120
    %1738 = vbcast.lane.b32.xlu0 %v1676, %s1737
    %v1739 = vpop.permute.xlu0 %1738
    %v1740 = vlaneseq
    %v1741 = vshrl.u32 %v1740, 7
    %v1742 = vsub.s32 2, %v1741
    %v1743 = vrot.slane %v1063, %v1742
    %1745 = vbcast.lane.b32.xlu0 %v1743, 256
    %v1746 = vpop.permute.xlu0 %1745
    %s1748 = sor.u32 256, 8
    %1749 = vbcast.lane.b32.xlu0 %v1743, %s1748
    %v1750 = vpop.permute.xlu0 %1749
    %s1752 = sor.u32 256, 16
    %1753 = vbcast.lane.b32.xlu0 %v1743, %s1752
    %v1754 = vpop.permute.xlu0 %1753
    %s1756 = sor.u32 256, 24
    %1757 = vbcast.lane.b32.xlu0 %v1743, %s1756
    %v1758 = vpop.permute.xlu0 %1757
    %s1760 = sor.u32 256, 32
    %1761 = vbcast.lane.b32.xlu0 %v1743, %s1760
    %v1762 = vpop.permute.xlu0 %1761
    %s1764 = sor.u32 256, 40
    %1765 = vbcast.lane.b32.xlu0 %v1743, %s1764
    %v1766 = vpop.permute.xlu0 %1765
    %s1768 = sor.u32 256, 48
    %1769 = vbcast.lane.b32.xlu0 %v1743, %s1768
    %v1770 = vpop.permute.xlu0 %1769
    %s1772 = sor.u32 256, 56
    %1773 = vbcast.lane.b32.xlu0 %v1743, %s1772
    %v1774 = vpop.permute.xlu0 %1773
    %s1776 = sor.u32 256, 64
    %1777 = vbcast.lane.b32.xlu0 %v1743, %s1776
    %v1778 = vpop.permute.xlu0 %1777
    %s1780 = sor.u32 256, 72
    %1781 = vbcast.lane.b32.xlu0 %v1743, %s1780
    %v1782 = vpop.permute.xlu0 %1781
    %s1784 = sor.u32 256, 80
    %1785 = vbcast.lane.b32.xlu0 %v1743, %s1784
    %v1786 = vpop.permute.xlu0 %1785
    %s1788 = sor.u32 256, 88
    %1789 = vbcast.lane.b32.xlu0 %v1743, %s1788
    %v1790 = vpop.permute.xlu0 %1789
    %s1792 = sor.u32 256, 96
    %1793 = vbcast.lane.b32.xlu0 %v1743, %s1792
    %v1794 = vpop.permute.xlu0 %1793
    %s1796 = sor.u32 256, 104
    %1797 = vbcast.lane.b32.xlu0 %v1743, %s1796
    %v1798 = vpop.permute.xlu0 %1797
    %s1800 = sor.u32 256, 112
    %1801 = vbcast.lane.b32.xlu0 %v1743, %s1800
    %v1802 = vpop.permute.xlu0 %1801
    %s1804 = sor.u32 256, 120
    %1805 = vbcast.lane.b32.xlu0 %v1743, %s1804
    %v1806 = vpop.permute.xlu0 %1805
    %v1807 = vlaneseq
    %v1808 = vshrl.u32 %v1807, 7
    %v1809 = vsub.s32 3, %v1808
    %v1810 = vrot.slane %v1063, %v1809
    %1812 = vbcast.lane.b32.xlu0 %v1810, 256
    %v1813 = vpop.permute.xlu0 %1812
    %s1815 = sor.u32 256, 8
    %1816 = vbcast.lane.b32.xlu0 %v1810, %s1815
    %v1817 = vpop.permute.xlu0 %1816
    %s1819 = sor.u32 256, 16
    %1820 = vbcast.lane.b32.xlu0 %v1810, %s1819
    %v1821 = vpop.permute.xlu0 %1820
    %s1823 = sor.u32 256, 24
    %1824 = vbcast.lane.b32.xlu0 %v1810, %s1823
    %v1825 = vpop.permute.xlu0 %1824
    %s1827 = sor.u32 256, 32
    %1828 = vbcast.lane.b32.xlu0 %v1810, %s1827
    %v1829 = vpop.permute.xlu0 %1828
    %s1831 = sor.u32 256, 40
    %1832 = vbcast.lane.b32.xlu0 %v1810, %s1831
    %v1833 = vpop.permute.xlu0 %1832
    %s1835 = sor.u32 256, 48
    %1836 = vbcast.lane.b32.xlu0 %v1810, %s1835
    %v1837 = vpop.permute.xlu0 %1836
    %s1839 = sor.u32 256, 56
    %1840 = vbcast.lane.b32.xlu0 %v1810, %s1839
    %v1841 = vpop.permute.xlu0 %1840
    %s1843 = sor.u32 256, 64
    %1844 = vbcast.lane.b32.xlu0 %v1810, %s1843
    %v1845 = vpop.permute.xlu0 %1844
    %s1847 = sor.u32 256, 72
    %1848 = vbcast.lane.b32.xlu0 %v1810, %s1847
    %v1849 = vpop.permute.xlu0 %1848
    %s1851 = sor.u32 256, 80
    %1852 = vbcast.lane.b32.xlu0 %v1810, %s1851
    %v1853 = vpop.permute.xlu0 %1852
    %s1855 = sor.u32 256, 88
    %1856 = vbcast.lane.b32.xlu0 %v1810, %s1855
    %v1857 = vpop.permute.xlu0 %1856
    %s1859 = sor.u32 256, 96
    %1860 = vbcast.lane.b32.xlu0 %v1810, %s1859
    %v1861 = vpop.permute.xlu0 %1860
    %s1863 = sor.u32 256, 104
    %1864 = vbcast.lane.b32.xlu0 %v1810, %s1863
    %v1865 = vpop.permute.xlu0 %1864
    %s1867 = sor.u32 256, 112
    %1868 = vbcast.lane.b32.xlu0 %v1810, %s1867
    %v1869 = vpop.permute.xlu0 %1868
    %s1871 = sor.u32 256, 120
    %1872 = vbcast.lane.b32.xlu0 %v1810, %s1871
    %v1873 = vpop.permute.xlu0 %1872
    %v1874 = vlaneseq
    %v1875 = vshrl.u32 %v1874, 7
    %v1876 = vsub.s32 4, %v1875
    %v1877 = vrot.slane %v1063, %v1876
    %1879 = vbcast.lane.b32.xlu0 %v1877, 256
    %v1880 = vpop.permute.xlu0 %1879
    %s1882 = sor.u32 256, 8
    %1883 = vbcast.lane.b32.xlu0 %v1877, %s1882
    %v1884 = vpop.permute.xlu0 %1883
    %s1886 = sor.u32 256, 16
    %1887 = vbcast.lane.b32.xlu0 %v1877, %s1886
    %v1888 = vpop.permute.xlu0 %1887
    %s1890 = sor.u32 256, 24
    %1891 = vbcast.lane.b32.xlu0 %v1877, %s1890
    %v1892 = vpop.permute.xlu0 %1891
    %s1894 = sor.u32 256, 32
    %1895 = vbcast.lane.b32.xlu0 %v1877, %s1894
    %v1896 = vpop.permute.xlu0 %1895
    %s1898 = sor.u32 256, 40
    %1899 = vbcast.lane.b32.xlu0 %v1877, %s1898
    %v1900 = vpop.permute.xlu0 %1899
    %s1902 = sor.u32 256, 48
    %1903 = vbcast.lane.b32.xlu0 %v1877, %s1902
    %v1904 = vpop.permute.xlu0 %1903
    %s1906 = sor.u32 256, 56
    %1907 = vbcast.lane.b32.xlu0 %v1877, %s1906
    %v1908 = vpop.permute.xlu0 %1907
    %s1910 = sor.u32 256, 64
    %1911 = vbcast.lane.b32.xlu0 %v1877, %s1910
    %v1912 = vpop.permute.xlu0 %1911
    %s1914 = sor.u32 256, 72
    %1915 = vbcast.lane.b32.xlu0 %v1877, %s1914
    %v1916 = vpop.permute.xlu0 %1915
    %s1918 = sor.u32 256, 80
    %1919 = vbcast.lane.b32.xlu0 %v1877, %s1918
    %v1920 = vpop.permute.xlu0 %1919
    %s1922 = sor.u32 256, 88
    %1923 = vbcast.lane.b32.xlu0 %v1877, %s1922
    %v1924 = vpop.permute.xlu0 %1923
    %s1926 = sor.u32 256, 96
    %1927 = vbcast.lane.b32.xlu0 %v1877, %s1926
    %v1928 = vpop.permute.xlu0 %1927
    %s1930 = sor.u32 256, 104
    %1931 = vbcast.lane.b32.xlu0 %v1877, %s1930
    %v1932 = vpop.permute.xlu0 %1931
    %s1934 = sor.u32 256, 112
    %1935 = vbcast.lane.b32.xlu0 %v1877, %s1934
    %v1936 = vpop.permute.xlu0 %1935
    %s1938 = sor.u32 256, 120
    %1939 = vbcast.lane.b32.xlu0 %v1877, %s1938
    %v1940 = vpop.permute.xlu0 %1939
    %v1941 = vlaneseq
    %v1942 = vshrl.u32 %v1941, 7
    %v1943 = vsub.s32 5, %v1942
    %v1944 = vrot.slane %v1063, %v1943
    %1946 = vbcast.lane.b32.xlu0 %v1944, 256
    %v1947 = vpop.permute.xlu0 %1946
    %s1949 = sor.u32 256, 8
    %1950 = vbcast.lane.b32.xlu0 %v1944, %s1949
    %v1951 = vpop.permute.xlu0 %1950
    %s1953 = sor.u32 256, 16
    %1954 = vbcast.lane.b32.xlu0 %v1944, %s1953
    %v1955 = vpop.permute.xlu0 %1954
    %s1957 = sor.u32 256, 24
    %1958 = vbcast.lane.b32.xlu0 %v1944, %s1957
    %v1959 = vpop.permute.xlu0 %1958
    %s1961 = sor.u32 256, 32
    %1962 = vbcast.lane.b32.xlu0 %v1944, %s1961
    %v1963 = vpop.permute.xlu0 %1962
    %s1965 = sor.u32 256, 40
    %1966 = vbcast.lane.b32.xlu0 %v1944, %s1965
    %v1967 = vpop.permute.xlu0 %1966
    %s1969 = sor.u32 256, 48
    %1970 = vbcast.lane.b32.xlu0 %v1944, %s1969
    %v1971 = vpop.permute.xlu0 %1970
    %s1973 = sor.u32 256, 56
    %1974 = vbcast.lane.b32.xlu0 %v1944, %s1973
    %v1975 = vpop.permute.xlu0 %1974
    %s1977 = sor.u32 256, 64
    %1978 = vbcast.lane.b32.xlu0 %v1944, %s1977
    %v1979 = vpop.permute.xlu0 %1978
    %s1981 = sor.u32 256, 72
    %1982 = vbcast.lane.b32.xlu0 %v1944, %s1981
    %v1983 = vpop.permute.xlu0 %1982
    %s1985 = sor.u32 256, 80
    %1986 = vbcast.lane.b32.xlu0 %v1944, %s1985
    %v1987 = vpop.permute.xlu0 %1986
    %s1989 = sor.u32 256, 88
    %1990 = vbcast.lane.b32.xlu0 %v1944, %s1989
    %v1991 = vpop.permute.xlu0 %1990
    %s1993 = sor.u32 256, 96
    %1994 = vbcast.lane.b32.xlu0 %v1944, %s1993
    %v1995 = vpop.permute.xlu0 %1994
    %s1997 = sor.u32 256, 104
    %1998 = vbcast.lane.b32.xlu0 %v1944, %s1997
    %v1999 = vpop.permute.xlu0 %1998
    %s2001 = sor.u32 256, 112
    %2002 = vbcast.lane.b32.xlu0 %v1944, %s2001
    %v2003 = vpop.permute.xlu0 %2002
    %s2005 = sor.u32 256, 120
    %2006 = vbcast.lane.b32.xlu0 %v1944, %s2005
    %v2007 = vpop.permute.xlu0 %2006
    %v2008 = vlaneseq
    %v2009 = vshrl.u32 %v2008, 7
    %v2010 = vsub.s32 6, %v2009
    %v2011 = vrot.slane %v1063, %v2010
    %2013 = vbcast.lane.b32.xlu0 %v2011, 256
    %v2014 = vpop.permute.xlu0 %2013
    %s2016 = sor.u32 256, 8
    %2017 = vbcast.lane.b32.xlu0 %v2011, %s2016
    %v2018 = vpop.permute.xlu0 %2017
    %s2020 = sor.u32 256, 16
    %2021 = vbcast.lane.b32.xlu0 %v2011, %s2020
    %v2022 = vpop.permute.xlu0 %2021
    %s2024 = sor.u32 256, 24
    %2025 = vbcast.lane.b32.xlu0 %v2011, %s2024
    %v2026 = vpop.permute.xlu0 %2025
    %s2028 = sor.u32 256, 32
    %2029 = vbcast.lane.b32.xlu0 %v2011, %s2028
    %v2030 = vpop.permute.xlu0 %2029
    %s2032 = sor.u32 256, 40
    %2033 = vbcast.lane.b32.xlu0 %v2011, %s2032
    %v2034 = vpop.permute.xlu0 %2033
    %s2036 = sor.u32 256, 48
    %2037 = vbcast.lane.b32.xlu0 %v2011, %s2036
    %v2038 = vpop.permute.xlu0 %2037
    %s2040 = sor.u32 256, 56
    %2041 = vbcast.lane.b32.xlu0 %v2011, %s2040
    %v2042 = vpop.permute.xlu0 %2041
    %s2044 = sor.u32 256, 64
    %2045 = vbcast.lane.b32.xlu0 %v2011, %s2044
    %v2046 = vpop.permute.xlu0 %2045
    %s2048 = sor.u32 256, 72
    %2049 = vbcast.lane.b32.xlu0 %v2011, %s2048
    %v2050 = vpop.permute.xlu0 %2049
    %s2052 = sor.u32 256, 80
    %2053 = vbcast.lane.b32.xlu0 %v2011, %s2052
    %v2054 = vpop.permute.xlu0 %2053
    %s2056 = sor.u32 256, 88
    %2057 = vbcast.lane.b32.xlu0 %v2011, %s2056
    %v2058 = vpop.permute.xlu0 %2057
    %s2060 = sor.u32 256, 96
    %2061 = vbcast.lane.b32.xlu0 %v2011, %s2060
    %v2062 = vpop.permute.xlu0 %2061
    %s2064 = sor.u32 256, 104
    %2065 = vbcast.lane.b32.xlu0 %v2011, %s2064
    %v2066 = vpop.permute.xlu0 %2065
    %s2068 = sor.u32 256, 112
    %2069 = vbcast.lane.b32.xlu0 %v2011, %s2068
    %v2070 = vpop.permute.xlu0 %2069
    %s2072 = sor.u32 256, 120
    %2073 = vbcast.lane.b32.xlu0 %v2011, %s2072
    %v2074 = vpop.permute.xlu0 %2073
    %v2075 = vlaneseq
    %v2076 = vshrl.u32 %v2075, 7
    %v2077 = vsub.s32 7, %v2076
    %v2078 = vrot.slane %v1063, %v2077
    %2080 = vbcast.lane.b32.xlu0 %v2078, 256
    %v2081 = vpop.permute.xlu0 %2080
    %s2083 = sor.u32 256, 8
    %2084 = vbcast.lane.b32.xlu0 %v2078, %s2083
    %v2085 = vpop.permute.xlu0 %2084
    %s2087 = sor.u32 256, 16
    %2088 = vbcast.lane.b32.xlu0 %v2078, %s2087
    %v2089 = vpop.permute.xlu0 %2088
    %s2091 = sor.u32 256, 24
    %2092 = vbcast.lane.b32.xlu0 %v2078, %s2091
    %v2093 = vpop.permute.xlu0 %2092
    %s2095 = sor.u32 256, 32
    %2096 = vbcast.lane.b32.xlu0 %v2078, %s2095
    %v2097 = vpop.permute.xlu0 %2096
    %s2099 = sor.u32 256, 40
    %2100 = vbcast.lane.b32.xlu0 %v2078, %s2099
    %v2101 = vpop.permute.xlu0 %2100
    %s2103 = sor.u32 256, 48
    %2104 = vbcast.lane.b32.xlu0 %v2078, %s2103
    %v2105 = vpop.permute.xlu0 %2104
    %s2107 = sor.u32 256, 56
    %2108 = vbcast.lane.b32.xlu0 %v2078, %s2107
    %v2109 = vpop.permute.xlu0 %2108
    %s2111 = sor.u32 256, 64
    %2112 = vbcast.lane.b32.xlu0 %v2078, %s2111
    %v2113 = vpop.permute.xlu0 %2112
    %s2115 = sor.u32 256, 72
    %2116 = vbcast.lane.b32.xlu0 %v2078, %s2115
    %v2117 = vpop.permute.xlu0 %2116
    %s2119 = sor.u32 256, 80
    %2120 = vbcast.lane.b32.xlu0 %v2078, %s2119
    %v2121 = vpop.permute.xlu0 %2120
    %s2123 = sor.u32 256, 88
    %2124 = vbcast.lane.b32.xlu0 %v2078, %s2123
    %v2125 = vpop.permute.xlu0 %2124
    %s2127 = sor.u32 256, 96
    %2128 = vbcast.lane.b32.xlu0 %v2078, %s2127
    %v2129 = vpop.permute.xlu0 %2128
    %s2131 = sor.u32 256, 104
    %2132 = vbcast.lane.b32.xlu0 %v2078, %s2131
    %v2133 = vpop.permute.xlu0 %2132
    %s2135 = sor.u32 256, 112
    %2136 = vbcast.lane.b32.xlu0 %v2078, %s2135
    %v2137 = vpop.permute.xlu0 %2136
    %s2139 = sor.u32 256, 120
    %2140 = vbcast.lane.b32.xlu0 %v2078, %s2139
    %v2141 = vpop.permute.xlu0 %2140
    %v2142 = vlaneseq
    %v2143 = vshrl.u32 %v2142, 7
    %v2144 = vsub.s32 0, %v2143
    %v2145 = vrot.slane %v1064, %v2144
    %2147 = vbcast.lane.b32.xlu0 %v2145, 256
    %v2148 = vpop.permute.xlu0 %2147
    %s2150 = sor.u32 256, 8
    %2151 = vbcast.lane.b32.xlu0 %v2145, %s2150
    %v2152 = vpop.permute.xlu0 %2151
    %s2154 = sor.u32 256, 16
    %2155 = vbcast.lane.b32.xlu0 %v2145, %s2154
    %v2156 = vpop.permute.xlu0 %2155
    %s2158 = sor.u32 256, 24
    %2159 = vbcast.lane.b32.xlu0 %v2145, %s2158
    %v2160 = vpop.permute.xlu0 %2159
    %s2162 = sor.u32 256, 32
    %2163 = vbcast.lane.b32.xlu0 %v2145, %s2162
    %v2164 = vpop.permute.xlu0 %2163
    %s2166 = sor.u32 256, 40
    %2167 = vbcast.lane.b32.xlu0 %v2145, %s2166
    %v2168 = vpop.permute.xlu0 %2167
    %s2170 = sor.u32 256, 48
    %2171 = vbcast.lane.b32.xlu0 %v2145, %s2170
    %v2172 = vpop.permute.xlu0 %2171
    %s2174 = sor.u32 256, 56
    %2175 = vbcast.lane.b32.xlu0 %v2145, %s2174
    %v2176 = vpop.permute.xlu0 %2175
    %s2178 = sor.u32 256, 64
    %2179 = vbcast.lane.b32.xlu0 %v2145, %s2178
    %v2180 = vpop.permute.xlu0 %2179
    %s2182 = sor.u32 256, 72
    %2183 = vbcast.lane.b32.xlu0 %v2145, %s2182
    %v2184 = vpop.permute.xlu0 %2183
    %s2186 = sor.u32 256, 80
    %2187 = vbcast.lane.b32.xlu0 %v2145, %s2186
    %v2188 = vpop.permute.xlu0 %2187
    %s2190 = sor.u32 256, 88
    %2191 = vbcast.lane.b32.xlu0 %v2145, %s2190
    %v2192 = vpop.permute.xlu0 %2191
    %s2194 = sor.u32 256, 96
    %2195 = vbcast.lane.b32.xlu0 %v2145, %s2194
    %v2196 = vpop.permute.xlu0 %2195
    %s2198 = sor.u32 256, 104
    %2199 = vbcast.lane.b32.xlu0 %v2145, %s2198
    %v2200 = vpop.permute.xlu0 %2199
    %s2202 = sor.u32 256, 112
    %2203 = vbcast.lane.b32.xlu0 %v2145, %s2202
    %v2204 = vpop.permute.xlu0 %2203
    %s2206 = sor.u32 256, 120
    %2207 = vbcast.lane.b32.xlu0 %v2145, %s2206
    %v2208 = vpop.permute.xlu0 %2207
    %v2209 = vlaneseq
    %v2210 = vshrl.u32 %v2209, 7
    %v2211 = vsub.s32 1, %v2210
    %v2212 = vrot.slane %v1064, %v2211
    %2214 = vbcast.lane.b32.xlu0 %v2212, 256
    %v2215 = vpop.permute.xlu0 %2214
    %s2217 = sor.u32 256, 8
    %2218 = vbcast.lane.b32.xlu0 %v2212, %s2217
    %v2219 = vpop.permute.xlu0 %2218
    %s2221 = sor.u32 256, 16
    %2222 = vbcast.lane.b32.xlu0 %v2212, %s2221
    %v2223 = vpop.permute.xlu0 %2222
    %s2225 = sor.u32 256, 24
    %2226 = vbcast.lane.b32.xlu0 %v2212, %s2225
    %v2227 = vpop.permute.xlu0 %2226
    %s2229 = sor.u32 256, 32
    %2230 = vbcast.lane.b32.xlu0 %v2212, %s2229
    %v2231 = vpop.permute.xlu0 %2230
    %s2233 = sor.u32 256, 40
    %2234 = vbcast.lane.b32.xlu0 %v2212, %s2233
    %v2235 = vpop.permute.xlu0 %2234
    %s2237 = sor.u32 256, 48
    %2238 = vbcast.lane.b32.xlu0 %v2212, %s2237
    %v2239 = vpop.permute.xlu0 %2238
    %s2241 = sor.u32 256, 56
    %2242 = vbcast.lane.b32.xlu0 %v2212, %s2241
    %v2243 = vpop.permute.xlu0 %2242
    %s2245 = sor.u32 256, 64
    %2246 = vbcast.lane.b32.xlu0 %v2212, %s2245
    %v2247 = vpop.permute.xlu0 %2246
    %s2249 = sor.u32 256, 72
    %2250 = vbcast.lane.b32.xlu0 %v2212, %s2249
    %v2251 = vpop.permute.xlu0 %2250
    %s2253 = sor.u32 256, 80
    %2254 = vbcast.lane.b32.xlu0 %v2212, %s2253
    %v2255 = vpop.permute.xlu0 %2254
    %s2257 = sor.u32 256, 88
    %2258 = vbcast.lane.b32.xlu0 %v2212, %s2257
    %v2259 = vpop.permute.xlu0 %2258
    %s2261 = sor.u32 256, 96
    %2262 = vbcast.lane.b32.xlu0 %v2212, %s2261
    %v2263 = vpop.permute.xlu0 %2262
    %s2265 = sor.u32 256, 104
    %2266 = vbcast.lane.b32.xlu0 %v2212, %s2265
    %v2267 = vpop.permute.xlu0 %2266
    %s2269 = sor.u32 256, 112
    %2270 = vbcast.lane.b32.xlu0 %v2212, %s2269
    %v2271 = vpop.permute.xlu0 %2270
    %s2273 = sor.u32 256, 120
    %2274 = vbcast.lane.b32.xlu0 %v2212, %s2273
    %v2275 = vpop.permute.xlu0 %2274
    %v2276 = vlaneseq
    %v2277 = vshrl.u32 %v2276, 7
    %v2278 = vsub.s32 2, %v2277
    %v2279 = vrot.slane %v1064, %v2278
    %2281 = vbcast.lane.b32.xlu0 %v2279, 256
    %v2282 = vpop.permute.xlu0 %2281
    %s2284 = sor.u32 256, 8
    %2285 = vbcast.lane.b32.xlu0 %v2279, %s2284
    %v2286 = vpop.permute.xlu0 %2285
    %s2288 = sor.u32 256, 16
    %2289 = vbcast.lane.b32.xlu0 %v2279, %s2288
    %v2290 = vpop.permute.xlu0 %2289
    %s2292 = sor.u32 256, 24
    %2293 = vbcast.lane.b32.xlu0 %v2279, %s2292
    %v2294 = vpop.permute.xlu0 %2293
    %s2296 = sor.u32 256, 32
    %2297 = vbcast.lane.b32.xlu0 %v2279, %s2296
    %v2298 = vpop.permute.xlu0 %2297
    %s2300 = sor.u32 256, 40
    %2301 = vbcast.lane.b32.xlu0 %v2279, %s2300
    %v2302 = vpop.permute.xlu0 %2301
    %s2304 = sor.u32 256, 48
    %2305 = vbcast.lane.b32.xlu0 %v2279, %s2304
    %v2306 = vpop.permute.xlu0 %2305
    %s2308 = sor.u32 256, 56
    %2309 = vbcast.lane.b32.xlu0 %v2279, %s2308
    %v2310 = vpop.permute.xlu0 %2309
    %s2312 = sor.u32 256, 64
    %2313 = vbcast.lane.b32.xlu0 %v2279, %s2312
    %v2314 = vpop.permute.xlu0 %2313
    %s2316 = sor.u32 256, 72
    %2317 = vbcast.lane.b32.xlu0 %v2279, %s2316
    %v2318 = vpop.permute.xlu0 %2317
    %s2320 = sor.u32 256, 80
    %2321 = vbcast.lane.b32.xlu0 %v2279, %s2320
    %v2322 = vpop.permute.xlu0 %2321
    %s2324 = sor.u32 256, 88
    %2325 = vbcast.lane.b32.xlu0 %v2279, %s2324
    %v2326 = vpop.permute.xlu0 %2325
    %s2328 = sor.u32 256, 96
    %2329 = vbcast.lane.b32.xlu0 %v2279, %s2328
    %v2330 = vpop.permute.xlu0 %2329
    %s2332 = sor.u32 256, 104
    %2333 = vbcast.lane.b32.xlu0 %v2279, %s2332
    %v2334 = vpop.permute.xlu0 %2333
    %s2336 = sor.u32 256, 112
    %2337 = vbcast.lane.b32.xlu0 %v2279, %s2336
    %v2338 = vpop.permute.xlu0 %2337
    %s2340 = sor.u32 256, 120
    %2341 = vbcast.lane.b32.xlu0 %v2279, %s2340
    %v2342 = vpop.permute.xlu0 %2341
    %v2343 = vlaneseq
    %v2344 = vshrl.u32 %v2343, 7
    %v2345 = vsub.s32 3, %v2344
    %v2346 = vrot.slane %v1064, %v2345
    %2348 = vbcast.lane.b32.xlu0 %v2346, 256
    %v2349 = vpop.permute.xlu0 %2348
    %s2351 = sor.u32 256, 8
    %2352 = vbcast.lane.b32.xlu0 %v2346, %s2351
    %v2353 = vpop.permute.xlu0 %2352
    %s2355 = sor.u32 256, 16
    %2356 = vbcast.lane.b32.xlu0 %v2346, %s2355
    %v2357 = vpop.permute.xlu0 %2356
    %s2359 = sor.u32 256, 24
    %2360 = vbcast.lane.b32.xlu0 %v2346, %s2359
    %v2361 = vpop.permute.xlu0 %2360
    %s2363 = sor.u32 256, 32
    %2364 = vbcast.lane.b32.xlu0 %v2346, %s2363
    %v2365 = vpop.permute.xlu0 %2364
    %s2367 = sor.u32 256, 40
    %2368 = vbcast.lane.b32.xlu0 %v2346, %s2367
    %v2369 = vpop.permute.xlu0 %2368
    %s2371 = sor.u32 256, 48
    %2372 = vbcast.lane.b32.xlu0 %v2346, %s2371
    %v2373 = vpop.permute.xlu0 %2372
    %s2375 = sor.u32 256, 56
    %2376 = vbcast.lane.b32.xlu0 %v2346, %s2375
    %v2377 = vpop.permute.xlu0 %2376
    %s2379 = sor.u32 256, 64
    %2380 = vbcast.lane.b32.xlu0 %v2346, %s2379
    %v2381 = vpop.permute.xlu0 %2380
    %s2383 = sor.u32 256, 72
    %2384 = vbcast.lane.b32.xlu0 %v2346, %s2383
    %v2385 = vpop.permute.xlu0 %2384
    %s2387 = sor.u32 256, 80
    %2388 = vbcast.lane.b32.xlu0 %v2346, %s2387
    %v2389 = vpop.permute.xlu0 %2388
    %s2391 = sor.u32 256, 88
    %2392 = vbcast.lane.b32.xlu0 %v2346, %s2391
    %v2393 = vpop.permute.xlu0 %2392
    %s2395 = sor.u32 256, 96
    %2396 = vbcast.lane.b32.xlu0 %v2346, %s2395
    %v2397 = vpop.permute.xlu0 %2396
    %s2399 = sor.u32 256, 104
    %2400 = vbcast.lane.b32.xlu0 %v2346, %s2399
    %v2401 = vpop.permute.xlu0 %2400
    %s2403 = sor.u32 256, 112
    %2404 = vbcast.lane.b32.xlu0 %v2346, %s2403
    %v2405 = vpop.permute.xlu0 %2404
    %s2407 = sor.u32 256, 120
    %2408 = vbcast.lane.b32.xlu0 %v2346, %s2407
    %v2409 = vpop.permute.xlu0 %2408
    %v2410 = vlaneseq
    %v2411 = vshrl.u32 %v2410, 7
    %v2412 = vsub.s32 4, %v2411
    %v2413 = vrot.slane %v1064, %v2412
    %2415 = vbcast.lane.b32.xlu0 %v2413, 256
    %v2416 = vpop.permute.xlu0 %2415
    %s2418 = sor.u32 256, 8
    %2419 = vbcast.lane.b32.xlu0 %v2413, %s2418
    %v2420 = vpop.permute.xlu0 %2419
    %s2422 = sor.u32 256, 16
    %2423 = vbcast.lane.b32.xlu0 %v2413, %s2422
    %v2424 = vpop.permute.xlu0 %2423
    %s2426 = sor.u32 256, 24
    %2427 = vbcast.lane.b32.xlu0 %v2413, %s2426
    %v2428 = vpop.permute.xlu0 %2427
    %s2430 = sor.u32 256, 32
    %2431 = vbcast.lane.b32.xlu0 %v2413, %s2430
    %v2432 = vpop.permute.xlu0 %2431
    %s2434 = sor.u32 256, 40
    %2435 = vbcast.lane.b32.xlu0 %v2413, %s2434
    %v2436 = vpop.permute.xlu0 %2435
    %s2438 = sor.u32 256, 48
    %2439 = vbcast.lane.b32.xlu0 %v2413, %s2438
    %v2440 = vpop.permute.xlu0 %2439
    %s2442 = sor.u32 256, 56
    %2443 = vbcast.lane.b32.xlu0 %v2413, %s2442
    %v2444 = vpop.permute.xlu0 %2443
    %s2446 = sor.u32 256, 64
    %2447 = vbcast.lane.b32.xlu0 %v2413, %s2446
    %v2448 = vpop.permute.xlu0 %2447
    %s2450 = sor.u32 256, 72
    %2451 = vbcast.lane.b32.xlu0 %v2413, %s2450
    %v2452 = vpop.permute.xlu0 %2451
    %s2454 = sor.u32 256, 80
    %2455 = vbcast.lane.b32.xlu0 %v2413, %s2454
    %v2456 = vpop.permute.xlu0 %2455
    %s2458 = sor.u32 256, 88
    %2459 = vbcast.lane.b32.xlu0 %v2413, %s2458
    %v2460 = vpop.permute.xlu0 %2459
    %s2462 = sor.u32 256, 96
    %2463 = vbcast.lane.b32.xlu0 %v2413, %s2462
    %v2464 = vpop.permute.xlu0 %2463
    %s2466 = sor.u32 256, 104
    %2467 = vbcast.lane.b32.xlu0 %v2413, %s2466
    %v2468 = vpop.permute.xlu0 %2467
    %s2470 = sor.u32 256, 112
    %2471 = vbcast.lane.b32.xlu0 %v2413, %s2470
    %v2472 = vpop.permute.xlu0 %2471
    %s2474 = sor.u32 256, 120
    %2475 = vbcast.lane.b32.xlu0 %v2413, %s2474
    %v2476 = vpop.permute.xlu0 %2475
    %v2477 = vlaneseq
    %v2478 = vshrl.u32 %v2477, 7
    %v2479 = vsub.s32 5, %v2478
    %v2480 = vrot.slane %v1064, %v2479
    %2482 = vbcast.lane.b32.xlu0 %v2480, 256
    %v2483 = vpop.permute.xlu0 %2482
    %s2485 = sor.u32 256, 8
    %2486 = vbcast.lane.b32.xlu0 %v2480, %s2485
    %v2487 = vpop.permute.xlu0 %2486
    %s2489 = sor.u32 256, 16
    %2490 = vbcast.lane.b32.xlu0 %v2480, %s2489
    %v2491 = vpop.permute.xlu0 %2490
    %s2493 = sor.u32 256, 24
    %2494 = vbcast.lane.b32.xlu0 %v2480, %s2493
    %v2495 = vpop.permute.xlu0 %2494
    %s2497 = sor.u32 256, 32
    %2498 = vbcast.lane.b32.xlu0 %v2480, %s2497
    %v2499 = vpop.permute.xlu0 %2498
    %s2501 = sor.u32 256, 40
    %2502 = vbcast.lane.b32.xlu0 %v2480, %s2501
    %v2503 = vpop.permute.xlu0 %2502
    %s2505 = sor.u32 256, 48
    %2506 = vbcast.lane.b32.xlu0 %v2480, %s2505
    %v2507 = vpop.permute.xlu0 %2506
    %s2509 = sor.u32 256, 56
    %2510 = vbcast.lane.b32.xlu0 %v2480, %s2509
    %v2511 = vpop.permute.xlu0 %2510
    %s2513 = sor.u32 256, 64
    %2514 = vbcast.lane.b32.xlu0 %v2480, %s2513
    %v2515 = vpop.permute.xlu0 %2514
    %s2517 = sor.u32 256, 72
    %2518 = vbcast.lane.b32.xlu0 %v2480, %s2517
    %v2519 = vpop.permute.xlu0 %2518
    %s2521 = sor.u32 256, 80
    %2522 = vbcast.lane.b32.xlu0 %v2480, %s2521
    %v2523 = vpop.permute.xlu0 %2522
    %s2525 = sor.u32 256, 88
    %2526 = vbcast.lane.b32.xlu0 %v2480, %s2525
    %v2527 = vpop.permute.xlu0 %2526
    %s2529 = sor.u32 256, 96
    %2530 = vbcast.lane.b32.xlu0 %v2480, %s2529
    %v2531 = vpop.permute.xlu0 %2530
    %s2533 = sor.u32 256, 104
    %2534 = vbcast.lane.b32.xlu0 %v2480, %s2533
    %v2535 = vpop.permute.xlu0 %2534
    %s2537 = sor.u32 256, 112
    %2538 = vbcast.lane.b32.xlu0 %v2480, %s2537
    %v2539 = vpop.permute.xlu0 %2538
    %s2541 = sor.u32 256, 120
    %2542 = vbcast.lane.b32.xlu0 %v2480, %s2541
    %v2543 = vpop.permute.xlu0 %2542
    %v2544 = vlaneseq
    %v2545 = vshrl.u32 %v2544, 7
    %v2546 = vsub.s32 6, %v2545
    %v2547 = vrot.slane %v1064, %v2546
    %2549 = vbcast.lane.b32.xlu0 %v2547, 256
    %v2550 = vpop.permute.xlu0 %2549
    %s2552 = sor.u32 256, 8
    %2553 = vbcast.lane.b32.xlu0 %v2547, %s2552
    %v2554 = vpop.permute.xlu0 %2553
    %s2556 = sor.u32 256, 16
    %2557 = vbcast.lane.b32.xlu0 %v2547, %s2556
    %v2558 = vpop.permute.xlu0 %2557
    %s2560 = sor.u32 256, 24
    %2561 = vbcast.lane.b32.xlu0 %v2547, %s2560
    %v2562 = vpop.permute.xlu0 %2561
    %s2564 = sor.u32 256, 32
    %2565 = vbcast.lane.b32.xlu0 %v2547, %s2564
    %v2566 = vpop.permute.xlu0 %2565
    %s2568 = sor.u32 256, 40
    %2569 = vbcast.lane.b32.xlu0 %v2547, %s2568
    %v2570 = vpop.permute.xlu0 %2569
    %s2572 = sor.u32 256, 48
    %2573 = vbcast.lane.b32.xlu0 %v2547, %s2572
    %v2574 = vpop.permute.xlu0 %2573
    %s2576 = sor.u32 256, 56
    %2577 = vbcast.lane.b32.xlu0 %v2547, %s2576
    %v2578 = vpop.permute.xlu0 %2577
    %s2580 = sor.u32 256, 64
    %2581 = vbcast.lane.b32.xlu0 %v2547, %s2580
    %v2582 = vpop.permute.xlu0 %2581
    %s2584 = sor.u32 256, 72
    %2585 = vbcast.lane.b32.xlu0 %v2547, %s2584
    %v2586 = vpop.permute.xlu0 %2585
    %s2588 = sor.u32 256, 80
    %2589 = vbcast.lane.b32.xlu0 %v2547, %s2588
    %v2590 = vpop.permute.xlu0 %2589
    %s2592 = sor.u32 256, 88
    %2593 = vbcast.lane.b32.xlu0 %v2547, %s2592
    %v2594 = vpop.permute.xlu0 %2593
    %s2596 = sor.u32 256, 96
    %2597 = vbcast.lane.b32.xlu0 %v2547, %s2596
    %v2598 = vpop.permute.xlu0 %2597
    %s2600 = sor.u32 256, 104
    %2601 = vbcast.lane.b32.xlu0 %v2547, %s2600
    %v2602 = vpop.permute.xlu0 %2601
    %s2604 = sor.u32 256, 112
    %2605 = vbcast.lane.b32.xlu0 %v2547, %s2604
    %v2606 = vpop.permute.xlu0 %2605
    %s2608 = sor.u32 256, 120
    %2609 = vbcast.lane.b32.xlu0 %v2547, %s2608
    %v2610 = vpop.permute.xlu0 %2609
    %v2611 = vlaneseq
    %v2612 = vshrl.u32 %v2611, 7
    %v2613 = vsub.s32 7, %v2612
    %v2614 = vrot.slane %v1064, %v2613
    %2616 = vbcast.lane.b32.xlu0 %v2614, 256
    %v2617 = vpop.permute.xlu0 %2616
    %s2619 = sor.u32 256, 8
    %2620 = vbcast.lane.b32.xlu0 %v2614, %s2619
    %v2621 = vpop.permute.xlu0 %2620
    %s2623 = sor.u32 256, 16
    %2624 = vbcast.lane.b32.xlu0 %v2614, %s2623
    %v2625 = vpop.permute.xlu0 %2624
    %s2627 = sor.u32 256, 24
    %2628 = vbcast.lane.b32.xlu0 %v2614, %s2627
    %v2629 = vpop.permute.xlu0 %2628
    %s2631 = sor.u32 256, 32
    %2632 = vbcast.lane.b32.xlu0 %v2614, %s2631
    %v2633 = vpop.permute.xlu0 %2632
    %s2635 = sor.u32 256, 40
    %2636 = vbcast.lane.b32.xlu0 %v2614, %s2635
    %v2637 = vpop.permute.xlu0 %2636
    %s2639 = sor.u32 256, 48
    %2640 = vbcast.lane.b32.xlu0 %v2614, %s2639
    %v2641 = vpop.permute.xlu0 %2640
    %s2643 = sor.u32 256, 56
    %2644 = vbcast.lane.b32.xlu0 %v2614, %s2643
    %v2645 = vpop.permute.xlu0 %2644
    %s2647 = sor.u32 256, 64
    %2648 = vbcast.lane.b32.xlu0 %v2614, %s2647
    %v2649 = vpop.permute.xlu0 %2648
    %s2651 = sor.u32 256, 72
    %2652 = vbcast.lane.b32.xlu0 %v2614, %s2651
    %v2653 = vpop.permute.xlu0 %2652
    %s2655 = sor.u32 256, 80
    %2656 = vbcast.lane.b32.xlu0 %v2614, %s2655
    %v2657 = vpop.permute.xlu0 %2656
    %s2659 = sor.u32 256, 88
    %2660 = vbcast.lane.b32.xlu0 %v2614, %s2659
    %v2661 = vpop.permute.xlu0 %2660
    %s2663 = sor.u32 256, 96
    %2664 = vbcast.lane.b32.xlu0 %v2614, %s2663
    %v2665 = vpop.permute.xlu0 %2664
    %s2667 = sor.u32 256, 104
    %2668 = vbcast.lane.b32.xlu0 %v2614, %s2667
    %v2669 = vpop.permute.xlu0 %2668
    %s2671 = sor.u32 256, 112
    %2672 = vbcast.lane.b32.xlu0 %v2614, %s2671
    %v2673 = vpop.permute.xlu0 %2672
    %s2675 = sor.u32 256, 120
    %2676 = vbcast.lane.b32.xlu0 %v2614, %s2675
    %v2677 = vpop.permute.xlu0 %2676
    %v2678 = vlaneseq
    %v2679 = vshrl.u32 %v2678, 7
    %v2680 = vsub.s32 0, %v2679
    %v2681 = vrot.slane %v1065, %v2680
    %2683 = vbcast.lane.b32.xlu0 %v2681, 256
    %v2684 = vpop.permute.xlu0 %2683
    %s2686 = sor.u32 256, 8
    %2687 = vbcast.lane.b32.xlu0 %v2681, %s2686
    %v2688 = vpop.permute.xlu0 %2687
    %s2690 = sor.u32 256, 16
    %2691 = vbcast.lane.b32.xlu0 %v2681, %s2690
    %v2692 = vpop.permute.xlu0 %2691
    %s2694 = sor.u32 256, 24
    %2695 = vbcast.lane.b32.xlu0 %v2681, %s2694
    %v2696 = vpop.permute.xlu0 %2695
    %s2698 = sor.u32 256, 32
    %2699 = vbcast.lane.b32.xlu0 %v2681, %s2698
    %v2700 = vpop.permute.xlu0 %2699
    %s2702 = sor.u32 256, 40
    %2703 = vbcast.lane.b32.xlu0 %v2681, %s2702
    %v2704 = vpop.permute.xlu0 %2703
    %s2706 = sor.u32 256, 48
    %2707 = vbcast.lane.b32.xlu0 %v2681, %s2706
    %v2708 = vpop.permute.xlu0 %2707
    %s2710 = sor.u32 256, 56
    %2711 = vbcast.lane.b32.xlu0 %v2681, %s2710
    %v2712 = vpop.permute.xlu0 %2711
    %s2714 = sor.u32 256, 64
    %2715 = vbcast.lane.b32.xlu0 %v2681, %s2714
    %v2716 = vpop.permute.xlu0 %2715
    %s2718 = sor.u32 256, 72
    %2719 = vbcast.lane.b32.xlu0 %v2681, %s2718
    %v2720 = vpop.permute.xlu0 %2719
    %s2722 = sor.u32 256, 80
    %2723 = vbcast.lane.b32.xlu0 %v2681, %s2722
    %v2724 = vpop.permute.xlu0 %2723
    %s2726 = sor.u32 256, 88
    %2727 = vbcast.lane.b32.xlu0 %v2681, %s2726
    %v2728 = vpop.permute.xlu0 %2727
    %s2730 = sor.u32 256, 96
    %2731 = vbcast.lane.b32.xlu0 %v2681, %s2730
    %v2732 = vpop.permute.xlu0 %2731
    %s2734 = sor.u32 256, 104
    %2735 = vbcast.lane.b32.xlu0 %v2681, %s2734
    %v2736 = vpop.permute.xlu0 %2735
    %s2738 = sor.u32 256, 112
    %2739 = vbcast.lane.b32.xlu0 %v2681, %s2738
    %v2740 = vpop.permute.xlu0 %2739
    %s2742 = sor.u32 256, 120
    %2743 = vbcast.lane.b32.xlu0 %v2681, %s2742
    %v2744 = vpop.permute.xlu0 %2743
    %v2745 = vlaneseq
    %v2746 = vshrl.u32 %v2745, 7
    %v2747 = vsub.s32 1, %v2746
    %v2748 = vrot.slane %v1065, %v2747
    %2750 = vbcast.lane.b32.xlu0 %v2748, 256
    %v2751 = vpop.permute.xlu0 %2750
    %s2753 = sor.u32 256, 8
    %2754 = vbcast.lane.b32.xlu0 %v2748, %s2753
    %v2755 = vpop.permute.xlu0 %2754
    %s2757 = sor.u32 256, 16
    %2758 = vbcast.lane.b32.xlu0 %v2748, %s2757
    %v2759 = vpop.permute.xlu0 %2758
    %s2761 = sor.u32 256, 24
    %2762 = vbcast.lane.b32.xlu0 %v2748, %s2761
    %v2763 = vpop.permute.xlu0 %2762
    %s2765 = sor.u32 256, 32
    %2766 = vbcast.lane.b32.xlu0 %v2748, %s2765
    %v2767 = vpop.permute.xlu0 %2766
    %s2769 = sor.u32 256, 40
    %2770 = vbcast.lane.b32.xlu0 %v2748, %s2769
    %v2771 = vpop.permute.xlu0 %2770
    %s2773 = sor.u32 256, 48
    %2774 = vbcast.lane.b32.xlu0 %v2748, %s2773
    %v2775 = vpop.permute.xlu0 %2774
    %s2777 = sor.u32 256, 56
    %2778 = vbcast.lane.b32.xlu0 %v2748, %s2777
    %v2779 = vpop.permute.xlu0 %2778
    %s2781 = sor.u32 256, 64
    %2782 = vbcast.lane.b32.xlu0 %v2748, %s2781
    %v2783 = vpop.permute.xlu0 %2782
    %s2785 = sor.u32 256, 72
    %2786 = vbcast.lane.b32.xlu0 %v2748, %s2785
    %v2787 = vpop.permute.xlu0 %2786
    %s2789 = sor.u32 256, 80
    %2790 = vbcast.lane.b32.xlu0 %v2748, %s2789
    %v2791 = vpop.permute.xlu0 %2790
    %s2793 = sor.u32 256, 88
    %2794 = vbcast.lane.b32.xlu0 %v2748, %s2793
    %v2795 = vpop.permute.xlu0 %2794
    %s2797 = sor.u32 256, 96
    %2798 = vbcast.lane.b32.xlu0 %v2748, %s2797
    %v2799 = vpop.permute.xlu0 %2798
    %s2801 = sor.u32 256, 104
    %2802 = vbcast.lane.b32.xlu0 %v2748, %s2801
    %v2803 = vpop.permute.xlu0 %2802
    %s2805 = sor.u32 256, 112
    %2806 = vbcast.lane.b32.xlu0 %v2748, %s2805
    %v2807 = vpop.permute.xlu0 %2806
    %s2809 = sor.u32 256, 120
    %2810 = vbcast.lane.b32.xlu0 %v2748, %s2809
    %v2811 = vpop.permute.xlu0 %2810
    %v2812 = vlaneseq
    %v2813 = vshrl.u32 %v2812, 7
    %v2814 = vsub.s32 2, %v2813
    %v2815 = vrot.slane %v1065, %v2814
    %2817 = vbcast.lane.b32.xlu0 %v2815, 256
    %v2818 = vpop.permute.xlu0 %2817
    %s2820 = sor.u32 256, 8
    %2821 = vbcast.lane.b32.xlu0 %v2815, %s2820
    %v2822 = vpop.permute.xlu0 %2821
    %s2824 = sor.u32 256, 16
    %2825 = vbcast.lane.b32.xlu0 %v2815, %s2824
    %v2826 = vpop.permute.xlu0 %2825
    %s2828 = sor.u32 256, 24
    %2829 = vbcast.lane.b32.xlu0 %v2815, %s2828
    %v2830 = vpop.permute.xlu0 %2829
    %s2832 = sor.u32 256, 32
    %2833 = vbcast.lane.b32.xlu0 %v2815, %s2832
    %v2834 = vpop.permute.xlu0 %2833
    %s2836 = sor.u32 256, 40
    %2837 = vbcast.lane.b32.xlu0 %v2815, %s2836
    %v2838 = vpop.permute.xlu0 %2837
    %s2840 = sor.u32 256, 48
    %2841 = vbcast.lane.b32.xlu0 %v2815, %s2840
    %v2842 = vpop.permute.xlu0 %2841
    %s2844 = sor.u32 256, 56
    %2845 = vbcast.lane.b32.xlu0 %v2815, %s2844
    %v2846 = vpop.permute.xlu0 %2845
    %s2848 = sor.u32 256, 64
    %2849 = vbcast.lane.b32.xlu0 %v2815, %s2848
    %v2850 = vpop.permute.xlu0 %2849
    %s2852 = sor.u32 256, 72
    %2853 = vbcast.lane.b32.xlu0 %v2815, %s2852
    %v2854 = vpop.permute.xlu0 %2853
    %s2856 = sor.u32 256, 80
    %2857 = vbcast.lane.b32.xlu0 %v2815, %s2856
    %v2858 = vpop.permute.xlu0 %2857
    %s2860 = sor.u32 256, 88
    %2861 = vbcast.lane.b32.xlu0 %v2815, %s2860
    %v2862 = vpop.permute.xlu0 %2861
    %s2864 = sor.u32 256, 96
    %2865 = vbcast.lane.b32.xlu0 %v2815, %s2864
    %v2866 = vpop.permute.xlu0 %2865
    %s2868 = sor.u32 256, 104
    %2869 = vbcast.lane.b32.xlu0 %v2815, %s2868
    %v2870 = vpop.permute.xlu0 %2869
    %s2872 = sor.u32 256, 112
    %2873 = vbcast.lane.b32.xlu0 %v2815, %s2872
    %v2874 = vpop.permute.xlu0 %2873
    %s2876 = sor.u32 256, 120
    %2877 = vbcast.lane.b32.xlu0 %v2815, %s2876
    %v2878 = vpop.permute.xlu0 %2877
    %v2879 = vlaneseq
    %v2880 = vshrl.u32 %v2879, 7
    %v2881 = vsub.s32 3, %v2880
    %v2882 = vrot.slane %v1065, %v2881
    %2884 = vbcast.lane.b32.xlu0 %v2882, 256
    %v2885 = vpop.permute.xlu0 %2884
    %s2887 = sor.u32 256, 8
    %2888 = vbcast.lane.b32.xlu0 %v2882, %s2887
    %v2889 = vpop.permute.xlu0 %2888
    %s2891 = sor.u32 256, 16
    %2892 = vbcast.lane.b32.xlu0 %v2882, %s2891
    %v2893 = vpop.permute.xlu0 %2892
    %s2895 = sor.u32 256, 24
    %2896 = vbcast.lane.b32.xlu0 %v2882, %s2895
    %v2897 = vpop.permute.xlu0 %2896
    %s2899 = sor.u32 256, 32
    %2900 = vbcast.lane.b32.xlu0 %v2882, %s2899
    %v2901 = vpop.permute.xlu0 %2900
    %s2903 = sor.u32 256, 40
    %2904 = vbcast.lane.b32.xlu0 %v2882, %s2903
    %v2905 = vpop.permute.xlu0 %2904
    %s2907 = sor.u32 256, 48
    %2908 = vbcast.lane.b32.xlu0 %v2882, %s2907
    %v2909 = vpop.permute.xlu0 %2908
    %s2911 = sor.u32 256, 56
    %2912 = vbcast.lane.b32.xlu0 %v2882, %s2911
    %v2913 = vpop.permute.xlu0 %2912
    %s2915 = sor.u32 256, 64
    %2916 = vbcast.lane.b32.xlu0 %v2882, %s2915
    %v2917 = vpop.permute.xlu0 %2916
    %s2919 = sor.u32 256, 72
    %2920 = vbcast.lane.b32.xlu0 %v2882, %s2919
    %v2921 = vpop.permute.xlu0 %2920
    %s2923 = sor.u32 256, 80
    %2924 = vbcast.lane.b32.xlu0 %v2882, %s2923
    %v2925 = vpop.permute.xlu0 %2924
    %s2927 = sor.u32 256, 88
    %2928 = vbcast.lane.b32.xlu0 %v2882, %s2927
    %v2929 = vpop.permute.xlu0 %2928
    %s2931 = sor.u32 256, 96
    %2932 = vbcast.lane.b32.xlu0 %v2882, %s2931
    %v2933 = vpop.permute.xlu0 %2932
    %s2935 = sor.u32 256, 104
    %2936 = vbcast.lane.b32.xlu0 %v2882, %s2935
    %v2937 = vpop.permute.xlu0 %2936
    %s2939 = sor.u32 256, 112
    %2940 = vbcast.lane.b32.xlu0 %v2882, %s2939
    %v2941 = vpop.permute.xlu0 %2940
    %s2943 = sor.u32 256, 120
    %2944 = vbcast.lane.b32.xlu0 %v2882, %s2943
    %v2945 = vpop.permute.xlu0 %2944
    %v2946 = vlaneseq
    %v2947 = vshrl.u32 %v2946, 7
    %v2948 = vsub.s32 4, %v2947
    %v2949 = vrot.slane %v1065, %v2948
    %2951 = vbcast.lane.b32.xlu0 %v2949, 256
    %v2952 = vpop.permute.xlu0 %2951
    %s2954 = sor.u32 256, 8
    %2955 = vbcast.lane.b32.xlu0 %v2949, %s2954
    %v2956 = vpop.permute.xlu0 %2955
    %s2958 = sor.u32 256, 16
    %2959 = vbcast.lane.b32.xlu0 %v2949, %s2958
    %v2960 = vpop.permute.xlu0 %2959
    %s2962 = sor.u32 256, 24
    %2963 = vbcast.lane.b32.xlu0 %v2949, %s2962
    %v2964 = vpop.permute.xlu0 %2963
    %s2966 = sor.u32 256, 32
    %2967 = vbcast.lane.b32.xlu0 %v2949, %s2966
    %v2968 = vpop.permute.xlu0 %2967
    %s2970 = sor.u32 256, 40
    %2971 = vbcast.lane.b32.xlu0 %v2949, %s2970
    %v2972 = vpop.permute.xlu0 %2971
    %s2974 = sor.u32 256, 48
    %2975 = vbcast.lane.b32.xlu0 %v2949, %s2974
    %v2976 = vpop.permute.xlu0 %2975
    %s2978 = sor.u32 256, 56
    %2979 = vbcast.lane.b32.xlu0 %v2949, %s2978
    %v2980 = vpop.permute.xlu0 %2979
    %s2982 = sor.u32 256, 64
    %2983 = vbcast.lane.b32.xlu0 %v2949, %s2982
    %v2984 = vpop.permute.xlu0 %2983
    %s2986 = sor.u32 256, 72
    %2987 = vbcast.lane.b32.xlu0 %v2949, %s2986
    %v2988 = vpop.permute.xlu0 %2987
    %s2990 = sor.u32 256, 80
    %2991 = vbcast.lane.b32.xlu0 %v2949, %s2990
    %v2992 = vpop.permute.xlu0 %2991
    %s2994 = sor.u32 256, 88
    %2995 = vbcast.lane.b32.xlu0 %v2949, %s2994
    %v2996 = vpop.permute.xlu0 %2995
    %s2998 = sor.u32 256, 96
    %2999 = vbcast.lane.b32.xlu0 %v2949, %s2998
    %v3000 = vpop.permute.xlu0 %2999
    %s3002 = sor.u32 256, 104
    %3003 = vbcast.lane.b32.xlu0 %v2949, %s3002
    %v3004 = vpop.permute.xlu0 %3003
    %s3006 = sor.u32 256, 112
    %3007 = vbcast.lane.b32.xlu0 %v2949, %s3006
    %v3008 = vpop.permute.xlu0 %3007
    %s3010 = sor.u32 256, 120
    %3011 = vbcast.lane.b32.xlu0 %v2949, %s3010
    %v3012 = vpop.permute.xlu0 %3011
    %v3013 = vlaneseq
    %v3014 = vshrl.u32 %v3013, 7
    %v3015 = vsub.s32 5, %v3014
    %v3016 = vrot.slane %v1065, %v3015
    %3018 = vbcast.lane.b32.xlu0 %v3016, 256
    %v3019 = vpop.permute.xlu0 %3018
    %s3021 = sor.u32 256, 8
    %3022 = vbcast.lane.b32.xlu0 %v3016, %s3021
    %v3023 = vpop.permute.xlu0 %3022
    %s3025 = sor.u32 256, 16
    %3026 = vbcast.lane.b32.xlu0 %v3016, %s3025
    %v3027 = vpop.permute.xlu0 %3026
    %s3029 = sor.u32 256, 24
    %3030 = vbcast.lane.b32.xlu0 %v3016, %s3029
    %v3031 = vpop.permute.xlu0 %3030
    %s3033 = sor.u32 256, 32
    %3034 = vbcast.lane.b32.xlu0 %v3016, %s3033
    %v3035 = vpop.permute.xlu0 %3034
    %s3037 = sor.u32 256, 40
    %3038 = vbcast.lane.b32.xlu0 %v3016, %s3037
    %v3039 = vpop.permute.xlu0 %3038
    %s3041 = sor.u32 256, 48
    %3042 = vbcast.lane.b32.xlu0 %v3016, %s3041
    %v3043 = vpop.permute.xlu0 %3042
    %s3045 = sor.u32 256, 56
    %3046 = vbcast.lane.b32.xlu0 %v3016, %s3045
    %v3047 = vpop.permute.xlu0 %3046
    %s3049 = sor.u32 256, 64
    %3050 = vbcast.lane.b32.xlu0 %v3016, %s3049
    %v3051 = vpop.permute.xlu0 %3050
    %s3053 = sor.u32 256, 72
    %3054 = vbcast.lane.b32.xlu0 %v3016, %s3053
    %v3055 = vpop.permute.xlu0 %3054
    %s3057 = sor.u32 256, 80
    %3058 = vbcast.lane.b32.xlu0 %v3016, %s3057
    %v3059 = vpop.permute.xlu0 %3058
    %s3061 = sor.u32 256, 88
    %3062 = vbcast.lane.b32.xlu0 %v3016, %s3061
    %v3063 = vpop.permute.xlu0 %3062
    %s3065 = sor.u32 256, 96
    %3066 = vbcast.lane.b32.xlu0 %v3016, %s3065
    %v3067 = vpop.permute.xlu0 %3066
    %s3069 = sor.u32 256, 104
    %3070 = vbcast.lane.b32.xlu0 %v3016, %s3069
    %v3071 = vpop.permute.xlu0 %3070
    %s3073 = sor.u32 256, 112
    %3074 = vbcast.lane.b32.xlu0 %v3016, %s3073
    %v3075 = vpop.permute.xlu0 %3074
    %s3077 = sor.u32 256, 120
    %3078 = vbcast.lane.b32.xlu0 %v3016, %s3077
    %v3079 = vpop.permute.xlu0 %3078
    %v3080 = vlaneseq
    %v3081 = vshrl.u32 %v3080, 7
    %v3082 = vsub.s32 6, %v3081
    %v3083 = vrot.slane %v1065, %v3082
    %3085 = vbcast.lane.b32.xlu0 %v3083, 256
    %v3086 = vpop.permute.xlu0 %3085
    %s3088 = sor.u32 256, 8
    %3089 = vbcast.lane.b32.xlu0 %v3083, %s3088
    %v3090 = vpop.permute.xlu0 %3089
    %s3092 = sor.u32 256, 16
    %3093 = vbcast.lane.b32.xlu0 %v3083, %s3092
    %v3094 = vpop.permute.xlu0 %3093
    %s3096 = sor.u32 256, 24
    %3097 = vbcast.lane.b32.xlu0 %v3083, %s3096
    %v3098 = vpop.permute.xlu0 %3097
    %s3100 = sor.u32 256, 32
    %3101 = vbcast.lane.b32.xlu0 %v3083, %s3100
    %v3102 = vpop.permute.xlu0 %3101
    %s3104 = sor.u32 256, 40
    %3105 = vbcast.lane.b32.xlu0 %v3083, %s3104
    %v3106 = vpop.permute.xlu0 %3105
    %s3108 = sor.u32 256, 48
    %3109 = vbcast.lane.b32.xlu0 %v3083, %s3108
    %v3110 = vpop.permute.xlu0 %3109
    %s3112 = sor.u32 256, 56
    %3113 = vbcast.lane.b32.xlu0 %v3083, %s3112
    %v3114 = vpop.permute.xlu0 %3113
    %s3116 = sor.u32 256, 64
    %3117 = vbcast.lane.b32.xlu0 %v3083, %s3116
    %v3118 = vpop.permute.xlu0 %3117
    %s3120 = sor.u32 256, 72
    %3121 = vbcast.lane.b32.xlu0 %v3083, %s3120
    %v3122 = vpop.permute.xlu0 %3121
    %s3124 = sor.u32 256, 80
    %3125 = vbcast.lane.b32.xlu0 %v3083, %s3124
    %v3126 = vpop.permute.xlu0 %3125
    %s3128 = sor.u32 256, 88
    %3129 = vbcast.lane.b32.xlu0 %v3083, %s3128
    %v3130 = vpop.permute.xlu0 %3129
    %s3132 = sor.u32 256, 96
    %3133 = vbcast.lane.b32.xlu0 %v3083, %s3132
    %v3134 = vpop.permute.xlu0 %3133
    %s3136 = sor.u32 256, 104
    %3137 = vbcast.lane.b32.xlu0 %v3083, %s3136
    %v3138 = vpop.permute.xlu0 %3137
    %s3140 = sor.u32 256, 112
    %3141 = vbcast.lane.b32.xlu0 %v3083, %s3140
    %v3142 = vpop.permute.xlu0 %3141
    %s3144 = sor.u32 256, 120
    %3145 = vbcast.lane.b32.xlu0 %v3083, %s3144
    %v3146 = vpop.permute.xlu0 %3145
    %v3147 = vlaneseq
    %v3148 = vshrl.u32 %v3147, 7
    %v3149 = vsub.s32 7, %v3148
    %v3150 = vrot.slane %v1065, %v3149
    %3152 = vbcast.lane.b32.xlu0 %v3150, 256
    %v3153 = vpop.permute.xlu0 %3152
    %s3155 = sor.u32 256, 8
    %3156 = vbcast.lane.b32.xlu0 %v3150, %s3155
    %v3157 = vpop.permute.xlu0 %3156
    %s3159 = sor.u32 256, 16
    %3160 = vbcast.lane.b32.xlu0 %v3150, %s3159
    %v3161 = vpop.permute.xlu0 %3160
    %s3163 = sor.u32 256, 24
    %3164 = vbcast.lane.b32.xlu0 %v3150, %s3163
    %v3165 = vpop.permute.xlu0 %3164
    %s3167 = sor.u32 256, 32
    %3168 = vbcast.lane.b32.xlu0 %v3150, %s3167
    %v3169 = vpop.permute.xlu0 %3168
    %s3171 = sor.u32 256, 40
    %3172 = vbcast.lane.b32.xlu0 %v3150, %s3171
    %v3173 = vpop.permute.xlu0 %3172
    %s3175 = sor.u32 256, 48
    %3176 = vbcast.lane.b32.xlu0 %v3150, %s3175
    %v3177 = vpop.permute.xlu0 %3176
    %s3179 = sor.u32 256, 56
    %3180 = vbcast.lane.b32.xlu0 %v3150, %s3179
    %v3181 = vpop.permute.xlu0 %3180
    %s3183 = sor.u32 256, 64
    %3184 = vbcast.lane.b32.xlu0 %v3150, %s3183
    %v3185 = vpop.permute.xlu0 %3184
    %s3187 = sor.u32 256, 72
    %3188 = vbcast.lane.b32.xlu0 %v3150, %s3187
    %v3189 = vpop.permute.xlu0 %3188
    %s3191 = sor.u32 256, 80
    %3192 = vbcast.lane.b32.xlu0 %v3150, %s3191
    %v3193 = vpop.permute.xlu0 %3192
    %s3195 = sor.u32 256, 88
    %3196 = vbcast.lane.b32.xlu0 %v3150, %s3195
    %v3197 = vpop.permute.xlu0 %3196
    %s3199 = sor.u32 256, 96
    %3200 = vbcast.lane.b32.xlu0 %v3150, %s3199
    %v3201 = vpop.permute.xlu0 %3200
    %s3203 = sor.u32 256, 104
    %3204 = vbcast.lane.b32.xlu0 %v3150, %s3203
    %v3205 = vpop.permute.xlu0 %3204
    %s3207 = sor.u32 256, 112
    %3208 = vbcast.lane.b32.xlu0 %v3150, %s3207
    %v3209 = vpop.permute.xlu0 %3208
    %s3211 = sor.u32 256, 120
    %3212 = vbcast.lane.b32.xlu0 %v3150, %s3211
    %v3213 = vpop.permute.xlu0 %3212
    %v3214 = vlaneseq
    %v3215 = vshrl.u32 %v3214, 7
    %v3216 = vsub.s32 0, %v3215
    %v3217 = vrot.slane %v1066, %v3216
    %3219 = vbcast.lane.b32.xlu0 %v3217, 256
    %v3220 = vpop.permute.xlu0 %3219
    %s3222 = sor.u32 256, 8
    %3223 = vbcast.lane.b32.xlu0 %v3217, %s3222
    %v3224 = vpop.permute.xlu0 %3223
    %s3226 = sor.u32 256, 16
    %3227 = vbcast.lane.b32.xlu0 %v3217, %s3226
    %v3228 = vpop.permute.xlu0 %3227
    %s3230 = sor.u32 256, 24
    %3231 = vbcast.lane.b32.xlu0 %v3217, %s3230
    %v3232 = vpop.permute.xlu0 %3231
    %s3234 = sor.u32 256, 32
    %3235 = vbcast.lane.b32.xlu0 %v3217, %s3234
    %v3236 = vpop.permute.xlu0 %3235
    %s3238 = sor.u32 256, 40
    %3239 = vbcast.lane.b32.xlu0 %v3217, %s3238
    %v3240 = vpop.permute.xlu0 %3239
    %s3242 = sor.u32 256, 48
    %3243 = vbcast.lane.b32.xlu0 %v3217, %s3242
    %v3244 = vpop.permute.xlu0 %3243
    %s3246 = sor.u32 256, 56
    %3247 = vbcast.lane.b32.xlu0 %v3217, %s3246
    %v3248 = vpop.permute.xlu0 %3247
    %s3250 = sor.u32 256, 64
    %3251 = vbcast.lane.b32.xlu0 %v3217, %s3250
    %v3252 = vpop.permute.xlu0 %3251
    %s3254 = sor.u32 256, 72
    %3255 = vbcast.lane.b32.xlu0 %v3217, %s3254
    %v3256 = vpop.permute.xlu0 %3255
    %s3258 = sor.u32 256, 80
    %3259 = vbcast.lane.b32.xlu0 %v3217, %s3258
    %v3260 = vpop.permute.xlu0 %3259
    %s3262 = sor.u32 256, 88
    %3263 = vbcast.lane.b32.xlu0 %v3217, %s3262
    %v3264 = vpop.permute.xlu0 %3263
    %s3266 = sor.u32 256, 96
    %3267 = vbcast.lane.b32.xlu0 %v3217, %s3266
    %v3268 = vpop.permute.xlu0 %3267
    %s3270 = sor.u32 256, 104
    %3271 = vbcast.lane.b32.xlu0 %v3217, %s3270
    %v3272 = vpop.permute.xlu0 %3271
    %s3274 = sor.u32 256, 112
    %3275 = vbcast.lane.b32.xlu0 %v3217, %s3274
    %v3276 = vpop.permute.xlu0 %3275
    %s3278 = sor.u32 256, 120
    %3279 = vbcast.lane.b32.xlu0 %v3217, %s3278
    %v3280 = vpop.permute.xlu0 %3279
    %v3281 = vlaneseq
    %v3282 = vshrl.u32 %v3281, 7
    %v3283 = vsub.s32 1, %v3282
    %v3284 = vrot.slane %v1066, %v3283
    %3286 = vbcast.lane.b32.xlu0 %v3284, 256
    %v3287 = vpop.permute.xlu0 %3286
    %s3289 = sor.u32 256, 8
    %3290 = vbcast.lane.b32.xlu0 %v3284, %s3289
    %v3291 = vpop.permute.xlu0 %3290
    %s3293 = sor.u32 256, 16
    %3294 = vbcast.lane.b32.xlu0 %v3284, %s3293
    %v3295 = vpop.permute.xlu0 %3294
    %s3297 = sor.u32 256, 24
    %3298 = vbcast.lane.b32.xlu0 %v3284, %s3297
    %v3299 = vpop.permute.xlu0 %3298
    %s3301 = sor.u32 256, 32
    %3302 = vbcast.lane.b32.xlu0 %v3284, %s3301
    %v3303 = vpop.permute.xlu0 %3302
    %s3305 = sor.u32 256, 40
    %3306 = vbcast.lane.b32.xlu0 %v3284, %s3305
    %v3307 = vpop.permute.xlu0 %3306
    %s3309 = sor.u32 256, 48
    %3310 = vbcast.lane.b32.xlu0 %v3284, %s3309
    %v3311 = vpop.permute.xlu0 %3310
    %s3313 = sor.u32 256, 56
    %3314 = vbcast.lane.b32.xlu0 %v3284, %s3313
    %v3315 = vpop.permute.xlu0 %3314
    %s3317 = sor.u32 256, 64
    %3318 = vbcast.lane.b32.xlu0 %v3284, %s3317
    %v3319 = vpop.permute.xlu0 %3318
    %s3321 = sor.u32 256, 72
    %3322 = vbcast.lane.b32.xlu0 %v3284, %s3321
    %v3323 = vpop.permute.xlu0 %3322
    %s3325 = sor.u32 256, 80
    %3326 = vbcast.lane.b32.xlu0 %v3284, %s3325
    %v3327 = vpop.permute.xlu0 %3326
    %s3329 = sor.u32 256, 88
    %3330 = vbcast.lane.b32.xlu0 %v3284, %s3329
    %v3331 = vpop.permute.xlu0 %3330
    %s3333 = sor.u32 256, 96
    %3334 = vbcast.lane.b32.xlu0 %v3284, %s3333
    %v3335 = vpop.permute.xlu0 %3334
    %s3337 = sor.u32 256, 104
    %3338 = vbcast.lane.b32.xlu0 %v3284, %s3337
    %v3339 = vpop.permute.xlu0 %3338
    %s3341 = sor.u32 256, 112
    %3342 = vbcast.lane.b32.xlu0 %v3284, %s3341
    %v3343 = vpop.permute.xlu0 %3342
    %s3345 = sor.u32 256, 120
    %3346 = vbcast.lane.b32.xlu0 %v3284, %s3345
    %v3347 = vpop.permute.xlu0 %3346
    %v3348 = vlaneseq
    %v3349 = vshrl.u32 %v3348, 7
    %v3350 = vsub.s32 2, %v3349
    %v3351 = vrot.slane %v1066, %v3350
    %3353 = vbcast.lane.b32.xlu0 %v3351, 256
    %v3354 = vpop.permute.xlu0 %3353
    %s3356 = sor.u32 256, 8
    %3357 = vbcast.lane.b32.xlu0 %v3351, %s3356
    %v3358 = vpop.permute.xlu0 %3357
    %s3360 = sor.u32 256, 16
    %3361 = vbcast.lane.b32.xlu0 %v3351, %s3360
    %v3362 = vpop.permute.xlu0 %3361
    %s3364 = sor.u32 256, 24
    %3365 = vbcast.lane.b32.xlu0 %v3351, %s3364
    %v3366 = vpop.permute.xlu0 %3365
    %s3368 = sor.u32 256, 32
    %3369 = vbcast.lane.b32.xlu0 %v3351, %s3368
    %v3370 = vpop.permute.xlu0 %3369
    %s3372 = sor.u32 256, 40
    %3373 = vbcast.lane.b32.xlu0 %v3351, %s3372
    %v3374 = vpop.permute.xlu0 %3373
    %s3376 = sor.u32 256, 48
    %3377 = vbcast.lane.b32.xlu0 %v3351, %s3376
    %v3378 = vpop.permute.xlu0 %3377
    %s3380 = sor.u32 256, 56
    %3381 = vbcast.lane.b32.xlu0 %v3351, %s3380
    %v3382 = vpop.permute.xlu0 %3381
    %s3384 = sor.u32 256, 64
    %3385 = vbcast.lane.b32.xlu0 %v3351, %s3384
    %v3386 = vpop.permute.xlu0 %3385
    %s3388 = sor.u32 256, 72
    %3389 = vbcast.lane.b32.xlu0 %v3351, %s3388
    %v3390 = vpop.permute.xlu0 %3389
    %s3392 = sor.u32 256, 80
    %3393 = vbcast.lane.b32.xlu0 %v3351, %s3392
    %v3394 = vpop.permute.xlu0 %3393
    %s3396 = sor.u32 256, 88
    %3397 = vbcast.lane.b32.xlu0 %v3351, %s3396
    %v3398 = vpop.permute.xlu0 %3397
    %s3400 = sor.u32 256, 96
    %3401 = vbcast.lane.b32.xlu0 %v3351, %s3400
    %v3402 = vpop.permute.xlu0 %3401
    %s3404 = sor.u32 256, 104
    %3405 = vbcast.lane.b32.xlu0 %v3351, %s3404
    %v3406 = vpop.permute.xlu0 %3405
    %s3408 = sor.u32 256, 112
    %3409 = vbcast.lane.b32.xlu0 %v3351, %s3408
    %v3410 = vpop.permute.xlu0 %3409
    %s3412 = sor.u32 256, 120
    %3413 = vbcast.lane.b32.xlu0 %v3351, %s3412
    %v3414 = vpop.permute.xlu0 %3413
    %v3415 = vlaneseq
    %v3416 = vshrl.u32 %v3415, 7
    %v3417 = vsub.s32 3, %v3416
    %v3418 = vrot.slane %v1066, %v3417
    %3420 = vbcast.lane.b32.xlu0 %v3418, 256
    %v3421 = vpop.permute.xlu0 %3420
    %s3423 = sor.u32 256, 8
    %3424 = vbcast.lane.b32.xlu0 %v3418, %s3423
    %v3425 = vpop.permute.xlu0 %3424
    %s3427 = sor.u32 256, 16
    %3428 = vbcast.lane.b32.xlu0 %v3418, %s3427
    %v3429 = vpop.permute.xlu0 %3428
    %s3431 = sor.u32 256, 24
    %3432 = vbcast.lane.b32.xlu0 %v3418, %s3431
    %v3433 = vpop.permute.xlu0 %3432
    %s3435 = sor.u32 256, 32
    %3436 = vbcast.lane.b32.xlu0 %v3418, %s3435
    %v3437 = vpop.permute.xlu0 %3436
    %s3439 = sor.u32 256, 40
    %3440 = vbcast.lane.b32.xlu0 %v3418, %s3439
    %v3441 = vpop.permute.xlu0 %3440
    %s3443 = sor.u32 256, 48
    %3444 = vbcast.lane.b32.xlu0 %v3418, %s3443
    %v3445 = vpop.permute.xlu0 %3444
    %s3447 = sor.u32 256, 56
    %3448 = vbcast.lane.b32.xlu0 %v3418, %s3447
    %v3449 = vpop.permute.xlu0 %3448
    %s3451 = sor.u32 256, 64
    %3452 = vbcast.lane.b32.xlu0 %v3418, %s3451
    %v3453 = vpop.permute.xlu0 %3452
    %s3455 = sor.u32 256, 72
    %3456 = vbcast.lane.b32.xlu0 %v3418, %s3455
    %v3457 = vpop.permute.xlu0 %3456
    %s3459 = sor.u32 256, 80
    %3460 = vbcast.lane.b32.xlu0 %v3418, %s3459
    %v3461 = vpop.permute.xlu0 %3460
    %s3463 = sor.u32 256, 88
    %3464 = vbcast.lane.b32.xlu0 %v3418, %s3463
    %v3465 = vpop.permute.xlu0 %3464
    %s3467 = sor.u32 256, 96
    %3468 = vbcast.lane.b32.xlu0 %v3418, %s3467
    %v3469 = vpop.permute.xlu0 %3468
    %s3471 = sor.u32 256, 104
    %3472 = vbcast.lane.b32.xlu0 %v3418, %s3471
    %v3473 = vpop.permute.xlu0 %3472
    %s3475 = sor.u32 256, 112
    %3476 = vbcast.lane.b32.xlu0 %v3418, %s3475
    %v3477 = vpop.permute.xlu0 %3476
    %s3479 = sor.u32 256, 120
    %3480 = vbcast.lane.b32.xlu0 %v3418, %s3479
    %v3481 = vpop.permute.xlu0 %3480
    %v3482 = vlaneseq
    %v3483 = vshrl.u32 %v3482, 7
    %v3484 = vsub.s32 4, %v3483
    %v3485 = vrot.slane %v1066, %v3484
    %3487 = vbcast.lane.b32.xlu0 %v3485, 256
    %v3488 = vpop.permute.xlu0 %3487
    %s3490 = sor.u32 256, 8
    %3491 = vbcast.lane.b32.xlu0 %v3485, %s3490
    %v3492 = vpop.permute.xlu0 %3491
    %s3494 = sor.u32 256, 16
    %3495 = vbcast.lane.b32.xlu0 %v3485, %s3494
    %v3496 = vpop.permute.xlu0 %3495
    %s3498 = sor.u32 256, 24
    %3499 = vbcast.lane.b32.xlu0 %v3485, %s3498
    %v3500 = vpop.permute.xlu0 %3499
    %s3502 = sor.u32 256, 32
    %3503 = vbcast.lane.b32.xlu0 %v3485, %s3502
    %v3504 = vpop.permute.xlu0 %3503
    %s3506 = sor.u32 256, 40
    %3507 = vbcast.lane.b32.xlu0 %v3485, %s3506
    %v3508 = vpop.permute.xlu0 %3507
    %s3510 = sor.u32 256, 48
    %3511 = vbcast.lane.b32.xlu0 %v3485, %s3510
    %v3512 = vpop.permute.xlu0 %3511
    %s3514 = sor.u32 256, 56
    %3515 = vbcast.lane.b32.xlu0 %v3485, %s3514
    %v3516 = vpop.permute.xlu0 %3515
    %s3518 = sor.u32 256, 64
    %3519 = vbcast.lane.b32.xlu0 %v3485, %s3518
    %v3520 = vpop.permute.xlu0 %3519
    %s3522 = sor.u32 256, 72
    %3523 = vbcast.lane.b32.xlu0 %v3485, %s3522
    %v3524 = vpop.permute.xlu0 %3523
    %s3526 = sor.u32 256, 80
    %3527 = vbcast.lane.b32.xlu0 %v3485, %s3526
    %v3528 = vpop.permute.xlu0 %3527
    %s3530 = sor.u32 256, 88
    %3531 = vbcast.lane.b32.xlu0 %v3485, %s3530
    %v3532 = vpop.permute.xlu0 %3531
    %s3534 = sor.u32 256, 96
    %3535 = vbcast.lane.b32.xlu0 %v3485, %s3534
    %v3536 = vpop.permute.xlu0 %3535
    %s3538 = sor.u32 256, 104
    %3539 = vbcast.lane.b32.xlu0 %v3485, %s3538
    %v3540 = vpop.permute.xlu0 %3539
    %s3542 = sor.u32 256, 112
    %3543 = vbcast.lane.b32.xlu0 %v3485, %s3542
    %v3544 = vpop.permute.xlu0 %3543
    %s3546 = sor.u32 256, 120
    %3547 = vbcast.lane.b32.xlu0 %v3485, %s3546
    %v3548 = vpop.permute.xlu0 %3547
    %v3549 = vlaneseq
    %v3550 = vshrl.u32 %v3549, 7
    %v3551 = vsub.s32 5, %v3550
    %v3552 = vrot.slane %v1066, %v3551
    %3554 = vbcast.lane.b32.xlu0 %v3552, 256
    %v3555 = vpop.permute.xlu0 %3554
    %s3557 = sor.u32 256, 8
    %3558 = vbcast.lane.b32.xlu0 %v3552, %s3557
    %v3559 = vpop.permute.xlu0 %3558
    %s3561 = sor.u32 256, 16
    %3562 = vbcast.lane.b32.xlu0 %v3552, %s3561
    %v3563 = vpop.permute.xlu0 %3562
    %s3565 = sor.u32 256, 24
    %3566 = vbcast.lane.b32.xlu0 %v3552, %s3565
    %v3567 = vpop.permute.xlu0 %3566
    %s3569 = sor.u32 256, 32
    %3570 = vbcast.lane.b32.xlu0 %v3552, %s3569
    %v3571 = vpop.permute.xlu0 %3570
    %s3573 = sor.u32 256, 40
    %3574 = vbcast.lane.b32.xlu0 %v3552, %s3573
    %v3575 = vpop.permute.xlu0 %3574
    %s3577 = sor.u32 256, 48
    %3578 = vbcast.lane.b32.xlu0 %v3552, %s3577
    %v3579 = vpop.permute.xlu0 %3578
    %s3581 = sor.u32 256, 56
    %3582 = vbcast.lane.b32.xlu0 %v3552, %s3581
    %v3583 = vpop.permute.xlu0 %3582
    %s3585 = sor.u32 256, 64
    %3586 = vbcast.lane.b32.xlu0 %v3552, %s3585
    %v3587 = vpop.permute.xlu0 %3586
    %s3589 = sor.u32 256, 72
    %3590 = vbcast.lane.b32.xlu0 %v3552, %s3589
    %v3591 = vpop.permute.xlu0 %3590
    %s3593 = sor.u32 256, 80
    %3594 = vbcast.lane.b32.xlu0 %v3552, %s3593
    %v3595 = vpop.permute.xlu0 %3594
    %s3597 = sor.u32 256, 88
    %3598 = vbcast.lane.b32.xlu0 %v3552, %s3597
    %v3599 = vpop.permute.xlu0 %3598
    %s3601 = sor.u32 256, 96
    %3602 = vbcast.lane.b32.xlu0 %v3552, %s3601
    %v3603 = vpop.permute.xlu0 %3602
    %s3605 = sor.u32 256, 104
    %3606 = vbcast.lane.b32.xlu0 %v3552, %s3605
    %v3607 = vpop.permute.xlu0 %3606
    %s3609 = sor.u32 256, 112
    %3610 = vbcast.lane.b32.xlu0 %v3552, %s3609
    %v3611 = vpop.permute.xlu0 %3610
    %s3613 = sor.u32 256, 120
    %3614 = vbcast.lane.b32.xlu0 %v3552, %s3613
    %v3615 = vpop.permute.xlu0 %3614
    %v3616 = vlaneseq
    %v3617 = vshrl.u32 %v3616, 7
    %v3618 = vsub.s32 6, %v3617
    %v3619 = vrot.slane %v1066, %v3618
    %3621 = vbcast.lane.b32.xlu0 %v3619, 256
    %v3622 = vpop.permute.xlu0 %3621
    %s3624 = sor.u32 256, 8
    %3625 = vbcast.lane.b32.xlu0 %v3619, %s3624
    %v3626 = vpop.permute.xlu0 %3625
    %s3628 = sor.u32 256, 16
    %3629 = vbcast.lane.b32.xlu0 %v3619, %s3628
    %v3630 = vpop.permute.xlu0 %3629
    %s3632 = sor.u32 256, 24
    %3633 = vbcast.lane.b32.xlu0 %v3619, %s3632
    %v3634 = vpop.permute.xlu0 %3633
    %s3636 = sor.u32 256, 32
    %3637 = vbcast.lane.b32.xlu0 %v3619, %s3636
    %v3638 = vpop.permute.xlu0 %3637
    %s3640 = sor.u32 256, 40
    %3641 = vbcast.lane.b32.xlu0 %v3619, %s3640
    %v3642 = vpop.permute.xlu0 %3641
    %s3644 = sor.u32 256, 48
    %3645 = vbcast.lane.b32.xlu0 %v3619, %s3644
    %v3646 = vpop.permute.xlu0 %3645
    %s3648 = sor.u32 256, 56
    %3649 = vbcast.lane.b32.xlu0 %v3619, %s3648
    %v3650 = vpop.permute.xlu0 %3649
    %s3652 = sor.u32 256, 64
    %3653 = vbcast.lane.b32.xlu0 %v3619, %s3652
    %v3654 = vpop.permute.xlu0 %3653
    %s3656 = sor.u32 256, 72
    %3657 = vbcast.lane.b32.xlu0 %v3619, %s3656
    %v3658 = vpop.permute.xlu0 %3657
    %s3660 = sor.u32 256, 80
    %3661 = vbcast.lane.b32.xlu0 %v3619, %s3660
    %v3662 = vpop.permute.xlu0 %3661
    %s3664 = sor.u32 256, 88
    %3665 = vbcast.lane.b32.xlu0 %v3619, %s3664
    %v3666 = vpop.permute.xlu0 %3665
    %s3668 = sor.u32 256, 96
    %3669 = vbcast.lane.b32.xlu0 %v3619, %s3668
    %v3670 = vpop.permute.xlu0 %3669
    %s3672 = sor.u32 256, 104
    %3673 = vbcast.lane.b32.xlu0 %v3619, %s3672
    %v3674 = vpop.permute.xlu0 %3673
    %s3676 = sor.u32 256, 112
    %3677 = vbcast.lane.b32.xlu0 %v3619, %s3676
    %v3678 = vpop.permute.xlu0 %3677
    %s3680 = sor.u32 256, 120
    %3681 = vbcast.lane.b32.xlu0 %v3619, %s3680
    %v3682 = vpop.permute.xlu0 %3681
    %v3683 = vlaneseq
    %v3684 = vshrl.u32 %v3683, 7
    %v3685 = vsub.s32 7, %v3684
    %v3686 = vrot.slane %v1066, %v3685
    %3688 = vbcast.lane.b32.xlu0 %v3686, 256
    %v3689 = vpop.permute.xlu0 %3688
    %s3691 = sor.u32 256, 8
    %3692 = vbcast.lane.b32.xlu0 %v3686, %s3691
    %v3693 = vpop.permute.xlu0 %3692
    %s3695 = sor.u32 256, 16
    %3696 = vbcast.lane.b32.xlu0 %v3686, %s3695
    %v3697 = vpop.permute.xlu0 %3696
    %s3699 = sor.u32 256, 24
    %3700 = vbcast.lane.b32.xlu0 %v3686, %s3699
    %v3701 = vpop.permute.xlu0 %3700
    %s3703 = sor.u32 256, 32
    %3704 = vbcast.lane.b32.xlu0 %v3686, %s3703
    %v3705 = vpop.permute.xlu0 %3704
    %s3707 = sor.u32 256, 40
    %3708 = vbcast.lane.b32.xlu0 %v3686, %s3707
    %v3709 = vpop.permute.xlu0 %3708
    %s3711 = sor.u32 256, 48
    %3712 = vbcast.lane.b32.xlu0 %v3686, %s3711
    %v3713 = vpop.permute.xlu0 %3712
    %s3715 = sor.u32 256, 56
    %3716 = vbcast.lane.b32.xlu0 %v3686, %s3715
    %v3717 = vpop.permute.xlu0 %3716
    %s3719 = sor.u32 256, 64
    %3720 = vbcast.lane.b32.xlu0 %v3686, %s3719
    %v3721 = vpop.permute.xlu0 %3720
    %s3723 = sor.u32 256, 72
    %3724 = vbcast.lane.b32.xlu0 %v3686, %s3723
    %v3725 = vpop.permute.xlu0 %3724
    %s3727 = sor.u32 256, 80
    %3728 = vbcast.lane.b32.xlu0 %v3686, %s3727
    %v3729 = vpop.permute.xlu0 %3728
    %s3731 = sor.u32 256, 88
    %3732 = vbcast.lane.b32.xlu0 %v3686, %s3731
    %v3733 = vpop.permute.xlu0 %3732
    %s3735 = sor.u32 256, 96
    %3736 = vbcast.lane.b32.xlu0 %v3686, %s3735
    %v3737 = vpop.permute.xlu0 %3736
    %s3739 = sor.u32 256, 104
    %3740 = vbcast.lane.b32.xlu0 %v3686, %s3739
    %v3741 = vpop.permute.xlu0 %3740
    %s3743 = sor.u32 256, 112
    %3744 = vbcast.lane.b32.xlu0 %v3686, %s3743
    %v3745 = vpop.permute.xlu0 %3744
    %s3747 = sor.u32 256, 120
    %3748 = vbcast.lane.b32.xlu0 %v3686, %s3747
    %v3749 = vpop.permute.xlu0 %3748
    %v3750 = vlaneseq
    %v3751 = vshrl.u32 %v3750, 7
    %v3752 = vsub.s32 0, %v3751
    %v3753 = vrot.slane %v1067, %v3752
    %3755 = vbcast.lane.b32.xlu0 %v3753, 256
    %v3756 = vpop.permute.xlu0 %3755
    %s3758 = sor.u32 256, 8
    %3759 = vbcast.lane.b32.xlu0 %v3753, %s3758
    %v3760 = vpop.permute.xlu0 %3759
    %s3762 = sor.u32 256, 16
    %3763 = vbcast.lane.b32.xlu0 %v3753, %s3762
    %v3764 = vpop.permute.xlu0 %3763
    %s3766 = sor.u32 256, 24
    %3767 = vbcast.lane.b32.xlu0 %v3753, %s3766
    %v3768 = vpop.permute.xlu0 %3767
    %s3770 = sor.u32 256, 32
    %3771 = vbcast.lane.b32.xlu0 %v3753, %s3770
    %v3772 = vpop.permute.xlu0 %3771
    %s3774 = sor.u32 256, 40
    %3775 = vbcast.lane.b32.xlu0 %v3753, %s3774
    %v3776 = vpop.permute.xlu0 %3775
    %s3778 = sor.u32 256, 48
    %3779 = vbcast.lane.b32.xlu0 %v3753, %s3778
    %v3780 = vpop.permute.xlu0 %3779
    %s3782 = sor.u32 256, 56
    %3783 = vbcast.lane.b32.xlu0 %v3753, %s3782
    %v3784 = vpop.permute.xlu0 %3783
    %s3786 = sor.u32 256, 64
    %3787 = vbcast.lane.b32.xlu0 %v3753, %s3786
    %v3788 = vpop.permute.xlu0 %3787
    %s3790 = sor.u32 256, 72
    %3791 = vbcast.lane.b32.xlu0 %v3753, %s3790
    %v3792 = vpop.permute.xlu0 %3791
    %s3794 = sor.u32 256, 80
    %3795 = vbcast.lane.b32.xlu0 %v3753, %s3794
    %v3796 = vpop.permute.xlu0 %3795
    %s3798 = sor.u32 256, 88
    %3799 = vbcast.lane.b32.xlu0 %v3753, %s3798
    %v3800 = vpop.permute.xlu0 %3799
    %s3802 = sor.u32 256, 96
    %3803 = vbcast.lane.b32.xlu0 %v3753, %s3802
    %v3804 = vpop.permute.xlu0 %3803
    %s3806 = sor.u32 256, 104
    %3807 = vbcast.lane.b32.xlu0 %v3753, %s3806
    %v3808 = vpop.permute.xlu0 %3807
    %s3810 = sor.u32 256, 112
    %3811 = vbcast.lane.b32.xlu0 %v3753, %s3810
    %v3812 = vpop.permute.xlu0 %3811
    %s3814 = sor.u32 256, 120
    %3815 = vbcast.lane.b32.xlu0 %v3753, %s3814
    %v3816 = vpop.permute.xlu0 %3815
    %v3817 = vlaneseq
    %v3818 = vshrl.u32 %v3817, 7
    %v3819 = vsub.s32 1, %v3818
    %v3820 = vrot.slane %v1067, %v3819
    %3822 = vbcast.lane.b32.xlu0 %v3820, 256
    %v3823 = vpop.permute.xlu0 %3822
    %s3825 = sor.u32 256, 8
    %3826 = vbcast.lane.b32.xlu0 %v3820, %s3825
    %v3827 = vpop.permute.xlu0 %3826
    %s3829 = sor.u32 256, 16
    %3830 = vbcast.lane.b32.xlu0 %v3820, %s3829
    %v3831 = vpop.permute.xlu0 %3830
    %s3833 = sor.u32 256, 24
    %3834 = vbcast.lane.b32.xlu0 %v3820, %s3833
    %v3835 = vpop.permute.xlu0 %3834
    %s3837 = sor.u32 256, 32
    %3838 = vbcast.lane.b32.xlu0 %v3820, %s3837
    %v3839 = vpop.permute.xlu0 %3838
    %s3841 = sor.u32 256, 40
    %3842 = vbcast.lane.b32.xlu0 %v3820, %s3841
    %v3843 = vpop.permute.xlu0 %3842
    %s3845 = sor.u32 256, 48
    %3846 = vbcast.lane.b32.xlu0 %v3820, %s3845
    %v3847 = vpop.permute.xlu0 %3846
    %s3849 = sor.u32 256, 56
    %3850 = vbcast.lane.b32.xlu0 %v3820, %s3849
    %v3851 = vpop.permute.xlu0 %3850
    %s3853 = sor.u32 256, 64
    %3854 = vbcast.lane.b32.xlu0 %v3820, %s3853
    %v3855 = vpop.permute.xlu0 %3854
    %s3857 = sor.u32 256, 72
    %3858 = vbcast.lane.b32.xlu0 %v3820, %s3857
    %v3859 = vpop.permute.xlu0 %3858
    %s3861 = sor.u32 256, 80
    %3862 = vbcast.lane.b32.xlu0 %v3820, %s3861
    %v3863 = vpop.permute.xlu0 %3862
    %s3865 = sor.u32 256, 88
    %3866 = vbcast.lane.b32.xlu0 %v3820, %s3865
    %v3867 = vpop.permute.xlu0 %3866
    %s3869 = sor.u32 256, 96
    %3870 = vbcast.lane.b32.xlu0 %v3820, %s3869
    %v3871 = vpop.permute.xlu0 %3870
    %s3873 = sor.u32 256, 104
    %3874 = vbcast.lane.b32.xlu0 %v3820, %s3873
    %v3875 = vpop.permute.xlu0 %3874
    %s3877 = sor.u32 256, 112
    %3878 = vbcast.lane.b32.xlu0 %v3820, %s3877
    %v3879 = vpop.permute.xlu0 %3878
    %s3881 = sor.u32 256, 120
    %3882 = vbcast.lane.b32.xlu0 %v3820, %s3881
    %v3883 = vpop.permute.xlu0 %3882
    %v3884 = vlaneseq
    %v3885 = vshrl.u32 %v3884, 7
    %v3886 = vsub.s32 2, %v3885
    %v3887 = vrot.slane %v1067, %v3886
    %3889 = vbcast.lane.b32.xlu0 %v3887, 256
    %v3890 = vpop.permute.xlu0 %3889
    %s3892 = sor.u32 256, 8
    %3893 = vbcast.lane.b32.xlu0 %v3887, %s3892
    %v3894 = vpop.permute.xlu0 %3893
    %s3896 = sor.u32 256, 16
    %3897 = vbcast.lane.b32.xlu0 %v3887, %s3896
    %v3898 = vpop.permute.xlu0 %3897
    %s3900 = sor.u32 256, 24
    %3901 = vbcast.lane.b32.xlu0 %v3887, %s3900
    %v3902 = vpop.permute.xlu0 %3901
    %s3904 = sor.u32 256, 32
    %3905 = vbcast.lane.b32.xlu0 %v3887, %s3904
    %v3906 = vpop.permute.xlu0 %3905
    %s3908 = sor.u32 256, 40
    %3909 = vbcast.lane.b32.xlu0 %v3887, %s3908
    %v3910 = vpop.permute.xlu0 %3909
    %s3912 = sor.u32 256, 48
    %3913 = vbcast.lane.b32.xlu0 %v3887, %s3912
    %v3914 = vpop.permute.xlu0 %3913
    %s3916 = sor.u32 256, 56
    %3917 = vbcast.lane.b32.xlu0 %v3887, %s3916
    %v3918 = vpop.permute.xlu0 %3917
    %s3920 = sor.u32 256, 64
    %3921 = vbcast.lane.b32.xlu0 %v3887, %s3920
    %v3922 = vpop.permute.xlu0 %3921
    %s3924 = sor.u32 256, 72
    %3925 = vbcast.lane.b32.xlu0 %v3887, %s3924
    %v3926 = vpop.permute.xlu0 %3925
    %s3928 = sor.u32 256, 80
    %3929 = vbcast.lane.b32.xlu0 %v3887, %s3928
    %v3930 = vpop.permute.xlu0 %3929
    %s3932 = sor.u32 256, 88
    %3933 = vbcast.lane.b32.xlu0 %v3887, %s3932
    %v3934 = vpop.permute.xlu0 %3933
    %s3936 = sor.u32 256, 96
    %3937 = vbcast.lane.b32.xlu0 %v3887, %s3936
    %v3938 = vpop.permute.xlu0 %3937
    %s3940 = sor.u32 256, 104
    %3941 = vbcast.lane.b32.xlu0 %v3887, %s3940
    %v3942 = vpop.permute.xlu0 %3941
    %s3944 = sor.u32 256, 112
    %3945 = vbcast.lane.b32.xlu0 %v3887, %s3944
    %v3946 = vpop.permute.xlu0 %3945
    %s3948 = sor.u32 256, 120
    %3949 = vbcast.lane.b32.xlu0 %v3887, %s3948
    %v3950 = vpop.permute.xlu0 %3949
    %v3951 = vlaneseq
    %v3952 = vshrl.u32 %v3951, 7
    %v3953 = vsub.s32 3, %v3952
    %v3954 = vrot.slane %v1067, %v3953
    %3956 = vbcast.lane.b32.xlu0 %v3954, 256
    %v3957 = vpop.permute.xlu0 %3956
    %s3959 = sor.u32 256, 8
    %3960 = vbcast.lane.b32.xlu0 %v3954, %s3959
    %v3961 = vpop.permute.xlu0 %3960
    %s3963 = sor.u32 256, 16
    %3964 = vbcast.lane.b32.xlu0 %v3954, %s3963
    %v3965 = vpop.permute.xlu0 %3964
    %s3967 = sor.u32 256, 24
    %3968 = vbcast.lane.b32.xlu0 %v3954, %s3967
    %v3969 = vpop.permute.xlu0 %3968
    %s3971 = sor.u32 256, 32
    %3972 = vbcast.lane.b32.xlu0 %v3954, %s3971
    %v3973 = vpop.permute.xlu0 %3972
    %s3975 = sor.u32 256, 40
    %3976 = vbcast.lane.b32.xlu0 %v3954, %s3975
    %v3977 = vpop.permute.xlu0 %3976
    %s3979 = sor.u32 256, 48
    %3980 = vbcast.lane.b32.xlu0 %v3954, %s3979
    %v3981 = vpop.permute.xlu0 %3980
    %s3983 = sor.u32 256, 56
    %3984 = vbcast.lane.b32.xlu0 %v3954, %s3983
    %v3985 = vpop.permute.xlu0 %3984
    %s3987 = sor.u32 256, 64
    %3988 = vbcast.lane.b32.xlu0 %v3954, %s3987
    %v3989 = vpop.permute.xlu0 %3988
    %s3991 = sor.u32 256, 72
    %3992 = vbcast.lane.b32.xlu0 %v3954, %s3991
    %v3993 = vpop.permute.xlu0 %3992
    %s3995 = sor.u32 256, 80
    %3996 = vbcast.lane.b32.xlu0 %v3954, %s3995
    %v3997 = vpop.permute.xlu0 %3996
    %s3999 = sor.u32 256, 88
    %4000 = vbcast.lane.b32.xlu0 %v3954, %s3999
    %v4001 = vpop.permute.xlu0 %4000
    %s4003 = sor.u32 256, 96
    %4004 = vbcast.lane.b32.xlu0 %v3954, %s4003
    %v4005 = vpop.permute.xlu0 %4004
    %s4007 = sor.u32 256, 104
    %4008 = vbcast.lane.b32.xlu0 %v3954, %s4007
    %v4009 = vpop.permute.xlu0 %4008
    %s4011 = sor.u32 256, 112
    %4012 = vbcast.lane.b32.xlu0 %v3954, %s4011
    %v4013 = vpop.permute.xlu0 %4012
    %s4015 = sor.u32 256, 120
    %4016 = vbcast.lane.b32.xlu0 %v3954, %s4015
    %v4017 = vpop.permute.xlu0 %4016
    %v4018 = vlaneseq
    %v4019 = vshrl.u32 %v4018, 7
    %v4020 = vsub.s32 4, %v4019
    %v4021 = vrot.slane %v1067, %v4020
    %4023 = vbcast.lane.b32.xlu0 %v4021, 256
    %v4024 = vpop.permute.xlu0 %4023
    %s4026 = sor.u32 256, 8
    %4027 = vbcast.lane.b32.xlu0 %v4021, %s4026
    %v4028 = vpop.permute.xlu0 %4027
    %s4030 = sor.u32 256, 16
    %4031 = vbcast.lane.b32.xlu0 %v4021, %s4030
    %v4032 = vpop.permute.xlu0 %4031
    %s4034 = sor.u32 256, 24
    %4035 = vbcast.lane.b32.xlu0 %v4021, %s4034
    %v4036 = vpop.permute.xlu0 %4035
    %s4038 = sor.u32 256, 32
    %4039 = vbcast.lane.b32.xlu0 %v4021, %s4038
    %v4040 = vpop.permute.xlu0 %4039
    %s4042 = sor.u32 256, 40
    %4043 = vbcast.lane.b32.xlu0 %v4021, %s4042
    %v4044 = vpop.permute.xlu0 %4043
    %s4046 = sor.u32 256, 48
    %4047 = vbcast.lane.b32.xlu0 %v4021, %s4046
    %v4048 = vpop.permute.xlu0 %4047
    %s4050 = sor.u32 256, 56
    %4051 = vbcast.lane.b32.xlu0 %v4021, %s4050
    %v4052 = vpop.permute.xlu0 %4051
    %s4054 = sor.u32 256, 64
    %4055 = vbcast.lane.b32.xlu0 %v4021, %s4054
    %v4056 = vpop.permute.xlu0 %4055
    %s4058 = sor.u32 256, 72
    %4059 = vbcast.lane.b32.xlu0 %v4021, %s4058
    %v4060 = vpop.permute.xlu0 %4059
    %s4062 = sor.u32 256, 80
    %4063 = vbcast.lane.b32.xlu0 %v4021, %s4062
    %v4064 = vpop.permute.xlu0 %4063
    %s4066 = sor.u32 256, 88
    %4067 = vbcast.lane.b32.xlu0 %v4021, %s4066
    %v4068 = vpop.permute.xlu0 %4067
    %s4070 = sor.u32 256, 96
    %4071 = vbcast.lane.b32.xlu0 %v4021, %s4070
    %v4072 = vpop.permute.xlu0 %4071
    %s4074 = sor.u32 256, 104
    %4075 = vbcast.lane.b32.xlu0 %v4021, %s4074
    %v4076 = vpop.permute.xlu0 %4075
    %s4078 = sor.u32 256, 112
    %4079 = vbcast.lane.b32.xlu0 %v4021, %s4078
    %v4080 = vpop.permute.xlu0 %4079
    %s4082 = sor.u32 256, 120
    %4083 = vbcast.lane.b32.xlu0 %v4021, %s4082
    %v4084 = vpop.permute.xlu0 %4083
    %v4085 = vlaneseq
    %v4086 = vshrl.u32 %v4085, 7
    %v4087 = vsub.s32 5, %v4086
    %v4088 = vrot.slane %v1067, %v4087
    %4090 = vbcast.lane.b32.xlu0 %v4088, 256
    %v4091 = vpop.permute.xlu0 %4090
    %s4093 = sor.u32 256, 8
    %4094 = vbcast.lane.b32.xlu0 %v4088, %s4093
    %v4095 = vpop.permute.xlu0 %4094
    %s4097 = sor.u32 256, 16
    %4098 = vbcast.lane.b32.xlu0 %v4088, %s4097
    %v4099 = vpop.permute.xlu0 %4098
    %s4101 = sor.u32 256, 24
    %4102 = vbcast.lane.b32.xlu0 %v4088, %s4101
    %v4103 = vpop.permute.xlu0 %4102
    %s4105 = sor.u32 256, 32
    %4106 = vbcast.lane.b32.xlu0 %v4088, %s4105
    %v4107 = vpop.permute.xlu0 %4106
    %s4109 = sor.u32 256, 40
    %4110 = vbcast.lane.b32.xlu0 %v4088, %s4109
    %v4111 = vpop.permute.xlu0 %4110
    %s4113 = sor.u32 256, 48
    %4114 = vbcast.lane.b32.xlu0 %v4088, %s4113
    %v4115 = vpop.permute.xlu0 %4114
    %s4117 = sor.u32 256, 56
    %4118 = vbcast.lane.b32.xlu0 %v4088, %s4117
    %v4119 = vpop.permute.xlu0 %4118
    %s4121 = sor.u32 256, 64
    %4122 = vbcast.lane.b32.xlu0 %v4088, %s4121
    %v4123 = vpop.permute.xlu0 %4122
    %s4125 = sor.u32 256, 72
    %4126 = vbcast.lane.b32.xlu0 %v4088, %s4125
    %v4127 = vpop.permute.xlu0 %4126
    %s4129 = sor.u32 256, 80
    %4130 = vbcast.lane.b32.xlu0 %v4088, %s4129
    %v4131 = vpop.permute.xlu0 %4130
    %s4133 = sor.u32 256, 88
    %4134 = vbcast.lane.b32.xlu0 %v4088, %s4133
    %v4135 = vpop.permute.xlu0 %4134
    %s4137 = sor.u32 256, 96
    %4138 = vbcast.lane.b32.xlu0 %v4088, %s4137
    %v4139 = vpop.permute.xlu0 %4138
    %s4141 = sor.u32 256, 104
    %4142 = vbcast.lane.b32.xlu0 %v4088, %s4141
    %v4143 = vpop.permute.xlu0 %4142
    %s4145 = sor.u32 256, 112
    %4146 = vbcast.lane.b32.xlu0 %v4088, %s4145
    %v4147 = vpop.permute.xlu0 %4146
    %s4149 = sor.u32 256, 120
    %4150 = vbcast.lane.b32.xlu0 %v4088, %s4149
    %v4151 = vpop.permute.xlu0 %4150
    %v4152 = vlaneseq
    %v4153 = vshrl.u32 %v4152, 7
    %v4154 = vsub.s32 6, %v4153
    %v4155 = vrot.slane %v1067, %v4154
    %4157 = vbcast.lane.b32.xlu0 %v4155, 256
    %v4158 = vpop.permute.xlu0 %4157
    %s4160 = sor.u32 256, 8
    %4161 = vbcast.lane.b32.xlu0 %v4155, %s4160
    %v4162 = vpop.permute.xlu0 %4161
    %s4164 = sor.u32 256, 16
    %4165 = vbcast.lane.b32.xlu0 %v4155, %s4164
    %v4166 = vpop.permute.xlu0 %4165
    %s4168 = sor.u32 256, 24
    %4169 = vbcast.lane.b32.xlu0 %v4155, %s4168
    %v4170 = vpop.permute.xlu0 %4169
    %s4172 = sor.u32 256, 32
    %4173 = vbcast.lane.b32.xlu0 %v4155, %s4172
    %v4174 = vpop.permute.xlu0 %4173
    %s4176 = sor.u32 256, 40
    %4177 = vbcast.lane.b32.xlu0 %v4155, %s4176
    %v4178 = vpop.permute.xlu0 %4177
    %s4180 = sor.u32 256, 48
    %4181 = vbcast.lane.b32.xlu0 %v4155, %s4180
    %v4182 = vpop.permute.xlu0 %4181
    %s4184 = sor.u32 256, 56
    %4185 = vbcast.lane.b32.xlu0 %v4155, %s4184
    %v4186 = vpop.permute.xlu0 %4185
    %s4188 = sor.u32 256, 64
    %4189 = vbcast.lane.b32.xlu0 %v4155, %s4188
    %v4190 = vpop.permute.xlu0 %4189
    %s4192 = sor.u32 256, 72
    %4193 = vbcast.lane.b32.xlu0 %v4155, %s4192
    %v4194 = vpop.permute.xlu0 %4193
    %s4196 = sor.u32 256, 80
    %4197 = vbcast.lane.b32.xlu0 %v4155, %s4196
    %v4198 = vpop.permute.xlu0 %4197
    %s4200 = sor.u32 256, 88
    %4201 = vbcast.lane.b32.xlu0 %v4155, %s4200
    %v4202 = vpop.permute.xlu0 %4201
    %s4204 = sor.u32 256, 96
    %4205 = vbcast.lane.b32.xlu0 %v4155, %s4204
    %v4206 = vpop.permute.xlu0 %4205
    %s4208 = sor.u32 256, 104
    %4209 = vbcast.lane.b32.xlu0 %v4155, %s4208
    %v4210 = vpop.permute.xlu0 %4209
    %s4212 = sor.u32 256, 112
    %4213 = vbcast.lane.b32.xlu0 %v4155, %s4212
    %v4214 = vpop.permute.xlu0 %4213
    %s4216 = sor.u32 256, 120
    %4217 = vbcast.lane.b32.xlu0 %v4155, %s4216
    %v4218 = vpop.permute.xlu0 %4217
    %v4219 = vlaneseq
    %v4220 = vshrl.u32 %v4219, 7
    %v4221 = vsub.s32 7, %v4220
    %v4222 = vrot.slane %v1067, %v4221
    %4224 = vbcast.lane.b32.xlu0 %v4222, 256
    %v4225 = vpop.permute.xlu0 %4224
    %s4227 = sor.u32 256, 8
    %4228 = vbcast.lane.b32.xlu0 %v4222, %s4227
    %v4229 = vpop.permute.xlu0 %4228
    %s4231 = sor.u32 256, 16
    %4232 = vbcast.lane.b32.xlu0 %v4222, %s4231
    %v4233 = vpop.permute.xlu0 %4232
    %s4235 = sor.u32 256, 24
    %4236 = vbcast.lane.b32.xlu0 %v4222, %s4235
    %v4237 = vpop.permute.xlu0 %4236
    %s4239 = sor.u32 256, 32
    %4240 = vbcast.lane.b32.xlu0 %v4222, %s4239
    %v4241 = vpop.permute.xlu0 %4240
    %s4243 = sor.u32 256, 40
    %4244 = vbcast.lane.b32.xlu0 %v4222, %s4243
    %v4245 = vpop.permute.xlu0 %4244
    %s4247 = sor.u32 256, 48
    %4248 = vbcast.lane.b32.xlu0 %v4222, %s4247
    %v4249 = vpop.permute.xlu0 %4248
    %s4251 = sor.u32 256, 56
    %4252 = vbcast.lane.b32.xlu0 %v4222, %s4251
    %v4253 = vpop.permute.xlu0 %4252
    %s4255 = sor.u32 256, 64
    %4256 = vbcast.lane.b32.xlu0 %v4222, %s4255
    %v4257 = vpop.permute.xlu0 %4256
    %s4259 = sor.u32 256, 72
    %4260 = vbcast.lane.b32.xlu0 %v4222, %s4259
    %v4261 = vpop.permute.xlu0 %4260
    %s4263 = sor.u32 256, 80
    %4264 = vbcast.lane.b32.xlu0 %v4222, %s4263
    %v4265 = vpop.permute.xlu0 %4264
    %s4267 = sor.u32 256, 88
    %4268 = vbcast.lane.b32.xlu0 %v4222, %s4267
    %v4269 = vpop.permute.xlu0 %4268
    %s4271 = sor.u32 256, 96
    %4272 = vbcast.lane.b32.xlu0 %v4222, %s4271
    %v4273 = vpop.permute.xlu0 %4272
    %s4275 = sor.u32 256, 104
    %4276 = vbcast.lane.b32.xlu0 %v4222, %s4275
    %v4277 = vpop.permute.xlu0 %4276
    %s4279 = sor.u32 256, 112
    %4280 = vbcast.lane.b32.xlu0 %v4222, %s4279
    %v4281 = vpop.permute.xlu0 %4280
    %s4283 = sor.u32 256, 120
    %4284 = vbcast.lane.b32.xlu0 %v4222, %s4283
    %v4285 = vpop.permute.xlu0 %4284
    %v4286 = vlaneseq
    %v4287 = vshrl.u32 %v4286, 7
    %v4288 = vsub.s32 0, %v4287
    %v4289 = vrot.slane %v1068, %v4288
    %4291 = vbcast.lane.b32.xlu0 %v4289, 256
    %v4292 = vpop.permute.xlu0 %4291
    %s4294 = sor.u32 256, 8
    %4295 = vbcast.lane.b32.xlu0 %v4289, %s4294
    %v4296 = vpop.permute.xlu0 %4295
    %s4298 = sor.u32 256, 16
    %4299 = vbcast.lane.b32.xlu0 %v4289, %s4298
    %v4300 = vpop.permute.xlu0 %4299
    %s4302 = sor.u32 256, 24
    %4303 = vbcast.lane.b32.xlu0 %v4289, %s4302
    %v4304 = vpop.permute.xlu0 %4303
    %s4306 = sor.u32 256, 32
    %4307 = vbcast.lane.b32.xlu0 %v4289, %s4306
    %v4308 = vpop.permute.xlu0 %4307
    %s4310 = sor.u32 256, 40
    %4311 = vbcast.lane.b32.xlu0 %v4289, %s4310
    %v4312 = vpop.permute.xlu0 %4311
    %s4314 = sor.u32 256, 48
    %4315 = vbcast.lane.b32.xlu0 %v4289, %s4314
    %v4316 = vpop.permute.xlu0 %4315
    %s4318 = sor.u32 256, 56
    %4319 = vbcast.lane.b32.xlu0 %v4289, %s4318
    %v4320 = vpop.permute.xlu0 %4319
    %s4322 = sor.u32 256, 64
    %4323 = vbcast.lane.b32.xlu0 %v4289, %s4322
    %v4324 = vpop.permute.xlu0 %4323
    %s4326 = sor.u32 256, 72
    %4327 = vbcast.lane.b32.xlu0 %v4289, %s4326
    %v4328 = vpop.permute.xlu0 %4327
    %s4330 = sor.u32 256, 80
    %4331 = vbcast.lane.b32.xlu0 %v4289, %s4330
    %v4332 = vpop.permute.xlu0 %4331
    %s4334 = sor.u32 256, 88
    %4335 = vbcast.lane.b32.xlu0 %v4289, %s4334
    %v4336 = vpop.permute.xlu0 %4335
    %s4338 = sor.u32 256, 96
    %4339 = vbcast.lane.b32.xlu0 %v4289, %s4338
    %v4340 = vpop.permute.xlu0 %4339
    %s4342 = sor.u32 256, 104
    %4343 = vbcast.lane.b32.xlu0 %v4289, %s4342
    %v4344 = vpop.permute.xlu0 %4343
    %s4346 = sor.u32 256, 112
    %4347 = vbcast.lane.b32.xlu0 %v4289, %s4346
    %v4348 = vpop.permute.xlu0 %4347
    %s4350 = sor.u32 256, 120
    %4351 = vbcast.lane.b32.xlu0 %v4289, %s4350
    %v4352 = vpop.permute.xlu0 %4351
    %v4353 = vlaneseq
    %v4354 = vshrl.u32 %v4353, 7
    %v4355 = vsub.s32 1, %v4354
    %v4356 = vrot.slane %v1068, %v4355
    %4358 = vbcast.lane.b32.xlu0 %v4356, 256
    %v4359 = vpop.permute.xlu0 %4358
    %s4361 = sor.u32 256, 8
    %4362 = vbcast.lane.b32.xlu0 %v4356, %s4361
    %v4363 = vpop.permute.xlu0 %4362
    %s4365 = sor.u32 256, 16
    %4366 = vbcast.lane.b32.xlu0 %v4356, %s4365
    %v4367 = vpop.permute.xlu0 %4366
    %s4369 = sor.u32 256, 24
    %4370 = vbcast.lane.b32.xlu0 %v4356, %s4369
    %v4371 = vpop.permute.xlu0 %4370
    %s4373 = sor.u32 256, 32
    %4374 = vbcast.lane.b32.xlu0 %v4356, %s4373
    %v4375 = vpop.permute.xlu0 %4374
    %s4377 = sor.u32 256, 40
    %4378 = vbcast.lane.b32.xlu0 %v4356, %s4377
    %v4379 = vpop.permute.xlu0 %4378
    %s4381 = sor.u32 256, 48
    %4382 = vbcast.lane.b32.xlu0 %v4356, %s4381
    %v4383 = vpop.permute.xlu0 %4382
    %s4385 = sor.u32 256, 56
    %4386 = vbcast.lane.b32.xlu0 %v4356, %s4385
    %v4387 = vpop.permute.xlu0 %4386
    %s4389 = sor.u32 256, 64
    %4390 = vbcast.lane.b32.xlu0 %v4356, %s4389
    %v4391 = vpop.permute.xlu0 %4390
    %s4393 = sor.u32 256, 72
    %4394 = vbcast.lane.b32.xlu0 %v4356, %s4393
    %v4395 = vpop.permute.xlu0 %4394
    %s4397 = sor.u32 256, 80
    %4398 = vbcast.lane.b32.xlu0 %v4356, %s4397
    %v4399 = vpop.permute.xlu0 %4398
    %s4401 = sor.u32 256, 88
    %4402 = vbcast.lane.b32.xlu0 %v4356, %s4401
    %v4403 = vpop.permute.xlu0 %4402
    %s4405 = sor.u32 256, 96
    %4406 = vbcast.lane.b32.xlu0 %v4356, %s4405
    %v4407 = vpop.permute.xlu0 %4406
    %s4409 = sor.u32 256, 104
    %4410 = vbcast.lane.b32.xlu0 %v4356, %s4409
    %v4411 = vpop.permute.xlu0 %4410
    %s4413 = sor.u32 256, 112
    %4414 = vbcast.lane.b32.xlu0 %v4356, %s4413
    %v4415 = vpop.permute.xlu0 %4414
    %s4417 = sor.u32 256, 120
    %4418 = vbcast.lane.b32.xlu0 %v4356, %s4417
    %v4419 = vpop.permute.xlu0 %4418
    %v4420 = vlaneseq
    %v4421 = vshrl.u32 %v4420, 7
    %v4422 = vsub.s32 2, %v4421
    %v4423 = vrot.slane %v1068, %v4422
    %4425 = vbcast.lane.b32.xlu0 %v4423, 256
    %v4426 = vpop.permute.xlu0 %4425
    %s4428 = sor.u32 256, 8
    %4429 = vbcast.lane.b32.xlu0 %v4423, %s4428
    %v4430 = vpop.permute.xlu0 %4429
    %s4432 = sor.u32 256, 16
    %4433 = vbcast.lane.b32.xlu0 %v4423, %s4432
    %v4434 = vpop.permute.xlu0 %4433
    %s4436 = sor.u32 256, 24
    %4437 = vbcast.lane.b32.xlu0 %v4423, %s4436
    %v4438 = vpop.permute.xlu0 %4437
    %s4440 = sor.u32 256, 32
    %4441 = vbcast.lane.b32.xlu0 %v4423, %s4440
    %v4442 = vpop.permute.xlu0 %4441
    %s4444 = sor.u32 256, 40
    %4445 = vbcast.lane.b32.xlu0 %v4423, %s4444
    %v4446 = vpop.permute.xlu0 %4445
    %s4448 = sor.u32 256, 48
    %4449 = vbcast.lane.b32.xlu0 %v4423, %s4448
    %v4450 = vpop.permute.xlu0 %4449
    %s4452 = sor.u32 256, 56
    %4453 = vbcast.lane.b32.xlu0 %v4423, %s4452
    %v4454 = vpop.permute.xlu0 %4453
    %s4456 = sor.u32 256, 64
    %4457 = vbcast.lane.b32.xlu0 %v4423, %s4456
    %v4458 = vpop.permute.xlu0 %4457
    %s4460 = sor.u32 256, 72
    %4461 = vbcast.lane.b32.xlu0 %v4423, %s4460
    %v4462 = vpop.permute.xlu0 %4461
    %s4464 = sor.u32 256, 80
    %4465 = vbcast.lane.b32.xlu0 %v4423, %s4464
    %v4466 = vpop.permute.xlu0 %4465
    %s4468 = sor.u32 256, 88
    %4469 = vbcast.lane.b32.xlu0 %v4423, %s4468
    %v4470 = vpop.permute.xlu0 %4469
    %s4472 = sor.u32 256, 96
    %4473 = vbcast.lane.b32.xlu0 %v4423, %s4472
    %v4474 = vpop.permute.xlu0 %4473
    %s4476 = sor.u32 256, 104
    %4477 = vbcast.lane.b32.xlu0 %v4423, %s4476
    %v4478 = vpop.permute.xlu0 %4477
    %s4480 = sor.u32 256, 112
    %4481 = vbcast.lane.b32.xlu0 %v4423, %s4480
    %v4482 = vpop.permute.xlu0 %4481
    %s4484 = sor.u32 256, 120
    %4485 = vbcast.lane.b32.xlu0 %v4423, %s4484
    %v4486 = vpop.permute.xlu0 %4485
    %v4487 = vlaneseq
    %v4488 = vshrl.u32 %v4487, 7
    %v4489 = vsub.s32 3, %v4488
    %v4490 = vrot.slane %v1068, %v4489
    %4492 = vbcast.lane.b32.xlu0 %v4490, 256
    %v4493 = vpop.permute.xlu0 %4492
    %s4495 = sor.u32 256, 8
    %4496 = vbcast.lane.b32.xlu0 %v4490, %s4495
    %v4497 = vpop.permute.xlu0 %4496
    %s4499 = sor.u32 256, 16
    %4500 = vbcast.lane.b32.xlu0 %v4490, %s4499
    %v4501 = vpop.permute.xlu0 %4500
    %s4503 = sor.u32 256, 24
    %4504 = vbcast.lane.b32.xlu0 %v4490, %s4503
    %v4505 = vpop.permute.xlu0 %4504
    %s4507 = sor.u32 256, 32
    %4508 = vbcast.lane.b32.xlu0 %v4490, %s4507
    %v4509 = vpop.permute.xlu0 %4508
    %s4511 = sor.u32 256, 40
    %4512 = vbcast.lane.b32.xlu0 %v4490, %s4511
    %v4513 = vpop.permute.xlu0 %4512
    %s4515 = sor.u32 256, 48
    %4516 = vbcast.lane.b32.xlu0 %v4490, %s4515
    %v4517 = vpop.permute.xlu0 %4516
    %s4519 = sor.u32 256, 56
    %4520 = vbcast.lane.b32.xlu0 %v4490, %s4519
    %v4521 = vpop.permute.xlu0 %4520
    %s4523 = sor.u32 256, 64
    %4524 = vbcast.lane.b32.xlu0 %v4490, %s4523
    %v4525 = vpop.permute.xlu0 %4524
    %s4527 = sor.u32 256, 72
    %4528 = vbcast.lane.b32.xlu0 %v4490, %s4527
    %v4529 = vpop.permute.xlu0 %4528
    %s4531 = sor.u32 256, 80
    %4532 = vbcast.lane.b32.xlu0 %v4490, %s4531
    %v4533 = vpop.permute.xlu0 %4532
    %s4535 = sor.u32 256, 88
    %4536 = vbcast.lane.b32.xlu0 %v4490, %s4535
    %v4537 = vpop.permute.xlu0 %4536
    %s4539 = sor.u32 256, 96
    %4540 = vbcast.lane.b32.xlu0 %v4490, %s4539
    %v4541 = vpop.permute.xlu0 %4540
    %s4543 = sor.u32 256, 104
    %4544 = vbcast.lane.b32.xlu0 %v4490, %s4543
    %v4545 = vpop.permute.xlu0 %4544
    %s4547 = sor.u32 256, 112
    %4548 = vbcast.lane.b32.xlu0 %v4490, %s4547
    %v4549 = vpop.permute.xlu0 %4548
    %s4551 = sor.u32 256, 120
    %4552 = vbcast.lane.b32.xlu0 %v4490, %s4551
    %v4553 = vpop.permute.xlu0 %4552
    %v4554 = vlaneseq
    %v4555 = vshrl.u32 %v4554, 7
    %v4556 = vsub.s32 4, %v4555
    %v4557 = vrot.slane %v1068, %v4556
    %4559 = vbcast.lane.b32.xlu0 %v4557, 256
    %v4560 = vpop.permute.xlu0 %4559
    %s4562 = sor.u32 256, 8
    %4563 = vbcast.lane.b32.xlu0 %v4557, %s4562
    %v4564 = vpop.permute.xlu0 %4563
    %s4566 = sor.u32 256, 16
    %4567 = vbcast.lane.b32.xlu0 %v4557, %s4566
    %v4568 = vpop.permute.xlu0 %4567
    %s4570 = sor.u32 256, 24
    %4571 = vbcast.lane.b32.xlu0 %v4557, %s4570
    %v4572 = vpop.permute.xlu0 %4571
    %s4574 = sor.u32 256, 32
    %4575 = vbcast.lane.b32.xlu0 %v4557, %s4574
    %v4576 = vpop.permute.xlu0 %4575
    %s4578 = sor.u32 256, 40
    %4579 = vbcast.lane.b32.xlu0 %v4557, %s4578
    %v4580 = vpop.permute.xlu0 %4579
    %s4582 = sor.u32 256, 48
    %4583 = vbcast.lane.b32.xlu0 %v4557, %s4582
    %v4584 = vpop.permute.xlu0 %4583
    %s4586 = sor.u32 256, 56
    %4587 = vbcast.lane.b32.xlu0 %v4557, %s4586
    %v4588 = vpop.permute.xlu0 %4587
    %s4590 = sor.u32 256, 64
    %4591 = vbcast.lane.b32.xlu0 %v4557, %s4590
    %v4592 = vpop.permute.xlu0 %4591
    %s4594 = sor.u32 256, 72
    %4595 = vbcast.lane.b32.xlu0 %v4557, %s4594
    %v4596 = vpop.permute.xlu0 %4595
    %s4598 = sor.u32 256, 80
    %4599 = vbcast.lane.b32.xlu0 %v4557, %s4598
    %v4600 = vpop.permute.xlu0 %4599
    %s4602 = sor.u32 256, 88
    %4603 = vbcast.lane.b32.xlu0 %v4557, %s4602
    %v4604 = vpop.permute.xlu0 %4603
    %s4606 = sor.u32 256, 96
    %4607 = vbcast.lane.b32.xlu0 %v4557, %s4606
    %v4608 = vpop.permute.xlu0 %4607
    %s4610 = sor.u32 256, 104
    %4611 = vbcast.lane.b32.xlu0 %v4557, %s4610
    %v4612 = vpop.permute.xlu0 %4611
    %s4614 = sor.u32 256, 112
    %4615 = vbcast.lane.b32.xlu0 %v4557, %s4614
    %v4616 = vpop.permute.xlu0 %4615
    %s4618 = sor.u32 256, 120
    %4619 = vbcast.lane.b32.xlu0 %v4557, %s4618
    %v4620 = vpop.permute.xlu0 %4619
    %v4621 = vlaneseq
    %v4622 = vshrl.u32 %v4621, 7
    %v4623 = vsub.s32 5, %v4622
    %v4624 = vrot.slane %v1068, %v4623
    %4626 = vbcast.lane.b32.xlu0 %v4624, 256
    %v4627 = vpop.permute.xlu0 %4626
    %s4629 = sor.u32 256, 8
    %4630 = vbcast.lane.b32.xlu0 %v4624, %s4629
    %v4631 = vpop.permute.xlu0 %4630
    %s4633 = sor.u32 256, 16
    %4634 = vbcast.lane.b32.xlu0 %v4624, %s4633
    %v4635 = vpop.permute.xlu0 %4634
    %s4637 = sor.u32 256, 24
    %4638 = vbcast.lane.b32.xlu0 %v4624, %s4637
    %v4639 = vpop.permute.xlu0 %4638
    %s4641 = sor.u32 256, 32
    %4642 = vbcast.lane.b32.xlu0 %v4624, %s4641
    %v4643 = vpop.permute.xlu0 %4642
    %s4645 = sor.u32 256, 40
    %4646 = vbcast.lane.b32.xlu0 %v4624, %s4645
    %v4647 = vpop.permute.xlu0 %4646
    %s4649 = sor.u32 256, 48
    %4650 = vbcast.lane.b32.xlu0 %v4624, %s4649
    %v4651 = vpop.permute.xlu0 %4650
    %s4653 = sor.u32 256, 56
    %4654 = vbcast.lane.b32.xlu0 %v4624, %s4653
    %v4655 = vpop.permute.xlu0 %4654
    %s4657 = sor.u32 256, 64
    %4658 = vbcast.lane.b32.xlu0 %v4624, %s4657
    %v4659 = vpop.permute.xlu0 %4658
    %s4661 = sor.u32 256, 72
    %4662 = vbcast.lane.b32.xlu0 %v4624, %s4661
    %v4663 = vpop.permute.xlu0 %4662
    %s4665 = sor.u32 256, 80
    %4666 = vbcast.lane.b32.xlu0 %v4624, %s4665
    %v4667 = vpop.permute.xlu0 %4666
    %s4669 = sor.u32 256, 88
    %4670 = vbcast.lane.b32.xlu0 %v4624, %s4669
    %v4671 = vpop.permute.xlu0 %4670
    %s4673 = sor.u32 256, 96
    %4674 = vbcast.lane.b32.xlu0 %v4624, %s4673
    %v4675 = vpop.permute.xlu0 %4674
    %s4677 = sor.u32 256, 104
    %4678 = vbcast.lane.b32.xlu0 %v4624, %s4677
    %v4679 = vpop.permute.xlu0 %4678
    %s4681 = sor.u32 256, 112
    %4682 = vbcast.lane.b32.xlu0 %v4624, %s4681
    %v4683 = vpop.permute.xlu0 %4682
    %s4685 = sor.u32 256, 120
    %4686 = vbcast.lane.b32.xlu0 %v4624, %s4685
    %v4687 = vpop.permute.xlu0 %4686
    %v4688 = vlaneseq
    %v4689 = vshrl.u32 %v4688, 7
    %v4690 = vsub.s32 6, %v4689
    %v4691 = vrot.slane %v1068, %v4690
    %4693 = vbcast.lane.b32.xlu0 %v4691, 256
    %v4694 = vpop.permute.xlu0 %4693
    %s4696 = sor.u32 256, 8
    %4697 = vbcast.lane.b32.xlu0 %v4691, %s4696
    %v4698 = vpop.permute.xlu0 %4697
    %s4700 = sor.u32 256, 16
    %4701 = vbcast.lane.b32.xlu0 %v4691, %s4700
    %v4702 = vpop.permute.xlu0 %4701
    %s4704 = sor.u32 256, 24
    %4705 = vbcast.lane.b32.xlu0 %v4691, %s4704
    %v4706 = vpop.permute.xlu0 %4705
    %s4708 = sor.u32 256, 32
    %4709 = vbcast.lane.b32.xlu0 %v4691, %s4708
    %v4710 = vpop.permute.xlu0 %4709
    %s4712 = sor.u32 256, 40
    %4713 = vbcast.lane.b32.xlu0 %v4691, %s4712
    %v4714 = vpop.permute.xlu0 %4713
    %s4716 = sor.u32 256, 48
    %4717 = vbcast.lane.b32.xlu0 %v4691, %s4716
    %v4718 = vpop.permute.xlu0 %4717
    %s4720 = sor.u32 256, 56
    %4721 = vbcast.lane.b32.xlu0 %v4691, %s4720
    %v4722 = vpop.permute.xlu0 %4721
    %s4724 = sor.u32 256, 64
    %4725 = vbcast.lane.b32.xlu0 %v4691, %s4724
    %v4726 = vpop.permute.xlu0 %4725
    %s4728 = sor.u32 256, 72
    %4729 = vbcast.lane.b32.xlu0 %v4691, %s4728
    %v4730 = vpop.permute.xlu0 %4729
    %s4732 = sor.u32 256, 80
    %4733 = vbcast.lane.b32.xlu0 %v4691, %s4732
    %v4734 = vpop.permute.xlu0 %4733
    %s4736 = sor.u32 256, 88
    %4737 = vbcast.lane.b32.xlu0 %v4691, %s4736
    %v4738 = vpop.permute.xlu0 %4737
    %s4740 = sor.u32 256, 96
    %4741 = vbcast.lane.b32.xlu0 %v4691, %s4740
    %v4742 = vpop.permute.xlu0 %4741
    %s4744 = sor.u32 256, 104
    %4745 = vbcast.lane.b32.xlu0 %v4691, %s4744
    %v4746 = vpop.permute.xlu0 %4745
    %s4748 = sor.u32 256, 112
    %4749 = vbcast.lane.b32.xlu0 %v4691, %s4748
    %v4750 = vpop.permute.xlu0 %4749
    %s4752 = sor.u32 256, 120
    %4753 = vbcast.lane.b32.xlu0 %v4691, %s4752
    %v4754 = vpop.permute.xlu0 %4753
    %v4755 = vlaneseq
    %v4756 = vshrl.u32 %v4755, 7
    %v4757 = vsub.s32 7, %v4756
    %v4758 = vrot.slane %v1068, %v4757
    %4760 = vbcast.lane.b32.xlu0 %v4758, 256
    %v4761 = vpop.permute.xlu0 %4760
    %s4763 = sor.u32 256, 8
    %4764 = vbcast.lane.b32.xlu0 %v4758, %s4763
    %v4765 = vpop.permute.xlu0 %4764
    %s4767 = sor.u32 256, 16
    %4768 = vbcast.lane.b32.xlu0 %v4758, %s4767
    %v4769 = vpop.permute.xlu0 %4768
    %s4771 = sor.u32 256, 24
    %4772 = vbcast.lane.b32.xlu0 %v4758, %s4771
    %v4773 = vpop.permute.xlu0 %4772
    %s4775 = sor.u32 256, 32
    %4776 = vbcast.lane.b32.xlu0 %v4758, %s4775
    %v4777 = vpop.permute.xlu0 %4776
    %s4779 = sor.u32 256, 40
    %4780 = vbcast.lane.b32.xlu0 %v4758, %s4779
    %v4781 = vpop.permute.xlu0 %4780
    %s4783 = sor.u32 256, 48
    %4784 = vbcast.lane.b32.xlu0 %v4758, %s4783
    %v4785 = vpop.permute.xlu0 %4784
    %s4787 = sor.u32 256, 56
    %4788 = vbcast.lane.b32.xlu0 %v4758, %s4787
    %v4789 = vpop.permute.xlu0 %4788
    %s4791 = sor.u32 256, 64
    %4792 = vbcast.lane.b32.xlu0 %v4758, %s4791
    %v4793 = vpop.permute.xlu0 %4792
    %s4795 = sor.u32 256, 72
    %4796 = vbcast.lane.b32.xlu0 %v4758, %s4795
    %v4797 = vpop.permute.xlu0 %4796
    %s4799 = sor.u32 256, 80
    %4800 = vbcast.lane.b32.xlu0 %v4758, %s4799
    %v4801 = vpop.permute.xlu0 %4800
    %s4803 = sor.u32 256, 88
    %4804 = vbcast.lane.b32.xlu0 %v4758, %s4803
    %v4805 = vpop.permute.xlu0 %4804
    %s4807 = sor.u32 256, 96
    %4808 = vbcast.lane.b32.xlu0 %v4758, %s4807
    %v4809 = vpop.permute.xlu0 %4808
    %s4811 = sor.u32 256, 104
    %4812 = vbcast.lane.b32.xlu0 %v4758, %s4811
    %v4813 = vpop.permute.xlu0 %4812
    %s4815 = sor.u32 256, 112
    %4816 = vbcast.lane.b32.xlu0 %v4758, %s4815
    %v4817 = vpop.permute.xlu0 %4816
    %s4819 = sor.u32 256, 120
    %4820 = vbcast.lane.b32.xlu0 %v4758, %s4819
    %v4821 = vpop.permute.xlu0 %4820
    %v4822 = vlaneseq
    %v4823 = vshrl.u32 %v4822, 7
    %v4824 = vsub.s32 0, %v4823
    %v4825 = vrot.slane %v1069, %v4824
    %4827 = vbcast.lane.b32.xlu0 %v4825, 256
    %v4828 = vpop.permute.xlu0 %4827
    %s4830 = sor.u32 256, 8
    %4831 = vbcast.lane.b32.xlu0 %v4825, %s4830
    %v4832 = vpop.permute.xlu0 %4831
    %s4834 = sor.u32 256, 16
    %4835 = vbcast.lane.b32.xlu0 %v4825, %s4834
    %v4836 = vpop.permute.xlu0 %4835
    %s4838 = sor.u32 256, 24
    %4839 = vbcast.lane.b32.xlu0 %v4825, %s4838
    %v4840 = vpop.permute.xlu0 %4839
    %s4842 = sor.u32 256, 32
    %4843 = vbcast.lane.b32.xlu0 %v4825, %s4842
    %v4844 = vpop.permute.xlu0 %4843
    %s4846 = sor.u32 256, 40
    %4847 = vbcast.lane.b32.xlu0 %v4825, %s4846
    %v4848 = vpop.permute.xlu0 %4847
    %s4850 = sor.u32 256, 48
    %4851 = vbcast.lane.b32.xlu0 %v4825, %s4850
    %v4852 = vpop.permute.xlu0 %4851
    %s4854 = sor.u32 256, 56
    %4855 = vbcast.lane.b32.xlu0 %v4825, %s4854
    %v4856 = vpop.permute.xlu0 %4855
    %s4858 = sor.u32 256, 64
    %4859 = vbcast.lane.b32.xlu0 %v4825, %s4858
    %v4860 = vpop.permute.xlu0 %4859
    %s4862 = sor.u32 256, 72
    %4863 = vbcast.lane.b32.xlu0 %v4825, %s4862
    %v4864 = vpop.permute.xlu0 %4863
    %s4866 = sor.u32 256, 80
    %4867 = vbcast.lane.b32.xlu0 %v4825, %s4866
    %v4868 = vpop.permute.xlu0 %4867
    %s4870 = sor.u32 256, 88
    %4871 = vbcast.lane.b32.xlu0 %v4825, %s4870
    %v4872 = vpop.permute.xlu0 %4871
    %s4874 = sor.u32 256, 96
    %4875 = vbcast.lane.b32.xlu0 %v4825, %s4874
    %v4876 = vpop.permute.xlu0 %4875
    %s4878 = sor.u32 256, 104
    %4879 = vbcast.lane.b32.xlu0 %v4825, %s4878
    %v4880 = vpop.permute.xlu0 %4879
    %s4882 = sor.u32 256, 112
    %4883 = vbcast.lane.b32.xlu0 %v4825, %s4882
    %v4884 = vpop.permute.xlu0 %4883
    %s4886 = sor.u32 256, 120
    %4887 = vbcast.lane.b32.xlu0 %v4825, %s4886
    %v4888 = vpop.permute.xlu0 %4887
    %v4889 = vlaneseq
    %v4890 = vshrl.u32 %v4889, 7
    %v4891 = vsub.s32 1, %v4890
    %v4892 = vrot.slane %v1069, %v4891
    %4894 = vbcast.lane.b32.xlu0 %v4892, 256
    %v4895 = vpop.permute.xlu0 %4894
    %s4897 = sor.u32 256, 8
    %4898 = vbcast.lane.b32.xlu0 %v4892, %s4897
    %v4899 = vpop.permute.xlu0 %4898
    %s4901 = sor.u32 256, 16
    %4902 = vbcast.lane.b32.xlu0 %v4892, %s4901
    %v4903 = vpop.permute.xlu0 %4902
    %s4905 = sor.u32 256, 24
    %4906 = vbcast.lane.b32.xlu0 %v4892, %s4905
    %v4907 = vpop.permute.xlu0 %4906
    %s4909 = sor.u32 256, 32
    %4910 = vbcast.lane.b32.xlu0 %v4892, %s4909
    %v4911 = vpop.permute.xlu0 %4910
    %s4913 = sor.u32 256, 40
    %4914 = vbcast.lane.b32.xlu0 %v4892, %s4913
    %v4915 = vpop.permute.xlu0 %4914
    %s4917 = sor.u32 256, 48
    %4918 = vbcast.lane.b32.xlu0 %v4892, %s4917
    %v4919 = vpop.permute.xlu0 %4918
    %s4921 = sor.u32 256, 56
    %4922 = vbcast.lane.b32.xlu0 %v4892, %s4921
    %v4923 = vpop.permute.xlu0 %4922
    %s4925 = sor.u32 256, 64
    %4926 = vbcast.lane.b32.xlu0 %v4892, %s4925
    %v4927 = vpop.permute.xlu0 %4926
    %s4929 = sor.u32 256, 72
    %4930 = vbcast.lane.b32.xlu0 %v4892, %s4929
    %v4931 = vpop.permute.xlu0 %4930
    %s4933 = sor.u32 256, 80
    %4934 = vbcast.lane.b32.xlu0 %v4892, %s4933
    %v4935 = vpop.permute.xlu0 %4934
    %s4937 = sor.u32 256, 88
    %4938 = vbcast.lane.b32.xlu0 %v4892, %s4937
    %v4939 = vpop.permute.xlu0 %4938
    %s4941 = sor.u32 256, 96
    %4942 = vbcast.lane.b32.xlu0 %v4892, %s4941
    %v4943 = vpop.permute.xlu0 %4942
    %s4945 = sor.u32 256, 104
    %4946 = vbcast.lane.b32.xlu0 %v4892, %s4945
    %v4947 = vpop.permute.xlu0 %4946
    %s4949 = sor.u32 256, 112
    %4950 = vbcast.lane.b32.xlu0 %v4892, %s4949
    %v4951 = vpop.permute.xlu0 %4950
    %s4953 = sor.u32 256, 120
    %4954 = vbcast.lane.b32.xlu0 %v4892, %s4953
    %v4955 = vpop.permute.xlu0 %4954
    %v4956 = vlaneseq
    %v4957 = vshrl.u32 %v4956, 7
    %v4958 = vsub.s32 2, %v4957
    %v4959 = vrot.slane %v1069, %v4958
    %4961 = vbcast.lane.b32.xlu0 %v4959, 256
    %v4962 = vpop.permute.xlu0 %4961
    %s4964 = sor.u32 256, 8
    %4965 = vbcast.lane.b32.xlu0 %v4959, %s4964
    %v4966 = vpop.permute.xlu0 %4965
    %s4968 = sor.u32 256, 16
    %4969 = vbcast.lane.b32.xlu0 %v4959, %s4968
    %v4970 = vpop.permute.xlu0 %4969
    %s4972 = sor.u32 256, 24
    %4973 = vbcast.lane.b32.xlu0 %v4959, %s4972
    %v4974 = vpop.permute.xlu0 %4973
    %s4976 = sor.u32 256, 32
    %4977 = vbcast.lane.b32.xlu0 %v4959, %s4976
    %v4978 = vpop.permute.xlu0 %4977
    %s4980 = sor.u32 256, 40
    %4981 = vbcast.lane.b32.xlu0 %v4959, %s4980
    %v4982 = vpop.permute.xlu0 %4981
    %s4984 = sor.u32 256, 48
    %4985 = vbcast.lane.b32.xlu0 %v4959, %s4984
    %v4986 = vpop.permute.xlu0 %4985
    %s4988 = sor.u32 256, 56
    %4989 = vbcast.lane.b32.xlu0 %v4959, %s4988
    %v4990 = vpop.permute.xlu0 %4989
    %s4992 = sor.u32 256, 64
    %4993 = vbcast.lane.b32.xlu0 %v4959, %s4992
    %v4994 = vpop.permute.xlu0 %4993
    %s4996 = sor.u32 256, 72
    %4997 = vbcast.lane.b32.xlu0 %v4959, %s4996
    %v4998 = vpop.permute.xlu0 %4997
    %s5000 = sor.u32 256, 80
    %5001 = vbcast.lane.b32.xlu0 %v4959, %s5000
    %v5002 = vpop.permute.xlu0 %5001
    %s5004 = sor.u32 256, 88
    %5005 = vbcast.lane.b32.xlu0 %v4959, %s5004
    %v5006 = vpop.permute.xlu0 %5005
    %s5008 = sor.u32 256, 96
    %5009 = vbcast.lane.b32.xlu0 %v4959, %s5008
    %v5010 = vpop.permute.xlu0 %5009
    %s5012 = sor.u32 256, 104
    %5013 = vbcast.lane.b32.xlu0 %v4959, %s5012
    %v5014 = vpop.permute.xlu0 %5013
    %s5016 = sor.u32 256, 112
    %5017 = vbcast.lane.b32.xlu0 %v4959, %s5016
    %v5018 = vpop.permute.xlu0 %5017
    %s5020 = sor.u32 256, 120
    %5021 = vbcast.lane.b32.xlu0 %v4959, %s5020
    %v5022 = vpop.permute.xlu0 %5021
    %v5023 = vlaneseq
    %v5024 = vshrl.u32 %v5023, 7
    %v5025 = vsub.s32 3, %v5024
    %v5026 = vrot.slane %v1069, %v5025
    %5028 = vbcast.lane.b32.xlu0 %v5026, 256
    %v5029 = vpop.permute.xlu0 %5028
    %s5031 = sor.u32 256, 8
    %5032 = vbcast.lane.b32.xlu0 %v5026, %s5031
    %v5033 = vpop.permute.xlu0 %5032
    %s5035 = sor.u32 256, 16
    %5036 = vbcast.lane.b32.xlu0 %v5026, %s5035
    %v5037 = vpop.permute.xlu0 %5036
    %s5039 = sor.u32 256, 24
    %5040 = vbcast.lane.b32.xlu0 %v5026, %s5039
    %v5041 = vpop.permute.xlu0 %5040
    %s5043 = sor.u32 256, 32
    %5044 = vbcast.lane.b32.xlu0 %v5026, %s5043
    %v5045 = vpop.permute.xlu0 %5044
    %s5047 = sor.u32 256, 40
    %5048 = vbcast.lane.b32.xlu0 %v5026, %s5047
    %v5049 = vpop.permute.xlu0 %5048
    %s5051 = sor.u32 256, 48
    %5052 = vbcast.lane.b32.xlu0 %v5026, %s5051
    %v5053 = vpop.permute.xlu0 %5052
    %s5055 = sor.u32 256, 56
    %5056 = vbcast.lane.b32.xlu0 %v5026, %s5055
    %v5057 = vpop.permute.xlu0 %5056
    %s5059 = sor.u32 256, 64
    %5060 = vbcast.lane.b32.xlu0 %v5026, %s5059
    %v5061 = vpop.permute.xlu0 %5060
    %s5063 = sor.u32 256, 72
    %5064 = vbcast.lane.b32.xlu0 %v5026, %s5063
    %v5065 = vpop.permute.xlu0 %5064
    %s5067 = sor.u32 256, 80
    %5068 = vbcast.lane.b32.xlu0 %v5026, %s5067
    %v5069 = vpop.permute.xlu0 %5068
    %s5071 = sor.u32 256, 88
    %5072 = vbcast.lane.b32.xlu0 %v5026, %s5071
    %v5073 = vpop.permute.xlu0 %5072
    %s5075 = sor.u32 256, 96
    %5076 = vbcast.lane.b32.xlu0 %v5026, %s5075
    %v5077 = vpop.permute.xlu0 %5076
    %s5079 = sor.u32 256, 104
    %5080 = vbcast.lane.b32.xlu0 %v5026, %s5079
    %v5081 = vpop.permute.xlu0 %5080
    %s5083 = sor.u32 256, 112
    %5084 = vbcast.lane.b32.xlu0 %v5026, %s5083
    %v5085 = vpop.permute.xlu0 %5084
    %s5087 = sor.u32 256, 120
    %5088 = vbcast.lane.b32.xlu0 %v5026, %s5087
    %v5089 = vpop.permute.xlu0 %5088
    %v5090 = vlaneseq
    %v5091 = vshrl.u32 %v5090, 7
    %v5092 = vsub.s32 4, %v5091
    %v5093 = vrot.slane %v1069, %v5092
    %5095 = vbcast.lane.b32.xlu0 %v5093, 256
    %v5096 = vpop.permute.xlu0 %5095
    %s5098 = sor.u32 256, 8
    %5099 = vbcast.lane.b32.xlu0 %v5093, %s5098
    %v5100 = vpop.permute.xlu0 %5099
    %s5102 = sor.u32 256, 16
    %5103 = vbcast.lane.b32.xlu0 %v5093, %s5102
    %v5104 = vpop.permute.xlu0 %5103
    %s5106 = sor.u32 256, 24
    %5107 = vbcast.lane.b32.xlu0 %v5093, %s5106
    %v5108 = vpop.permute.xlu0 %5107
    %s5110 = sor.u32 256, 32
    %5111 = vbcast.lane.b32.xlu0 %v5093, %s5110
    %v5112 = vpop.permute.xlu0 %5111
    %s5114 = sor.u32 256, 40
    %5115 = vbcast.lane.b32.xlu0 %v5093, %s5114
    %v5116 = vpop.permute.xlu0 %5115
    %s5118 = sor.u32 256, 48
    %5119 = vbcast.lane.b32.xlu0 %v5093, %s5118
    %v5120 = vpop.permute.xlu0 %5119
    %s5122 = sor.u32 256, 56
    %5123 = vbcast.lane.b32.xlu0 %v5093, %s5122
    %v5124 = vpop.permute.xlu0 %5123
    %s5126 = sor.u32 256, 64
    %5127 = vbcast.lane.b32.xlu0 %v5093, %s5126
    %v5128 = vpop.permute.xlu0 %5127
    %s5130 = sor.u32 256, 72
    %5131 = vbcast.lane.b32.xlu0 %v5093, %s5130
    %v5132 = vpop.permute.xlu0 %5131
    %s5134 = sor.u32 256, 80
    %5135 = vbcast.lane.b32.xlu0 %v5093, %s5134
    %v5136 = vpop.permute.xlu0 %5135
    %s5138 = sor.u32 256, 88
    %5139 = vbcast.lane.b32.xlu0 %v5093, %s5138
    %v5140 = vpop.permute.xlu0 %5139
    %s5142 = sor.u32 256, 96
    %5143 = vbcast.lane.b32.xlu0 %v5093, %s5142
    %v5144 = vpop.permute.xlu0 %5143
    %s5146 = sor.u32 256, 104
    %5147 = vbcast.lane.b32.xlu0 %v5093, %s5146
    %v5148 = vpop.permute.xlu0 %5147
    %s5150 = sor.u32 256, 112
    %5151 = vbcast.lane.b32.xlu0 %v5093, %s5150
    %v5152 = vpop.permute.xlu0 %5151
    %s5154 = sor.u32 256, 120
    %5155 = vbcast.lane.b32.xlu0 %v5093, %s5154
    %v5156 = vpop.permute.xlu0 %5155
    %v5157 = vlaneseq
    %v5158 = vshrl.u32 %v5157, 7
    %v5159 = vsub.s32 5, %v5158
    %v5160 = vrot.slane %v1069, %v5159
    %5162 = vbcast.lane.b32.xlu0 %v5160, 256
    %v5163 = vpop.permute.xlu0 %5162
    %s5165 = sor.u32 256, 8
    %5166 = vbcast.lane.b32.xlu0 %v5160, %s5165
    %v5167 = vpop.permute.xlu0 %5166
    %s5169 = sor.u32 256, 16
    %5170 = vbcast.lane.b32.xlu0 %v5160, %s5169
    %v5171 = vpop.permute.xlu0 %5170
    %s5173 = sor.u32 256, 24
    %5174 = vbcast.lane.b32.xlu0 %v5160, %s5173
    %v5175 = vpop.permute.xlu0 %5174
    %s5177 = sor.u32 256, 32
    %5178 = vbcast.lane.b32.xlu0 %v5160, %s5177
    %v5179 = vpop.permute.xlu0 %5178
    %s5181 = sor.u32 256, 40
    %5182 = vbcast.lane.b32.xlu0 %v5160, %s5181
    %v5183 = vpop.permute.xlu0 %5182
    %s5185 = sor.u32 256, 48
    %5186 = vbcast.lane.b32.xlu0 %v5160, %s5185
    %v5187 = vpop.permute.xlu0 %5186
    %s5189 = sor.u32 256, 56
    %5190 = vbcast.lane.b32.xlu0 %v5160, %s5189
    %v5191 = vpop.permute.xlu0 %5190
    %s5193 = sor.u32 256, 64
    %5194 = vbcast.lane.b32.xlu0 %v5160, %s5193
    %v5195 = vpop.permute.xlu0 %5194
    %s5197 = sor.u32 256, 72
    %5198 = vbcast.lane.b32.xlu0 %v5160, %s5197
    %v5199 = vpop.permute.xlu0 %5198
    %s5201 = sor.u32 256, 80
    %5202 = vbcast.lane.b32.xlu0 %v5160, %s5201
    %v5203 = vpop.permute.xlu0 %5202
    %s5205 = sor.u32 256, 88
    %5206 = vbcast.lane.b32.xlu0 %v5160, %s5205
    %v5207 = vpop.permute.xlu0 %5206
    %s5209 = sor.u32 256, 96
    %5210 = vbcast.lane.b32.xlu0 %v5160, %s5209
    %v5211 = vpop.permute.xlu0 %5210
    %s5213 = sor.u32 256, 104
    %5214 = vbcast.lane.b32.xlu0 %v5160, %s5213
    %v5215 = vpop.permute.xlu0 %5214
    %s5217 = sor.u32 256, 112
    %5218 = vbcast.lane.b32.xlu0 %v5160, %s5217
    %v5219 = vpop.permute.xlu0 %5218
    %s5221 = sor.u32 256, 120
    %5222 = vbcast.lane.b32.xlu0 %v5160, %s5221
    %v5223 = vpop.permute.xlu0 %5222
    %v5224 = vlaneseq
    %v5225 = vshrl.u32 %v5224, 7
    %v5226 = vsub.s32 6, %v5225
    %v5227 = vrot.slane %v1069, %v5226
    %5229 = vbcast.lane.b32.xlu0 %v5227, 256
    %v5230 = vpop.permute.xlu0 %5229
    %s5232 = sor.u32 256, 8
    %5233 = vbcast.lane.b32.xlu0 %v5227, %s5232
    %v5234 = vpop.permute.xlu0 %5233
    %s5236 = sor.u32 256, 16
    %5237 = vbcast.lane.b32.xlu0 %v5227, %s5236
    %v5238 = vpop.permute.xlu0 %5237
    %s5240 = sor.u32 256, 24
    %5241 = vbcast.lane.b32.xlu0 %v5227, %s5240
    %v5242 = vpop.permute.xlu0 %5241
    %s5244 = sor.u32 256, 32
    %5245 = vbcast.lane.b32.xlu0 %v5227, %s5244
    %v5246 = vpop.permute.xlu0 %5245
    %s5248 = sor.u32 256, 40
    %5249 = vbcast.lane.b32.xlu0 %v5227, %s5248
    %v5250 = vpop.permute.xlu0 %5249
    %s5252 = sor.u32 256, 48
    %5253 = vbcast.lane.b32.xlu0 %v5227, %s5252
    %v5254 = vpop.permute.xlu0 %5253
    %s5256 = sor.u32 256, 56
    %5257 = vbcast.lane.b32.xlu0 %v5227, %s5256
    %v5258 = vpop.permute.xlu0 %5257
    %s5260 = sor.u32 256, 64
    %5261 = vbcast.lane.b32.xlu0 %v5227, %s5260
    %v5262 = vpop.permute.xlu0 %5261
    %s5264 = sor.u32 256, 72
    %5265 = vbcast.lane.b32.xlu0 %v5227, %s5264
    %v5266 = vpop.permute.xlu0 %5265
    %s5268 = sor.u32 256, 80
    %5269 = vbcast.lane.b32.xlu0 %v5227, %s5268
    %v5270 = vpop.permute.xlu0 %5269
    %s5272 = sor.u32 256, 88
    %5273 = vbcast.lane.b32.xlu0 %v5227, %s5272
    %v5274 = vpop.permute.xlu0 %5273
    %s5276 = sor.u32 256, 96
    %5277 = vbcast.lane.b32.xlu0 %v5227, %s5276
    %v5278 = vpop.permute.xlu0 %5277
    %s5280 = sor.u32 256, 104
    %5281 = vbcast.lane.b32.xlu0 %v5227, %s5280
    %v5282 = vpop.permute.xlu0 %5281
    %s5284 = sor.u32 256, 112
    %5285 = vbcast.lane.b32.xlu0 %v5227, %s5284
    %v5286 = vpop.permute.xlu0 %5285
    %s5288 = sor.u32 256, 120
    %5289 = vbcast.lane.b32.xlu0 %v5227, %s5288
    %v5290 = vpop.permute.xlu0 %5289
    %v5291 = vlaneseq
    %v5292 = vshrl.u32 %v5291, 7
    %v5293 = vsub.s32 7, %v5292
    %v5294 = vrot.slane %v1069, %v5293
    %5296 = vbcast.lane.b32.xlu0 %v5294, 256
    %v5297 = vpop.permute.xlu0 %5296
    %s5299 = sor.u32 256, 8
    %5300 = vbcast.lane.b32.xlu0 %v5294, %s5299
    %v5301 = vpop.permute.xlu0 %5300
    %s5303 = sor.u32 256, 16
    %5304 = vbcast.lane.b32.xlu0 %v5294, %s5303
    %v5305 = vpop.permute.xlu0 %5304
    %s5307 = sor.u32 256, 24
    %5308 = vbcast.lane.b32.xlu0 %v5294, %s5307
    %v5309 = vpop.permute.xlu0 %5308
    %s5311 = sor.u32 256, 32
    %5312 = vbcast.lane.b32.xlu0 %v5294, %s5311
    %v5313 = vpop.permute.xlu0 %5312
    %s5315 = sor.u32 256, 40
    %5316 = vbcast.lane.b32.xlu0 %v5294, %s5315
    %v5317 = vpop.permute.xlu0 %5316
    %s5319 = sor.u32 256, 48
    %5320 = vbcast.lane.b32.xlu0 %v5294, %s5319
    %v5321 = vpop.permute.xlu0 %5320
    %s5323 = sor.u32 256, 56
    %5324 = vbcast.lane.b32.xlu0 %v5294, %s5323
    %v5325 = vpop.permute.xlu0 %5324
    %s5327 = sor.u32 256, 64
    %5328 = vbcast.lane.b32.xlu0 %v5294, %s5327
    %v5329 = vpop.permute.xlu0 %5328
    %s5331 = sor.u32 256, 72
    %5332 = vbcast.lane.b32.xlu0 %v5294, %s5331
    %v5333 = vpop.permute.xlu0 %5332
    %s5335 = sor.u32 256, 80
    %5336 = vbcast.lane.b32.xlu0 %v5294, %s5335
    %v5337 = vpop.permute.xlu0 %5336
    %s5339 = sor.u32 256, 88
    %5340 = vbcast.lane.b32.xlu0 %v5294, %s5339
    %v5341 = vpop.permute.xlu0 %5340
    %s5343 = sor.u32 256, 96
    %5344 = vbcast.lane.b32.xlu0 %v5294, %s5343
    %v5345 = vpop.permute.xlu0 %5344
    %s5347 = sor.u32 256, 104
    %5348 = vbcast.lane.b32.xlu0 %v5294, %s5347
    %v5349 = vpop.permute.xlu0 %5348
    %s5351 = sor.u32 256, 112
    %5352 = vbcast.lane.b32.xlu0 %v5294, %s5351
    %v5353 = vpop.permute.xlu0 %5352
    %s5355 = sor.u32 256, 120
    %5356 = vbcast.lane.b32.xlu0 %v5294, %s5355
    %v5357 = vpop.permute.xlu0 %5356
    %v5358 = vmul.f32 %v1076, %v1016
    %v5359 = vmul.f32 %v1080, %v1017
    %v5360 = vmul.f32 %v1084, %v1018
    %v5361 = vmul.f32 %v1088, %v1019
    %v5362 = vmul.f32 %v1092, %v1020
    %v5363 = vmul.f32 %v1096, %v1021
    %v5364 = vmul.f32 %v1100, %v1022
    %v5365 = vmul.f32 %v1104, %v1023
    %v5366 = vmul.f32 %v1108, %v1024
    %v5367 = vmul.f32 %v1112, %v1025
    %v5368 = vmul.f32 %v1116, %v1026
    %v5369 = vmul.f32 %v1120, %v1027
    %v5370 = vmul.f32 %v1124, %v1028
    %v5371 = vmul.f32 %v1128, %v1029
    %v5372 = vmul.f32 %v1132, %v1030
    %v5373 = vmul.f32 %v1136, %v1031
    %v5374 = vmul.f32 %v1143, %v1016
    %v5375 = vmul.f32 %v1147, %v1017
    %v5376 = vmul.f32 %v1151, %v1018
    %v5377 = vmul.f32 %v1155, %v1019
    %v5378 = vmul.f32 %v1159, %v1020
    %v5379 = vmul.f32 %v1163, %v1021
    %v5380 = vmul.f32 %v1167, %v1022
    %v5381 = vmul.f32 %v1171, %v1023
    %v5382 = vmul.f32 %v1175, %v1024
    %v5383 = vmul.f32 %v1179, %v1025
    %v5384 = vmul.f32 %v1183, %v1026
    %v5385 = vmul.f32 %v1187, %v1027
    %v5386 = vmul.f32 %v1191, %v1028
    %v5387 = vmul.f32 %v1195, %v1029
    %v5388 = vmul.f32 %v1199, %v1030
    %v5389 = vmul.f32 %v1203, %v1031
    %v5390 = vmul.f32 %v1210, %v1016
    %v5391 = vmul.f32 %v1214, %v1017
    %v5392 = vmul.f32 %v1218, %v1018
    %v5393 = vmul.f32 %v1222, %v1019
    %v5394 = vmul.f32 %v1226, %v1020
    %v5395 = vmul.f32 %v1230, %v1021
    %v5396 = vmul.f32 %v1234, %v1022
    %v5397 = vmul.f32 %v1238, %v1023
    %v5398 = vmul.f32 %v1242, %v1024
    %v5399 = vmul.f32 %v1246, %v1025
    %v5400 = vmul.f32 %v1250, %v1026
    %v5401 = vmul.f32 %v1254, %v1027
    %v5402 = vmul.f32 %v1258, %v1028
    %v5403 = vmul.f32 %v1262, %v1029
    %v5404 = vmul.f32 %v1266, %v1030
    %v5405 = vmul.f32 %v1270, %v1031
    %v5406 = vmul.f32 %v1277, %v1016
    %v5407 = vmul.f32 %v1281, %v1017
    %v5408 = vmul.f32 %v1285, %v1018
    %v5409 = vmul.f32 %v1289, %v1019
    %v5410 = vmul.f32 %v1293, %v1020
    %v5411 = vmul.f32 %v1297, %v1021
    %v5412 = vmul.f32 %v1301, %v1022
    %v5413 = vmul.f32 %v1305, %v1023
    %v5414 = vmul.f32 %v1309, %v1024
    %v5415 = vmul.f32 %v1313, %v1025
    %v5416 = vmul.f32 %v1317, %v1026
    %v5417 = vmul.f32 %v1321, %v1027
    %v5418 = vmul.f32 %v1325, %v1028
    %v5419 = vmul.f32 %v1329, %v1029
    %v5420 = vmul.f32 %v1333, %v1030
    %v5421 = vmul.f32 %v1337, %v1031
    %v5422 = vmul.f32 %v1344, %v1016
    %v5423 = vmul.f32 %v1348, %v1017
    %v5424 = vmul.f32 %v1352, %v1018
    %v5425 = vmul.f32 %v1356, %v1019
    %v5426 = vmul.f32 %v1360, %v1020
    %v5427 = vmul.f32 %v1364, %v1021
    %v5428 = vmul.f32 %v1368, %v1022
    %v5429 = vmul.f32 %v1372, %v1023
    %v5430 = vmul.f32 %v1376, %v1024
    %v5431 = vmul.f32 %v1380, %v1025
    %v5432 = vmul.f32 %v1384, %v1026
    %v5433 = vmul.f32 %v1388, %v1027
    %v5434 = vmul.f32 %v1392, %v1028
    %v5435 = vmul.f32 %v1396, %v1029
    %v5436 = vmul.f32 %v1400, %v1030
    %v5437 = vmul.f32 %v1404, %v1031
    %v5438 = vmul.f32 %v1411, %v1016
    %v5439 = vmul.f32 %v1415, %v1017
    %v5440 = vmul.f32 %v1419, %v1018
    %v5441 = vmul.f32 %v1423, %v1019
    %v5442 = vmul.f32 %v1427, %v1020
    %v5443 = vmul.f32 %v1431, %v1021
    %v5444 = vmul.f32 %v1435, %v1022
    %v5445 = vmul.f32 %v1439, %v1023
    %v5446 = vmul.f32 %v1443, %v1024
    %v5447 = vmul.f32 %v1447, %v1025
    %v5448 = vmul.f32 %v1451, %v1026
    %v5449 = vmul.f32 %v1455, %v1027
    %v5450 = vmul.f32 %v1459, %v1028
    %v5451 = vmul.f32 %v1463, %v1029
    %v5452 = vmul.f32 %v1467, %v1030
    %v5453 = vmul.f32 %v1471, %v1031
    %v5454 = vmul.f32 %v1478, %v1016
    %v5455 = vmul.f32 %v1482, %v1017
    %v5456 = vmul.f32 %v1486, %v1018
    %v5457 = vmul.f32 %v1490, %v1019
    %v5458 = vmul.f32 %v1494, %v1020
    %v5459 = vmul.f32 %v1498, %v1021
    %v5460 = vmul.f32 %v1502, %v1022
    %v5461 = vmul.f32 %v1506, %v1023
    %v5462 = vmul.f32 %v1510, %v1024
    %v5463 = vmul.f32 %v1514, %v1025
    %v5464 = vmul.f32 %v1518, %v1026
    %v5465 = vmul.f32 %v1522, %v1027
    %v5466 = vmul.f32 %v1526, %v1028
    %v5467 = vmul.f32 %v1530, %v1029
    %v5468 = vmul.f32 %v1534, %v1030
    %v5469 = vmul.f32 %v1538, %v1031
    %v5470 = vmul.f32 %v1545, %v1016
    %v5471 = vmul.f32 %v1549, %v1017
    %v5472 = vmul.f32 %v1553, %v1018
    %v5473 = vmul.f32 %v1557, %v1019
    %v5474 = vmul.f32 %v1561, %v1020
    %v5475 = vmul.f32 %v1565, %v1021
    %v5476 = vmul.f32 %v1569, %v1022
    %v5477 = vmul.f32 %v1573, %v1023
    %v5478 = vmul.f32 %v1577, %v1024
    %v5479 = vmul.f32 %v1581, %v1025
    %v5480 = vmul.f32 %v1585, %v1026
    %v5481 = vmul.f32 %v1589, %v1027
    %v5482 = vmul.f32 %v1593, %v1028
    %v5483 = vmul.f32 %v1597, %v1029
    %v5484 = vmul.f32 %v1601, %v1030
    %v5485 = vmul.f32 %v1605, %v1031
    %v5486 = vmul.f32 %v1612, %v1016
    %v5487 = vmul.f32 %v1616, %v1017
    %v5488 = vmul.f32 %v1620, %v1018
    %v5489 = vmul.f32 %v1624, %v1019
    %v5490 = vmul.f32 %v1628, %v1020
    %v5491 = vmul.f32 %v1632, %v1021
    %v5492 = vmul.f32 %v1636, %v1022
    %v5493 = vmul.f32 %v1640, %v1023
    %v5494 = vmul.f32 %v1644, %v1024
    %v5495 = vmul.f32 %v1648, %v1025
    %v5496 = vmul.f32 %v1652, %v1026
    %v5497 = vmul.f32 %v1656, %v1027
    %v5498 = vmul.f32 %v1660, %v1028
    %v5499 = vmul.f32 %v1664, %v1029
    %v5500 = vmul.f32 %v1668, %v1030
    %v5501 = vmul.f32 %v1672, %v1031
    %v5502 = vmul.f32 %v1679, %v1016
    %v5503 = vmul.f32 %v1683, %v1017
    %v5504 = vmul.f32 %v1687, %v1018
    %v5505 = vmul.f32 %v1691, %v1019
    %v5506 = vmul.f32 %v1695, %v1020
    %v5507 = vmul.f32 %v1699, %v1021
    %v5508 = vmul.f32 %v1703, %v1022
    %v5509 = vmul.f32 %v1707, %v1023
    %v5510 = vmul.f32 %v1711, %v1024
    %v5511 = vmul.f32 %v1715, %v1025
    %v5512 = vmul.f32 %v1719, %v1026
    %v5513 = vmul.f32 %v1723, %v1027
    %v5514 = vmul.f32 %v1727, %v1028
    %v5515 = vmul.f32 %v1731, %v1029
    %v5516 = vmul.f32 %v1735, %v1030
    %v5517 = vmul.f32 %v1739, %v1031
    %v5518 = vmul.f32 %v1746, %v1016
    %v5519 = vmul.f32 %v1750, %v1017
    %v5520 = vmul.f32 %v1754, %v1018
    %v5521 = vmul.f32 %v1758, %v1019
    %v5522 = vmul.f32 %v1762, %v1020
    %v5523 = vmul.f32 %v1766, %v1021
    %v5524 = vmul.f32 %v1770, %v1022
    %v5525 = vmul.f32 %v1774, %v1023
    %v5526 = vmul.f32 %v1778, %v1024
    %v5527 = vmul.f32 %v1782, %v1025
    %v5528 = vmul.f32 %v1786, %v1026
    %v5529 = vmul.f32 %v1790, %v1027
    %v5530 = vmul.f32 %v1794, %v1028
    %v5531 = vmul.f32 %v1798, %v1029
    %v5532 = vmul.f32 %v1802, %v1030
    %v5533 = vmul.f32 %v1806, %v1031
    %v5534 = vmul.f32 %v1813, %v1016
    %v5535 = vmul.f32 %v1817, %v1017
    %v5536 = vmul.f32 %v1821, %v1018
    %v5537 = vmul.f32 %v1825, %v1019
    %v5538 = vmul.f32 %v1829, %v1020
    %v5539 = vmul.f32 %v1833, %v1021
    %v5540 = vmul.f32 %v1837, %v1022
    %v5541 = vmul.f32 %v1841, %v1023
    %v5542 = vmul.f32 %v1845, %v1024
    %v5543 = vmul.f32 %v1849, %v1025
    %v5544 = vmul.f32 %v1853, %v1026
    %v5545 = vmul.f32 %v1857, %v1027
    %v5546 = vmul.f32 %v1861, %v1028
    %v5547 = vmul.f32 %v1865, %v1029
    %v5548 = vmul.f32 %v1869, %v1030
    %v5549 = vmul.f32 %v1873, %v1031
    %v5550 = vmul.f32 %v1880, %v1016
    %v5551 = vmul.f32 %v1884, %v1017
    %v5552 = vmul.f32 %v1888, %v1018
    %v5553 = vmul.f32 %v1892, %v1019
    %v5554 = vmul.f32 %v1896, %v1020
    %v5555 = vmul.f32 %v1900, %v1021
    %v5556 = vmul.f32 %v1904, %v1022
    %v5557 = vmul.f32 %v1908, %v1023
    %v5558 = vmul.f32 %v1912, %v1024
    %v5559 = vmul.f32 %v1916, %v1025
    %v5560 = vmul.f32 %v1920, %v1026
    %v5561 = vmul.f32 %v1924, %v1027
    %v5562 = vmul.f32 %v1928, %v1028
    %v5563 = vmul.f32 %v1932, %v1029
    %v5564 = vmul.f32 %v1936, %v1030
    %v5565 = vmul.f32 %v1940, %v1031
    %v5566 = vmul.f32 %v1947, %v1016
    %v5567 = vmul.f32 %v1951, %v1017
    %v5568 = vmul.f32 %v1955, %v1018
    %v5569 = vmul.f32 %v1959, %v1019
    %v5570 = vmul.f32 %v1963, %v1020
    %v5571 = vmul.f32 %v1967, %v1021
    %v5572 = vmul.f32 %v1971, %v1022
    %v5573 = vmul.f32 %v1975, %v1023
    %v5574 = vmul.f32 %v1979, %v1024
    %v5575 = vmul.f32 %v1983, %v1025
    %v5576 = vmul.f32 %v1987, %v1026
    %v5577 = vmul.f32 %v1991, %v1027
    %v5578 = vmul.f32 %v1995, %v1028
    %v5579 = vmul.f32 %v1999, %v1029
    %v5580 = vmul.f32 %v2003, %v1030
    %v5581 = vmul.f32 %v2007, %v1031
    %v5582 = vmul.f32 %v2014, %v1016
    %v5583 = vmul.f32 %v2018, %v1017
    %v5584 = vmul.f32 %v2022, %v1018
    %v5585 = vmul.f32 %v2026, %v1019
    %v5586 = vmul.f32 %v2030, %v1020
    %v5587 = vmul.f32 %v2034, %v1021
    %v5588 = vmul.f32 %v2038, %v1022
    %v5589 = vmul.f32 %v2042, %v1023
    %v5590 = vmul.f32 %v2046, %v1024
    %v5591 = vmul.f32 %v2050, %v1025
    %v5592 = vmul.f32 %v2054, %v1026
    %v5593 = vmul.f32 %v2058, %v1027
    %v5594 = vmul.f32 %v2062, %v1028
    %v5595 = vmul.f32 %v2066, %v1029
    %v5596 = vmul.f32 %v2070, %v1030
    %v5597 = vmul.f32 %v2074, %v1031
    %v5598 = vmul.f32 %v2081, %v1016
    %v5599 = vmul.f32 %v2085, %v1017
    %v5600 = vmul.f32 %v2089, %v1018
    %v5601 = vmul.f32 %v2093, %v1019
    %v5602 = vmul.f32 %v2097, %v1020
    %v5603 = vmul.f32 %v2101, %v1021
    %v5604 = vmul.f32 %v2105, %v1022
    %v5605 = vmul.f32 %v2109, %v1023
    %v5606 = vmul.f32 %v2113, %v1024
    %v5607 = vmul.f32 %v2117, %v1025
    %v5608 = vmul.f32 %v2121, %v1026
    %v5609 = vmul.f32 %v2125, %v1027
    %v5610 = vmul.f32 %v2129, %v1028
    %v5611 = vmul.f32 %v2133, %v1029
    %v5612 = vmul.f32 %v2137, %v1030
    %v5613 = vmul.f32 %v2141, %v1031
    %v5614 = vmul.f32 %v2148, %v1016
    %v5615 = vmul.f32 %v2152, %v1017
    %v5616 = vmul.f32 %v2156, %v1018
    %v5617 = vmul.f32 %v2160, %v1019
    %v5618 = vmul.f32 %v2164, %v1020
    %v5619 = vmul.f32 %v2168, %v1021
    %v5620 = vmul.f32 %v2172, %v1022
    %v5621 = vmul.f32 %v2176, %v1023
    %v5622 = vmul.f32 %v2180, %v1024
    %v5623 = vmul.f32 %v2184, %v1025
    %v5624 = vmul.f32 %v2188, %v1026
    %v5625 = vmul.f32 %v2192, %v1027
    %v5626 = vmul.f32 %v2196, %v1028
    %v5627 = vmul.f32 %v2200, %v1029
    %v5628 = vmul.f32 %v2204, %v1030
    %v5629 = vmul.f32 %v2208, %v1031
    %v5630 = vmul.f32 %v2215, %v1016
    %v5631 = vmul.f32 %v2219, %v1017
    %v5632 = vmul.f32 %v2223, %v1018
    %v5633 = vmul.f32 %v2227, %v1019
    %v5634 = vmul.f32 %v2231, %v1020
    %v5635 = vmul.f32 %v2235, %v1021
    %v5636 = vmul.f32 %v2239, %v1022
    %v5637 = vmul.f32 %v2243, %v1023
    %v5638 = vmul.f32 %v2247, %v1024
    %v5639 = vmul.f32 %v2251, %v1025
    %v5640 = vmul.f32 %v2255, %v1026
    %v5641 = vmul.f32 %v2259, %v1027
    %v5642 = vmul.f32 %v2263, %v1028
    %v5643 = vmul.f32 %v2267, %v1029
    %v5644 = vmul.f32 %v2271, %v1030
    %v5645 = vmul.f32 %v2275, %v1031
    %v5646 = vmul.f32 %v2282, %v1016
    %v5647 = vmul.f32 %v2286, %v1017
    %v5648 = vmul.f32 %v2290, %v1018
    %v5649 = vmul.f32 %v2294, %v1019
    %v5650 = vmul.f32 %v2298, %v1020
    %v5651 = vmul.f32 %v2302, %v1021
    %v5652 = vmul.f32 %v2306, %v1022
    %v5653 = vmul.f32 %v2310, %v1023
    %v5654 = vmul.f32 %v2314, %v1024
    %v5655 = vmul.f32 %v2318, %v1025
    %v5656 = vmul.f32 %v2322, %v1026
    %v5657 = vmul.f32 %v2326, %v1027
    %v5658 = vmul.f32 %v2330, %v1028
    %v5659 = vmul.f32 %v2334, %v1029
    %v5660 = vmul.f32 %v2338, %v1030
    %v5661 = vmul.f32 %v2342, %v1031
    %v5662 = vmul.f32 %v2349, %v1016
    %v5663 = vmul.f32 %v2353, %v1017
    %v5664 = vmul.f32 %v2357, %v1018
    %v5665 = vmul.f32 %v2361, %v1019
    %v5666 = vmul.f32 %v2365, %v1020
    %v5667 = vmul.f32 %v2369, %v1021
    %v5668 = vmul.f32 %v2373, %v1022
    %v5669 = vmul.f32 %v2377, %v1023
    %v5670 = vmul.f32 %v2381, %v1024
    %v5671 = vmul.f32 %v2385, %v1025
    %v5672 = vmul.f32 %v2389, %v1026
    %v5673 = vmul.f32 %v2393, %v1027
    %v5674 = vmul.f32 %v2397, %v1028
    %v5675 = vmul.f32 %v2401, %v1029
    %v5676 = vmul.f32 %v2405, %v1030
    %v5677 = vmul.f32 %v2409, %v1031
    %v5678 = vmul.f32 %v2416, %v1016
    %v5679 = vmul.f32 %v2420, %v1017
    %v5680 = vmul.f32 %v2424, %v1018
    %v5681 = vmul.f32 %v2428, %v1019
    %v5682 = vmul.f32 %v2432, %v1020
    %v5683 = vmul.f32 %v2436, %v1021
    %v5684 = vmul.f32 %v2440, %v1022
    %v5685 = vmul.f32 %v2444, %v1023
    %v5686 = vmul.f32 %v2448, %v1024
    %v5687 = vmul.f32 %v2452, %v1025
    %v5688 = vmul.f32 %v2456, %v1026
    %v5689 = vmul.f32 %v2460, %v1027
    %v5690 = vmul.f32 %v2464, %v1028
    %v5691 = vmul.f32 %v2468, %v1029
    %v5692 = vmul.f32 %v2472, %v1030
    %v5693 = vmul.f32 %v2476, %v1031
    %v5694 = vmul.f32 %v2483, %v1016
    %v5695 = vmul.f32 %v2487, %v1017
    %v5696 = vmul.f32 %v2491, %v1018
    %v5697 = vmul.f32 %v2495, %v1019
    %v5698 = vmul.f32 %v2499, %v1020
    %v5699 = vmul.f32 %v2503, %v1021
    %v5700 = vmul.f32 %v2507, %v1022
    %v5701 = vmul.f32 %v2511, %v1023
    %v5702 = vmul.f32 %v2515, %v1024
    %v5703 = vmul.f32 %v2519, %v1025
    %v5704 = vmul.f32 %v2523, %v1026
    %v5705 = vmul.f32 %v2527, %v1027
    %v5706 = vmul.f32 %v2531, %v1028
    %v5707 = vmul.f32 %v2535, %v1029
    %v5708 = vmul.f32 %v2539, %v1030
    %v5709 = vmul.f32 %v2543, %v1031
    %v5710 = vmul.f32 %v2550, %v1016
    %v5711 = vmul.f32 %v2554, %v1017
    %v5712 = vmul.f32 %v2558, %v1018
    %v5713 = vmul.f32 %v2562, %v1019
    %v5714 = vmul.f32 %v2566, %v1020
    %v5715 = vmul.f32 %v2570, %v1021
    %v5716 = vmul.f32 %v2574, %v1022
    %v5717 = vmul.f32 %v2578, %v1023
    %v5718 = vmul.f32 %v2582, %v1024
    %v5719 = vmul.f32 %v2586, %v1025
    %v5720 = vmul.f32 %v2590, %v1026
    %v5721 = vmul.f32 %v2594, %v1027
    %v5722 = vmul.f32 %v2598, %v1028
    %v5723 = vmul.f32 %v2602, %v1029
    %v5724 = vmul.f32 %v2606, %v1030
    %v5725 = vmul.f32 %v2610, %v1031
    %v5726 = vmul.f32 %v2617, %v1016
    %v5727 = vmul.f32 %v2621, %v1017
    %v5728 = vmul.f32 %v2625, %v1018
    %v5729 = vmul.f32 %v2629, %v1019
    %v5730 = vmul.f32 %v2633, %v1020
    %v5731 = vmul.f32 %v2637, %v1021
    %v5732 = vmul.f32 %v2641, %v1022
    %v5733 = vmul.f32 %v2645, %v1023
    %v5734 = vmul.f32 %v2649, %v1024
    %v5735 = vmul.f32 %v2653, %v1025
    %v5736 = vmul.f32 %v2657, %v1026
    %v5737 = vmul.f32 %v2661, %v1027
    %v5738 = vmul.f32 %v2665, %v1028
    %v5739 = vmul.f32 %v2669, %v1029
    %v5740 = vmul.f32 %v2673, %v1030
    %v5741 = vmul.f32 %v2677, %v1031
    %v5742 = vmul.f32 %v2684, %v1016
    %v5743 = vmul.f32 %v2688, %v1017
    %v5744 = vmul.f32 %v2692, %v1018
    %v5745 = vmul.f32 %v2696, %v1019
    %v5746 = vmul.f32 %v2700, %v1020
    %v5747 = vmul.f32 %v2704, %v1021
    %v5748 = vmul.f32 %v2708, %v1022
    %v5749 = vmul.f32 %v2712, %v1023
    %v5750 = vmul.f32 %v2716, %v1024
    %v5751 = vmul.f32 %v2720, %v1025
    %v5752 = vmul.f32 %v2724, %v1026
    %v5753 = vmul.f32 %v2728, %v1027
    %v5754 = vmul.f32 %v2732, %v1028
    %v5755 = vmul.f32 %v2736, %v1029
    %v5756 = vmul.f32 %v2740, %v1030
    %v5757 = vmul.f32 %v2744, %v1031
    %v5758 = vmul.f32 %v2751, %v1016
    %v5759 = vmul.f32 %v2755, %v1017
    %v5760 = vmul.f32 %v2759, %v1018
    %v5761 = vmul.f32 %v2763, %v1019
    %v5762 = vmul.f32 %v2767, %v1020
    %v5763 = vmul.f32 %v2771, %v1021
    %v5764 = vmul.f32 %v2775, %v1022
    %v5765 = vmul.f32 %v2779, %v1023
    %v5766 = vmul.f32 %v2783, %v1024
    %v5767 = vmul.f32 %v2787, %v1025
    %v5768 = vmul.f32 %v2791, %v1026
    %v5769 = vmul.f32 %v2795, %v1027
    %v5770 = vmul.f32 %v2799, %v1028
    %v5771 = vmul.f32 %v2803, %v1029
    %v5772 = vmul.f32 %v2807, %v1030
    %v5773 = vmul.f32 %v2811, %v1031
    %v5774 = vmul.f32 %v2818, %v1016
    %v5775 = vmul.f32 %v2822, %v1017
    %v5776 = vmul.f32 %v2826, %v1018
    %v5777 = vmul.f32 %v2830, %v1019
    %v5778 = vmul.f32 %v2834, %v1020
    %v5779 = vmul.f32 %v2838, %v1021
    %v5780 = vmul.f32 %v2842, %v1022
    %v5781 = vmul.f32 %v2846, %v1023
    %v5782 = vmul.f32 %v2850, %v1024
    %v5783 = vmul.f32 %v2854, %v1025
    %v5784 = vmul.f32 %v2858, %v1026
    %v5785 = vmul.f32 %v2862, %v1027
    %v5786 = vmul.f32 %v2866, %v1028
    %v5787 = vmul.f32 %v2870, %v1029
    %v5788 = vmul.f32 %v2874, %v1030
    %v5789 = vmul.f32 %v2878, %v1031
    %v5790 = vmul.f32 %v2885, %v1016
    %v5791 = vmul.f32 %v2889, %v1017
    %v5792 = vmul.f32 %v2893, %v1018
    %v5793 = vmul.f32 %v2897, %v1019
    %v5794 = vmul.f32 %v2901, %v1020
    %v5795 = vmul.f32 %v2905, %v1021
    %v5796 = vmul.f32 %v2909, %v1022
    %v5797 = vmul.f32 %v2913, %v1023
    %v5798 = vmul.f32 %v2917, %v1024
    %v5799 = vmul.f32 %v2921, %v1025
    %v5800 = vmul.f32 %v2925, %v1026
    %v5801 = vmul.f32 %v2929, %v1027
    %v5802 = vmul.f32 %v2933, %v1028
    %v5803 = vmul.f32 %v2937, %v1029
    %v5804 = vmul.f32 %v2941, %v1030
    %v5805 = vmul.f32 %v2945, %v1031
    %v5806 = vmul.f32 %v2952, %v1016
    %v5807 = vmul.f32 %v2956, %v1017
    %v5808 = vmul.f32 %v2960, %v1018
    %v5809 = vmul.f32 %v2964, %v1019
    %v5810 = vmul.f32 %v2968, %v1020
    %v5811 = vmul.f32 %v2972, %v1021
    %v5812 = vmul.f32 %v2976, %v1022
    %v5813 = vmul.f32 %v2980, %v1023
    %v5814 = vmul.f32 %v2984, %v1024
    %v5815 = vmul.f32 %v2988, %v1025
    %v5816 = vmul.f32 %v2992, %v1026
    %v5817 = vmul.f32 %v2996, %v1027
    %v5818 = vmul.f32 %v3000, %v1028
    %v5819 = vmul.f32 %v3004, %v1029
    %v5820 = vmul.f32 %v3008, %v1030
    %v5821 = vmul.f32 %v3012, %v1031
    %v5822 = vmul.f32 %v3019, %v1016
    %v5823 = vmul.f32 %v3023, %v1017
    %v5824 = vmul.f32 %v3027, %v1018
    %v5825 = vmul.f32 %v3031, %v1019
    %v5826 = vmul.f32 %v3035, %v1020
    %v5827 = vmul.f32 %v3039, %v1021
    %v5828 = vmul.f32 %v3043, %v1022
    %v5829 = vmul.f32 %v3047, %v1023
    %v5830 = vmul.f32 %v3051, %v1024
    %v5831 = vmul.f32 %v3055, %v1025
    %v5832 = vmul.f32 %v3059, %v1026
    %v5833 = vmul.f32 %v3063, %v1027
    %v5834 = vmul.f32 %v3067, %v1028
    %v5835 = vmul.f32 %v3071, %v1029
    %v5836 = vmul.f32 %v3075, %v1030
    %v5837 = vmul.f32 %v3079, %v1031
    %v5838 = vmul.f32 %v3086, %v1016
    %v5839 = vmul.f32 %v3090, %v1017
    %v5840 = vmul.f32 %v3094, %v1018
    %v5841 = vmul.f32 %v3098, %v1019
    %v5842 = vmul.f32 %v3102, %v1020
    %v5843 = vmul.f32 %v3106, %v1021
    %v5844 = vmul.f32 %v3110, %v1022
    %v5845 = vmul.f32 %v3114, %v1023
    %v5846 = vmul.f32 %v3118, %v1024
    %v5847 = vmul.f32 %v3122, %v1025
    %v5848 = vmul.f32 %v3126, %v1026
    %v5849 = vmul.f32 %v3130, %v1027
    %v5850 = vmul.f32 %v3134, %v1028
    %v5851 = vmul.f32 %v3138, %v1029
    %v5852 = vmul.f32 %v3142, %v1030
    %v5853 = vmul.f32 %v3146, %v1031
    %v5854 = vmul.f32 %v3153, %v1016
    %v5855 = vmul.f32 %v3157, %v1017
    %v5856 = vmul.f32 %v3161, %v1018
    %v5857 = vmul.f32 %v3165, %v1019
    %v5858 = vmul.f32 %v3169, %v1020
    %v5859 = vmul.f32 %v3173, %v1021
    %v5860 = vmul.f32 %v3177, %v1022
    %v5861 = vmul.f32 %v3181, %v1023
    %v5862 = vmul.f32 %v3185, %v1024
    %v5863 = vmul.f32 %v3189, %v1025
    %v5864 = vmul.f32 %v3193, %v1026
    %v5865 = vmul.f32 %v3197, %v1027
    %v5866 = vmul.f32 %v3201, %v1028
    %v5867 = vmul.f32 %v3205, %v1029
    %v5868 = vmul.f32 %v3209, %v1030
    %v5869 = vmul.f32 %v3213, %v1031
    %v5870 = vmul.f32 %v3220, %v1016
    %v5871 = vmul.f32 %v3224, %v1017
    %v5872 = vmul.f32 %v3228, %v1018
    %v5873 = vmul.f32 %v3232, %v1019
    %v5874 = vmul.f32 %v3236, %v1020
    %v5875 = vmul.f32 %v3240, %v1021
    %v5876 = vmul.f32 %v3244, %v1022
    %v5877 = vmul.f32 %v3248, %v1023
    %v5878 = vmul.f32 %v3252, %v1024
    %v5879 = vmul.f32 %v3256, %v1025
    %v5880 = vmul.f32 %v3260, %v1026
    %v5881 = vmul.f32 %v3264, %v1027
    %v5882 = vmul.f32 %v3268, %v1028
    %v5883 = vmul.f32 %v3272, %v1029
    %v5884 = vmul.f32 %v3276, %v1030
    %v5885 = vmul.f32 %v3280, %v1031
    %v5886 = vmul.f32 %v3287, %v1016
    %v5887 = vmul.f32 %v3291, %v1017
    %v5888 = vmul.f32 %v3295, %v1018
    %v5889 = vmul.f32 %v3299, %v1019
    %v5890 = vmul.f32 %v3303, %v1020
    %v5891 = vmul.f32 %v3307, %v1021
    %v5892 = vmul.f32 %v3311, %v1022
    %v5893 = vmul.f32 %v3315, %v1023
    %v5894 = vmul.f32 %v3319, %v1024
    %v5895 = vmul.f32 %v3323, %v1025
    %v5896 = vmul.f32 %v3327, %v1026
    %v5897 = vmul.f32 %v3331, %v1027
    %v5898 = vmul.f32 %v3335, %v1028
    %v5899 = vmul.f32 %v3339, %v1029
    %v5900 = vmul.f32 %v3343, %v1030
    %v5901 = vmul.f32 %v3347, %v1031
    %v5902 = vmul.f32 %v3354, %v1016
    %v5903 = vmul.f32 %v3358, %v1017
    %v5904 = vmul.f32 %v3362, %v1018
    %v5905 = vmul.f32 %v3366, %v1019
    %v5906 = vmul.f32 %v3370, %v1020
    %v5907 = vmul.f32 %v3374, %v1021
    %v5908 = vmul.f32 %v3378, %v1022
    %v5909 = vmul.f32 %v3382, %v1023
    %v5910 = vmul.f32 %v3386, %v1024
    %v5911 = vmul.f32 %v3390, %v1025
    %v5912 = vmul.f32 %v3394, %v1026
    %v5913 = vmul.f32 %v3398, %v1027
    %v5914 = vmul.f32 %v3402, %v1028
    %v5915 = vmul.f32 %v3406, %v1029
    %v5916 = vmul.f32 %v3410, %v1030
    %v5917 = vmul.f32 %v3414, %v1031
    %v5918 = vmul.f32 %v3421, %v1016
    %v5919 = vmul.f32 %v3425, %v1017
    %v5920 = vmul.f32 %v3429, %v1018
    %v5921 = vmul.f32 %v3433, %v1019
    %v5922 = vmul.f32 %v3437, %v1020
    %v5923 = vmul.f32 %v3441, %v1021
    %v5924 = vmul.f32 %v3445, %v1022
    %v5925 = vmul.f32 %v3449, %v1023
    %v5926 = vmul.f32 %v3453, %v1024
    %v5927 = vmul.f32 %v3457, %v1025
    %v5928 = vmul.f32 %v3461, %v1026
    %v5929 = vmul.f32 %v3465, %v1027
    %v5930 = vmul.f32 %v3469, %v1028
    %v5931 = vmul.f32 %v3473, %v1029
    %v5932 = vmul.f32 %v3477, %v1030
    %v5933 = vmul.f32 %v3481, %v1031
    %v5934 = vmul.f32 %v3488, %v1016
    %v5935 = vmul.f32 %v3492, %v1017
    %v5936 = vmul.f32 %v3496, %v1018
    %v5937 = vmul.f32 %v3500, %v1019
    %v5938 = vmul.f32 %v3504, %v1020
    %v5939 = vmul.f32 %v3508, %v1021
    %v5940 = vmul.f32 %v3512, %v1022
    %v5941 = vmul.f32 %v3516, %v1023
    %v5942 = vmul.f32 %v3520, %v1024
    %v5943 = vmul.f32 %v3524, %v1025
    %v5944 = vmul.f32 %v3528, %v1026
    %v5945 = vmul.f32 %v3532, %v1027
    %v5946 = vmul.f32 %v3536, %v1028
    %v5947 = vmul.f32 %v3540, %v1029
    %v5948 = vmul.f32 %v3544, %v1030
    %v5949 = vmul.f32 %v3548, %v1031
    %v5950 = vmul.f32 %v3555, %v1016
    %v5951 = vmul.f32 %v3559, %v1017
    %v5952 = vmul.f32 %v3563, %v1018
    %v5953 = vmul.f32 %v3567, %v1019
    %v5954 = vmul.f32 %v3571, %v1020
    %v5955 = vmul.f32 %v3575, %v1021
    %v5956 = vmul.f32 %v3579, %v1022
    %v5957 = vmul.f32 %v3583, %v1023
    %v5958 = vmul.f32 %v3587, %v1024
    %v5959 = vmul.f32 %v3591, %v1025
    %v5960 = vmul.f32 %v3595, %v1026
    %v5961 = vmul.f32 %v3599, %v1027
    %v5962 = vmul.f32 %v3603, %v1028
    %v5963 = vmul.f32 %v3607, %v1029
    %v5964 = vmul.f32 %v3611, %v1030
    %v5965 = vmul.f32 %v3615, %v1031
    %v5966 = vmul.f32 %v3622, %v1016
    %v5967 = vmul.f32 %v3626, %v1017
    %v5968 = vmul.f32 %v3630, %v1018
    %v5969 = vmul.f32 %v3634, %v1019
    %v5970 = vmul.f32 %v3638, %v1020
    %v5971 = vmul.f32 %v3642, %v1021
    %v5972 = vmul.f32 %v3646, %v1022
    %v5973 = vmul.f32 %v3650, %v1023
    %v5974 = vmul.f32 %v3654, %v1024
    %v5975 = vmul.f32 %v3658, %v1025
    %v5976 = vmul.f32 %v3662, %v1026
    %v5977 = vmul.f32 %v3666, %v1027
    %v5978 = vmul.f32 %v3670, %v1028
    %v5979 = vmul.f32 %v3674, %v1029
    %v5980 = vmul.f32 %v3678, %v1030
    %v5981 = vmul.f32 %v3682, %v1031
    %v5982 = vmul.f32 %v3689, %v1016
    %v5983 = vmul.f32 %v3693, %v1017
    %v5984 = vmul.f32 %v3697, %v1018
    %v5985 = vmul.f32 %v3701, %v1019
    %v5986 = vmul.f32 %v3705, %v1020
    %v5987 = vmul.f32 %v3709, %v1021
    %v5988 = vmul.f32 %v3713, %v1022
    %v5989 = vmul.f32 %v3717, %v1023
    %v5990 = vmul.f32 %v3721, %v1024
    %v5991 = vmul.f32 %v3725, %v1025
    %v5992 = vmul.f32 %v3729, %v1026
    %v5993 = vmul.f32 %v3733, %v1027
    %v5994 = vmul.f32 %v3737, %v1028
    %v5995 = vmul.f32 %v3741, %v1029
    %v5996 = vmul.f32 %v3745, %v1030
    %v5997 = vmul.f32 %v3749, %v1031
    %v5998 = vmul.f32 %v3756, %v1016
    %v5999 = vmul.f32 %v3760, %v1017
    %v6000 = vmul.f32 %v3764, %v1018
    %v6001 = vmul.f32 %v3768, %v1019
    %v6002 = vmul.f32 %v3772, %v1020
    %v6003 = vmul.f32 %v3776, %v1021
    %v6004 = vmul.f32 %v3780, %v1022
    %v6005 = vmul.f32 %v3784, %v1023
    %v6006 = vmul.f32 %v3788, %v1024
    %v6007 = vmul.f32 %v3792, %v1025
    %v6008 = vmul.f32 %v3796, %v1026
    %v6009 = vmul.f32 %v3800, %v1027
    %v6010 = vmul.f32 %v3804, %v1028
    %v6011 = vmul.f32 %v3808, %v1029
    %v6012 = vmul.f32 %v3812, %v1030
    %v6013 = vmul.f32 %v3816, %v1031
    %v6014 = vmul.f32 %v3823, %v1016
    %v6015 = vmul.f32 %v3827, %v1017
    %v6016 = vmul.f32 %v3831, %v1018
    %v6017 = vmul.f32 %v3835, %v1019
    %v6018 = vmul.f32 %v3839, %v1020
    %v6019 = vmul.f32 %v3843, %v1021
    %v6020 = vmul.f32 %v3847, %v1022
    %v6021 = vmul.f32 %v3851, %v1023
    %v6022 = vmul.f32 %v3855, %v1024
    %v6023 = vmul.f32 %v3859, %v1025
    %v6024 = vmul.f32 %v3863, %v1026
    %v6025 = vmul.f32 %v3867, %v1027
    %v6026 = vmul.f32 %v3871, %v1028
    %v6027 = vmul.f32 %v3875, %v1029
    %v6028 = vmul.f32 %v3879, %v1030
    %v6029 = vmul.f32 %v3883, %v1031
    %v6030 = vmul.f32 %v3890, %v1016
    %v6031 = vmul.f32 %v3894, %v1017
    %v6032 = vmul.f32 %v3898, %v1018
    %v6033 = vmul.f32 %v3902, %v1019
    %v6034 = vmul.f32 %v3906, %v1020
    %v6035 = vmul.f32 %v3910, %v1021
    %v6036 = vmul.f32 %v3914, %v1022
    %v6037 = vmul.f32 %v3918, %v1023
    %v6038 = vmul.f32 %v3922, %v1024
    %v6039 = vmul.f32 %v3926, %v1025
    %v6040 = vmul.f32 %v3930, %v1026
    %v6041 = vmul.f32 %v3934, %v1027
    %v6042 = vmul.f32 %v3938, %v1028
    %v6043 = vmul.f32 %v3942, %v1029
    %v6044 = vmul.f32 %v3946, %v1030
    %v6045 = vmul.f32 %v3950, %v1031
    %v6046 = vmul.f32 %v3957, %v1016
    %v6047 = vmul.f32 %v3961, %v1017
    %v6048 = vmul.f32 %v3965, %v1018
    %v6049 = vmul.f32 %v3969, %v1019
    %v6050 = vmul.f32 %v3973, %v1020
    %v6051 = vmul.f32 %v3977, %v1021
    %v6052 = vmul.f32 %v3981, %v1022
    %v6053 = vmul.f32 %v3985, %v1023
    %v6054 = vmul.f32 %v3989, %v1024
    %v6055 = vmul.f32 %v3993, %v1025
    %v6056 = vmul.f32 %v3997, %v1026
    %v6057 = vmul.f32 %v4001, %v1027
    %v6058 = vmul.f32 %v4005, %v1028
    %v6059 = vmul.f32 %v4009, %v1029
    %v6060 = vmul.f32 %v4013, %v1030
    %v6061 = vmul.f32 %v4017, %v1031
    %v6062 = vmul.f32 %v4024, %v1016
    %v6063 = vmul.f32 %v4028, %v1017
    %v6064 = vmul.f32 %v4032, %v1018
    %v6065 = vmul.f32 %v4036, %v1019
    %v6066 = vmul.f32 %v4040, %v1020
    %v6067 = vmul.f32 %v4044, %v1021
    %v6068 = vmul.f32 %v4048, %v1022
    %v6069 = vmul.f32 %v4052, %v1023
    %v6070 = vmul.f32 %v4056, %v1024
    %v6071 = vmul.f32 %v4060, %v1025
    %v6072 = vmul.f32 %v4064, %v1026
    %v6073 = vmul.f32 %v4068, %v1027
    %v6074 = vmul.f32 %v4072, %v1028
    %v6075 = vmul.f32 %v4076, %v1029
    %v6076 = vmul.f32 %v4080, %v1030
    %v6077 = vmul.f32 %v4084, %v1031
    %v6078 = vmul.f32 %v4091, %v1016
    %v6079 = vmul.f32 %v4095, %v1017
    %v6080 = vmul.f32 %v4099, %v1018
    %v6081 = vmul.f32 %v4103, %v1019
    %v6082 = vmul.f32 %v4107, %v1020
    %v6083 = vmul.f32 %v4111, %v1021
    %v6084 = vmul.f32 %v4115, %v1022
    %v6085 = vmul.f32 %v4119, %v1023
    %v6086 = vmul.f32 %v4123, %v1024
    %v6087 = vmul.f32 %v4127, %v1025
    %v6088 = vmul.f32 %v4131, %v1026
    %v6089 = vmul.f32 %v4135, %v1027
    %v6090 = vmul.f32 %v4139, %v1028
    %v6091 = vmul.f32 %v4143, %v1029
    %v6092 = vmul.f32 %v4147, %v1030
    %v6093 = vmul.f32 %v4151, %v1031
    %v6094 = vmul.f32 %v4158, %v1016
    %v6095 = vmul.f32 %v4162, %v1017
    %v6096 = vmul.f32 %v4166, %v1018
    %v6097 = vmul.f32 %v4170, %v1019
    %v6098 = vmul.f32 %v4174, %v1020
    %v6099 = vmul.f32 %v4178, %v1021
    %v6100 = vmul.f32 %v4182, %v1022
    %v6101 = vmul.f32 %v4186, %v1023
    %v6102 = vmul.f32 %v4190, %v1024
    %v6103 = vmul.f32 %v4194, %v1025
    %v6104 = vmul.f32 %v4198, %v1026
    %v6105 = vmul.f32 %v4202, %v1027
    %v6106 = vmul.f32 %v4206, %v1028
    %v6107 = vmul.f32 %v4210, %v1029
    %v6108 = vmul.f32 %v4214, %v1030
    %v6109 = vmul.f32 %v4218, %v1031
    %v6110 = vmul.f32 %v4225, %v1016
    %v6111 = vmul.f32 %v4229, %v1017
    %v6112 = vmul.f32 %v4233, %v1018
    %v6113 = vmul.f32 %v4237, %v1019
    %v6114 = vmul.f32 %v4241, %v1020
    %v6115 = vmul.f32 %v4245, %v1021
    %v6116 = vmul.f32 %v4249, %v1022
    %v6117 = vmul.f32 %v4253, %v1023
    %v6118 = vmul.f32 %v4257, %v1024
    %v6119 = vmul.f32 %v4261, %v1025
    %v6120 = vmul.f32 %v4265, %v1026
    %v6121 = vmul.f32 %v4269, %v1027
    %v6122 = vmul.f32 %v4273, %v1028
    %v6123 = vmul.f32 %v4277, %v1029
    %v6124 = vmul.f32 %v4281, %v1030
    %v6125 = vmul.f32 %v4285, %v1031
    %v6126 = vmul.f32 %v4292, %v1016
    %v6127 = vmul.f32 %v4296, %v1017
    %v6128 = vmul.f32 %v4300, %v1018
    %v6129 = vmul.f32 %v4304, %v1019
    %v6130 = vmul.f32 %v4308, %v1020
    %v6131 = vmul.f32 %v4312, %v1021
    %v6132 = vmul.f32 %v4316, %v1022
    %v6133 = vmul.f32 %v4320, %v1023
    %v6134 = vmul.f32 %v4324, %v1024
    %v6135 = vmul.f32 %v4328, %v1025
    %v6136 = vmul.f32 %v4332, %v1026
    %v6137 = vmul.f32 %v4336, %v1027
    %v6138 = vmul.f32 %v4340, %v1028
    %v6139 = vmul.f32 %v4344, %v1029
    %v6140 = vmul.f32 %v4348, %v1030
    %v6141 = vmul.f32 %v4352, %v1031
    %v6142 = vmul.f32 %v4359, %v1016
    %v6143 = vmul.f32 %v4363, %v1017
    %v6144 = vmul.f32 %v4367, %v1018
    %v6145 = vmul.f32 %v4371, %v1019
    %v6146 = vmul.f32 %v4375, %v1020
    %v6147 = vmul.f32 %v4379, %v1021
    %v6148 = vmul.f32 %v4383, %v1022
    %v6149 = vmul.f32 %v4387, %v1023
    %v6150 = vmul.f32 %v4391, %v1024
    %v6151 = vmul.f32 %v4395, %v1025
    %v6152 = vmul.f32 %v4399, %v1026
    %v6153 = vmul.f32 %v4403, %v1027
    %v6154 = vmul.f32 %v4407, %v1028
    %v6155 = vmul.f32 %v4411, %v1029
    %v6156 = vmul.f32 %v4415, %v1030
    %v6157 = vmul.f32 %v4419, %v1031
    %v6158 = vmul.f32 %v4426, %v1016
    %v6159 = vmul.f32 %v4430, %v1017
    %v6160 = vmul.f32 %v4434, %v1018
    %v6161 = vmul.f32 %v4438, %v1019
    %v6162 = vmul.f32 %v4442, %v1020
    %v6163 = vmul.f32 %v4446, %v1021
    %v6164 = vmul.f32 %v4450, %v1022
    %v6165 = vmul.f32 %v4454, %v1023
    %v6166 = vmul.f32 %v4458, %v1024
    %v6167 = vmul.f32 %v4462, %v1025
    %v6168 = vmul.f32 %v4466, %v1026
    %v6169 = vmul.f32 %v4470, %v1027
    %v6170 = vmul.f32 %v4474, %v1028
    %v6171 = vmul.f32 %v4478, %v1029
    %v6172 = vmul.f32 %v4482, %v1030
    %v6173 = vmul.f32 %v4486, %v1031
    %v6174 = vmul.f32 %v4493, %v1016
    %v6175 = vmul.f32 %v4497, %v1017
    %v6176 = vmul.f32 %v4501, %v1018
    %v6177 = vmul.f32 %v4505, %v1019
    %v6178 = vmul.f32 %v4509, %v1020
    %v6179 = vmul.f32 %v4513, %v1021
    %v6180 = vmul.f32 %v4517, %v1022
    %v6181 = vmul.f32 %v4521, %v1023
    %v6182 = vmul.f32 %v4525, %v1024
    %v6183 = vmul.f32 %v4529, %v1025
    %v6184 = vmul.f32 %v4533, %v1026
    %v6185 = vmul.f32 %v4537, %v1027
    %v6186 = vmul.f32 %v4541, %v1028
    %v6187 = vmul.f32 %v4545, %v1029
    %v6188 = vmul.f32 %v4549, %v1030
    %v6189 = vmul.f32 %v4553, %v1031
    %v6190 = vmul.f32 %v4560, %v1016
    %v6191 = vmul.f32 %v4564, %v1017
    %v6192 = vmul.f32 %v4568, %v1018
    %v6193 = vmul.f32 %v4572, %v1019
    %v6194 = vmul.f32 %v4576, %v1020
    %v6195 = vmul.f32 %v4580, %v1021
    %v6196 = vmul.f32 %v4584, %v1022
    %v6197 = vmul.f32 %v4588, %v1023
    %v6198 = vmul.f32 %v4592, %v1024
    %v6199 = vmul.f32 %v4596, %v1025
    %v6200 = vmul.f32 %v4600, %v1026
    %v6201 = vmul.f32 %v4604, %v1027
    %v6202 = vmul.f32 %v4608, %v1028
    %v6203 = vmul.f32 %v4612, %v1029
    %v6204 = vmul.f32 %v4616, %v1030
    %v6205 = vmul.f32 %v4620, %v1031
    %v6206 = vmul.f32 %v4627, %v1016
    %v6207 = vmul.f32 %v4631, %v1017
    %v6208 = vmul.f32 %v4635, %v1018
    %v6209 = vmul.f32 %v4639, %v1019
    %v6210 = vmul.f32 %v4643, %v1020
    %v6211 = vmul.f32 %v4647, %v1021
    %v6212 = vmul.f32 %v4651, %v1022
    %v6213 = vmul.f32 %v4655, %v1023
    %v6214 = vmul.f32 %v4659, %v1024
    %v6215 = vmul.f32 %v4663, %v1025
    %v6216 = vmul.f32 %v4667, %v1026
    %v6217 = vmul.f32 %v4671, %v1027
    %v6218 = vmul.f32 %v4675, %v1028
    %v6219 = vmul.f32 %v4679, %v1029
    %v6220 = vmul.f32 %v4683, %v1030
    %v6221 = vmul.f32 %v4687, %v1031
    %v6222 = vmul.f32 %v4694, %v1016
    %v6223 = vmul.f32 %v4698, %v1017
    %v6224 = vmul.f32 %v4702, %v1018
    %v6225 = vmul.f32 %v4706, %v1019
    %v6226 = vmul.f32 %v4710, %v1020
    %v6227 = vmul.f32 %v4714, %v1021
    %v6228 = vmul.f32 %v4718, %v1022
    %v6229 = vmul.f32 %v4722, %v1023
    %v6230 = vmul.f32 %v4726, %v1024
    %v6231 = vmul.f32 %v4730, %v1025
    %v6232 = vmul.f32 %v4734, %v1026
    %v6233 = vmul.f32 %v4738, %v1027
    %v6234 = vmul.f32 %v4742, %v1028
    %v6235 = vmul.f32 %v4746, %v1029
    %v6236 = vmul.f32 %v4750, %v1030
    %v6237 = vmul.f32 %v4754, %v1031
    %v6238 = vmul.f32 %v4761, %v1016
    %v6239 = vmul.f32 %v4765, %v1017
    %v6240 = vmul.f32 %v4769, %v1018
    %v6241 = vmul.f32 %v4773, %v1019
    %v6242 = vmul.f32 %v4777, %v1020
    %v6243 = vmul.f32 %v4781, %v1021
    %v6244 = vmul.f32 %v4785, %v1022
    %v6245 = vmul.f32 %v4789, %v1023
    %v6246 = vmul.f32 %v4793, %v1024
    %v6247 = vmul.f32 %v4797, %v1025
    %v6248 = vmul.f32 %v4801, %v1026
    %v6249 = vmul.f32 %v4805, %v1027
    %v6250 = vmul.f32 %v4809, %v1028
    %v6251 = vmul.f32 %v4813, %v1029
    %v6252 = vmul.f32 %v4817, %v1030
    %v6253 = vmul.f32 %v4821, %v1031
    %v6254 = vmul.f32 %v4828, %v1016
    %v6255 = vmul.f32 %v4832, %v1017
    %v6256 = vmul.f32 %v4836, %v1018
    %v6257 = vmul.f32 %v4840, %v1019
    %v6258 = vmul.f32 %v4844, %v1020
    %v6259 = vmul.f32 %v4848, %v1021
    %v6260 = vmul.f32 %v4852, %v1022
    %v6261 = vmul.f32 %v4856, %v1023
    %v6262 = vmul.f32 %v4860, %v1024
    %v6263 = vmul.f32 %v4864, %v1025
    %v6264 = vmul.f32 %v4868, %v1026
    %v6265 = vmul.f32 %v4872, %v1027
    %v6266 = vmul.f32 %v4876, %v1028
    %v6267 = vmul.f32 %v4880, %v1029
    %v6268 = vmul.f32 %v4884, %v1030
    %v6269 = vmul.f32 %v4888, %v1031
    %v6270 = vmul.f32 %v4895, %v1016
    %v6271 = vmul.f32 %v4899, %v1017
    %v6272 = vmul.f32 %v4903, %v1018
    %v6273 = vmul.f32 %v4907, %v1019
    %v6274 = vmul.f32 %v4911, %v1020
    %v6275 = vmul.f32 %v4915, %v1021
    %v6276 = vmul.f32 %v4919, %v1022
    %v6277 = vmul.f32 %v4923, %v1023
    %v6278 = vmul.f32 %v4927, %v1024
    %v6279 = vmul.f32 %v4931, %v1025
    %v6280 = vmul.f32 %v4935, %v1026
    %v6281 = vmul.f32 %v4939, %v1027
    %v6282 = vmul.f32 %v4943, %v1028
    %v6283 = vmul.f32 %v4947, %v1029
    %v6284 = vmul.f32 %v4951, %v1030
    %v6285 = vmul.f32 %v4955, %v1031
    %v6286 = vmul.f32 %v4962, %v1016
    %v6287 = vmul.f32 %v4966, %v1017
    %v6288 = vmul.f32 %v4970, %v1018
    %v6289 = vmul.f32 %v4974, %v1019
    %v6290 = vmul.f32 %v4978, %v1020
    %v6291 = vmul.f32 %v4982, %v1021
    %v6292 = vmul.f32 %v4986, %v1022
    %v6293 = vmul.f32 %v4990, %v1023
    %v6294 = vmul.f32 %v4994, %v1024
    %v6295 = vmul.f32 %v4998, %v1025
    %v6296 = vmul.f32 %v5002, %v1026
    %v6297 = vmul.f32 %v5006, %v1027
    %v6298 = vmul.f32 %v5010, %v1028
    %v6299 = vmul.f32 %v5014, %v1029
    %v6300 = vmul.f32 %v5018, %v1030
    %v6301 = vmul.f32 %v5022, %v1031
    %v6302 = vmul.f32 %v5029, %v1016
    %v6303 = vmul.f32 %v5033, %v1017
    %v6304 = vmul.f32 %v5037, %v1018
    %v6305 = vmul.f32 %v5041, %v1019
    %v6306 = vmul.f32 %v5045, %v1020
    %v6307 = vmul.f32 %v5049, %v1021
    %v6308 = vmul.f32 %v5053, %v1022
    %v6309 = vmul.f32 %v5057, %v1023
    %v6310 = vmul.f32 %v5061, %v1024
    %v6311 = vmul.f32 %v5065, %v1025
    %v6312 = vmul.f32 %v5069, %v1026
    %v6313 = vmul.f32 %v5073, %v1027
    %v6314 = vmul.f32 %v5077, %v1028
    %v6315 = vmul.f32 %v5081, %v1029
    %v6316 = vmul.f32 %v5085, %v1030
    %v6317 = vmul.f32 %v5089, %v1031
    %v6318 = vmul.f32 %v5096, %v1016
    %v6319 = vmul.f32 %v5100, %v1017
    %v6320 = vmul.f32 %v5104, %v1018
    %v6321 = vmul.f32 %v5108, %v1019
    %v6322 = vmul.f32 %v5112, %v1020
    %v6323 = vmul.f32 %v5116, %v1021
    %v6324 = vmul.f32 %v5120, %v1022
    %v6325 = vmul.f32 %v5124, %v1023
    %v6326 = vmul.f32 %v5128, %v1024
    %v6327 = vmul.f32 %v5132, %v1025
    %v6328 = vmul.f32 %v5136, %v1026
    %v6329 = vmul.f32 %v5140, %v1027
    %v6330 = vmul.f32 %v5144, %v1028
    %v6331 = vmul.f32 %v5148, %v1029
    %v6332 = vmul.f32 %v5152, %v1030
    %v6333 = vmul.f32 %v5156, %v1031
    %v6334 = vmul.f32 %v5163, %v1016
    %v6335 = vmul.f32 %v5167, %v1017
    %v6336 = vmul.f32 %v5171, %v1018
    %v6337 = vmul.f32 %v5175, %v1019
    %v6338 = vmul.f32 %v5179, %v1020
    %v6339 = vmul.f32 %v5183, %v1021
    %v6340 = vmul.f32 %v5187, %v1022
    %v6341 = vmul.f32 %v5191, %v1023
    %v6342 = vmul.f32 %v5195, %v1024
    %v6343 = vmul.f32 %v5199, %v1025
    %v6344 = vmul.f32 %v5203, %v1026
    %v6345 = vmul.f32 %v5207, %v1027
    %v6346 = vmul.f32 %v5211, %v1028
    %v6347 = vmul.f32 %v5215, %v1029
    %v6348 = vmul.f32 %v5219, %v1030
    %v6349 = vmul.f32 %v5223, %v1031
    %v6350 = vmul.f32 %v5230, %v1016
    %v6351 = vmul.f32 %v5234, %v1017
    %v6352 = vmul.f32 %v5238, %v1018
    %v6353 = vmul.f32 %v5242, %v1019
    %v6354 = vmul.f32 %v5246, %v1020
    %v6355 = vmul.f32 %v5250, %v1021
    %v6356 = vmul.f32 %v5254, %v1022
    %v6357 = vmul.f32 %v5258, %v1023
    %v6358 = vmul.f32 %v5262, %v1024
    %v6359 = vmul.f32 %v5266, %v1025
    %v6360 = vmul.f32 %v5270, %v1026
    %v6361 = vmul.f32 %v5274, %v1027
    %v6362 = vmul.f32 %v5278, %v1028
    %v6363 = vmul.f32 %v5282, %v1029
    %v6364 = vmul.f32 %v5286, %v1030
    %v6365 = vmul.f32 %v5290, %v1031
    %v6366 = vmul.f32 %v5297, %v1016
    %v6367 = vmul.f32 %v5301, %v1017
    %v6368 = vmul.f32 %v5305, %v1018
    %v6369 = vmul.f32 %v5309, %v1019
    %v6370 = vmul.f32 %v5313, %v1020
    %v6371 = vmul.f32 %v5317, %v1021
    %v6372 = vmul.f32 %v5321, %v1022
    %v6373 = vmul.f32 %v5325, %v1023
    %v6374 = vmul.f32 %v5329, %v1024
    %v6375 = vmul.f32 %v5333, %v1025
    %v6376 = vmul.f32 %v5337, %v1026
    %v6377 = vmul.f32 %v5341, %v1027
    %v6378 = vmul.f32 %v5345, %v1028
    %v6379 = vmul.f32 %v5349, %v1029
    %v6380 = vmul.f32 %v5353, %v1030
    %v6381 = vmul.f32 %v5357, %v1031
    %v6382 = vld [vmem:[#allocation18] sm:$0xff]
    %v6383 = vld [vmem:[#allocation18 + $0x8] sm:$0xff]
    %v6384 = vld [vmem:[#allocation18 + $0x10] sm:$0xff]
    %v6385 = vld [vmem:[#allocation18 + $0x18] sm:$0xff]
    %v6386 = vld [vmem:[#allocation18 + $0x20] sm:$0xff]
    %v6387 = vld [vmem:[#allocation18 + $0x28] sm:$0xff]
    %v6388 = vld [vmem:[#allocation18 + $0x30] sm:$0xff]
    %v6389 = vld [vmem:[#allocation18 + $0x38] sm:$0xff]
    %v6390 = vmax.f32 %v5358, %v5359
    %v6391 = vmax.f32 %v6390, %v5360
    %v6392 = vmax.f32 %v6391, %v5361
    %v6393 = vmax.f32 %v6392, %v5362
    %v6394 = vmax.f32 %v6393, %v5363
    %v6395 = vmax.f32 %v6394, %v5364
    %v6396 = vmax.f32 %v6395, %v5365
    %v6397 = vmax.f32 %v6396, %v5366
    %v6398 = vmax.f32 %v6397, %v5367
    %v6399 = vmax.f32 %v6398, %v5368
    %v6400 = vmax.f32 %v6399, %v5369
    %v6401 = vmax.f32 %v6400, %v5370
    %v6402 = vmax.f32 %v6401, %v5371
    %v6403 = vmax.f32 %v6402, %v5372
    %v6404 = vmax.f32 %v6403, %v5373
    %v6405 = vrot.slane %v6404, 4
    %v6406 = vmax.f32 %v6404, %v6405
    %v6407 = vrot.slane %v6406, 2
    %v6408 = vmax.f32 %v6406, %v6407
    %v6409 = vrot.slane %v6408, 1
    %v6410 = vmax.f32 %v6408, %v6409
    %v6411 = vmax.f32 %v5374, %v5375
    %v6412 = vmax.f32 %v6411, %v5376
    %v6413 = vmax.f32 %v6412, %v5377
    %v6414 = vmax.f32 %v6413, %v5378
    %v6415 = vmax.f32 %v6414, %v5379
    %v6416 = vmax.f32 %v6415, %v5380
    %v6417 = vmax.f32 %v6416, %v5381
    %v6418 = vmax.f32 %v6417, %v5382
    %v6419 = vmax.f32 %v6418, %v5383
    %v6420 = vmax.f32 %v6419, %v5384
    %v6421 = vmax.f32 %v6420, %v5385
    %v6422 = vmax.f32 %v6421, %v5386
    %v6423 = vmax.f32 %v6422, %v5387
    %v6424 = vmax.f32 %v6423, %v5388
    %v6425 = vmax.f32 %v6424, %v5389
    %v6426 = vrot.slane %v6425, 4
    %v6427 = vmax.f32 %v6425, %v6426
    %v6428 = vrot.slane %v6427, 2
    %v6429 = vmax.f32 %v6427, %v6428
    %v6430 = vrot.slane %v6429, 1
    %v6431 = vmax.f32 %v6429, %v6430
    %v6432 = vmax.f32 %v5390, %v5391
    %v6433 = vmax.f32 %v6432, %v5392
    %v6434 = vmax.f32 %v6433, %v5393
    %v6435 = vmax.f32 %v6434, %v5394
    %v6436 = vmax.f32 %v6435, %v5395
    %v6437 = vmax.f32 %v6436, %v5396
    %v6438 = vmax.f32 %v6437, %v5397
    %v6439 = vmax.f32 %v6438, %v5398
    %v6440 = vmax.f32 %v6439, %v5399
    %v6441 = vmax.f32 %v6440, %v5400
    %v6442 = vmax.f32 %v6441, %v5401
    %v6443 = vmax.f32 %v6442, %v5402
    %v6444 = vmax.f32 %v6443, %v5403
    %v6445 = vmax.f32 %v6444, %v5404
    %v6446 = vmax.f32 %v6445, %v5405
    %v6447 = vrot.slane %v6446, 4
    %v6448 = vmax.f32 %v6446, %v6447
    %v6449 = vrot.slane %v6448, 2
    %v6450 = vmax.f32 %v6448, %v6449
    %v6451 = vrot.slane %v6450, 1
    %v6452 = vmax.f32 %v6450, %v6451
    %v6453 = vmax.f32 %v5406, %v5407
    %v6454 = vmax.f32 %v6453, %v5408
    %v6455 = vmax.f32 %v6454, %v5409
    %v6456 = vmax.f32 %v6455, %v5410
    %v6457 = vmax.f32 %v6456, %v5411
    %v6458 = vmax.f32 %v6457, %v5412
    %v6459 = vmax.f32 %v6458, %v5413
    %v6460 = vmax.f32 %v6459, %v5414
    %v6461 = vmax.f32 %v6460, %v5415
    %v6462 = vmax.f32 %v6461, %v5416
    %v6463 = vmax.f32 %v6462, %v5417
    %v6464 = vmax.f32 %v6463, %v5418
    %v6465 = vmax.f32 %v6464, %v5419
    %v6466 = vmax.f32 %v6465, %v5420
    %v6467 = vmax.f32 %v6466, %v5421
    %v6468 = vrot.slane %v6467, 4
    %v6469 = vmax.f32 %v6467, %v6468
    %v6470 = vrot.slane %v6469, 2
    %v6471 = vmax.f32 %v6469, %v6470
    %v6472 = vrot.slane %v6471, 1
    %v6473 = vmax.f32 %v6471, %v6472
    %v6474 = vmax.f32 %v5422, %v5423
    %v6475 = vmax.f32 %v6474, %v5424
    %v6476 = vmax.f32 %v6475, %v5425
    %v6477 = vmax.f32 %v6476, %v5426
    %v6478 = vmax.f32 %v6477, %v5427
    %v6479 = vmax.f32 %v6478, %v5428
    %v6480 = vmax.f32 %v6479, %v5429
    %v6481 = vmax.f32 %v6480, %v5430
    %v6482 = vmax.f32 %v6481, %v5431
    %v6483 = vmax.f32 %v6482, %v5432
    %v6484 = vmax.f32 %v6483, %v5433
    %v6485 = vmax.f32 %v6484, %v5434
    %v6486 = vmax.f32 %v6485, %v5435
    %v6487 = vmax.f32 %v6486, %v5436
    %v6488 = vmax.f32 %v6487, %v5437
    %v6489 = vrot.slane %v6488, 4
    %v6490 = vmax.f32 %v6488, %v6489
    %v6491 = vrot.slane %v6490, 2
    %v6492 = vmax.f32 %v6490, %v6491
    %v6493 = vrot.slane %v6492, 1
    %v6494 = vmax.f32 %v6492, %v6493
    %v6495 = vmax.f32 %v5438, %v5439
    %v6496 = vmax.f32 %v6495, %v5440
    %v6497 = vmax.f32 %v6496, %v5441
    %v6498 = vmax.f32 %v6497, %v5442
    %v6499 = vmax.f32 %v6498, %v5443
    %v6500 = vmax.f32 %v6499, %v5444
    %v6501 = vmax.f32 %v6500, %v5445
    %v6502 = vmax.f32 %v6501, %v5446
    %v6503 = vmax.f32 %v6502, %v5447
    %v6504 = vmax.f32 %v6503, %v5448
    %v6505 = vmax.f32 %v6504, %v5449
    %v6506 = vmax.f32 %v6505, %v5450
    %v6507 = vmax.f32 %v6506, %v5451
    %v6508 = vmax.f32 %v6507, %v5452
    %v6509 = vmax.f32 %v6508, %v5453
    %v6510 = vrot.slane %v6509, 4
    %v6511 = vmax.f32 %v6509, %v6510
    %v6512 = vrot.slane %v6511, 2
    %v6513 = vmax.f32 %v6511, %v6512
    %v6514 = vrot.slane %v6513, 1
    %v6515 = vmax.f32 %v6513, %v6514
    %v6516 = vmax.f32 %v5454, %v5455
    %v6517 = vmax.f32 %v6516, %v5456
    %v6518 = vmax.f32 %v6517, %v5457
    %v6519 = vmax.f32 %v6518, %v5458
    %v6520 = vmax.f32 %v6519, %v5459
    %v6521 = vmax.f32 %v6520, %v5460
    %v6522 = vmax.f32 %v6521, %v5461
    %v6523 = vmax.f32 %v6522, %v5462
    %v6524 = vmax.f32 %v6523, %v5463
    %v6525 = vmax.f32 %v6524, %v5464
    %v6526 = vmax.f32 %v6525, %v5465
    %v6527 = vmax.f32 %v6526, %v5466
    %v6528 = vmax.f32 %v6527, %v5467
    %v6529 = vmax.f32 %v6528, %v5468
    %v6530 = vmax.f32 %v6529, %v5469
    %v6531 = vrot.slane %v6530, 4
    %v6532 = vmax.f32 %v6530, %v6531
    %v6533 = vrot.slane %v6532, 2
    %v6534 = vmax.f32 %v6532, %v6533
    %v6535 = vrot.slane %v6534, 1
    %v6536 = vmax.f32 %v6534, %v6535
    %v6537 = vmax.f32 %v5470, %v5471
    %v6538 = vmax.f32 %v6537, %v5472
    %v6539 = vmax.f32 %v6538, %v5473
    %v6540 = vmax.f32 %v6539, %v5474
    %v6541 = vmax.f32 %v6540, %v5475
    %v6542 = vmax.f32 %v6541, %v5476
    %v6543 = vmax.f32 %v6542, %v5477
    %v6544 = vmax.f32 %v6543, %v5478
    %v6545 = vmax.f32 %v6544, %v5479
    %v6546 = vmax.f32 %v6545, %v5480
    %v6547 = vmax.f32 %v6546, %v5481
    %v6548 = vmax.f32 %v6547, %v5482
    %v6549 = vmax.f32 %v6548, %v5483
    %v6550 = vmax.f32 %v6549, %v5484
    %v6551 = vmax.f32 %v6550, %v5485
    %v6552 = vrot.slane %v6551, 4
    %v6553 = vmax.f32 %v6551, %v6552
    %v6554 = vrot.slane %v6553, 2
    %v6555 = vmax.f32 %v6553, %v6554
    %v6556 = vrot.slane %v6555, 1
    %v6557 = vmax.f32 %v6555, %v6556
    %v6558 = vmax.f32 %v5486, %v5487
    %v6559 = vmax.f32 %v6558, %v5488
    %v6560 = vmax.f32 %v6559, %v5489
    %v6561 = vmax.f32 %v6560, %v5490
    %v6562 = vmax.f32 %v6561, %v5491
    %v6563 = vmax.f32 %v6562, %v5492
    %v6564 = vmax.f32 %v6563, %v5493
    %v6565 = vmax.f32 %v6564, %v5494
    %v6566 = vmax.f32 %v6565, %v5495
    %v6567 = vmax.f32 %v6566, %v5496
    %v6568 = vmax.f32 %v6567, %v5497
    %v6569 = vmax.f32 %v6568, %v5498
    %v6570 = vmax.f32 %v6569, %v5499
    %v6571 = vmax.f32 %v6570, %v5500
    %v6572 = vmax.f32 %v6571, %v5501
    %v6573 = vrot.slane %v6572, 4
    %v6574 = vmax.f32 %v6572, %v6573
    %v6575 = vrot.slane %v6574, 2
    %v6576 = vmax.f32 %v6574, %v6575
    %v6577 = vrot.slane %v6576, 1
    %v6578 = vmax.f32 %v6576, %v6577
    %v6579 = vmax.f32 %v5502, %v5503
    %v6580 = vmax.f32 %v6579, %v5504
    %v6581 = vmax.f32 %v6580, %v5505
    %v6582 = vmax.f32 %v6581, %v5506
    %v6583 = vmax.f32 %v6582, %v5507
    %v6584 = vmax.f32 %v6583, %v5508
    %v6585 = vmax.f32 %v6584, %v5509
    %v6586 = vmax.f32 %v6585, %v5510
    %v6587 = vmax.f32 %v6586, %v5511
    %v6588 = vmax.f32 %v6587, %v5512
    %v6589 = vmax.f32 %v6588, %v5513
    %v6590 = vmax.f32 %v6589, %v5514
    %v6591 = vmax.f32 %v6590, %v5515
    %v6592 = vmax.f32 %v6591, %v5516
    %v6593 = vmax.f32 %v6592, %v5517
    %v6594 = vrot.slane %v6593, 4
    %v6595 = vmax.f32 %v6593, %v6594
    %v6596 = vrot.slane %v6595, 2
    %v6597 = vmax.f32 %v6595, %v6596
    %v6598 = vrot.slane %v6597, 1
    %v6599 = vmax.f32 %v6597, %v6598
    %v6600 = vmax.f32 %v5518, %v5519
    %v6601 = vmax.f32 %v6600, %v5520
    %v6602 = vmax.f32 %v6601, %v5521
    %v6603 = vmax.f32 %v6602, %v5522
    %v6604 = vmax.f32 %v6603, %v5523
    %v6605 = vmax.f32 %v6604, %v5524
    %v6606 = vmax.f32 %v6605, %v5525
    %v6607 = vmax.f32 %v6606, %v5526
    %v6608 = vmax.f32 %v6607, %v5527
    %v6609 = vmax.f32 %v6608, %v5528
    %v6610 = vmax.f32 %v6609, %v5529
    %v6611 = vmax.f32 %v6610, %v5530
    %v6612 = vmax.f32 %v6611, %v5531
    %v6613 = vmax.f32 %v6612, %v5532
    %v6614 = vmax.f32 %v6613, %v5533
    %v6615 = vrot.slane %v6614, 4
    %v6616 = vmax.f32 %v6614, %v6615
    %v6617 = vrot.slane %v6616, 2
    %v6618 = vmax.f32 %v6616, %v6617
    %v6619 = vrot.slane %v6618, 1
    %v6620 = vmax.f32 %v6618, %v6619
    %v6621 = vmax.f32 %v5534, %v5535
    %v6622 = vmax.f32 %v6621, %v5536
    %v6623 = vmax.f32 %v6622, %v5537
    %v6624 = vmax.f32 %v6623, %v5538
    %v6625 = vmax.f32 %v6624, %v5539
    %v6626 = vmax.f32 %v6625, %v5540
    %v6627 = vmax.f32 %v6626, %v5541
    %v6628 = vmax.f32 %v6627, %v5542
    %v6629 = vmax.f32 %v6628, %v5543
    %v6630 = vmax.f32 %v6629, %v5544
    %v6631 = vmax.f32 %v6630, %v5545
    %v6632 = vmax.f32 %v6631, %v5546
    %v6633 = vmax.f32 %v6632, %v5547
    %v6634 = vmax.f32 %v6633, %v5548
    %v6635 = vmax.f32 %v6634, %v5549
    %v6636 = vrot.slane %v6635, 4
    %v6637 = vmax.f32 %v6635, %v6636
    %v6638 = vrot.slane %v6637, 2
    %v6639 = vmax.f32 %v6637, %v6638
    %v6640 = vrot.slane %v6639, 1
    %v6641 = vmax.f32 %v6639, %v6640
    %v6642 = vmax.f32 %v5550, %v5551
    %v6643 = vmax.f32 %v6642, %v5552
    %v6644 = vmax.f32 %v6643, %v5553
    %v6645 = vmax.f32 %v6644, %v5554
    %v6646 = vmax.f32 %v6645, %v5555
    %v6647 = vmax.f32 %v6646, %v5556
    %v6648 = vmax.f32 %v6647, %v5557
    %v6649 = vmax.f32 %v6648, %v5558
    %v6650 = vmax.f32 %v6649, %v5559
    %v6651 = vmax.f32 %v6650, %v5560
    %v6652 = vmax.f32 %v6651, %v5561
    %v6653 = vmax.f32 %v6652, %v5562
    %v6654 = vmax.f32 %v6653, %v5563
    %v6655 = vmax.f32 %v6654, %v5564
    %v6656 = vmax.f32 %v6655, %v5565
    %v6657 = vrot.slane %v6656, 4
    %v6658 = vmax.f32 %v6656, %v6657
    %v6659 = vrot.slane %v6658, 2
    %v6660 = vmax.f32 %v6658, %v6659
    %v6661 = vrot.slane %v6660, 1
    %v6662 = vmax.f32 %v6660, %v6661
    %v6663 = vmax.f32 %v5566, %v5567
    %v6664 = vmax.f32 %v6663, %v5568
    %v6665 = vmax.f32 %v6664, %v5569
    %v6666 = vmax.f32 %v6665, %v5570
    %v6667 = vmax.f32 %v6666, %v5571
    %v6668 = vmax.f32 %v6667, %v5572
    %v6669 = vmax.f32 %v6668, %v5573
    %v6670 = vmax.f32 %v6669, %v5574
    %v6671 = vmax.f32 %v6670, %v5575
    %v6672 = vmax.f32 %v6671, %v5576
    %v6673 = vmax.f32 %v6672, %v5577
    %v6674 = vmax.f32 %v6673, %v5578
    %v6675 = vmax.f32 %v6674, %v5579
    %v6676 = vmax.f32 %v6675, %v5580
    %v6677 = vmax.f32 %v6676, %v5581
    %v6678 = vrot.slane %v6677, 4
    %v6679 = vmax.f32 %v6677, %v6678
    %v6680 = vrot.slane %v6679, 2
    %v6681 = vmax.f32 %v6679, %v6680
    %v6682 = vrot.slane %v6681, 1
    %v6683 = vmax.f32 %v6681, %v6682
    %v6684 = vmax.f32 %v5582, %v5583
    %v6685 = vmax.f32 %v6684, %v5584
    %v6686 = vmax.f32 %v6685, %v5585
    %v6687 = vmax.f32 %v6686, %v5586
    %v6688 = vmax.f32 %v6687, %v5587
    %v6689 = vmax.f32 %v6688, %v5588
    %v6690 = vmax.f32 %v6689, %v5589
    %v6691 = vmax.f32 %v6690, %v5590
    %v6692 = vmax.f32 %v6691, %v5591
    %v6693 = vmax.f32 %v6692, %v5592
    %v6694 = vmax.f32 %v6693, %v5593
    %v6695 = vmax.f32 %v6694, %v5594
    %v6696 = vmax.f32 %v6695, %v5595
    %v6697 = vmax.f32 %v6696, %v5596
    %v6698 = vmax.f32 %v6697, %v5597
    %v6699 = vrot.slane %v6698, 4
    %v6700 = vmax.f32 %v6698, %v6699
    %v6701 = vrot.slane %v6700, 2
    %v6702 = vmax.f32 %v6700, %v6701
    %v6703 = vrot.slane %v6702, 1
    %v6704 = vmax.f32 %v6702, %v6703
    %v6705 = vmax.f32 %v5598, %v5599
    %v6706 = vmax.f32 %v6705, %v5600
    %v6707 = vmax.f32 %v6706, %v5601
    %v6708 = vmax.f32 %v6707, %v5602
    %v6709 = vmax.f32 %v6708, %v5603
    %v6710 = vmax.f32 %v6709, %v5604
    %v6711 = vmax.f32 %v6710, %v5605
    %v6712 = vmax.f32 %v6711, %v5606
    %v6713 = vmax.f32 %v6712, %v5607
    %v6714 = vmax.f32 %v6713, %v5608
    %v6715 = vmax.f32 %v6714, %v5609
    %v6716 = vmax.f32 %v6715, %v5610
    %v6717 = vmax.f32 %v6716, %v5611
    %v6718 = vmax.f32 %v6717, %v5612
    %v6719 = vmax.f32 %v6718, %v5613
    %v6720 = vrot.slane %v6719, 4
    %v6721 = vmax.f32 %v6719, %v6720
    %v6722 = vrot.slane %v6721, 2
    %v6723 = vmax.f32 %v6721, %v6722
    %v6724 = vrot.slane %v6723, 1
    %v6725 = vmax.f32 %v6723, %v6724
    %v6726 = vmax.f32 %v5614, %v5615
    %v6727 = vmax.f32 %v6726, %v5616
    %v6728 = vmax.f32 %v6727, %v5617
    %v6729 = vmax.f32 %v6728, %v5618
    %v6730 = vmax.f32 %v6729, %v5619
    %v6731 = vmax.f32 %v6730, %v5620
    %v6732 = vmax.f32 %v6731, %v5621
    %v6733 = vmax.f32 %v6732, %v5622
    %v6734 = vmax.f32 %v6733, %v5623
    %v6735 = vmax.f32 %v6734, %v5624
    %v6736 = vmax.f32 %v6735, %v5625
    %v6737 = vmax.f32 %v6736, %v5626
    %v6738 = vmax.f32 %v6737, %v5627
    %v6739 = vmax.f32 %v6738, %v5628
    %v6740 = vmax.f32 %v6739, %v5629
    %v6741 = vrot.slane %v6740, 4
    %v6742 = vmax.f32 %v6740, %v6741
    %v6743 = vrot.slane %v6742, 2
    %v6744 = vmax.f32 %v6742, %v6743
    %v6745 = vrot.slane %v6744, 1
    %v6746 = vmax.f32 %v6744, %v6745
    %v6747 = vmax.f32 %v5630, %v5631
    %v6748 = vmax.f32 %v6747, %v5632
    %v6749 = vmax.f32 %v6748, %v5633
    %v6750 = vmax.f32 %v6749, %v5634
    %v6751 = vmax.f32 %v6750, %v5635
    %v6752 = vmax.f32 %v6751, %v5636
    %v6753 = vmax.f32 %v6752, %v5637
    %v6754 = vmax.f32 %v6753, %v5638
    %v6755 = vmax.f32 %v6754, %v5639
    %v6756 = vmax.f32 %v6755, %v5640
    %v6757 = vmax.f32 %v6756, %v5641
    %v6758 = vmax.f32 %v6757, %v5642
    %v6759 = vmax.f32 %v6758, %v5643
    %v6760 = vmax.f32 %v6759, %v5644
    %v6761 = vmax.f32 %v6760, %v5645
    %v6762 = vrot.slane %v6761, 4
    %v6763 = vmax.f32 %v6761, %v6762
    %v6764 = vrot.slane %v6763, 2
    %v6765 = vmax.f32 %v6763, %v6764
    %v6766 = vrot.slane %v6765, 1
    %v6767 = vmax.f32 %v6765, %v6766
    %v6768 = vmax.f32 %v5646, %v5647
    %v6769 = vmax.f32 %v6768, %v5648
    %v6770 = vmax.f32 %v6769, %v5649
    %v6771 = vmax.f32 %v6770, %v5650
    %v6772 = vmax.f32 %v6771, %v5651
    %v6773 = vmax.f32 %v6772, %v5652
    %v6774 = vmax.f32 %v6773, %v5653
    %v6775 = vmax.f32 %v6774, %v5654
    %v6776 = vmax.f32 %v6775, %v5655
    %v6777 = vmax.f32 %v6776, %v5656
    %v6778 = vmax.f32 %v6777, %v5657
    %v6779 = vmax.f32 %v6778, %v5658
    %v6780 = vmax.f32 %v6779, %v5659
    %v6781 = vmax.f32 %v6780, %v5660
    %v6782 = vmax.f32 %v6781, %v5661
    %v6783 = vrot.slane %v6782, 4
    %v6784 = vmax.f32 %v6782, %v6783
    %v6785 = vrot.slane %v6784, 2
    %v6786 = vmax.f32 %v6784, %v6785
    %v6787 = vrot.slane %v6786, 1
    %v6788 = vmax.f32 %v6786, %v6787
    %v6789 = vmax.f32 %v5662, %v5663
    %v6790 = vmax.f32 %v6789, %v5664
    %v6791 = vmax.f32 %v6790, %v5665
    %v6792 = vmax.f32 %v6791, %v5666
    %v6793 = vmax.f32 %v6792, %v5667
    %v6794 = vmax.f32 %v6793, %v5668
    %v6795 = vmax.f32 %v6794, %v5669
    %v6796 = vmax.f32 %v6795, %v5670
    %v6797 = vmax.f32 %v6796, %v5671
    %v6798 = vmax.f32 %v6797, %v5672
    %v6799 = vmax.f32 %v6798, %v5673
    %v6800 = vmax.f32 %v6799, %v5674
    %v6801 = vmax.f32 %v6800, %v5675
    %v6802 = vmax.f32 %v6801, %v5676
    %v6803 = vmax.f32 %v6802, %v5677
    %v6804 = vrot.slane %v6803, 4
    %v6805 = vmax.f32 %v6803, %v6804
    %v6806 = vrot.slane %v6805, 2
    %v6807 = vmax.f32 %v6805, %v6806
    %v6808 = vrot.slane %v6807, 1
    %v6809 = vmax.f32 %v6807, %v6808
    %v6810 = vmax.f32 %v5678, %v5679
    %v6811 = vmax.f32 %v6810, %v5680
    %v6812 = vmax.f32 %v6811, %v5681
    %v6813 = vmax.f32 %v6812, %v5682
    %v6814 = vmax.f32 %v6813, %v5683
    %v6815 = vmax.f32 %v6814, %v5684
    %v6816 = vmax.f32 %v6815, %v5685
    %v6817 = vmax.f32 %v6816, %v5686
    %v6818 = vmax.f32 %v6817, %v5687
    %v6819 = vmax.f32 %v6818, %v5688
    %v6820 = vmax.f32 %v6819, %v5689
    %v6821 = vmax.f32 %v6820, %v5690
    %v6822 = vmax.f32 %v6821, %v5691
    %v6823 = vmax.f32 %v6822, %v5692
    %v6824 = vmax.f32 %v6823, %v5693
    %v6825 = vrot.slane %v6824, 4
    %v6826 = vmax.f32 %v6824, %v6825
    %v6827 = vrot.slane %v6826, 2
    %v6828 = vmax.f32 %v6826, %v6827
    %v6829 = vrot.slane %v6828, 1
    %v6830 = vmax.f32 %v6828, %v6829
    %v6831 = vmax.f32 %v5694, %v5695
    %v6832 = vmax.f32 %v6831, %v5696
    %v6833 = vmax.f32 %v6832, %v5697
    %v6834 = vmax.f32 %v6833, %v5698
    %v6835 = vmax.f32 %v6834, %v5699
    %v6836 = vmax.f32 %v6835, %v5700
    %v6837 = vmax.f32 %v6836, %v5701
    %v6838 = vmax.f32 %v6837, %v5702
    %v6839 = vmax.f32 %v6838, %v5703
    %v6840 = vmax.f32 %v6839, %v5704
    %v6841 = vmax.f32 %v6840, %v5705
    %v6842 = vmax.f32 %v6841, %v5706
    %v6843 = vmax.f32 %v6842, %v5707
    %v6844 = vmax.f32 %v6843, %v5708
    %v6845 = vmax.f32 %v6844, %v5709
    %v6846 = vrot.slane %v6845, 4
    %v6847 = vmax.f32 %v6845, %v6846
    %v6848 = vrot.slane %v6847, 2
    %v6849 = vmax.f32 %v6847, %v6848
    %v6850 = vrot.slane %v6849, 1
    %v6851 = vmax.f32 %v6849, %v6850
    %v6852 = vmax.f32 %v5710, %v5711
    %v6853 = vmax.f32 %v6852, %v5712
    %v6854 = vmax.f32 %v6853, %v5713
    %v6855 = vmax.f32 %v6854, %v5714
    %v6856 = vmax.f32 %v6855, %v5715
    %v6857 = vmax.f32 %v6856, %v5716
    %v6858 = vmax.f32 %v6857, %v5717
    %v6859 = vmax.f32 %v6858, %v5718
    %v6860 = vmax.f32 %v6859, %v5719
    %v6861 = vmax.f32 %v6860, %v5720
    %v6862 = vmax.f32 %v6861, %v5721
    %v6863 = vmax.f32 %v6862, %v5722
    %v6864 = vmax.f32 %v6863, %v5723
    %v6865 = vmax.f32 %v6864, %v5724
    %v6866 = vmax.f32 %v6865, %v5725
    %v6867 = vrot.slane %v6866, 4
    %v6868 = vmax.f32 %v6866, %v6867
    %v6869 = vrot.slane %v6868, 2
    %v6870 = vmax.f32 %v6868, %v6869
    %v6871 = vrot.slane %v6870, 1
    %v6872 = vmax.f32 %v6870, %v6871
    %v6873 = vmax.f32 %v5726, %v5727
    %v6874 = vmax.f32 %v6873, %v5728
    %v6875 = vmax.f32 %v6874, %v5729
    %v6876 = vmax.f32 %v6875, %v5730
    %v6877 = vmax.f32 %v6876, %v5731
    %v6878 = vmax.f32 %v6877, %v5732
    %v6879 = vmax.f32 %v6878, %v5733
    %v6880 = vmax.f32 %v6879, %v5734
    %v6881 = vmax.f32 %v6880, %v5735
    %v6882 = vmax.f32 %v6881, %v5736
    %v6883 = vmax.f32 %v6882, %v5737
    %v6884 = vmax.f32 %v6883, %v5738
    %v6885 = vmax.f32 %v6884, %v5739
    %v6886 = vmax.f32 %v6885, %v5740
    %v6887 = vmax.f32 %v6886, %v5741
    %v6888 = vrot.slane %v6887, 4
    %v6889 = vmax.f32 %v6887, %v6888
    %v6890 = vrot.slane %v6889, 2
    %v6891 = vmax.f32 %v6889, %v6890
    %v6892 = vrot.slane %v6891, 1
    %v6893 = vmax.f32 %v6891, %v6892
    %v6894 = vmax.f32 %v5742, %v5743
    %v6895 = vmax.f32 %v6894, %v5744
    %v6896 = vmax.f32 %v6895, %v5745
    %v6897 = vmax.f32 %v6896, %v5746
    %v6898 = vmax.f32 %v6897, %v5747
    %v6899 = vmax.f32 %v6898, %v5748
    %v6900 = vmax.f32 %v6899, %v5749
    %v6901 = vmax.f32 %v6900, %v5750
    %v6902 = vmax.f32 %v6901, %v5751
    %v6903 = vmax.f32 %v6902, %v5752
    %v6904 = vmax.f32 %v6903, %v5753
    %v6905 = vmax.f32 %v6904, %v5754
    %v6906 = vmax.f32 %v6905, %v5755
    %v6907 = vmax.f32 %v6906, %v5756
    %v6908 = vmax.f32 %v6907, %v5757
    %v6909 = vrot.slane %v6908, 4
    %v6910 = vmax.f32 %v6908, %v6909
    %v6911 = vrot.slane %v6910, 2
    %v6912 = vmax.f32 %v6910, %v6911
    %v6913 = vrot.slane %v6912, 1
    %v6914 = vmax.f32 %v6912, %v6913
    %v6915 = vmax.f32 %v5758, %v5759
    %v6916 = vmax.f32 %v6915, %v5760
    %v6917 = vmax.f32 %v6916, %v5761
    %v6918 = vmax.f32 %v6917, %v5762
    %v6919 = vmax.f32 %v6918, %v5763
    %v6920 = vmax.f32 %v6919, %v5764
    %v6921 = vmax.f32 %v6920, %v5765
    %v6922 = vmax.f32 %v6921, %v5766
    %v6923 = vmax.f32 %v6922, %v5767
    %v6924 = vmax.f32 %v6923, %v5768
    %v6925 = vmax.f32 %v6924, %v5769
    %v6926 = vmax.f32 %v6925, %v5770
    %v6927 = vmax.f32 %v6926, %v5771
    %v6928 = vmax.f32 %v6927, %v5772
    %v6929 = vmax.f32 %v6928, %v5773
    %v6930 = vrot.slane %v6929, 4
    %v6931 = vmax.f32 %v6929, %v6930
    %v6932 = vrot.slane %v6931, 2
    %v6933 = vmax.f32 %v6931, %v6932
    %v6934 = vrot.slane %v6933, 1
    %v6935 = vmax.f32 %v6933, %v6934
    %v6936 = vmax.f32 %v5774, %v5775
    %v6937 = vmax.f32 %v6936, %v5776
    %v6938 = vmax.f32 %v6937, %v5777
    %v6939 = vmax.f32 %v6938, %v5778
    %v6940 = vmax.f32 %v6939, %v5779
    %v6941 = vmax.f32 %v6940, %v5780
    %v6942 = vmax.f32 %v6941, %v5781
    %v6943 = vmax.f32 %v6942, %v5782
    %v6944 = vmax.f32 %v6943, %v5783
    %v6945 = vmax.f32 %v6944, %v5784
    %v6946 = vmax.f32 %v6945, %v5785
    %v6947 = vmax.f32 %v6946, %v5786
    %v6948 = vmax.f32 %v6947, %v5787
    %v6949 = vmax.f32 %v6948, %v5788
    %v6950 = vmax.f32 %v6949, %v5789
    %v6951 = vrot.slane %v6950, 4
    %v6952 = vmax.f32 %v6950, %v6951
    %v6953 = vrot.slane %v6952, 2
    %v6954 = vmax.f32 %v6952, %v6953
    %v6955 = vrot.slane %v6954, 1
    %v6956 = vmax.f32 %v6954, %v6955
    %v6957 = vmax.f32 %v5790, %v5791
    %v6958 = vmax.f32 %v6957, %v5792
    %v6959 = vmax.f32 %v6958, %v5793
    %v6960 = vmax.f32 %v6959, %v5794
    %v6961 = vmax.f32 %v6960, %v5795
    %v6962 = vmax.f32 %v6961, %v5796
    %v6963 = vmax.f32 %v6962, %v5797
    %v6964 = vmax.f32 %v6963, %v5798
    %v6965 = vmax.f32 %v6964, %v5799
    %v6966 = vmax.f32 %v6965, %v5800
    %v6967 = vmax.f32 %v6966, %v5801
    %v6968 = vmax.f32 %v6967, %v5802
    %v6969 = vmax.f32 %v6968, %v5803
    %v6970 = vmax.f32 %v6969, %v5804
    %v6971 = vmax.f32 %v6970, %v5805
    %v6972 = vrot.slane %v6971, 4
    %v6973 = vmax.f32 %v6971, %v6972
    %v6974 = vrot.slane %v6973, 2
    %v6975 = vmax.f32 %v6973, %v6974
    %v6976 = vrot.slane %v6975, 1
    %v6977 = vmax.f32 %v6975, %v6976
    %v6978 = vmax.f32 %v5806, %v5807
    %v6979 = vmax.f32 %v6978, %v5808
    %v6980 = vmax.f32 %v6979, %v5809
    %v6981 = vmax.f32 %v6980, %v5810
    %v6982 = vmax.f32 %v6981, %v5811
    %v6983 = vmax.f32 %v6982, %v5812
    %v6984 = vmax.f32 %v6983, %v5813
    %v6985 = vmax.f32 %v6984, %v5814
    %v6986 = vmax.f32 %v6985, %v5815
    %v6987 = vmax.f32 %v6986, %v5816
    %v6988 = vmax.f32 %v6987, %v5817
    %v6989 = vmax.f32 %v6988, %v5818
    %v6990 = vmax.f32 %v6989, %v5819
    %v6991 = vmax.f32 %v6990, %v5820
    %v6992 = vmax.f32 %v6991, %v5821
    %v6993 = vrot.slane %v6992, 4
    %v6994 = vmax.f32 %v6992, %v6993
    %v6995 = vrot.slane %v6994, 2
    %v6996 = vmax.f32 %v6994, %v6995
    %v6997 = vrot.slane %v6996, 1
    %v6998 = vmax.f32 %v6996, %v6997
    %v6999 = vmax.f32 %v5822, %v5823
    %v7000 = vmax.f32 %v6999, %v5824
    %v7001 = vmax.f32 %v7000, %v5825
    %v7002 = vmax.f32 %v7001, %v5826
    %v7003 = vmax.f32 %v7002, %v5827
    %v7004 = vmax.f32 %v7003, %v5828
    %v7005 = vmax.f32 %v7004, %v5829
    %v7006 = vmax.f32 %v7005, %v5830
    %v7007 = vmax.f32 %v7006, %v5831
    %v7008 = vmax.f32 %v7007, %v5832
    %v7009 = vmax.f32 %v7008, %v5833
    %v7010 = vmax.f32 %v7009, %v5834
    %v7011 = vmax.f32 %v7010, %v5835
    %v7012 = vmax.f32 %v7011, %v5836
    %v7013 = vmax.f32 %v7012, %v5837
    %v7014 = vrot.slane %v7013, 4
    %v7015 = vmax.f32 %v7013, %v7014
    %v7016 = vrot.slane %v7015, 2
    %v7017 = vmax.f32 %v7015, %v7016
    %v7018 = vrot.slane %v7017, 1
    %v7019 = vmax.f32 %v7017, %v7018
    %v7020 = vmax.f32 %v5838, %v5839
    %v7021 = vmax.f32 %v7020, %v5840
    %v7022 = vmax.f32 %v7021, %v5841
    %v7023 = vmax.f32 %v7022, %v5842
    %v7024 = vmax.f32 %v7023, %v5843
    %v7025 = vmax.f32 %v7024, %v5844
    %v7026 = vmax.f32 %v7025, %v5845
    %v7027 = vmax.f32 %v7026, %v5846
    %v7028 = vmax.f32 %v7027, %v5847
    %v7029 = vmax.f32 %v7028, %v5848
    %v7030 = vmax.f32 %v7029, %v5849
    %v7031 = vmax.f32 %v7030, %v5850
    %v7032 = vmax.f32 %v7031, %v5851
    %v7033 = vmax.f32 %v7032, %v5852
    %v7034 = vmax.f32 %v7033, %v5853
    %v7035 = vrot.slane %v7034, 4
    %v7036 = vmax.f32 %v7034, %v7035
    %v7037 = vrot.slane %v7036, 2
    %v7038 = vmax.f32 %v7036, %v7037
    %v7039 = vrot.slane %v7038, 1
    %v7040 = vmax.f32 %v7038, %v7039
    %v7041 = vmax.f32 %v5854, %v5855
    %v7042 = vmax.f32 %v7041, %v5856
    %v7043 = vmax.f32 %v7042, %v5857
    %v7044 = vmax.f32 %v7043, %v5858
    %v7045 = vmax.f32 %v7044, %v5859
    %v7046 = vmax.f32 %v7045, %v5860
    %v7047 = vmax.f32 %v7046, %v5861
    %v7048 = vmax.f32 %v7047, %v5862
    %v7049 = vmax.f32 %v7048, %v5863
    %v7050 = vmax.f32 %v7049, %v5864
    %v7051 = vmax.f32 %v7050, %v5865
    %v7052 = vmax.f32 %v7051, %v5866
    %v7053 = vmax.f32 %v7052, %v5867
    %v7054 = vmax.f32 %v7053, %v5868
    %v7055 = vmax.f32 %v7054, %v5869
    %v7056 = vrot.slane %v7055, 4
    %v7057 = vmax.f32 %v7055, %v7056
    %v7058 = vrot.slane %v7057, 2
    %v7059 = vmax.f32 %v7057, %v7058
    %v7060 = vrot.slane %v7059, 1
    %v7061 = vmax.f32 %v7059, %v7060
    %v7062 = vmax.f32 %v5870, %v5871
    %v7063 = vmax.f32 %v7062, %v5872
    %v7064 = vmax.f32 %v7063, %v5873
    %v7065 = vmax.f32 %v7064, %v5874
    %v7066 = vmax.f32 %v7065, %v5875
    %v7067 = vmax.f32 %v7066, %v5876
    %v7068 = vmax.f32 %v7067, %v5877
    %v7069 = vmax.f32 %v7068, %v5878
    %v7070 = vmax.f32 %v7069, %v5879
    %v7071 = vmax.f32 %v7070, %v5880
    %v7072 = vmax.f32 %v7071, %v5881
    %v7073 = vmax.f32 %v7072, %v5882
    %v7074 = vmax.f32 %v7073, %v5883
    %v7075 = vmax.f32 %v7074, %v5884
    %v7076 = vmax.f32 %v7075, %v5885
    %v7077 = vrot.slane %v7076, 4
    %v7078 = vmax.f32 %v7076, %v7077
    %v7079 = vrot.slane %v7078, 2
    %v7080 = vmax.f32 %v7078, %v7079
    %v7081 = vrot.slane %v7080, 1
    %v7082 = vmax.f32 %v7080, %v7081
    %v7083 = vmax.f32 %v5886, %v5887
    %v7084 = vmax.f32 %v7083, %v5888
    %v7085 = vmax.f32 %v7084, %v5889
    %v7086 = vmax.f32 %v7085, %v5890
    %v7087 = vmax.f32 %v7086, %v5891
    %v7088 = vmax.f32 %v7087, %v5892
    %v7089 = vmax.f32 %v7088, %v5893
    %v7090 = vmax.f32 %v7089, %v5894
    %v7091 = vmax.f32 %v7090, %v5895
    %v7092 = vmax.f32 %v7091, %v5896
    %v7093 = vmax.f32 %v7092, %v5897
    %v7094 = vmax.f32 %v7093, %v5898
    %v7095 = vmax.f32 %v7094, %v5899
    %v7096 = vmax.f32 %v7095, %v5900
    %v7097 = vmax.f32 %v7096, %v5901
    %v7098 = vrot.slane %v7097, 4
    %v7099 = vmax.f32 %v7097, %v7098
    %v7100 = vrot.slane %v7099, 2
    %v7101 = vmax.f32 %v7099, %v7100
    %v7102 = vrot.slane %v7101, 1
    %v7103 = vmax.f32 %v7101, %v7102
    %v7104 = vmax.f32 %v5902, %v5903
    %v7105 = vmax.f32 %v7104, %v5904
    %v7106 = vmax.f32 %v7105, %v5905
    %v7107 = vmax.f32 %v7106, %v5906
    %v7108 = vmax.f32 %v7107, %v5907
    %v7109 = vmax.f32 %v7108, %v5908
    %v7110 = vmax.f32 %v7109, %v5909
    %v7111 = vmax.f32 %v7110, %v5910
    %v7112 = vmax.f32 %v7111, %v5911
    %v7113 = vmax.f32 %v7112, %v5912
    %v7114 = vmax.f32 %v7113, %v5913
    %v7115 = vmax.f32 %v7114, %v5914
    %v7116 = vmax.f32 %v7115, %v5915
    %v7117 = vmax.f32 %v7116, %v5916
    %v7118 = vmax.f32 %v7117, %v5917
    %v7119 = vrot.slane %v7118, 4
    %v7120 = vmax.f32 %v7118, %v7119
    %v7121 = vrot.slane %v7120, 2
    %v7122 = vmax.f32 %v7120, %v7121
    %v7123 = vrot.slane %v7122, 1
    %v7124 = vmax.f32 %v7122, %v7123
    %v7125 = vmax.f32 %v5918, %v5919
    %v7126 = vmax.f32 %v7125, %v5920
    %v7127 = vmax.f32 %v7126, %v5921
    %v7128 = vmax.f32 %v7127, %v5922
    %v7129 = vmax.f32 %v7128, %v5923
    %v7130 = vmax.f32 %v7129, %v5924
    %v7131 = vmax.f32 %v7130, %v5925
    %v7132 = vmax.f32 %v7131, %v5926
    %v7133 = vmax.f32 %v7132, %v5927
    %v7134 = vmax.f32 %v7133, %v5928
    %v7135 = vmax.f32 %v7134, %v5929
    %v7136 = vmax.f32 %v7135, %v5930
    %v7137 = vmax.f32 %v7136, %v5931
    %v7138 = vmax.f32 %v7137, %v5932
    %v7139 = vmax.f32 %v7138, %v5933
    %v7140 = vrot.slane %v7139, 4
    %v7141 = vmax.f32 %v7139, %v7140
    %v7142 = vrot.slane %v7141, 2
    %v7143 = vmax.f32 %v7141, %v7142
    %v7144 = vrot.slane %v7143, 1
    %v7145 = vmax.f32 %v7143, %v7144
    %v7146 = vmax.f32 %v5934, %v5935
    %v7147 = vmax.f32 %v7146, %v5936
    %v7148 = vmax.f32 %v7147, %v5937
    %v7149 = vmax.f32 %v7148, %v5938
    %v7150 = vmax.f32 %v7149, %v5939
    %v7151 = vmax.f32 %v7150, %v5940
    %v7152 = vmax.f32 %v7151, %v5941
    %v7153 = vmax.f32 %v7152, %v5942
    %v7154 = vmax.f32 %v7153, %v5943
    %v7155 = vmax.f32 %v7154, %v5944
    %v7156 = vmax.f32 %v7155, %v5945
    %v7157 = vmax.f32 %v7156, %v5946
    %v7158 = vmax.f32 %v7157, %v5947
    %v7159 = vmax.f32 %v7158, %v5948
    %v7160 = vmax.f32 %v7159, %v5949
    %v7161 = vrot.slane %v7160, 4
    %v7162 = vmax.f32 %v7160, %v7161
    %v7163 = vrot.slane %v7162, 2
    %v7164 = vmax.f32 %v7162, %v7163
    %v7165 = vrot.slane %v7164, 1
    %v7166 = vmax.f32 %v7164, %v7165
    %v7167 = vmax.f32 %v5950, %v5951
    %v7168 = vmax.f32 %v7167, %v5952
    %v7169 = vmax.f32 %v7168, %v5953
    %v7170 = vmax.f32 %v7169, %v5954
    %v7171 = vmax.f32 %v7170, %v5955
    %v7172 = vmax.f32 %v7171, %v5956
    %v7173 = vmax.f32 %v7172, %v5957
    %v7174 = vmax.f32 %v7173, %v5958
    %v7175 = vmax.f32 %v7174, %v5959
    %v7176 = vmax.f32 %v7175, %v5960
    %v7177 = vmax.f32 %v7176, %v5961
    %v7178 = vmax.f32 %v7177, %v5962
    %v7179 = vmax.f32 %v7178, %v5963
    %v7180 = vmax.f32 %v7179, %v5964
    %v7181 = vmax.f32 %v7180, %v5965
    %v7182 = vrot.slane %v7181, 4
    %v7183 = vmax.f32 %v7181, %v7182
    %v7184 = vrot.slane %v7183, 2
    %v7185 = vmax.f32 %v7183, %v7184
    %v7186 = vrot.slane %v7185, 1
    %v7187 = vmax.f32 %v7185, %v7186
    %v7188 = vmax.f32 %v5966, %v5967
    %v7189 = vmax.f32 %v7188, %v5968
    %v7190 = vmax.f32 %v7189, %v5969
    %v7191 = vmax.f32 %v7190, %v5970
    %v7192 = vmax.f32 %v7191, %v5971
    %v7193 = vmax.f32 %v7192, %v5972
    %v7194 = vmax.f32 %v7193, %v5973
    %v7195 = vmax.f32 %v7194, %v5974
    %v7196 = vmax.f32 %v7195, %v5975
    %v7197 = vmax.f32 %v7196, %v5976
    %v7198 = vmax.f32 %v7197, %v5977
    %v7199 = vmax.f32 %v7198, %v5978
    %v7200 = vmax.f32 %v7199, %v5979
    %v7201 = vmax.f32 %v7200, %v5980
    %v7202 = vmax.f32 %v7201, %v5981
    %v7203 = vrot.slane %v7202, 4
    %v7204 = vmax.f32 %v7202, %v7203
    %v7205 = vrot.slane %v7204, 2
    %v7206 = vmax.f32 %v7204, %v7205
    %v7207 = vrot.slane %v7206, 1
    %v7208 = vmax.f32 %v7206, %v7207
    %v7209 = vmax.f32 %v5982, %v5983
    %v7210 = vmax.f32 %v7209, %v5984
    %v7211 = vmax.f32 %v7210, %v5985
    %v7212 = vmax.f32 %v7211, %v5986
    %v7213 = vmax.f32 %v7212, %v5987
    %v7214 = vmax.f32 %v7213, %v5988
    %v7215 = vmax.f32 %v7214, %v5989
    %v7216 = vmax.f32 %v7215, %v5990
    %v7217 = vmax.f32 %v7216, %v5991
    %v7218 = vmax.f32 %v7217, %v5992
    %v7219 = vmax.f32 %v7218, %v5993
    %v7220 = vmax.f32 %v7219, %v5994
    %v7221 = vmax.f32 %v7220, %v5995
    %v7222 = vmax.f32 %v7221, %v5996
    %v7223 = vmax.f32 %v7222, %v5997
    %v7224 = vrot.slane %v7223, 4
    %v7225 = vmax.f32 %v7223, %v7224
    %v7226 = vrot.slane %v7225, 2
    %v7227 = vmax.f32 %v7225, %v7226
    %v7228 = vrot.slane %v7227, 1
    %v7229 = vmax.f32 %v7227, %v7228
    %v7230 = vmax.f32 %v5998, %v5999
    %v7231 = vmax.f32 %v7230, %v6000
    %v7232 = vmax.f32 %v7231, %v6001
    %v7233 = vmax.f32 %v7232, %v6002
    %v7234 = vmax.f32 %v7233, %v6003
    %v7235 = vmax.f32 %v7234, %v6004
    %v7236 = vmax.f32 %v7235, %v6005
    %v7237 = vmax.f32 %v7236, %v6006
    %v7238 = vmax.f32 %v7237, %v6007
    %v7239 = vmax.f32 %v7238, %v6008
    %v7240 = vmax.f32 %v7239, %v6009
    %v7241 = vmax.f32 %v7240, %v6010
    %v7242 = vmax.f32 %v7241, %v6011
    %v7243 = vmax.f32 %v7242, %v6012
    %v7244 = vmax.f32 %v7243, %v6013
    %v7245 = vrot.slane %v7244, 4
    %v7246 = vmax.f32 %v7244, %v7245
    %v7247 = vrot.slane %v7246, 2
    %v7248 = vmax.f32 %v7246, %v7247
    %v7249 = vrot.slane %v7248, 1
    %v7250 = vmax.f32 %v7248, %v7249
    %v7251 = vmax.f32 %v6014, %v6015
    %v7252 = vmax.f32 %v7251, %v6016
    %v7253 = vmax.f32 %v7252, %v6017
    %v7254 = vmax.f32 %v7253, %v6018
    %v7255 = vmax.f32 %v7254, %v6019
    %v7256 = vmax.f32 %v7255, %v6020
    %v7257 = vmax.f32 %v7256, %v6021
    %v7258 = vmax.f32 %v7257, %v6022
    %v7259 = vmax.f32 %v7258, %v6023
    %v7260 = vmax.f32 %v7259, %v6024
    %v7261 = vmax.f32 %v7260, %v6025
    %v7262 = vmax.f32 %v7261, %v6026
    %v7263 = vmax.f32 %v7262, %v6027
    %v7264 = vmax.f32 %v7263, %v6028
    %v7265 = vmax.f32 %v7264, %v6029
    %v7266 = vrot.slane %v7265, 4
    %v7267 = vmax.f32 %v7265, %v7266
    %v7268 = vrot.slane %v7267, 2
    %v7269 = vmax.f32 %v7267, %v7268
    %v7270 = vrot.slane %v7269, 1
    %v7271 = vmax.f32 %v7269, %v7270
    %v7272 = vmax.f32 %v6030, %v6031
    %v7273 = vmax.f32 %v7272, %v6032
    %v7274 = vmax.f32 %v7273, %v6033
    %v7275 = vmax.f32 %v7274, %v6034
    %v7276 = vmax.f32 %v7275, %v6035
    %v7277 = vmax.f32 %v7276, %v6036
    %v7278 = vmax.f32 %v7277, %v6037
    %v7279 = vmax.f32 %v7278, %v6038
    %v7280 = vmax.f32 %v7279, %v6039
    %v7281 = vmax.f32 %v7280, %v6040
    %v7282 = vmax.f32 %v7281, %v6041
    %v7283 = vmax.f32 %v7282, %v6042
    %v7284 = vmax.f32 %v7283, %v6043
    %v7285 = vmax.f32 %v7284, %v6044
    %v7286 = vmax.f32 %v7285, %v6045
    %v7287 = vrot.slane %v7286, 4
    %v7288 = vmax.f32 %v7286, %v7287
    %v7289 = vrot.slane %v7288, 2
    %v7290 = vmax.f32 %v7288, %v7289
    %v7291 = vrot.slane %v7290, 1
    %v7292 = vmax.f32 %v7290, %v7291
    %v7293 = vmax.f32 %v6046, %v6047
    %v7294 = vmax.f32 %v7293, %v6048
    %v7295 = vmax.f32 %v7294, %v6049
    %v7296 = vmax.f32 %v7295, %v6050
    %v7297 = vmax.f32 %v7296, %v6051
    %v7298 = vmax.f32 %v7297, %v6052
    %v7299 = vmax.f32 %v7298, %v6053
    %v7300 = vmax.f32 %v7299, %v6054
    %v7301 = vmax.f32 %v7300, %v6055
    %v7302 = vmax.f32 %v7301, %v6056
    %v7303 = vmax.f32 %v7302, %v6057
    %v7304 = vmax.f32 %v7303, %v6058
    %v7305 = vmax.f32 %v7304, %v6059
    %v7306 = vmax.f32 %v7305, %v6060
    %v7307 = vmax.f32 %v7306, %v6061
    %v7308 = vrot.slane %v7307, 4
    %v7309 = vmax.f32 %v7307, %v7308
    %v7310 = vrot.slane %v7309, 2
    %v7311 = vmax.f32 %v7309, %v7310
    %v7312 = vrot.slane %v7311, 1
    %v7313 = vmax.f32 %v7311, %v7312
    %v7314 = vmax.f32 %v6062, %v6063
    %v7315 = vmax.f32 %v7314, %v6064
    %v7316 = vmax.f32 %v7315, %v6065
    %v7317 = vmax.f32 %v7316, %v6066
    %v7318 = vmax.f32 %v7317, %v6067
    %v7319 = vmax.f32 %v7318, %v6068
    %v7320 = vmax.f32 %v7319, %v6069
    %v7321 = vmax.f32 %v7320, %v6070
    %v7322 = vmax.f32 %v7321, %v6071
    %v7323 = vmax.f32 %v7322, %v6072
    %v7324 = vmax.f32 %v7323, %v6073
    %v7325 = vmax.f32 %v7324, %v6074
    %v7326 = vmax.f32 %v7325, %v6075
    %v7327 = vmax.f32 %v7326, %v6076
    %v7328 = vmax.f32 %v7327, %v6077
    %v7329 = vrot.slane %v7328, 4
    %v7330 = vmax.f32 %v7328, %v7329
    %v7331 = vrot.slane %v7330, 2
    %v7332 = vmax.f32 %v7330, %v7331
    %v7333 = vrot.slane %v7332, 1
    %v7334 = vmax.f32 %v7332, %v7333
    %v7335 = vmax.f32 %v6078, %v6079
    %v7336 = vmax.f32 %v7335, %v6080
    %v7337 = vmax.f32 %v7336, %v6081
    %v7338 = vmax.f32 %v7337, %v6082
    %v7339 = vmax.f32 %v7338, %v6083
    %v7340 = vmax.f32 %v7339, %v6084
    %v7341 = vmax.f32 %v7340, %v6085
    %v7342 = vmax.f32 %v7341, %v6086
    %v7343 = vmax.f32 %v7342, %v6087
    %v7344 = vmax.f32 %v7343, %v6088
    %v7345 = vmax.f32 %v7344, %v6089
    %v7346 = vmax.f32 %v7345, %v6090
    %v7347 = vmax.f32 %v7346, %v6091
    %v7348 = vmax.f32 %v7347, %v6092
    %v7349 = vmax.f32 %v7348, %v6093
    %v7350 = vrot.slane %v7349, 4
    %v7351 = vmax.f32 %v7349, %v7350
    %v7352 = vrot.slane %v7351, 2
    %v7353 = vmax.f32 %v7351, %v7352
    %v7354 = vrot.slane %v7353, 1
    %v7355 = vmax.f32 %v7353, %v7354
    %v7356 = vmax.f32 %v6094, %v6095
    %v7357 = vmax.f32 %v7356, %v6096
    %v7358 = vmax.f32 %v7357, %v6097
    %v7359 = vmax.f32 %v7358, %v6098
    %v7360 = vmax.f32 %v7359, %v6099
    %v7361 = vmax.f32 %v7360, %v6100
    %v7362 = vmax.f32 %v7361, %v6101
    %v7363 = vmax.f32 %v7362, %v6102
    %v7364 = vmax.f32 %v7363, %v6103
    %v7365 = vmax.f32 %v7364, %v6104
    %v7366 = vmax.f32 %v7365, %v6105
    %v7367 = vmax.f32 %v7366, %v6106
    %v7368 = vmax.f32 %v7367, %v6107
    %v7369 = vmax.f32 %v7368, %v6108
    %v7370 = vmax.f32 %v7369, %v6109
    %v7371 = vrot.slane %v7370, 4
    %v7372 = vmax.f32 %v7370, %v7371
    %v7373 = vrot.slane %v7372, 2
    %v7374 = vmax.f32 %v7372, %v7373
    %v7375 = vrot.slane %v7374, 1
    %v7376 = vmax.f32 %v7374, %v7375
    %v7377 = vmax.f32 %v6110, %v6111
    %v7378 = vmax.f32 %v7377, %v6112
    %v7379 = vmax.f32 %v7378, %v6113
    %v7380 = vmax.f32 %v7379, %v6114
    %v7381 = vmax.f32 %v7380, %v6115
    %v7382 = vmax.f32 %v7381, %v6116
    %v7383 = vmax.f32 %v7382, %v6117
    %v7384 = vmax.f32 %v7383, %v6118
    %v7385 = vmax.f32 %v7384, %v6119
    %v7386 = vmax.f32 %v7385, %v6120
    %v7387 = vmax.f32 %v7386, %v6121
    %v7388 = vmax.f32 %v7387, %v6122
    %v7389 = vmax.f32 %v7388, %v6123
    %v7390 = vmax.f32 %v7389, %v6124
    %v7391 = vmax.f32 %v7390, %v6125
    %v7392 = vrot.slane %v7391, 4
    %v7393 = vmax.f32 %v7391, %v7392
    %v7394 = vrot.slane %v7393, 2
    %v7395 = vmax.f32 %v7393, %v7394
    %v7396 = vrot.slane %v7395, 1
    %v7397 = vmax.f32 %v7395, %v7396
    %v7398 = vmax.f32 %v6126, %v6127
    %v7399 = vmax.f32 %v7398, %v6128
    %v7400 = vmax.f32 %v7399, %v6129
    %v7401 = vmax.f32 %v7400, %v6130
    %v7402 = vmax.f32 %v7401, %v6131
    %v7403 = vmax.f32 %v7402, %v6132
    %v7404 = vmax.f32 %v7403, %v6133
    %v7405 = vmax.f32 %v7404, %v6134
    %v7406 = vmax.f32 %v7405, %v6135
    %v7407 = vmax.f32 %v7406, %v6136
    %v7408 = vmax.f32 %v7407, %v6137
    %v7409 = vmax.f32 %v7408, %v6138
    %v7410 = vmax.f32 %v7409, %v6139
    %v7411 = vmax.f32 %v7410, %v6140
    %v7412 = vmax.f32 %v7411, %v6141
    %v7413 = vrot.slane %v7412, 4
    %v7414 = vmax.f32 %v7412, %v7413
    %v7415 = vrot.slane %v7414, 2
    %v7416 = vmax.f32 %v7414, %v7415
    %v7417 = vrot.slane %v7416, 1
    %v7418 = vmax.f32 %v7416, %v7417
    %v7419 = vmax.f32 %v6142, %v6143
    %v7420 = vmax.f32 %v7419, %v6144
    %v7421 = vmax.f32 %v7420, %v6145
    %v7422 = vmax.f32 %v7421, %v6146
    %v7423 = vmax.f32 %v7422, %v6147
    %v7424 = vmax.f32 %v7423, %v6148
    %v7425 = vmax.f32 %v7424, %v6149
    %v7426 = vmax.f32 %v7425, %v6150
    %v7427 = vmax.f32 %v7426, %v6151
    %v7428 = vmax.f32 %v7427, %v6152
    %v7429 = vmax.f32 %v7428, %v6153
    %v7430 = vmax.f32 %v7429, %v6154
    %v7431 = vmax.f32 %v7430, %v6155
    %v7432 = vmax.f32 %v7431, %v6156
    %v7433 = vmax.f32 %v7432, %v6157
    %v7434 = vrot.slane %v7433, 4
    %v7435 = vmax.f32 %v7433, %v7434
    %v7436 = vrot.slane %v7435, 2
    %v7437 = vmax.f32 %v7435, %v7436
    %v7438 = vrot.slane %v7437, 1
    %v7439 = vmax.f32 %v7437, %v7438
    %v7440 = vmax.f32 %v6158, %v6159
    %v7441 = vmax.f32 %v7440, %v6160
    %v7442 = vmax.f32 %v7441, %v6161
    %v7443 = vmax.f32 %v7442, %v6162
    %v7444 = vmax.f32 %v7443, %v6163
    %v7445 = vmax.f32 %v7444, %v6164
    %v7446 = vmax.f32 %v7445, %v6165
    %v7447 = vmax.f32 %v7446, %v6166
    %v7448 = vmax.f32 %v7447, %v6167
    %v7449 = vmax.f32 %v7448, %v6168
    %v7450 = vmax.f32 %v7449, %v6169
    %v7451 = vmax.f32 %v7450, %v6170
    %v7452 = vmax.f32 %v7451, %v6171
    %v7453 = vmax.f32 %v7452, %v6172
    %v7454 = vmax.f32 %v7453, %v6173
    %v7455 = vrot.slane %v7454, 4
    %v7456 = vmax.f32 %v7454, %v7455
    %v7457 = vrot.slane %v7456, 2
    %v7458 = vmax.f32 %v7456, %v7457
    %v7459 = vrot.slane %v7458, 1
    %v7460 = vmax.f32 %v7458, %v7459
    %v7461 = vmax.f32 %v6174, %v6175
    %v7462 = vmax.f32 %v7461, %v6176
    %v7463 = vmax.f32 %v7462, %v6177
    %v7464 = vmax.f32 %v7463, %v6178
    %v7465 = vmax.f32 %v7464, %v6179
    %v7466 = vmax.f32 %v7465, %v6180
    %v7467 = vmax.f32 %v7466, %v6181
    %v7468 = vmax.f32 %v7467, %v6182
    %v7469 = vmax.f32 %v7468, %v6183
    %v7470 = vmax.f32 %v7469, %v6184
    %v7471 = vmax.f32 %v7470, %v6185
    %v7472 = vmax.f32 %v7471, %v6186
    %v7473 = vmax.f32 %v7472, %v6187
    %v7474 = vmax.f32 %v7473, %v6188
    %v7475 = vmax.f32 %v7474, %v6189
    %v7476 = vrot.slane %v7475, 4
    %v7477 = vmax.f32 %v7475, %v7476
    %v7478 = vrot.slane %v7477, 2
    %v7479 = vmax.f32 %v7477, %v7478
    %v7480 = vrot.slane %v7479, 1
    %v7481 = vmax.f32 %v7479, %v7480
    %v7482 = vmax.f32 %v6190, %v6191
    %v7483 = vmax.f32 %v7482, %v6192
    %v7484 = vmax.f32 %v7483, %v6193
    %v7485 = vmax.f32 %v7484, %v6194
    %v7486 = vmax.f32 %v7485, %v6195
    %v7487 = vmax.f32 %v7486, %v6196
    %v7488 = vmax.f32 %v7487, %v6197
    %v7489 = vmax.f32 %v7488, %v6198
    %v7490 = vmax.f32 %v7489, %v6199
    %v7491 = vmax.f32 %v7490, %v6200
    %v7492 = vmax.f32 %v7491, %v6201
    %v7493 = vmax.f32 %v7492, %v6202
    %v7494 = vmax.f32 %v7493, %v6203
    %v7495 = vmax.f32 %v7494, %v6204
    %v7496 = vmax.f32 %v7495, %v6205
    %v7497 = vrot.slane %v7496, 4
    %v7498 = vmax.f32 %v7496, %v7497
    %v7499 = vrot.slane %v7498, 2
    %v7500 = vmax.f32 %v7498, %v7499
    %v7501 = vrot.slane %v7500, 1
    %v7502 = vmax.f32 %v7500, %v7501
    %v7503 = vmax.f32 %v6206, %v6207
    %v7504 = vmax.f32 %v7503, %v6208
    %v7505 = vmax.f32 %v7504, %v6209
    %v7506 = vmax.f32 %v7505, %v6210
    %v7507 = vmax.f32 %v7506, %v6211
    %v7508 = vmax.f32 %v7507, %v6212
    %v7509 = vmax.f32 %v7508, %v6213
    %v7510 = vmax.f32 %v7509, %v6214
    %v7511 = vmax.f32 %v7510, %v6215
    %v7512 = vmax.f32 %v7511, %v6216
    %v7513 = vmax.f32 %v7512, %v6217
    %v7514 = vmax.f32 %v7513, %v6218
    %v7515 = vmax.f32 %v7514, %v6219
    %v7516 = vmax.f32 %v7515, %v6220
    %v7517 = vmax.f32 %v7516, %v6221
    %v7518 = vrot.slane %v7517, 4
    %v7519 = vmax.f32 %v7517, %v7518
    %v7520 = vrot.slane %v7519, 2
    %v7521 = vmax.f32 %v7519, %v7520
    %v7522 = vrot.slane %v7521, 1
    %v7523 = vmax.f32 %v7521, %v7522
    %v7524 = vmax.f32 %v6222, %v6223
    %v7525 = vmax.f32 %v7524, %v6224
    %v7526 = vmax.f32 %v7525, %v6225
    %v7527 = vmax.f32 %v7526, %v6226
    %v7528 = vmax.f32 %v7527, %v6227
    %v7529 = vmax.f32 %v7528, %v6228
    %v7530 = vmax.f32 %v7529, %v6229
    %v7531 = vmax.f32 %v7530, %v6230
    %v7532 = vmax.f32 %v7531, %v6231
    %v7533 = vmax.f32 %v7532, %v6232
    %v7534 = vmax.f32 %v7533, %v6233
    %v7535 = vmax.f32 %v7534, %v6234
    %v7536 = vmax.f32 %v7535, %v6235
    %v7537 = vmax.f32 %v7536, %v6236
    %v7538 = vmax.f32 %v7537, %v6237
    %v7539 = vrot.slane %v7538, 4
    %v7540 = vmax.f32 %v7538, %v7539
    %v7541 = vrot.slane %v7540, 2
    %v7542 = vmax.f32 %v7540, %v7541
    %v7543 = vrot.slane %v7542, 1
    %v7544 = vmax.f32 %v7542, %v7543
    %v7545 = vmax.f32 %v6238, %v6239
    %v7546 = vmax.f32 %v7545, %v6240
    %v7547 = vmax.f32 %v7546, %v6241
    %v7548 = vmax.f32 %v7547, %v6242
    %v7549 = vmax.f32 %v7548, %v6243
    %v7550 = vmax.f32 %v7549, %v6244
    %v7551 = vmax.f32 %v7550, %v6245
    %v7552 = vmax.f32 %v7551, %v6246
    %v7553 = vmax.f32 %v7552, %v6247
    %v7554 = vmax.f32 %v7553, %v6248
    %v7555 = vmax.f32 %v7554, %v6249
    %v7556 = vmax.f32 %v7555, %v6250
    %v7557 = vmax.f32 %v7556, %v6251
    %v7558 = vmax.f32 %v7557, %v6252
    %v7559 = vmax.f32 %v7558, %v6253
    %v7560 = vrot.slane %v7559, 4
    %v7561 = vmax.f32 %v7559, %v7560
    %v7562 = vrot.slane %v7561, 2
    %v7563 = vmax.f32 %v7561, %v7562
    %v7564 = vrot.slane %v7563, 1
    %v7565 = vmax.f32 %v7563, %v7564
    %v7566 = vmax.f32 %v6254, %v6255
    %v7567 = vmax.f32 %v7566, %v6256
    %v7568 = vmax.f32 %v7567, %v6257
    %v7569 = vmax.f32 %v7568, %v6258
    %v7570 = vmax.f32 %v7569, %v6259
    %v7571 = vmax.f32 %v7570, %v6260
    %v7572 = vmax.f32 %v7571, %v6261
    %v7573 = vmax.f32 %v7572, %v6262
    %v7574 = vmax.f32 %v7573, %v6263
    %v7575 = vmax.f32 %v7574, %v6264
    %v7576 = vmax.f32 %v7575, %v6265
    %v7577 = vmax.f32 %v7576, %v6266
    %v7578 = vmax.f32 %v7577, %v6267
    %v7579 = vmax.f32 %v7578, %v6268
    %v7580 = vmax.f32 %v7579, %v6269
    %v7581 = vrot.slane %v7580, 4
    %v7582 = vmax.f32 %v7580, %v7581
    %v7583 = vrot.slane %v7582, 2
    %v7584 = vmax.f32 %v7582, %v7583
    %v7585 = vrot.slane %v7584, 1
    %v7586 = vmax.f32 %v7584, %v7585
    %v7587 = vmax.f32 %v6270, %v6271
    %v7588 = vmax.f32 %v7587, %v6272
    %v7589 = vmax.f32 %v7588, %v6273
    %v7590 = vmax.f32 %v7589, %v6274
    %v7591 = vmax.f32 %v7590, %v6275
    %v7592 = vmax.f32 %v7591, %v6276
    %v7593 = vmax.f32 %v7592, %v6277
    %v7594 = vmax.f32 %v7593, %v6278
    %v7595 = vmax.f32 %v7594, %v6279
    %v7596 = vmax.f32 %v7595, %v6280
    %v7597 = vmax.f32 %v7596, %v6281
    %v7598 = vmax.f32 %v7597, %v6282
    %v7599 = vmax.f32 %v7598, %v6283
    %v7600 = vmax.f32 %v7599, %v6284
    %v7601 = vmax.f32 %v7600, %v6285
    %v7602 = vrot.slane %v7601, 4
    %v7603 = vmax.f32 %v7601, %v7602
    %v7604 = vrot.slane %v7603, 2
    %v7605 = vmax.f32 %v7603, %v7604
    %v7606 = vrot.slane %v7605, 1
    %v7607 = vmax.f32 %v7605, %v7606
    %v7608 = vmax.f32 %v6286, %v6287
    %v7609 = vmax.f32 %v7608, %v6288
    %v7610 = vmax.f32 %v7609, %v6289
    %v7611 = vmax.f32 %v7610, %v6290
    %v7612 = vmax.f32 %v7611, %v6291
    %v7613 = vmax.f32 %v7612, %v6292
    %v7614 = vmax.f32 %v7613, %v6293
    %v7615 = vmax.f32 %v7614, %v6294
    %v7616 = vmax.f32 %v7615, %v6295
    %v7617 = vmax.f32 %v7616, %v6296
    %v7618 = vmax.f32 %v7617, %v6297
    %v7619 = vmax.f32 %v7618, %v6298
    %v7620 = vmax.f32 %v7619, %v6299
    %v7621 = vmax.f32 %v7620, %v6300
    %v7622 = vmax.f32 %v7621, %v6301
    %v7623 = vrot.slane %v7622, 4
    %v7624 = vmax.f32 %v7622, %v7623
    %v7625 = vrot.slane %v7624, 2
    %v7626 = vmax.f32 %v7624, %v7625
    %v7627 = vrot.slane %v7626, 1
    %v7628 = vmax.f32 %v7626, %v7627
    %v7629 = vmax.f32 %v6302, %v6303
    %v7630 = vmax.f32 %v7629, %v6304
    %v7631 = vmax.f32 %v7630, %v6305
    %v7632 = vmax.f32 %v7631, %v6306
    %v7633 = vmax.f32 %v7632, %v6307
    %v7634 = vmax.f32 %v7633, %v6308
    %v7635 = vmax.f32 %v7634, %v6309
    %v7636 = vmax.f32 %v7635, %v6310
    %v7637 = vmax.f32 %v7636, %v6311
    %v7638 = vmax.f32 %v7637, %v6312
    %v7639 = vmax.f32 %v7638, %v6313
    %v7640 = vmax.f32 %v7639, %v6314
    %v7641 = vmax.f32 %v7640, %v6315
    %v7642 = vmax.f32 %v7641, %v6316
    %v7643 = vmax.f32 %v7642, %v6317
    %v7644 = vrot.slane %v7643, 4
    %v7645 = vmax.f32 %v7643, %v7644
    %v7646 = vrot.slane %v7645, 2
    %v7647 = vmax.f32 %v7645, %v7646
    %v7648 = vrot.slane %v7647, 1
    %v7649 = vmax.f32 %v7647, %v7648
    %v7650 = vmax.f32 %v6318, %v6319
    %v7651 = vmax.f32 %v7650, %v6320
    %v7652 = vmax.f32 %v7651, %v6321
    %v7653 = vmax.f32 %v7652, %v6322
    %v7654 = vmax.f32 %v7653, %v6323
    %v7655 = vmax.f32 %v7654, %v6324
    %v7656 = vmax.f32 %v7655, %v6325
    %v7657 = vmax.f32 %v7656, %v6326
    %v7658 = vmax.f32 %v7657, %v6327
    %v7659 = vmax.f32 %v7658, %v6328
    %v7660 = vmax.f32 %v7659, %v6329
    %v7661 = vmax.f32 %v7660, %v6330
    %v7662 = vmax.f32 %v7661, %v6331
    %v7663 = vmax.f32 %v7662, %v6332
    %v7664 = vmax.f32 %v7663, %v6333
    %v7665 = vrot.slane %v7664, 4
    %v7666 = vmax.f32 %v7664, %v7665
    %v7667 = vrot.slane %v7666, 2
    %v7668 = vmax.f32 %v7666, %v7667
    %v7669 = vrot.slane %v7668, 1
    %v7670 = vmax.f32 %v7668, %v7669
    %v7671 = vmax.f32 %v6334, %v6335
    %v7672 = vmax.f32 %v7671, %v6336
    %v7673 = vmax.f32 %v7672, %v6337
    %v7674 = vmax.f32 %v7673, %v6338
    %v7675 = vmax.f32 %v7674, %v6339
    %v7676 = vmax.f32 %v7675, %v6340
    %v7677 = vmax.f32 %v7676, %v6341
    %v7678 = vmax.f32 %v7677, %v6342
    %v7679 = vmax.f32 %v7678, %v6343
    %v7680 = vmax.f32 %v7679, %v6344
    %v7681 = vmax.f32 %v7680, %v6345
    %v7682 = vmax.f32 %v7681, %v6346
    %v7683 = vmax.f32 %v7682, %v6347
    %v7684 = vmax.f32 %v7683, %v6348
    %v7685 = vmax.f32 %v7684, %v6349
    %v7686 = vrot.slane %v7685, 4
    %v7687 = vmax.f32 %v7685, %v7686
    %v7688 = vrot.slane %v7687, 2
    %v7689 = vmax.f32 %v7687, %v7688
    %v7690 = vrot.slane %v7689, 1
    %v7691 = vmax.f32 %v7689, %v7690
    %v7692 = vmax.f32 %v6350, %v6351
    %v7693 = vmax.f32 %v7692, %v6352
    %v7694 = vmax.f32 %v7693, %v6353
    %v7695 = vmax.f32 %v7694, %v6354
    %v7696 = vmax.f32 %v7695, %v6355
    %v7697 = vmax.f32 %v7696, %v6356
    %v7698 = vmax.f32 %v7697, %v6357
    %v7699 = vmax.f32 %v7698, %v6358
    %v7700 = vmax.f32 %v7699, %v6359
    %v7701 = vmax.f32 %v7700, %v6360
    %v7702 = vmax.f32 %v7701, %v6361
    %v7703 = vmax.f32 %v7702, %v6362
    %v7704 = vmax.f32 %v7703, %v6363
    %v7705 = vmax.f32 %v7704, %v6364
    %v7706 = vmax.f32 %v7705, %v6365
    %v7707 = vrot.slane %v7706, 4
    %v7708 = vmax.f32 %v7706, %v7707
    %v7709 = vrot.slane %v7708, 2
    %v7710 = vmax.f32 %v7708, %v7709
    %v7711 = vrot.slane %v7710, 1
    %v7712 = vmax.f32 %v7710, %v7711
    %v7713 = vmax.f32 %v6366, %v6367
    %v7714 = vmax.f32 %v7713, %v6368
    %v7715 = vmax.f32 %v7714, %v6369
    %v7716 = vmax.f32 %v7715, %v6370
    %v7717 = vmax.f32 %v7716, %v6371
    %v7718 = vmax.f32 %v7717, %v6372
    %v7719 = vmax.f32 %v7718, %v6373
    %v7720 = vmax.f32 %v7719, %v6374
    %v7721 = vmax.f32 %v7720, %v6375
    %v7722 = vmax.f32 %v7721, %v6376
    %v7723 = vmax.f32 %v7722, %v6377
    %v7724 = vmax.f32 %v7723, %v6378
    %v7725 = vmax.f32 %v7724, %v6379
    %v7726 = vmax.f32 %v7725, %v6380
    %v7727 = vmax.f32 %v7726, %v6381
    %v7728 = vrot.slane %v7727, 4
    %v7729 = vmax.f32 %v7727, %v7728
    %v7730 = vrot.slane %v7729, 2
    %v7731 = vmax.f32 %v7729, %v7730
    %v7732 = vrot.slane %v7731, 1
    %v7733 = vmax.f32 %v7731, %v7732
    %vm7798 = vcmask 1041409
    %v7799 = vsel %vm7798, %v6431, %v6410
    %vm7800 = vcmask 1042434
    %v7801 = vsel %vm7800, %v6452, %v7799
    %vm7802 = vcmask 1043459
    %v7803 = vsel %vm7802, %v6473, %v7801
    %vm7804 = vcmask 1044484
    %v7805 = vsel %vm7804, %v6494, %v7803
    %vm7806 = vcmask 1045509
    %v7807 = vsel %vm7806, %v6515, %v7805
    %vm7808 = vcmask 1046534
    %v7809 = vsel %vm7808, %v6536, %v7807
    %vm7810 = vcmask 1047559
    %v7811 = vsel %vm7810, %v6557, %v7809
    %v7812 = vsel %vm7798, %v6599, %v6578
    %v7813 = vsel %vm7800, %v6620, %v7812
    %v7814 = vsel %vm7802, %v6641, %v7813
    %v7815 = vsel %vm7804, %v6662, %v7814
    %v7816 = vsel %vm7806, %v6683, %v7815
    %v7817 = vsel %vm7808, %v6704, %v7816
    %v7818 = vsel %vm7810, %v6725, %v7817
    %v7819 = vsel %vm7798, %v6767, %v6746
    %v7820 = vsel %vm7800, %v6788, %v7819
    %v7821 = vsel %vm7802, %v6809, %v7820
    %v7822 = vsel %vm7804, %v6830, %v7821
    %v7823 = vsel %vm7806, %v6851, %v7822
    %v7824 = vsel %vm7808, %v6872, %v7823
    %v7825 = vsel %vm7810, %v6893, %v7824
    %v7826 = vsel %vm7798, %v6935, %v6914
    %v7827 = vsel %vm7800, %v6956, %v7826
    %v7828 = vsel %vm7802, %v6977, %v7827
    %v7829 = vsel %vm7804, %v6998, %v7828
    %v7830 = vsel %vm7806, %v7019, %v7829
    %v7831 = vsel %vm7808, %v7040, %v7830
    %v7832 = vsel %vm7810, %v7061, %v7831
    %v7833 = vsel %vm7798, %v7103, %v7082
    %v7834 = vsel %vm7800, %v7124, %v7833
    %v7835 = vsel %vm7802, %v7145, %v7834
    %v7836 = vsel %vm7804, %v7166, %v7835
    %v7837 = vsel %vm7806, %v7187, %v7836
    %v7838 = vsel %vm7808, %v7208, %v7837
    %v7839 = vsel %vm7810, %v7229, %v7838
    %v7840 = vsel %vm7798, %v7271, %v7250
    %v7841 = vsel %vm7800, %v7292, %v7840
    %v7842 = vsel %vm7802, %v7313, %v7841
    %v7843 = vsel %vm7804, %v7334, %v7842
    %v7844 = vsel %vm7806, %v7355, %v7843
    %v7845 = vsel %vm7808, %v7376, %v7844
    %v7846 = vsel %vm7810, %v7397, %v7845
    %v7847 = vsel %vm7798, %v7439, %v7418
    %v7848 = vsel %vm7800, %v7460, %v7847
    %v7849 = vsel %vm7802, %v7481, %v7848
    %v7850 = vsel %vm7804, %v7502, %v7849
    %v7851 = vsel %vm7806, %v7523, %v7850
    %v7852 = vsel %vm7808, %v7544, %v7851
    %v7853 = vsel %vm7810, %v7565, %v7852
    %v7854 = vsel %vm7798, %v7607, %v7586
    %v7855 = vsel %vm7800, %v7628, %v7854
    %v7856 = vsel %vm7802, %v7649, %v7855
    %v7857 = vsel %vm7804, %v7670, %v7856
    %v7858 = vsel %vm7806, %v7691, %v7857
    %v7859 = vsel %vm7808, %v7712, %v7858
    %v7860 = vsel %vm7810, %v7733, %v7859
    %v7869 = vmax.f32 %v6382, %v7811
    %v7870 = vmax.f32 %v6383, %v7818
    %v7871 = vmax.f32 %v6384, %v7825
    %v7872 = vmax.f32 %v6385, %v7832
    %v7873 = vmax.f32 %v6386, %v7839
    %v7874 = vmax.f32 %v6387, %v7846
    %v7875 = vmax.f32 %v6388, %v7853
    %v7876 = vmax.f32 %v6389, %v7860
    %7877 = vst [vmem:[#allocation18] sm:$0xff] %v7869
    %7878 = vst [vmem:[#allocation18 + $0x8] sm:$0xff] %v7870
    %7879 = vst [vmem:[#allocation18 + $0x10] sm:$0xff] %v7871
    %7880 = vst [vmem:[#allocation18 + $0x18] sm:$0xff] %v7872
    %7881 = vst [vmem:[#allocation18 + $0x20] sm:$0xff] %v7873
    %7882 = vst [vmem:[#allocation18 + $0x28] sm:$0xff] %v7874
    %7883 = vst [vmem:[#allocation18 + $0x30] sm:$0xff] %v7875
    %7884 = vst [vmem:[#allocation18 + $0x38] sm:$0xff] %v7876
    // Predicated region
    $region78: #{tpu_custom_call.1} parent=1 // pred_check
      _
    $region79: #{tpu_custom_call.1} parent=1 // pred_check_branch
      %7886 = sbr.rel (0) target = $region81
    $region80: #{tpu_custom_call.1} parent=1 // pred_region
      %s7888 = ssub.s32 1024, 1024
      %7889 = vsyncadd [#allocation5], %s7888
      %s7890 = sshll.u32 [#allocation18], 4
      %s7891 = int_to_ptr.vmem [resolvable:$true] %s7890
      %7896 = dma.vmem_to_hbm [thread:$0]  %s7891, 1024, %s9, [#allocation5], 128, 128, 8
    $region81: #{tpu_custom_call.1} parent=1 // pred_fallthru
      _
    // Predicated region
    $region82: #{tpu_custom_call.1} parent=1 // pred_check
      _
    $region83: #{tpu_custom_call.1} parent=1 // pred_check_branch
      %7898 = sbr.rel (0) target = $region85
    $region84: #{tpu_custom_call.1} parent=1 // pred_region
      %7899 = dma.done [#allocation5], 1024
    $region85: #{tpu_custom_call.1} parent=1 // pred_fallthru
      _
    %7900 = vsyncpa [#allocation4], 1
    %7901 = vsyncpa [#allocation7], 1
    %7902 = vsyncpa [#allocation10], 1
    %7903 = vsyncpa [#allocation13], 1
    %7904 = vsyncpa [#allocation16], 1
    %7905 = vsyncpa [#allocation5], 1

</llo_original>
